<compile_context>
chip_gen: v7x
topology: tpu7x:2x2x1
jax: 0.10.0
libtpu: 0.0.40
codegen_flags: <defaults>
</compile_context>

<pallas_src>
import functools

import jax
import jax.numpy as jnp
from jax.experimental import pallas as pl
from jax.experimental.pallas import tpu as pltpu

IND = 4                 # input planes
RES_BLOCK_FILTERS = 32  # RES_BLOCK_FILLTERS
BLOCKS = 2              # number of residual blocks
BN_EPS = 1e-5


# ---------------------------------------------------------------------------
# Fused Pallas kernel: stem + residual blocks, fully VMEM resident.
# ---------------------------------------------------------------------------
def _feature_kernel(x_ref, w_ref, shift_ref, o_ref, act_ref, patch_ref,
                    *, B, H, W, C, blocks):
    # x_ref:     (B, H, W, C)      input, channels zero-padded IND -> C
    # w_ref:     (L, 9*C, C)       im2col conv weights, BN scale pre-folded
    # shift_ref: (L, 1, C)         folded BN shift per layer
    # o_ref:     (B*H*W, C)        final activation (row index = (b, y, x))
    # act_ref:   (B, H+2, W+2, C)  activation scratch with zero halo
    # patch_ref: (B*H*W, 9*C)      im2col scratch
    M = B * H * W

    # Zero the halo once; the interior is overwritten every layer, the halo
    # never is, so it stays zero for all 5 convs.
    act_ref[...] = jnp.zeros_like(act_ref)
    act_ref[:, 1:H + 1, 1:W + 1, :] = x_ref[...]

    def write_act(y2d):
        act_ref[:, 1:H + 1, 1:W + 1, :] = y2d.reshape(B, H, W, C)

    def read_act():
        return act_ref[:, 1:H + 1, 1:W + 1, :].reshape(M, C)

    def conv_bn(layer):
        # im2col: gather the 9 shifted windows into one (M, 9*C) matrix so the
        # conv becomes a single deep-K MXU matmul instead of 9 small ones.
        for dy in range(3):
            for dx in range(3):
                k0 = (dy * 3 + dx) * C
                win = act_ref[:, dy:dy + H, dx:dx + W, :]      # (B, H, W, C)
                patch_ref[:, k0:k0 + C] = win.reshape(M, C)
        y = jnp.dot(patch_ref[...], w_ref[layer],
                    preferred_element_type=jnp.float32)         # (M, C)
        return y + shift_ref[layer]                              # (1, C) bcast

    # stem: relu(bn(conv(x)))
    write_act(jnp.maximum(conv_bn(0), 0.0))

    # residual blocks: relu(bn2(conv2(relu(bn1(conv1(x))))) + x)
    for blk in range(blocks):
        res = read_act()                                         # block input
        write_act(jnp.maximum(conv_bn(2 * blk + 1), 0.0))
        y = jnp.maximum(conv_bn(2 * blk + 2) + res, 0.0)
        if blk + 1 < blocks:
            write_act(y)
        else:
            o_ref[...] = y.astype(o_ref.dtype)                   # final store


# ---------------------------------------------------------------------------
# One-time parameter transform: fold BN scale into weights, build im2col
# weight stacks (L, 9*C, C) and shift stacks (L, 1, C).
# ---------------------------------------------------------------------------
def _fuse_params(params):
    def fold(w, scale):
        return w * scale.reshape(1, 1, 1, -1)

    stem_w, stem_s, stem_b = params["stem"]
    C = stem_w.shape[-1]
    w0 = fold(stem_w, stem_s[0])
    # zero-pad stem input channels (IND -> C) so all layers share one shape
    w0 = jnp.pad(w0, ((0, 0), (0, 0), (0, C - w0.shape[2]), (0, 0)))
    ws = [w0.reshape(9 * C, C)]
    shifts = [stem_b.reshape(1, C)]
    for (w1, s1, b1), (w2, s2, b2) in params["blocks"]:
        ws.append(fold(w1, s1[0]).reshape(9 * C, C))
        shifts.append(b1.reshape(1, C))
        ws.append(fold(w2, s2[0]).reshape(9 * C, C))
        shifts.append(b2.reshape(1, C))
    return jnp.stack(ws), jnp.stack(shifts)


# ---------------------------------------------------------------------------
# Feature forward (Pallas) and pure-JAX reference
# ---------------------------------------------------------------------------
def feature_forward(params, x_nchw):
    B, Cin, H, W = x_nchw.shape
    C = params["stem"][0].shape[-1]
    blocks = len(params["blocks"])
    L = 1 + 2 * blocks

    w_all, shift_all = _fuse_params(params)                  # (L,9C,C),(L,1,C)

    x = jnp.transpose(x_nchw, (0, 2, 3, 1)).astype(jnp.float32)      # NHWC
    x = jnp.pad(x, ((0, 0), (0, 0), (0, 0), (0, C - Cin)))    # channels -> C

    kernel = functools.partial(_feature_kernel, B=B, H=H, W=W, C=C,
                               blocks=blocks)
    out2d = pl.pallas_call(
        kernel,
        out_shape=jax.ShapeDtypeStruct((B * H * W, C), jnp.float32),
        grid_spec=pltpu.PrefetchScalarGridSpec(
            num_scalar_prefetch=0,
            grid=(1,),
            in_specs=[
                pl.BlockSpec((B, H, W, C), lambda i: (0, 0, 0, 0)),
                pl.BlockSpec((L, 9 * C, C), lambda i: (0, 0, 0)),
                pl.BlockSpec((L, 1, C), lambda i: (0, 0, 0)),
            ],
            out_specs=pl.BlockSpec((B * H * W, C), lambda i: (0, 0)),
            scratch_shapes=[
                pltpu.VMEM((B, H + 2, W + 2, C), jnp.float32),   # activations
                pltpu.VMEM((B * H * W, 9 * C), jnp.float32),     # im2col
            ],
        ),
        compiler_params=pltpu.CompilerParams(
            # single fused step; "parallel" buys nothing on 1-TC chips
            dimension_semantics=("arbitrary",)),
    )(x, w_all, shift_all)

    out = out2d.reshape(B, H, W, C)
    return jnp.transpose(out, (0, 3, 1, 2))                   # NHWC -> NCHW


def _conv_ref(x_nhwc, w_hwio):
    return jax.lax.conv_general_dilated(
        x_nhwc, w_hwio, window_strides=(1, 1), padding="SAME",
        dimension_numbers=("NHWC", "HWIO", "NHWC"))


def feature_forward_ref(params, x_nchw):
    x = jnp.transpose(x_nchw, (0, 2, 3, 1)).astype(jnp.float32)

    def cbr(x, w, s, b, res):
        y = _conv_ref(x, w) * s[0][None, None, :] + b[0][None, None, :] + res
        return jnp.maximum(y, 0.0)

    w, s, b = params["stem"]
    x = cbr(x, w, s, b, 0.0)
    for (w1, s1, b1), (w2, s2, b2) in params["blocks"]:
        h = cbr(x, w1, s1, b1, 0.0)
        x = cbr(h, w2, s2, b2, x)
    return jnp.transpose(x, (0, 3, 1, 2))


# ---------------------------------------------------------------------------
# Parameter construction (deterministic, synthetic)
# ---------------------------------------------------------------------------
def _fold_bn(gamma, beta, mean, var, eps=BN_EPS):
    scale = gamma / jnp.sqrt(var + eps)
    shift = beta - mean * scale
    return scale.reshape(1, -1), shift.reshape(1, -1)


def _conv_weight(key, cin, cout):
    w = jax.random.normal(key, (3, 3, cin, cout), jnp.float32)
    return w * (1.0 / jnp.sqrt(9.0 * cin))


def _bn_params(key, c):
    k1, k2, k3, k4 = jax.random.split(key, 4)
    gamma = 1.0 + 0.1 * jax.random.normal(k1, (c,), jnp.float32)
    beta = 0.1 * jax.random.normal(k2, (c,), jnp.float32)
    mean = 0.1 * jax.random.normal(k3, (c,), jnp.float32)
    var = 1.0 + 0.1 * jax.random.uniform(k4, (c,), jnp.float32)
    return _fold_bn(gamma, beta, mean, var)


def init_feature_params(key, ind=IND, filters=RES_BLOCK_FILTERS,
                        blocks=BLOCKS):
    keys = jax.random.split(key, 2 + 4 * blocks)
    stem_w = _conv_weight(keys[0], ind, filters)
    stem_s, stem_b = _bn_params(keys[1], filters)
    block_params = []
    for i in range(blocks):
        kw1, kb1, kw2, kb2 = keys[2 + 4 * i: 2 + 4 * (i + 1)]
        w1 = _conv_weight(kw1, filters, filters)
        s1, b1 = _bn_params(kb1, filters)
        w2 = _conv_weight(kw2, filters, filters)
        s2, b2 = _bn_params(kb2, filters)
        block_params.append(((w1, s1, b1), (w2, s2, b2)))
    return {"stem": (stem_w, stem_s, stem_b), "blocks": block_params}


if __name__ == "__main__":
    key = jax.random.PRNGKey(0)
    k_param, k_x = jax.random.split(key)

    B, H, W = 2, 8, 8
    params = init_feature_params(k_param)
    x = jax.random.normal(k_x, (B, IND, H, W), jnp.float32)   # NCHW like torch

    out = jax.block_until_ready(jax.jit(feature_forward)(params, x))
    ref = jax.block_until_ready(feature_forward_ref(params, x))

    assert out.shape == (B, RES_BLOCK_FILTERS, H, W)
    assert jnp.allclose(out, ref, atol=1e-4, rtol=1e-4), (
        float(jnp.max(jnp.abs(out - ref))))

    print("KERNEL_OK")
</pallas_src>

<mosaic_0001>
module attributes {stable_mosaic.version = 11 : i64} {
  func.func @_feature_kernel(%arg0: i32, %arg1: memref<2x8x8x32xf32, #tpu.memory_space<vmem>>, %arg2: memref<5x288x32xf32, #tpu.memory_space<vmem>>, %arg3: memref<5x1x32xf32, #tpu.memory_space<vmem>>, %arg4: memref<128x32xf32, #tpu.memory_space<vmem>>, %arg5: memref<2x10x10x32xf32, #tpu.memory_space<vmem>>, %arg6: memref<128x288xf32, #tpu.memory_space<vmem>>) attributes {dimension_semantics = [#tpu.dimension_semantics<arbitrary>], iteration_bounds = array<i64: 1>, scalar_prefetch = 0 : i64, scratch_operands = 2 : i64, tpu.core_type = #tpu.core_type<tc>, window_params = [{pipeline_mode = #tpu.pipeline_mode<synchronous>, transform_indices = @transform_0, window_bounds = array<i64: 2, 8, 8, 32>}, {pipeline_mode = #tpu.pipeline_mode<synchronous>, transform_indices = @transform_1, window_bounds = array<i64: 5, 288, 32>}, {pipeline_mode = #tpu.pipeline_mode<synchronous>, transform_indices = @transform_2, window_bounds = array<i64: 5, 1, 32>}, {pipeline_mode = #tpu.pipeline_mode<synchronous>, transform_indices = @transform_3, window_bounds = array<i64: 128, 32>}]} {
    %cst = arith.constant 0.000000e+00 : f32
    %0 = vector.broadcast %cst : f32 to vector<2x10x10x32xf32>
    %c0 = arith.constant 0 : index
    %c0_0 = arith.constant 0 : index
    %c0_1 = arith.constant 0 : index
    %c0_2 = arith.constant 0 : index
    %1 = vector.load %arg5[%c0, %c0_0, %c0_1, %c0_2] : memref<2x10x10x32xf32, #tpu.memory_space<vmem>>, vector<2x10x10x32xf32>
    tpu.vector_store %arg5[%c0, %c0_0, %c0_1, %c0_2], %0 {strides = array<i32>} : memref<2x10x10x32xf32, #tpu.memory_space<vmem>>, vector<2x10x10x32xf32>,
    %c0_3 = arith.constant 0 : index
    %c0_4 = arith.constant 0 : index
    %c0_5 = arith.constant 0 : index
    %c0_6 = arith.constant 0 : index
    %2 = vector.load %arg1[%c0_3, %c0_4, %c0_5, %c0_6] : memref<2x8x8x32xf32, #tpu.memory_space<vmem>>, vector<2x8x8x32xf32>
    %c0_7 = arith.constant 0 : index
    %c1 = arith.constant 1 : index
    %c1_8 = arith.constant 1 : index
    %c0_9 = arith.constant 0 : index
    %3 = vector.load %arg5[%c0_7, %c1, %c1_8, %c0_9] : memref<2x10x10x32xf32, #tpu.memory_space<vmem>>, vector<2x8x8x32xf32>
    tpu.vector_store %arg5[%c0_7, %c1, %c1_8, %c0_9], %2 {strides = array<i32>} : memref<2x10x10x32xf32, #tpu.memory_space<vmem>>, vector<2x8x8x32xf32>,
    %c0_10 = arith.constant 0 : index
    %c0_11 = arith.constant 0 : index
    %c0_12 = arith.constant 0 : index
    %c0_13 = arith.constant 0 : index
    %4 = vector.load %arg5[%c0_10, %c0_11, %c0_12, %c0_13] : memref<2x10x10x32xf32, #tpu.memory_space<vmem>>, vector<2x8x8x32xf32>
    %5 = vector.shape_cast %4 : vector<2x8x8x32xf32> to vector<128x32xf32>
    %c0_14 = arith.constant 0 : index
    %c0_15 = arith.constant 0 : index
    %6 = vector.load %arg6[%c0_14, %c0_15] : memref<128x288xf32, #tpu.memory_space<vmem>>, vector<128x32xf32>
    tpu.vector_store %arg6[%c0_14, %c0_15], %5 {strides = array<i32>} : memref<128x288xf32, #tpu.memory_space<vmem>>, vector<128x32xf32>,
    %c0_16 = arith.constant 0 : index
    %c0_17 = arith.constant 0 : index
    %c1_18 = arith.constant 1 : index
    %c0_19 = arith.constant 0 : index
    %7 = vector.load %arg5[%c0_16, %c0_17, %c1_18, %c0_19] : memref<2x10x10x32xf32, #tpu.memory_space<vmem>>, vector<2x8x8x32xf32>
    %8 = vector.shape_cast %7 : vector<2x8x8x32xf32> to vector<128x32xf32>
    %c0_20 = arith.constant 0 : index
    %c32 = arith.constant 32 : index
    %9 = vector.load %arg6[%c0_20, %c32] : memref<128x288xf32, #tpu.memory_space<vmem>>, vector<128x32xf32>
    tpu.vector_store %arg6[%c0_20, %c32], %8 {strides = array<i32>} : memref<128x288xf32, #tpu.memory_space<vmem>>, vector<128x32xf32>,
    %c0_21 = arith.constant 0 : index
    %c0_22 = arith.constant 0 : index
    %c2 = arith.constant 2 : index
    %c0_23 = arith.constant 0 : index
    %10 = vector.load %arg5[%c0_21, %c0_22, %c2, %c0_23] : memref<2x10x10x32xf32, #tpu.memory_space<vmem>>, vector<2x8x8x32xf32>
    %11 = vector.shape_cast %10 : vector<2x8x8x32xf32> to vector<128x32xf32>
    %c0_24 = arith.constant 0 : index
    %c64 = arith.constant 64 : index
    %12 = vector.load %arg6[%c0_24, %c64] : memref<128x288xf32, #tpu.memory_space<vmem>>, vector<128x32xf32>
    tpu.vector_store %arg6[%c0_24, %c64], %11 {strides = array<i32>} : memref<128x288xf32, #tpu.memory_space<vmem>>, vector<128x32xf32>,
    %c0_25 = arith.constant 0 : index
    %c1_26 = arith.constant 1 : index
    %c0_27 = arith.constant 0 : index
    %c0_28 = arith.constant 0 : index
    %13 = vector.load %arg5[%c0_25, %c1_26, %c0_27, %c0_28] : memref<2x10x10x32xf32, #tpu.memory_space<vmem>>, vector<2x8x8x32xf32>
    %14 = vector.shape_cast %13 : vector<2x8x8x32xf32> to vector<128x32xf32>
    %c0_29 = arith.constant 0 : index
    %c96 = arith.constant 96 : index
    %15 = vector.load %arg6[%c0_29, %c96] : memref<128x288xf32, #tpu.memory_space<vmem>>, vector<128x32xf32>
    tpu.vector_store %arg6[%c0_29, %c96], %14 {strides = array<i32>} : memref<128x288xf32, #tpu.memory_space<vmem>>, vector<128x32xf32>,
    %c0_30 = arith.constant 0 : index
    %c1_31 = arith.constant 1 : index
    %c1_32 = arith.constant 1 : index
    %c0_33 = arith.constant 0 : index
    %16 = vector.load %arg5[%c0_30, %c1_31, %c1_32, %c0_33] : memref<2x10x10x32xf32, #tpu.memory_space<vmem>>, vector<2x8x8x32xf32>
    %17 = vector.shape_cast %16 : vector<2x8x8x32xf32> to vector<128x32xf32>
    %c0_34 = arith.constant 0 : index
    %c128 = arith.constant 128 : index
    %18 = vector.load %arg6[%c0_34, %c128] : memref<128x288xf32, #tpu.memory_space<vmem>>, vector<128x32xf32>
    tpu.vector_store %arg6[%c0_34, %c128], %17 {strides = array<i32>} : memref<128x288xf32, #tpu.memory_space<vmem>>, vector<128x32xf32>,
    %c0_35 = arith.constant 0 : index
    %c1_36 = arith.constant 1 : index
    %c2_37 = arith.constant 2 : index
    %c0_38 = arith.constant 0 : index
    %19 = vector.load %arg5[%c0_35, %c1_36, %c2_37, %c0_38] : memref<2x10x10x32xf32, #tpu.memory_space<vmem>>, vector<2x8x8x32xf32>
    %20 = vector.shape_cast %19 : vector<2x8x8x32xf32> to vector<128x32xf32>
    %c0_39 = arith.constant 0 : index
    %c160 = arith.constant 160 : index
    %21 = vector.load %arg6[%c0_39, %c160] : memref<128x288xf32, #tpu.memory_space<vmem>>, vector<128x32xf32>
    tpu.vector_store %arg6[%c0_39, %c160], %20 {strides = array<i32>} : memref<128x288xf32, #tpu.memory_space<vmem>>, vector<128x32xf32>,
    %c0_40 = arith.constant 0 : index
    %c2_41 = arith.constant 2 : index
    %c0_42 = arith.constant 0 : index
    %c0_43 = arith.constant 0 : index
    %22 = vector.load %arg5[%c0_40, %c2_41, %c0_42, %c0_43] : memref<2x10x10x32xf32, #tpu.memory_space<vmem>>, vector<2x8x8x32xf32>
    %23 = vector.shape_cast %22 : vector<2x8x8x32xf32> to vector<128x32xf32>
    %c0_44 = arith.constant 0 : index
    %c192 = arith.constant 192 : index
    %24 = vector.load %arg6[%c0_44, %c192] : memref<128x288xf32, #tpu.memory_space<vmem>>, vector<128x32xf32>
    tpu.vector_store %arg6[%c0_44, %c192], %23 {strides = array<i32>} : memref<128x288xf32, #tpu.memory_space<vmem>>, vector<128x32xf32>,
    %c0_45 = arith.constant 0 : index
    %c2_46 = arith.constant 2 : index
    %c1_47 = arith.constant 1 : index
    %c0_48 = arith.constant 0 : index
    %25 = vector.load %arg5[%c0_45, %c2_46, %c1_47, %c0_48] : memref<2x10x10x32xf32, #tpu.memory_space<vmem>>, vector<2x8x8x32xf32>
    %26 = vector.shape_cast %25 : vector<2x8x8x32xf32> to vector<128x32xf32>
    %c0_49 = arith.constant 0 : index
    %c224 = arith.constant 224 : index
    %27 = vector.load %arg6[%c0_49, %c224] : memref<128x288xf32, #tpu.memory_space<vmem>>, vector<128x32xf32>
    tpu.vector_store %arg6[%c0_49, %c224], %26 {strides = array<i32>} : memref<128x288xf32, #tpu.memory_space<vmem>>, vector<128x32xf32>,
    %c0_50 = arith.constant 0 : index
    %c2_51 = arith.constant 2 : index
    %c2_52 = arith.constant 2 : index
    %c0_53 = arith.constant 0 : index
    %28 = vector.load %arg5[%c0_50, %c2_51, %c2_52, %c0_53] : memref<2x10x10x32xf32, #tpu.memory_space<vmem>>, vector<2x8x8x32xf32>
    %29 = vector.shape_cast %28 : vector<2x8x8x32xf32> to vector<128x32xf32>
    %c0_54 = arith.constant 0 : index
    %c256 = arith.constant 256 : index
    %30 = vector.load %arg6[%c0_54, %c256] : memref<128x288xf32, #tpu.memory_space<vmem>>, vector<128x32xf32>
    tpu.vector_store %arg6[%c0_54, %c256], %29 {strides = array<i32>} : memref<128x288xf32, #tpu.memory_space<vmem>>, vector<128x32xf32>,
    %c0_55 = arith.constant 0 : index
    %c0_56 = arith.constant 0 : index
    %31 = vector.load %arg6[%c0_55, %c0_56] : memref<128x288xf32, #tpu.memory_space<vmem>>, vector<128x288xf32>
    %c0_57 = arith.constant 0 : index
    %c0_58 = arith.constant 0 : index
    %c0_59 = arith.constant 0 : index
    %32 = vector.load %arg2[%c0_57, %c0_58, %c0_59] : memref<5x288x32xf32, #tpu.memory_space<vmem>>, vector<1x288x32xf32>
    %33 = vector.shape_cast %32 : vector<1x288x32xf32> to vector<288x32xf32>
    %cst_60 = arith.constant dense<0.000000e+00> : vector<128x32xf32>
    %34 = tpu.matmul %31, %33, %cst_60 {dimension_numbers = #tpu.dot_dimension_numbers<[1], [0], [0], [1], [0, 0, 1, 1], [], []>} : vector<128x288xf32>, vector<288x32xf32>, vector<128x32xf32> -> vector<128x32xf32>
    %c0_61 = arith.constant 0 : index
    %c0_62 = arith.constant 0 : index
    %c0_63 = arith.constant 0 : index
    %35 = vector.load %arg3[%c0_61, %c0_62, %c0_63] : memref<5x1x32xf32, #tpu.memory_space<vmem>>, vector<1x1x32xf32>
    %36 = vector.shape_cast %35 : vector<1x1x32xf32> to vector<1x32xf32>
    %37 = vector.broadcast %36 : vector<1x32xf32> to vector<128x32xf32>
    %38 = arith.addf %34, %37 : vector<128x32xf32>
    %cst_64 = arith.constant 0.000000e+00 : f32
    %39 = vector.broadcast %cst_64 : f32 to vector<128x32xf32>
    %40 = arith.maximumf %38, %39 : vector<128x32xf32>
    %41 = vector.shape_cast %40 : vector<128x32xf32> to vector<2x8x8x32xf32>
    %c0_65 = arith.constant 0 : index
    %c1_66 = arith.constant 1 : index
    %c1_67 = arith.constant 1 : index
    %c0_68 = arith.constant 0 : index
    %42 = vector.load %arg5[%c0_65, %c1_66, %c1_67, %c0_68] : memref<2x10x10x32xf32, #tpu.memory_space<vmem>>, vector<2x8x8x32xf32>
    tpu.vector_store %arg5[%c0_65, %c1_66, %c1_67, %c0_68], %41 {strides = array<i32>} : memref<2x10x10x32xf32, #tpu.memory_space<vmem>>, vector<2x8x8x32xf32>,
    %c0_69 = arith.constant 0 : index
    %c1_70 = arith.constant 1 : index
    %c1_71 = arith.constant 1 : index
    %c0_72 = arith.constant 0 : index
    %43 = vector.load %arg5[%c0_69, %c1_70, %c1_71, %c0_72] : memref<2x10x10x32xf32, #tpu.memory_space<vmem>>, vector<2x8x8x32xf32>
    %44 = vector.shape_cast %43 : vector<2x8x8x32xf32> to vector<128x32xf32>
    %c0_73 = arith.constant 0 : index
    %c0_74 = arith.constant 0 : index
    %c0_75 = arith.constant 0 : index
    %c0_76 = arith.constant 0 : index
    %45 = vector.load %arg5[%c0_73, %c0_74, %c0_75, %c0_76] : memref<2x10x10x32xf32, #tpu.memory_space<vmem>>, vector<2x8x8x32xf32>
    %46 = vector.shape_cast %45 : vector<2x8x8x32xf32> to vector<128x32xf32>
    %c0_77 = arith.constant 0 : index
    %c0_78 = arith.constant 0 : index
    %47 = vector.load %arg6[%c0_77, %c0_78] : memref<128x288xf32, #tpu.memory_space<vmem>>, vector<128x32xf32>
    tpu.vector_store %arg6[%c0_77, %c0_78], %46 {strides = array<i32>} : memref<128x288xf32, #tpu.memory_space<vmem>>, vector<128x32xf32>,
    %c0_79 = arith.constant 0 : index
    %c0_80 = arith.constant 0 : index
    %c1_81 = arith.constant 1 : index
    %c0_82 = arith.constant 0 : index
    %48 = vector.load %arg5[%c0_79, %c0_80, %c1_81, %c0_82] : memref<2x10x10x32xf32, #tpu.memory_space<vmem>>, vector<2x8x8x32xf32>
    %49 = vector.shape_cast %48 : vector<2x8x8x32xf32> to vector<128x32xf32>
    %c0_83 = arith.constant 0 : index
    %c32_84 = arith.constant 32 : index
    %50 = vector.load %arg6[%c0_83, %c32_84] : memref<128x288xf32, #tpu.memory_space<vmem>>, vector<128x32xf32>
    tpu.vector_store %arg6[%c0_83, %c32_84], %49 {strides = array<i32>} : memref<128x288xf32, #tpu.memory_space<vmem>>, vector<128x32xf32>,
    %c0_85 = arith.constant 0 : index
    %c0_86 = arith.constant 0 : index
    %c2_87 = arith.constant 2 : index
    %c0_88 = arith.constant 0 : index
    %51 = vector.load %arg5[%c0_85, %c0_86, %c2_87, %c0_88] : memref<2x10x10x32xf32, #tpu.memory_space<vmem>>, vector<2x8x8x32xf32>
    %52 = vector.shape_cast %51 : vector<2x8x8x32xf32> to vector<128x32xf32>
    %c0_89 = arith.constant 0 : index
    %c64_90 = arith.constant 64 : index
    %53 = vector.load %arg6[%c0_89, %c64_90] : memref<128x288xf32, #tpu.memory_space<vmem>>, vector<128x32xf32>
    tpu.vector_store %arg6[%c0_89, %c64_90], %52 {strides = array<i32>} : memref<128x288xf32, #tpu.memory_space<vmem>>, vector<128x32xf32>,
    %c0_91 = arith.constant 0 : index
    %c1_92 = arith.constant 1 : index
    %c0_93 = arith.constant 0 : index
    %c0_94 = arith.constant 0 : index
    %54 = vector.load %arg5[%c0_91, %c1_92, %c0_93, %c0_94] : memref<2x10x10x32xf32, #tpu.memory_space<vmem>>, vector<2x8x8x32xf32>
    %55 = vector.shape_cast %54 : vector<2x8x8x32xf32> to vector<128x32xf32>
    %c0_95 = arith.constant 0 : index
    %c96_96 = arith.constant 96 : index
    %56 = vector.load %arg6[%c0_95, %c96_96] : memref<128x288xf32, #tpu.memory_space<vmem>>, vector<128x32xf32>
    tpu.vector_store %arg6[%c0_95, %c96_96], %55 {strides = array<i32>} : memref<128x288xf32, #tpu.memory_space<vmem>>, vector<128x32xf32>,
    %c0_97 = arith.constant 0 : index
    %c1_98 = arith.constant 1 : index
    %c1_99 = arith.constant 1 : index
    %c0_100 = arith.constant 0 : index
    %57 = vector.load %arg5[%c0_97, %c1_98, %c1_99, %c0_100] : memref<2x10x10x32xf32, #tpu.memory_space<vmem>>, vector<2x8x8x32xf32>
    %58 = vector.shape_cast %57 : vector<2x8x8x32xf32> to vector<128x32xf32>
    %c0_101 = arith.constant 0 : index
    %c128_102 = arith.constant 128 : index
    %59 = vector.load %arg6[%c0_101, %c128_102] : memref<128x288xf32, #tpu.memory_space<vmem>>, vector<128x32xf32>
    tpu.vector_store %arg6[%c0_101, %c128_102], %58 {strides = array<i32>} : memref<128x288xf32, #tpu.memory_space<vmem>>, vector<128x32xf32>,
    %c0_103 = arith.constant 0 : index
    %c1_104 = arith.constant 1 : index
    %c2_105 = arith.constant 2 : index
    %c0_106 = arith.constant 0 : index
    %60 = vector.load %arg5[%c0_103, %c1_104, %c2_105, %c0_106] : memref<2x10x10x32xf32, #tpu.memory_space<vmem>>, vector<2x8x8x32xf32>
    %61 = vector.shape_cast %60 : vector<2x8x8x32xf32> to vector<128x32xf32>
    %c0_107 = arith.constant 0 : index
    %c160_108 = arith.constant 160 : index
    %62 = vector.load %arg6[%c0_107, %c160_108] : memref<128x288xf32, #tpu.memory_space<vmem>>, vector<128x32xf32>
    tpu.vector_store %arg6[%c0_107, %c160_108], %61 {strides = array<i32>} : memref<128x288xf32, #tpu.memory_space<vmem>>, vector<128x32xf32>,
    %c0_109 = arith.constant 0 : index
    %c2_110 = arith.constant 2 : index
    %c0_111 = arith.constant 0 : index
    %c0_112 = arith.constant 0 : index
    %63 = vector.load %arg5[%c0_109, %c2_110, %c0_111, %c0_112] : memref<2x10x10x32xf32, #tpu.memory_space<vmem>>, vector<2x8x8x32xf32>
    %64 = vector.shape_cast %63 : vector<2x8x8x32xf32> to vector<128x32xf32>
    %c0_113 = arith.constant 0 : index
    %c192_114 = arith.constant 192 : index
    %65 = vector.load %arg6[%c0_113, %c192_114] : memref<128x288xf32, #tpu.memory_space<vmem>>, vector<128x32xf32>
    tpu.vector_store %arg6[%c0_113, %c192_114], %64 {strides = array<i32>} : memref<128x288xf32, #tpu.memory_space<vmem>>, vector<128x32xf32>,
    %c0_115 = arith.constant 0 : index
    %c2_116 = arith.constant 2 : index
    %c1_117 = arith.constant 1 : index
    %c0_118 = arith.constant 0 : index
    %66 = vector.load %arg5[%c0_115, %c2_116, %c1_117, %c0_118] : memref<2x10x10x32xf32, #tpu.memory_space<vmem>>, vector<2x8x8x32xf32>
    %67 = vector.shape_cast %66 : vector<2x8x8x32xf32> to vector<128x32xf32>
    %c0_119 = arith.constant 0 : index
    %c224_120 = arith.constant 224 : index
    %68 = vector.load %arg6[%c0_119, %c224_120] : memref<128x288xf32, #tpu.memory_space<vmem>>, vector<128x32xf32>
    tpu.vector_store %arg6[%c0_119, %c224_120], %67 {strides = array<i32>} : memref<128x288xf32, #tpu.memory_space<vmem>>, vector<128x32xf32>,
    %c0_121 = arith.constant 0 : index
    %c2_122 = arith.constant 2 : index
    %c2_123 = arith.constant 2 : index
    %c0_124 = arith.constant 0 : index
    %69 = vector.load %arg5[%c0_121, %c2_122, %c2_123, %c0_124] : memref<2x10x10x32xf32, #tpu.memory_space<vmem>>, vector<2x8x8x32xf32>
    %70 = vector.shape_cast %69 : vector<2x8x8x32xf32> to vector<128x32xf32>
    %c0_125 = arith.constant 0 : index
    %c256_126 = arith.constant 256 : index
    %71 = vector.load %arg6[%c0_125, %c256_126] : memref<128x288xf32, #tpu.memory_space<vmem>>, vector<128x32xf32>
    tpu.vector_store %arg6[%c0_125, %c256_126], %70 {strides = array<i32>} : memref<128x288xf32, #tpu.memory_space<vmem>>, vector<128x32xf32>,
    %c0_127 = arith.constant 0 : index
    %c0_128 = arith.constant 0 : index
    %72 = vector.load %arg6[%c0_127, %c0_128] : memref<128x288xf32, #tpu.memory_space<vmem>>, vector<128x288xf32>
    %c1_129 = arith.constant 1 : index
    %c0_130 = arith.constant 0 : index
    %c0_131 = arith.constant 0 : index
    %73 = vector.load %arg2[%c1_129, %c0_130, %c0_131] : memref<5x288x32xf32, #tpu.memory_space<vmem>>, vector<1x288x32xf32>
    %74 = vector.shape_cast %73 : vector<1x288x32xf32> to vector<288x32xf32>
    %cst_132 = arith.constant dense<0.000000e+00> : vector<128x32xf32>
    %75 = tpu.matmul %72, %74, %cst_132 {dimension_numbers = #tpu.dot_dimension_numbers<[1], [0], [0], [1], [0, 0, 1, 1], [], []>} : vector<128x288xf32>, vector<288x32xf32>, vector<128x32xf32> -> vector<128x32xf32>
    %c1_133 = arith.constant 1 : index
    %c0_134 = arith.constant 0 : index
    %c0_135 = arith.constant 0 : index
    %76 = vector.load %arg3[%c1_133, %c0_134, %c0_135] : memref<5x1x32xf32, #tpu.memory_space<vmem>>, vector<1x1x32xf32>
    %77 = vector.shape_cast %76 : vector<1x1x32xf32> to vector<1x32xf32>
    %78 = vector.broadcast %77 : vector<1x32xf32> to vector<128x32xf32>
    %79 = arith.addf %75, %78 : vector<128x32xf32>
    %cst_136 = arith.constant 0.000000e+00 : f32
    %80 = vector.broadcast %cst_136 : f32 to vector<128x32xf32>
    %81 = arith.maximumf %79, %80 : vector<128x32xf32>
    %82 = vector.shape_cast %81 : vector<128x32xf32> to vector<2x8x8x32xf32>
    %c0_137 = arith.constant 0 : index
    %c1_138 = arith.constant 1 : index
    %c1_139 = arith.constant 1 : index
    %c0_140 = arith.constant 0 : index
    %83 = vector.load %arg5[%c0_137, %c1_138, %c1_139, %c0_140] : memref<2x10x10x32xf32, #tpu.memory_space<vmem>>, vector<2x8x8x32xf32>
    tpu.vector_store %arg5[%c0_137, %c1_138, %c1_139, %c0_140], %82 {strides = array<i32>} : memref<2x10x10x32xf32, #tpu.memory_space<vmem>>, vector<2x8x8x32xf32>,
    %c0_141 = arith.constant 0 : index
    %c0_142 = arith.constant 0 : index
    %c0_143 = arith.constant 0 : index
    %c0_144 = arith.constant 0 : index
    %84 = vector.load %arg5[%c0_141, %c0_142, %c0_143, %c0_144] : memref<2x10x10x32xf32, #tpu.memory_space<vmem>>, vector<2x8x8x32xf32>
    %85 = vector.shape_cast %84 : vector<2x8x8x32xf32> to vector<128x32xf32>
    %c0_145 = arith.constant 0 : index
    %c0_146 = arith.constant 0 : index
    %86 = vector.load %arg6[%c0_145, %c0_146] : memref<128x288xf32, #tpu.memory_space<vmem>>, vector<128x32xf32>
    tpu.vector_store %arg6[%c0_145, %c0_146], %85 {strides = array<i32>} : memref<128x288xf32, #tpu.memory_space<vmem>>, vector<128x32xf32>,
    %c0_147 = arith.constant 0 : index
    %c0_148 = arith.constant 0 : index
    %c1_149 = arith.constant 1 : index
    %c0_150 = arith.constant 0 : index
    %87 = vector.load %arg5[%c0_147, %c0_148, %c1_149, %c0_150] : memref<2x10x10x32xf32, #tpu.memory_space<vmem>>, vector<2x8x8x32xf32>
    %88 = vector.shape_cast %87 : vector<2x8x8x32xf32> to vector<128x32xf32>
    %c0_151 = arith.constant 0 : index
    %c32_152 = arith.constant 32 : index
    %89 = vector.load %arg6[%c0_151, %c32_152] : memref<128x288xf32, #tpu.memory_space<vmem>>, vector<128x32xf32>
    tpu.vector_store %arg6[%c0_151, %c32_152], %88 {strides = array<i32>} : memref<128x288xf32, #tpu.memory_space<vmem>>, vector<128x32xf32>,
    %c0_153 = arith.constant 0 : index
    %c0_154 = arith.constant 0 : index
    %c2_155 = arith.constant 2 : index
    %c0_156 = arith.constant 0 : index
    %90 = vector.load %arg5[%c0_153, %c0_154, %c2_155, %c0_156] : memref<2x10x10x32xf32, #tpu.memory_space<vmem>>, vector<2x8x8x32xf32>
    %91 = vector.shape_cast %90 : vector<2x8x8x32xf32> to vector<128x32xf32>
    %c0_157 = arith.constant 0 : index
    %c64_158 = arith.constant 64 : index
    %92 = vector.load %arg6[%c0_157, %c64_158] : memref<128x288xf32, #tpu.memory_space<vmem>>, vector<128x32xf32>
    tpu.vector_store %arg6[%c0_157, %c64_158], %91 {strides = array<i32>} : memref<128x288xf32, #tpu.memory_space<vmem>>, vector<128x32xf32>,
    %c0_159 = arith.constant 0 : index
    %c1_160 = arith.constant 1 : index
    %c0_161 = arith.constant 0 : index
    %c0_162 = arith.constant 0 : index
    %93 = vector.load %arg5[%c0_159, %c1_160, %c0_161, %c0_162] : memref<2x10x10x32xf32, #tpu.memory_space<vmem>>, vector<2x8x8x32xf32>
    %94 = vector.shape_cast %93 : vector<2x8x8x32xf32> to vector<128x32xf32>
    %c0_163 = arith.constant 0 : index
    %c96_164 = arith.constant 96 : index
    %95 = vector.load %arg6[%c0_163, %c96_164] : memref<128x288xf32, #tpu.memory_space<vmem>>, vector<128x32xf32>
    tpu.vector_store %arg6[%c0_163, %c96_164], %94 {strides = array<i32>} : memref<128x288xf32, #tpu.memory_space<vmem>>, vector<128x32xf32>,
    %c0_165 = arith.constant 0 : index
    %c1_166 = arith.constant 1 : index
    %c1_167 = arith.constant 1 : index
    %c0_168 = arith.constant 0 : index
    %96 = vector.load %arg5[%c0_165, %c1_166, %c1_167, %c0_168] : memref<2x10x10x32xf32, #tpu.memory_space<vmem>>, vector<2x8x8x32xf32>
    %97 = vector.shape_cast %96 : vector<2x8x8x32xf32> to vector<128x32xf32>
    %c0_169 = arith.constant 0 : index
    %c128_170 = arith.constant 128 : index
    %98 = vector.load %arg6[%c0_169, %c128_170] : memref<128x288xf32, #tpu.memory_space<vmem>>, vector<128x32xf32>
    tpu.vector_store %arg6[%c0_169, %c128_170], %97 {strides = array<i32>} : memref<128x288xf32, #tpu.memory_space<vmem>>, vector<128x32xf32>,
    %c0_171 = arith.constant 0 : index
    %c1_172 = arith.constant 1 : index
    %c2_173 = arith.constant 2 : index
    %c0_174 = arith.constant 0 : index
    %99 = vector.load %arg5[%c0_171, %c1_172, %c2_173, %c0_174] : memref<2x10x10x32xf32, #tpu.memory_space<vmem>>, vector<2x8x8x32xf32>
    %100 = vector.shape_cast %99 : vector<2x8x8x32xf32> to vector<128x32xf32>
    %c0_175 = arith.constant 0 : index
    %c160_176 = arith.constant 160 : index
    %101 = vector.load %arg6[%c0_175, %c160_176] : memref<128x288xf32, #tpu.memory_space<vmem>>, vector<128x32xf32>
    tpu.vector_store %arg6[%c0_175, %c160_176], %100 {strides = array<i32>} : memref<128x288xf32, #tpu.memory_space<vmem>>, vector<128x32xf32>,
    %c0_177 = arith.constant 0 : index
    %c2_178 = arith.constant 2 : index
    %c0_179 = arith.constant 0 : index
    %c0_180 = arith.constant 0 : index
    %102 = vector.load %arg5[%c0_177, %c2_178, %c0_179, %c0_180] : memref<2x10x10x32xf32, #tpu.memory_space<vmem>>, vector<2x8x8x32xf32>
    %103 = vector.shape_cast %102 : vector<2x8x8x32xf32> to vector<128x32xf32>
    %c0_181 = arith.constant 0 : index
    %c192_182 = arith.constant 192 : index
    %104 = vector.load %arg6[%c0_181, %c192_182] : memref<128x288xf32, #tpu.memory_space<vmem>>, vector<128x32xf32>
    tpu.vector_store %arg6[%c0_181, %c192_182], %103 {strides = array<i32>} : memref<128x288xf32, #tpu.memory_space<vmem>>, vector<128x32xf32>,
    %c0_183 = arith.constant 0 : index
    %c2_184 = arith.constant 2 : index
    %c1_185 = arith.constant 1 : index
    %c0_186 = arith.constant 0 : index
    %105 = vector.load %arg5[%c0_183, %c2_184, %c1_185, %c0_186] : memref<2x10x10x32xf32, #tpu.memory_space<vmem>>, vector<2x8x8x32xf32>
    %106 = vector.shape_cast %105 : vector<2x8x8x32xf32> to vector<128x32xf32>
    %c0_187 = arith.constant 0 : index
    %c224_188 = arith.constant 224 : index
    %107 = vector.load %arg6[%c0_187, %c224_188] : memref<128x288xf32, #tpu.memory_space<vmem>>, vector<128x32xf32>
    tpu.vector_store %arg6[%c0_187, %c224_188], %106 {strides = array<i32>} : memref<128x288xf32, #tpu.memory_space<vmem>>, vector<128x32xf32>,
    %c0_189 = arith.constant 0 : index
    %c2_190 = arith.constant 2 : index
    %c2_191 = arith.constant 2 : index
    %c0_192 = arith.constant 0 : index
    %108 = vector.load %arg5[%c0_189, %c2_190, %c2_191, %c0_192] : memref<2x10x10x32xf32, #tpu.memory_space<vmem>>, vector<2x8x8x32xf32>
    %109 = vector.shape_cast %108 : vector<2x8x8x32xf32> to vector<128x32xf32>
    %c0_193 = arith.constant 0 : index
    %c256_194 = arith.constant 256 : index
    %110 = vector.load %arg6[%c0_193, %c256_194] : memref<128x288xf32, #tpu.memory_space<vmem>>, vector<128x32xf32>
    tpu.vector_store %arg6[%c0_193, %c256_194], %109 {strides = array<i32>} : memref<128x288xf32, #tpu.memory_space<vmem>>, vector<128x32xf32>,
    %c0_195 = arith.constant 0 : index
    %c0_196 = arith.constant 0 : index
    %111 = vector.load %arg6[%c0_195, %c0_196] : memref<128x288xf32, #tpu.memory_space<vmem>>, vector<128x288xf32>
    %c2_197 = arith.constant 2 : index
    %c0_198 = arith.constant 0 : index
    %c0_199 = arith.constant 0 : index
    %112 = vector.load %arg2[%c2_197, %c0_198, %c0_199] : memref<5x288x32xf32, #tpu.memory_space<vmem>>, vector<1x288x32xf32>
    %113 = vector.shape_cast %112 : vector<1x288x32xf32> to vector<288x32xf32>
    %cst_200 = arith.constant dense<0.000000e+00> : vector<128x32xf32>
    %114 = tpu.matmul %111, %113, %cst_200 {dimension_numbers = #tpu.dot_dimension_numbers<[1], [0], [0], [1], [0, 0, 1, 1], [], []>} : vector<128x288xf32>, vector<288x32xf32>, vector<128x32xf32> -> vector<128x32xf32>
    %c2_201 = arith.constant 2 : index
    %c0_202 = arith.constant 0 : index
    %c0_203 = arith.constant 0 : index
    %115 = vector.load %arg3[%c2_201, %c0_202, %c0_203] : memref<5x1x32xf32, #tpu.memory_space<vmem>>, vector<1x1x32xf32>
    %116 = vector.shape_cast %115 : vector<1x1x32xf32> to vector<1x32xf32>
    %117 = vector.broadcast %116 : vector<1x32xf32> to vector<128x32xf32>
    %118 = arith.addf %114, %117 : vector<128x32xf32>
    %119 = arith.addf %118, %44 : vector<128x32xf32>
    %cst_204 = arith.constant 0.000000e+00 : f32
    %120 = vector.broadcast %cst_204 : f32 to vector<128x32xf32>
    %121 = arith.maximumf %119, %120 : vector<128x32xf32>
    %122 = vector.shape_cast %121 : vector<128x32xf32> to vector<2x8x8x32xf32>
    %c0_205 = arith.constant 0 : index
    %c1_206 = arith.constant 1 : index
    %c1_207 = arith.constant 1 : index
    %c0_208 = arith.constant 0 : index
    %123 = vector.load %arg5[%c0_205, %c1_206, %c1_207, %c0_208] : memref<2x10x10x32xf32, #tpu.memory_space<vmem>>, vector<2x8x8x32xf32>
    tpu.vector_store %arg5[%c0_205, %c1_206, %c1_207, %c0_208], %122 {strides = array<i32>} : memref<2x10x10x32xf32, #tpu.memory_space<vmem>>, vector<2x8x8x32xf32>,
    %c0_209 = arith.constant 0 : index
    %c1_210 = arith.constant 1 : index
    %c1_211 = arith.constant 1 : index
    %c0_212 = arith.constant 0 : index
    %124 = vector.load %arg5[%c0_209, %c1_210, %c1_211, %c0_212] : memref<2x10x10x32xf32, #tpu.memory_space<vmem>>, vector<2x8x8x32xf32>
    %125 = vector.shape_cast %124 : vector<2x8x8x32xf32> to vector<128x32xf32>
    %c0_213 = arith.constant 0 : index
    %c0_214 = arith.constant 0 : index
    %c0_215 = arith.constant 0 : index
    %c0_216 = arith.constant 0 : index
    %126 = vector.load %arg5[%c0_213, %c0_214, %c0_215, %c0_216] : memref<2x10x10x32xf32, #tpu.memory_space<vmem>>, vector<2x8x8x32xf32>
    %127 = vector.shape_cast %126 : vector<2x8x8x32xf32> to vector<128x32xf32>
    %c0_217 = arith.constant 0 : index
    %c0_218 = arith.constant 0 : index
    %128 = vector.load %arg6[%c0_217, %c0_218] : memref<128x288xf32, #tpu.memory_space<vmem>>, vector<128x32xf32>
    tpu.vector_store %arg6[%c0_217, %c0_218], %127 {strides = array<i32>} : memref<128x288xf32, #tpu.memory_space<vmem>>, vector<128x32xf32>,
    %c0_219 = arith.constant 0 : index
    %c0_220 = arith.constant 0 : index
    %c1_221 = arith.constant 1 : index
    %c0_222 = arith.constant 0 : index
    %129 = vector.load %arg5[%c0_219, %c0_220, %c1_221, %c0_222] : memref<2x10x10x32xf32, #tpu.memory_space<vmem>>, vector<2x8x8x32xf32>
    %130 = vector.shape_cast %129 : vector<2x8x8x32xf32> to vector<128x32xf32>
    %c0_223 = arith.constant 0 : index
    %c32_224 = arith.constant 32 : index
    %131 = vector.load %arg6[%c0_223, %c32_224] : memref<128x288xf32, #tpu.memory_space<vmem>>, vector<128x32xf32>
    tpu.vector_store %arg6[%c0_223, %c32_224], %130 {strides = array<i32>} : memref<128x288xf32, #tpu.memory_space<vmem>>, vector<128x32xf32>,
    %c0_225 = arith.constant 0 : index
    %c0_226 = arith.constant 0 : index
    %c2_227 = arith.constant 2 : index
    %c0_228 = arith.constant 0 : index
    %132 = vector.load %arg5[%c0_225, %c0_226, %c2_227, %c0_228] : memref<2x10x10x32xf32, #tpu.memory_space<vmem>>, vector<2x8x8x32xf32>
    %133 = vector.shape_cast %132 : vector<2x8x8x32xf32> to vector<128x32xf32>
    %c0_229 = arith.constant 0 : index
    %c64_230 = arith.constant 64 : index
    %134 = vector.load %arg6[%c0_229, %c64_230] : memref<128x288xf32, #tpu.memory_space<vmem>>, vector<128x32xf32>
    tpu.vector_store %arg6[%c0_229, %c64_230], %133 {strides = array<i32>} : memref<128x288xf32, #tpu.memory_space<vmem>>, vector<128x32xf32>,
    %c0_231 = arith.constant 0 : index
    %c1_232 = arith.constant 1 : index
    %c0_233 = arith.constant 0 : index
    %c0_234 = arith.constant 0 : index
    %135 = vector.load %arg5[%c0_231, %c1_232, %c0_233, %c0_234] : memref<2x10x10x32xf32, #tpu.memory_space<vmem>>, vector<2x8x8x32xf32>
    %136 = vector.shape_cast %135 : vector<2x8x8x32xf32> to vector<128x32xf32>
    %c0_235 = arith.constant 0 : index
    %c96_236 = arith.constant 96 : index
    %137 = vector.load %arg6[%c0_235, %c96_236] : memref<128x288xf32, #tpu.memory_space<vmem>>, vector<128x32xf32>
    tpu.vector_store %arg6[%c0_235, %c96_236], %136 {strides = array<i32>} : memref<128x288xf32, #tpu.memory_space<vmem>>, vector<128x32xf32>,
    %c0_237 = arith.constant 0 : index
    %c1_238 = arith.constant 1 : index
    %c1_239 = arith.constant 1 : index
    %c0_240 = arith.constant 0 : index
    %138 = vector.load %arg5[%c0_237, %c1_238, %c1_239, %c0_240] : memref<2x10x10x32xf32, #tpu.memory_space<vmem>>, vector<2x8x8x32xf32>
    %139 = vector.shape_cast %138 : vector<2x8x8x32xf32> to vector<128x32xf32>
    %c0_241 = arith.constant 0 : index
    %c128_242 = arith.constant 128 : index
    %140 = vector.load %arg6[%c0_241, %c128_242] : memref<128x288xf32, #tpu.memory_space<vmem>>, vector<128x32xf32>
    tpu.vector_store %arg6[%c0_241, %c128_242], %139 {strides = array<i32>} : memref<128x288xf32, #tpu.memory_space<vmem>>, vector<128x32xf32>,
    %c0_243 = arith.constant 0 : index
    %c1_244 = arith.constant 1 : index
    %c2_245 = arith.constant 2 : index
    %c0_246 = arith.constant 0 : index
    %141 = vector.load %arg5[%c0_243, %c1_244, %c2_245, %c0_246] : memref<2x10x10x32xf32, #tpu.memory_space<vmem>>, vector<2x8x8x32xf32>
    %142 = vector.shape_cast %141 : vector<2x8x8x32xf32> to vector<128x32xf32>
    %c0_247 = arith.constant 0 : index
    %c160_248 = arith.constant 160 : index
    %143 = vector.load %arg6[%c0_247, %c160_248] : memref<128x288xf32, #tpu.memory_space<vmem>>, vector<128x32xf32>
    tpu.vector_store %arg6[%c0_247, %c160_248], %142 {strides = array<i32>} : memref<128x288xf32, #tpu.memory_space<vmem>>, vector<128x32xf32>,
    %c0_249 = arith.constant 0 : index
    %c2_250 = arith.constant 2 : index
    %c0_251 = arith.constant 0 : index
    %c0_252 = arith.constant 0 : index
    %144 = vector.load %arg5[%c0_249, %c2_250, %c0_251, %c0_252] : memref<2x10x10x32xf32, #tpu.memory_space<vmem>>, vector<2x8x8x32xf32>
    %145 = vector.shape_cast %144 : vector<2x8x8x32xf32> to vector<128x32xf32>
    %c0_253 = arith.constant 0 : index
    %c192_254 = arith.constant 192 : index
    %146 = vector.load %arg6[%c0_253, %c192_254] : memref<128x288xf32, #tpu.memory_space<vmem>>, vector<128x32xf32>
    tpu.vector_store %arg6[%c0_253, %c192_254], %145 {strides = array<i32>} : memref<128x288xf32, #tpu.memory_space<vmem>>, vector<128x32xf32>,
    %c0_255 = arith.constant 0 : index
    %c2_256 = arith.constant 2 : index
    %c1_257 = arith.constant 1 : index
    %c0_258 = arith.constant 0 : index
    %147 = vector.load %arg5[%c0_255, %c2_256, %c1_257, %c0_258] : memref<2x10x10x32xf32, #tpu.memory_space<vmem>>, vector<2x8x8x32xf32>
    %148 = vector.shape_cast %147 : vector<2x8x8x32xf32> to vector<128x32xf32>
    %c0_259 = arith.constant 0 : index
    %c224_260 = arith.constant 224 : index
    %149 = vector.load %arg6[%c0_259, %c224_260] : memref<128x288xf32, #tpu.memory_space<vmem>>, vector<128x32xf32>
    tpu.vector_store %arg6[%c0_259, %c224_260], %148 {strides = array<i32>} : memref<128x288xf32, #tpu.memory_space<vmem>>, vector<128x32xf32>,
    %c0_261 = arith.constant 0 : index
    %c2_262 = arith.constant 2 : index
    %c2_263 = arith.constant 2 : index
    %c0_264 = arith.constant 0 : index
    %150 = vector.load %arg5[%c0_261, %c2_262, %c2_263, %c0_264] : memref<2x10x10x32xf32, #tpu.memory_space<vmem>>, vector<2x8x8x32xf32>
    %151 = vector.shape_cast %150 : vector<2x8x8x32xf32> to vector<128x32xf32>
    %c0_265 = arith.constant 0 : index
    %c256_266 = arith.constant 256 : index
    %152 = vector.load %arg6[%c0_265, %c256_266] : memref<128x288xf32, #tpu.memory_space<vmem>>, vector<128x32xf32>
    tpu.vector_store %arg6[%c0_265, %c256_266], %151 {strides = array<i32>} : memref<128x288xf32, #tpu.memory_space<vmem>>, vector<128x32xf32>,
    %c0_267 = arith.constant 0 : index
    %c0_268 = arith.constant 0 : index
    %153 = vector.load %arg6[%c0_267, %c0_268] : memref<128x288xf32, #tpu.memory_space<vmem>>, vector<128x288xf32>
    %c3 = arith.constant 3 : index
    %c0_269 = arith.constant 0 : index
    %c0_270 = arith.constant 0 : index
    %154 = vector.load %arg2[%c3, %c0_269, %c0_270] : memref<5x288x32xf32, #tpu.memory_space<vmem>>, vector<1x288x32xf32>
    %155 = vector.shape_cast %154 : vector<1x288x32xf32> to vector<288x32xf32>
    %cst_271 = arith.constant dense<0.000000e+00> : vector<128x32xf32>
    %156 = tpu.matmul %153, %155, %cst_271 {dimension_numbers = #tpu.dot_dimension_numbers<[1], [0], [0], [1], [0, 0, 1, 1], [], []>} : vector<128x288xf32>, vector<288x32xf32>, vector<128x32xf32> -> vector<128x32xf32>
    %c3_272 = arith.constant 3 : index
    %c0_273 = arith.constant 0 : index
    %c0_274 = arith.constant 0 : index
    %157 = vector.load %arg3[%c3_272, %c0_273, %c0_274] : memref<5x1x32xf32, #tpu.memory_space<vmem>>, vector<1x1x32xf32>
    %158 = vector.shape_cast %157 : vector<1x1x32xf32> to vector<1x32xf32>
    %159 = vector.broadcast %158 : vector<1x32xf32> to vector<128x32xf32>
    %160 = arith.addf %156, %159 : vector<128x32xf32>
    %cst_275 = arith.constant 0.000000e+00 : f32
    %161 = vector.broadcast %cst_275 : f32 to vector<128x32xf32>
    %162 = arith.maximumf %160, %161 : vector<128x32xf32>
    %163 = vector.shape_cast %162 : vector<128x32xf32> to vector<2x8x8x32xf32>
    %c0_276 = arith.constant 0 : index
    %c1_277 = arith.constant 1 : index
    %c1_278 = arith.constant 1 : index
    %c0_279 = arith.constant 0 : index
    %164 = vector.load %arg5[%c0_276, %c1_277, %c1_278, %c0_279] : memref<2x10x10x32xf32, #tpu.memory_space<vmem>>, vector<2x8x8x32xf32>
    tpu.vector_store %arg5[%c0_276, %c1_277, %c1_278, %c0_279], %163 {strides = array<i32>} : memref<2x10x10x32xf32, #tpu.memory_space<vmem>>, vector<2x8x8x32xf32>,
    %c0_280 = arith.constant 0 : index
    %c0_281 = arith.constant 0 : index
    %c0_282 = arith.constant 0 : index
    %c0_283 = arith.constant 0 : index
    %165 = vector.load %arg5[%c0_280, %c0_281, %c0_282, %c0_283] : memref<2x10x10x32xf32, #tpu.memory_space<vmem>>, vector<2x8x8x32xf32>
    %166 = vector.shape_cast %165 : vector<2x8x8x32xf32> to vector<128x32xf32>
    %c0_284 = arith.constant 0 : index
    %c0_285 = arith.constant 0 : index
    %167 = vector.load %arg6[%c0_284, %c0_285] : memref<128x288xf32, #tpu.memory_space<vmem>>, vector<128x32xf32>
    tpu.vector_store %arg6[%c0_284, %c0_285], %166 {strides = array<i32>} : memref<128x288xf32, #tpu.memory_space<vmem>>, vector<128x32xf32>,
    %c0_286 = arith.constant 0 : index
    %c0_287 = arith.constant 0 : index
    %c1_288 = arith.constant 1 : index
    %c0_289 = arith.constant 0 : index
    %168 = vector.load %arg5[%c0_286, %c0_287, %c1_288, %c0_289] : memref<2x10x10x32xf32, #tpu.memory_space<vmem>>, vector<2x8x8x32xf32>
    %169 = vector.shape_cast %168 : vector<2x8x8x32xf32> to vector<128x32xf32>
    %c0_290 = arith.constant 0 : index
    %c32_291 = arith.constant 32 : index
    %170 = vector.load %arg6[%c0_290, %c32_291] : memref<128x288xf32, #tpu.memory_space<vmem>>, vector<128x32xf32>
    tpu.vector_store %arg6[%c0_290, %c32_291], %169 {strides = array<i32>} : memref<128x288xf32, #tpu.memory_space<vmem>>, vector<128x32xf32>,
    %c0_292 = arith.constant 0 : index
    %c0_293 = arith.constant 0 : index
    %c2_294 = arith.constant 2 : index
    %c0_295 = arith.constant 0 : index
    %171 = vector.load %arg5[%c0_292, %c0_293, %c2_294, %c0_295] : memref<2x10x10x32xf32, #tpu.memory_space<vmem>>, vector<2x8x8x32xf32>
    %172 = vector.shape_cast %171 : vector<2x8x8x32xf32> to vector<128x32xf32>
    %c0_296 = arith.constant 0 : index
    %c64_297 = arith.constant 64 : index
    %173 = vector.load %arg6[%c0_296, %c64_297] : memref<128x288xf32, #tpu.memory_space<vmem>>, vector<128x32xf32>
    tpu.vector_store %arg6[%c0_296, %c64_297], %172 {strides = array<i32>} : memref<128x288xf32, #tpu.memory_space<vmem>>, vector<128x32xf32>,
    %c0_298 = arith.constant 0 : index
    %c1_299 = arith.constant 1 : index
    %c0_300 = arith.constant 0 : index
    %c0_301 = arith.constant 0 : index
    %174 = vector.load %arg5[%c0_298, %c1_299, %c0_300, %c0_301] : memref<2x10x10x32xf32, #tpu.memory_space<vmem>>, vector<2x8x8x32xf32>
    %175 = vector.shape_cast %174 : vector<2x8x8x32xf32> to vector<128x32xf32>
    %c0_302 = arith.constant 0 : index
    %c96_303 = arith.constant 96 : index
    %176 = vector.load %arg6[%c0_302, %c96_303] : memref<128x288xf32, #tpu.memory_space<vmem>>, vector<128x32xf32>
    tpu.vector_store %arg6[%c0_302, %c96_303], %175 {strides = array<i32>} : memref<128x288xf32, #tpu.memory_space<vmem>>, vector<128x32xf32>,
    %c0_304 = arith.constant 0 : index
    %c1_305 = arith.constant 1 : index
    %c1_306 = arith.constant 1 : index
    %c0_307 = arith.constant 0 : index
    %177 = vector.load %arg5[%c0_304, %c1_305, %c1_306, %c0_307] : memref<2x10x10x32xf32, #tpu.memory_space<vmem>>, vector<2x8x8x32xf32>
    %178 = vector.shape_cast %177 : vector<2x8x8x32xf32> to vector<128x32xf32>
    %c0_308 = arith.constant 0 : index
    %c128_309 = arith.constant 128 : index
    %179 = vector.load %arg6[%c0_308, %c128_309] : memref<128x288xf32, #tpu.memory_space<vmem>>, vector<128x32xf32>
    tpu.vector_store %arg6[%c0_308, %c128_309], %178 {strides = array<i32>} : memref<128x288xf32, #tpu.memory_space<vmem>>, vector<128x32xf32>,
    %c0_310 = arith.constant 0 : index
    %c1_311 = arith.constant 1 : index
    %c2_312 = arith.constant 2 : index
    %c0_313 = arith.constant 0 : index
    %180 = vector.load %arg5[%c0_310, %c1_311, %c2_312, %c0_313] : memref<2x10x10x32xf32, #tpu.memory_space<vmem>>, vector<2x8x8x32xf32>
    %181 = vector.shape_cast %180 : vector<2x8x8x32xf32> to vector<128x32xf32>
    %c0_314 = arith.constant 0 : index
    %c160_315 = arith.constant 160 : index
    %182 = vector.load %arg6[%c0_314, %c160_315] : memref<128x288xf32, #tpu.memory_space<vmem>>, vector<128x32xf32>
    tpu.vector_store %arg6[%c0_314, %c160_315], %181 {strides = array<i32>} : memref<128x288xf32, #tpu.memory_space<vmem>>, vector<128x32xf32>,
    %c0_316 = arith.constant 0 : index
    %c2_317 = arith.constant 2 : index
    %c0_318 = arith.constant 0 : index
    %c0_319 = arith.constant 0 : index
    %183 = vector.load %arg5[%c0_316, %c2_317, %c0_318, %c0_319] : memref<2x10x10x32xf32, #tpu.memory_space<vmem>>, vector<2x8x8x32xf32>
    %184 = vector.shape_cast %183 : vector<2x8x8x32xf32> to vector<128x32xf32>
    %c0_320 = arith.constant 0 : index
    %c192_321 = arith.constant 192 : index
    %185 = vector.load %arg6[%c0_320, %c192_321] : memref<128x288xf32, #tpu.memory_space<vmem>>, vector<128x32xf32>
    tpu.vector_store %arg6[%c0_320, %c192_321], %184 {strides = array<i32>} : memref<128x288xf32, #tpu.memory_space<vmem>>, vector<128x32xf32>,
    %c0_322 = arith.constant 0 : index
    %c2_323 = arith.constant 2 : index
    %c1_324 = arith.constant 1 : index
    %c0_325 = arith.constant 0 : index
    %186 = vector.load %arg5[%c0_322, %c2_323, %c1_324, %c0_325] : memref<2x10x10x32xf32, #tpu.memory_space<vmem>>, vector<2x8x8x32xf32>
    %187 = vector.shape_cast %186 : vector<2x8x8x32xf32> to vector<128x32xf32>
    %c0_326 = arith.constant 0 : index
    %c224_327 = arith.constant 224 : index
    %188 = vector.load %arg6[%c0_326, %c224_327] : memref<128x288xf32, #tpu.memory_space<vmem>>, vector<128x32xf32>
    tpu.vector_store %arg6[%c0_326, %c224_327], %187 {strides = array<i32>} : memref<128x288xf32, #tpu.memory_space<vmem>>, vector<128x32xf32>,
    %c0_328 = arith.constant 0 : index
    %c2_329 = arith.constant 2 : index
    %c2_330 = arith.constant 2 : index
    %c0_331 = arith.constant 0 : index
    %189 = vector.load %arg5[%c0_328, %c2_329, %c2_330, %c0_331] : memref<2x10x10x32xf32, #tpu.memory_space<vmem>>, vector<2x8x8x32xf32>
    %190 = vector.shape_cast %189 : vector<2x8x8x32xf32> to vector<128x32xf32>
    %c0_332 = arith.constant 0 : index
    %c256_333 = arith.constant 256 : index
    %191 = vector.load %arg6[%c0_332, %c256_333] : memref<128x288xf32, #tpu.memory_space<vmem>>, vector<128x32xf32>
    tpu.vector_store %arg6[%c0_332, %c256_333], %190 {strides = array<i32>} : memref<128x288xf32, #tpu.memory_space<vmem>>, vector<128x32xf32>,
    %c0_334 = arith.constant 0 : index
    %c0_335 = arith.constant 0 : index
    %192 = vector.load %arg6[%c0_334, %c0_335] : memref<128x288xf32, #tpu.memory_space<vmem>>, vector<128x288xf32>
    %c4 = arith.constant 4 : index
    %c0_336 = arith.constant 0 : index
    %c0_337 = arith.constant 0 : index
    %193 = vector.load %arg2[%c4, %c0_336, %c0_337] : memref<5x288x32xf32, #tpu.memory_space<vmem>>, vector<1x288x32xf32>
    %194 = vector.shape_cast %193 : vector<1x288x32xf32> to vector<288x32xf32>
    %cst_338 = arith.constant dense<0.000000e+00> : vector<128x32xf32>
    %195 = tpu.matmul %192, %194, %cst_338 {dimension_numbers = #tpu.dot_dimension_numbers<[1], [0], [0], [1], [0, 0, 1, 1], [], []>} : vector<128x288xf32>, vector<288x32xf32>, vector<128x32xf32> -> vector<128x32xf32>
    %c4_339 = arith.constant 4 : index
    %c0_340 = arith.constant 0 : index
    %c0_341 = arith.constant 0 : index
    %196 = vector.load %arg3[%c4_339, %c0_340, %c0_341] : memref<5x1x32xf32, #tpu.memory_space<vmem>>, vector<1x1x32xf32>
    %197 = vector.shape_cast %196 : vector<1x1x32xf32> to vector<1x32xf32>
    %198 = vector.broadcast %197 : vector<1x32xf32> to vector<128x32xf32>
    %199 = arith.addf %195, %198 : vector<128x32xf32>
    %200 = arith.addf %199, %125 : vector<128x32xf32>
    %cst_342 = arith.constant 0.000000e+00 : f32
    %201 = vector.broadcast %cst_342 : f32 to vector<128x32xf32>
    %202 = arith.maximumf %200, %201 : vector<128x32xf32>
    %c0_343 = arith.constant 0 : index
    %c0_344 = arith.constant 0 : index
    %203 = vector.load %arg4[%c0_343, %c0_344] : memref<128x32xf32, #tpu.memory_space<vmem>>, vector<128x32xf32>
    tpu.vector_store %arg4[%c0_343, %c0_344], %202 {strides = array<i32>} : memref<128x32xf32, #tpu.memory_space<vmem>>, vector<128x32xf32>,
    return
  }
  func.func @transform_0(%arg0: i32) -> (i32, i32, i32, i32) {
    %c0_i32 = arith.constant 0 : i32
    %c0_i32_0 = arith.constant 0 : i32
    %c0_i32_1 = arith.constant 0 : i32
    %c0_i32_2 = arith.constant 0 : i32
    %c0_i32_3 = arith.constant 0 : i32
    return %c0_i32, %c0_i32_0, %c0_i32_1, %c0_i32_2 : i32, i32, i32, i32
  }
  func.func @transform_1(%arg0: i32) -> (i32, i32, i32) {
    %c0_i32 = arith.constant 0 : i32
    %c0_i32_0 = arith.constant 0 : i32
    %c0_i32_1 = arith.constant 0 : i32
    %c0_i32_2 = arith.constant 0 : i32
    return %c0_i32, %c0_i32_0, %c0_i32_1 : i32, i32, i32
  }
  func.func @transform_2(%arg0: i32) -> (i32, i32, i32) {
    %c0_i32 = arith.constant 0 : i32
    %c0_i32_0 = arith.constant 0 : i32
    %c0_i32_1 = arith.constant 0 : i32
    %c0_i32_2 = arith.constant 0 : i32
    return %c0_i32, %c0_i32_0, %c0_i32_1 : i32, i32, i32
  }
  func.func @transform_3(%arg0: i32) -> (i32, i32) {
    %c0_i32 = arith.constant 0 : i32
    %c0_i32_0 = arith.constant 0 : i32
    %c0_i32_1 = arith.constant 0 : i32
    return %c0_i32, %c0_i32_0 : i32, i32
  }
}

</mosaic_0001>

<llo_original>
// kernel: feature_forward.1
$region0: #{feature_forward.1}
  #allocation0 [shape = 'u32[]', space=smem, size = 0x4, offset = 0x4, fixed_abs, tag = 'smem constant byte address 0x4 - core index']
  #allocation1 [shape = 'u32[144,128]{1,0:T(1,128)}', space=vmem, size = 0x12000, scoped, tag = 'internal scratch']
  #allocation2 [shape = 'f32[2,10,10,32]{3,2,1,0:T(8,128)}', space=vmem, size = 0x28000, scoped, tag = 'scratch operand']
  #allocation3 [shape = 'f32[128,288]{1,0:T(8,128)}', space=vmem, size = 0x30000, scoped, tag = 'scratch operand']
  %s0 = inlined_call_operand.vmem [shape: f32[2,8,8,32], index: 0, kind: input, shape index: {}]
  %s1 = inlined_call_operand.vmem [shape: f32[5,288,32], index: 1, kind: input, shape index: {}]
  %s2 = inlined_call_operand.vmem [shape: f32[5,1,32], index: 2, kind: input, shape index: {}]
  %s3 = inlined_call_operand.hbm [shape: f32[128,32], index: 3, kind: output, shape index: {}]
  %s4 = sld [smem:[#allocation0]]
  $region22: #{feature_forward.1} parent=0
    _
  %s6 = ssub.s32 1, %s4
  %s7 = scalar_select 0, %s6, %s4
  $region1: #{feature_forward.1} parent=0
    #allocation4 [shape = 'u8[65536]{0}', space=vmem, size = 0x10000, scoped, tag = 'output window, operand 0, single buffered']
    #allocation5 [shape = 's32[1]{0}', space=sflag, size = 0x4, scoped, tag = 'scoped memory for feature_forward.1']
    %8 = vsyncpa [#allocation5], 0
    // Predicated region
    $region2: #{feature_forward.1} parent=1 // pred_check
      _
    $region3: #{feature_forward.1} parent=1 // pred_check_branch
      %10 = sbr.rel (0) target = $region5
    $region4: #{feature_forward.1} parent=1 // pred_region
      _
    $region5: #{feature_forward.1} parent=1 // pred_fallthru
      _
    // Predicated region
    $region6: #{feature_forward.1} parent=1 // pred_check
      _
    $region7: #{feature_forward.1} parent=1 // pred_check_branch
      %12 = sbr.rel (0) target = $region9
    $region8: #{feature_forward.1} parent=1 // pred_region
      _
    $region9: #{feature_forward.1} parent=1 // pred_fallthru
      _
    // Predicated region
    $region10: #{feature_forward.1} parent=1 // pred_check
      _
    $region11: #{feature_forward.1} parent=1 // pred_check_branch
      %14 = sbr.rel (0) target = $region13
    $region12: #{feature_forward.1} parent=1 // pred_region
      _
    $region13: #{feature_forward.1} parent=1 // pred_fallthru
      _
    %vm15 = vcmask 261120
    %16 = vst.msk [vmem:[#allocation2] sm:$0xff] %vm15, 0.0
    %vm17 = vcmask 254976
    %18 = vst.msk [vmem:[#allocation2 + $0x8] sm:$0x3] %vm17, 0.0
    %19 = vst.msk [vmem:[#allocation2 + $0x10] sm:$0xff] %vm15, 0.0
    %20 = vst.msk [vmem:[#allocation2 + $0x18] sm:$0x3] %vm17, 0.0
    %21 = vst.msk [vmem:[#allocation2 + $0x20] sm:$0xff] %vm15, 0.0
    %22 = vst.msk [vmem:[#allocation2 + $0x28] sm:$0x3] %vm17, 0.0
    %23 = vst.msk [vmem:[#allocation2 + $0x30] sm:$0xff] %vm15, 0.0
    %24 = vst.msk [vmem:[#allocation2 + $0x38] sm:$0x3] %vm17, 0.0
    %25 = vst.msk [vmem:[#allocation2 + $0x40] sm:$0xff] %vm15, 0.0
    %26 = vst.msk [vmem:[#allocation2 + $0x48] sm:$0x3] %vm17, 0.0
    %27 = vst.msk [vmem:[#allocation2 + $0x50] sm:$0xff] %vm15, 0.0
    %28 = vst.msk [vmem:[#allocation2 + $0x58] sm:$0x3] %vm17, 0.0
    %29 = vst.msk [vmem:[#allocation2 + $0x60] sm:$0xff] %vm15, 0.0
    %30 = vst.msk [vmem:[#allocation2 + $0x68] sm:$0x3] %vm17, 0.0
    %31 = vst.msk [vmem:[#allocation2 + $0x70] sm:$0xff] %vm15, 0.0
    %32 = vst.msk [vmem:[#allocation2 + $0x78] sm:$0x3] %vm17, 0.0
    %33 = vst.msk [vmem:[#allocation2 + $0x80] sm:$0xff] %vm15, 0.0
    %34 = vst.msk [vmem:[#allocation2 + $0x88] sm:$0x3] %vm17, 0.0
    %35 = vst.msk [vmem:[#allocation2 + $0x90] sm:$0xff] %vm15, 0.0
    %36 = vst.msk [vmem:[#allocation2 + $0x98] sm:$0x3] %vm17, 0.0
    %37 = vst.msk [vmem:[#allocation2 + $0xa0] sm:$0xff] %vm15, 0.0
    %38 = vst.msk [vmem:[#allocation2 + $0xa8] sm:$0x3] %vm17, 0.0
    %39 = vst.msk [vmem:[#allocation2 + $0xb0] sm:$0xff] %vm15, 0.0
    %40 = vst.msk [vmem:[#allocation2 + $0xb8] sm:$0x3] %vm17, 0.0
    %41 = vst.msk [vmem:[#allocation2 + $0xc0] sm:$0xff] %vm15, 0.0
    %42 = vst.msk [vmem:[#allocation2 + $0xc8] sm:$0x3] %vm17, 0.0
    %43 = vst.msk [vmem:[#allocation2 + $0xd0] sm:$0xff] %vm15, 0.0
    %44 = vst.msk [vmem:[#allocation2 + $0xd8] sm:$0x3] %vm17, 0.0
    %45 = vst.msk [vmem:[#allocation2 + $0xe0] sm:$0xff] %vm15, 0.0
    %46 = vst.msk [vmem:[#allocation2 + $0xe8] sm:$0x3] %vm17, 0.0
    %47 = vst.msk [vmem:[#allocation2 + $0xf0] sm:$0xff] %vm15, 0.0
    %48 = vst.msk [vmem:[#allocation2 + $0xf8] sm:$0x3] %vm17, 0.0
    %49 = vst.msk [vmem:[#allocation2 + $0x100] sm:$0xff] %vm15, 0.0
    %50 = vst.msk [vmem:[#allocation2 + $0x108] sm:$0x3] %vm17, 0.0
    %51 = vst.msk [vmem:[#allocation2 + $0x110] sm:$0xff] %vm15, 0.0
    %52 = vst.msk [vmem:[#allocation2 + $0x118] sm:$0x3] %vm17, 0.0
    %53 = vst.msk [vmem:[#allocation2 + $0x120] sm:$0xff] %vm15, 0.0
    %54 = vst.msk [vmem:[#allocation2 + $0x128] sm:$0x3] %vm17, 0.0
    %55 = vst.msk [vmem:[#allocation2 + $0x130] sm:$0xff] %vm15, 0.0
    %56 = vst.msk [vmem:[#allocation2 + $0x138] sm:$0x3] %vm17, 0.0
    %v57 = vld [vmem:[%s0] sm:$0xff]
    %v58 = vld [vmem:[%s0 + $0x8] sm:$0xff]
    %v59 = vld [vmem:[%s0 + $0x10] sm:$0xff]
    %v60 = vld [vmem:[%s0 + $0x18] sm:$0xff]
    %v61 = vld [vmem:[%s0 + $0x20] sm:$0xff]
    %v62 = vld [vmem:[%s0 + $0x28] sm:$0xff]
    %v63 = vld [vmem:[%s0 + $0x30] sm:$0xff]
    %v64 = vld [vmem:[%s0 + $0x38] sm:$0xff]
    %v65 = vld [vmem:[%s0 + $0x40] sm:$0xff]
    %v66 = vld [vmem:[%s0 + $0x48] sm:$0xff]
    %v67 = vld [vmem:[%s0 + $0x50] sm:$0xff]
    %v68 = vld [vmem:[%s0 + $0x58] sm:$0xff]
    %v69 = vld [vmem:[%s0 + $0x60] sm:$0xff]
    %v70 = vld [vmem:[%s0 + $0x68] sm:$0xff]
    %v71 = vld [vmem:[%s0 + $0x70] sm:$0xff]
    %v72 = vld [vmem:[%s0 + $0x78] sm:$0xff]
    %s73 = scalar_lea.vmem [#allocation2], 16
    %74 = vst.msk [vmem:[%s73 + $0x1] sm:$0xff] %vm15, %v57
    %75 = vst.msk [vmem:[%s73 + $0x11] sm:$0xff] %vm15, %v58
    %76 = vst.msk [vmem:[%s73 + $0x21] sm:$0xff] %vm15, %v59
    %77 = vst.msk [vmem:[%s73 + $0x31] sm:$0xff] %vm15, %v60
    %78 = vst.msk [vmem:[%s73 + $0x41] sm:$0xff] %vm15, %v61
    %79 = vst.msk [vmem:[%s73 + $0x51] sm:$0xff] %vm15, %v62
    %80 = vst.msk [vmem:[%s73 + $0x61] sm:$0xff] %vm15, %v63
    %81 = vst.msk [vmem:[%s73 + $0x71] sm:$0xff] %vm15, %v64
    %82 = vst.msk [vmem:[%s73 + $0xa1] sm:$0xff] %vm15, %v65
    %83 = vst.msk [vmem:[%s73 + $0xb1] sm:$0xff] %vm15, %v66
    %84 = vst.msk [vmem:[%s73 + $0xc1] sm:$0xff] %vm15, %v67
    %85 = vst.msk [vmem:[%s73 + $0xd1] sm:$0xff] %vm15, %v68
    %86 = vst.msk [vmem:[%s73 + $0xe1] sm:$0xff] %vm15, %v69
    %87 = vst.msk [vmem:[%s73 + $0xf1] sm:$0xff] %vm15, %v70
    %88 = vst.msk [vmem:[%s73 + $0x101] sm:$0xff] %vm15, %v71
    %89 = vst.msk [vmem:[%s73 + $0x111] sm:$0xff] %vm15, %v72
    %v90 = vld [vmem:[#allocation2] sm:$0xff]
    %v91 = vld [vmem:[#allocation2 + $0x10] sm:$0xff]
    %v92 = vld [vmem:[#allocation2 + $0x20] sm:$0xff]
    %v93 = vld [vmem:[#allocation2 + $0x30] sm:$0xff]
    %v94 = vld [vmem:[#allocation2 + $0x40] sm:$0xff]
    %v95 = vld [vmem:[#allocation2 + $0x50] sm:$0xff]
    %v96 = vld [vmem:[#allocation2 + $0x60] sm:$0xff]
    %v97 = vld [vmem:[#allocation2 + $0x70] sm:$0xff]
    %v98 = vld [vmem:[#allocation2 + $0xa0] sm:$0xff]
    %v99 = vld [vmem:[#allocation2 + $0xb0] sm:$0xff]
    %v100 = vld [vmem:[#allocation2 + $0xc0] sm:$0xff]
    %v101 = vld [vmem:[#allocation2 + $0xd0] sm:$0xff]
    %v102 = vld [vmem:[#allocation2 + $0xe0] sm:$0xff]
    %v103 = vld [vmem:[#allocation2 + $0xf0] sm:$0xff]
    %v104 = vld [vmem:[#allocation2 + $0x100] sm:$0xff]
    %v105 = vld [vmem:[#allocation2 + $0x110] sm:$0xff]
    %106 = vst.msk [vmem:[#allocation3] sm:$0xff] %vm15, %v90
    %107 = vst.msk [vmem:[#allocation3 + $0x18] sm:$0xff] %vm15, %v91
    %108 = vst.msk [vmem:[#allocation3 + $0x30] sm:$0xff] %vm15, %v92
    %109 = vst.msk [vmem:[#allocation3 + $0x48] sm:$0xff] %vm15, %v93
    %110 = vst.msk [vmem:[#allocation3 + $0x60] sm:$0xff] %vm15, %v94
    %111 = vst.msk [vmem:[#allocation3 + $0x78] sm:$0xff] %vm15, %v95
    %112 = vst.msk [vmem:[#allocation3 + $0x90] sm:$0xff] %vm15, %v96
    %113 = vst.msk [vmem:[#allocation3 + $0xa8] sm:$0xff] %vm15, %v97
    %114 = vst.msk [vmem:[#allocation3 + $0xc0] sm:$0xff] %vm15, %v98
    %115 = vst.msk [vmem:[#allocation3 + $0xd8] sm:$0xff] %vm15, %v99
    %116 = vst.msk [vmem:[#allocation3 + $0xf0] sm:$0xff] %vm15, %v100
    %117 = vst.msk [vmem:[#allocation3 + $0x108] sm:$0xff] %vm15, %v101
    %118 = vst.msk [vmem:[#allocation3 + $0x120] sm:$0xff] %vm15, %v102
    %119 = vst.msk [vmem:[#allocation3 + $0x138] sm:$0xff] %vm15, %v103
    %120 = vst.msk [vmem:[#allocation3 + $0x150] sm:$0xff] %vm15, %v104
    %121 = vst.msk [vmem:[#allocation3 + $0x168] sm:$0xff] %vm15, %v105
    %v122 = vld [vmem:[#allocation2 + $0x1] sm:$0xff]
    %v123 = vld [vmem:[#allocation2 + $0x11] sm:$0xff]
    %v124 = vld [vmem:[#allocation2 + $0x21] sm:$0xff]
    %v125 = vld [vmem:[#allocation2 + $0x31] sm:$0xff]
    %v126 = vld [vmem:[#allocation2 + $0x41] sm:$0xff]
    %v127 = vld [vmem:[#allocation2 + $0x51] sm:$0xff]
    %v128 = vld [vmem:[#allocation2 + $0x61] sm:$0xff]
    %v129 = vld [vmem:[#allocation2 + $0x71] sm:$0xff]
    %v130 = vld [vmem:[#allocation2 + $0xa1] sm:$0xff]
    %v131 = vld [vmem:[#allocation2 + $0xb1] sm:$0xff]
    %v132 = vld [vmem:[#allocation2 + $0xc1] sm:$0xff]
    %v133 = vld [vmem:[#allocation2 + $0xd1] sm:$0xff]
    %v134 = vld [vmem:[#allocation2 + $0xe1] sm:$0xff]
    %v135 = vld [vmem:[#allocation2 + $0xf1] sm:$0xff]
    %v136 = vld [vmem:[#allocation2 + $0x101] sm:$0xff]
    %v137 = vld [vmem:[#allocation2 + $0x111] sm:$0xff]
    %154 = vrot.lane.b32.xlu0 %v122, 32
    %v155 = vpop.permute.xlu0 %154
    %156 = vrot.lane.b32.xlu0 %v123, 32
    %v157 = vpop.permute.xlu0 %156
    %158 = vrot.lane.b32.xlu0 %v124, 32
    %v159 = vpop.permute.xlu0 %158
    %160 = vrot.lane.b32.xlu0 %v125, 32
    %v161 = vpop.permute.xlu0 %160
    %162 = vrot.lane.b32.xlu0 %v126, 32
    %v163 = vpop.permute.xlu0 %162
    %164 = vrot.lane.b32.xlu0 %v127, 32
    %v165 = vpop.permute.xlu0 %164
    %166 = vrot.lane.b32.xlu0 %v128, 32
    %v167 = vpop.permute.xlu0 %166
    %168 = vrot.lane.b32.xlu0 %v129, 32
    %v169 = vpop.permute.xlu0 %168
    %170 = vrot.lane.b32.xlu0 %v130, 32
    %v171 = vpop.permute.xlu0 %170
    %172 = vrot.lane.b32.xlu0 %v131, 32
    %v173 = vpop.permute.xlu0 %172
    %174 = vrot.lane.b32.xlu0 %v132, 32
    %v175 = vpop.permute.xlu0 %174
    %176 = vrot.lane.b32.xlu0 %v133, 32
    %v177 = vpop.permute.xlu0 %176
    %178 = vrot.lane.b32.xlu0 %v134, 32
    %v179 = vpop.permute.xlu0 %178
    %180 = vrot.lane.b32.xlu0 %v135, 32
    %v181 = vpop.permute.xlu0 %180
    %182 = vrot.lane.b32.xlu0 %v136, 32
    %v183 = vpop.permute.xlu0 %182
    %184 = vrot.lane.b32.xlu0 %v137, 32
    %v185 = vpop.permute.xlu0 %184
    %vm202 = vcmask 523520
    %203 = vst.msk [vmem:[#allocation3] sm:$0xff] %vm202, %v155
    %204 = vst.msk [vmem:[#allocation3 + $0x18] sm:$0xff] %vm202, %v157
    %205 = vst.msk [vmem:[#allocation3 + $0x30] sm:$0xff] %vm202, %v159
    %206 = vst.msk [vmem:[#allocation3 + $0x48] sm:$0xff] %vm202, %v161
    %207 = vst.msk [vmem:[#allocation3 + $0x60] sm:$0xff] %vm202, %v163
    %208 = vst.msk [vmem:[#allocation3 + $0x78] sm:$0xff] %vm202, %v165
    %209 = vst.msk [vmem:[#allocation3 + $0x90] sm:$0xff] %vm202, %v167
    %210 = vst.msk [vmem:[#allocation3 + $0xa8] sm:$0xff] %vm202, %v169
    %211 = vst.msk [vmem:[#allocation3 + $0xc0] sm:$0xff] %vm202, %v171
    %212 = vst.msk [vmem:[#allocation3 + $0xd8] sm:$0xff] %vm202, %v173
    %213 = vst.msk [vmem:[#allocation3 + $0xf0] sm:$0xff] %vm202, %v175
    %214 = vst.msk [vmem:[#allocation3 + $0x108] sm:$0xff] %vm202, %v177
    %215 = vst.msk [vmem:[#allocation3 + $0x120] sm:$0xff] %vm202, %v179
    %216 = vst.msk [vmem:[#allocation3 + $0x138] sm:$0xff] %vm202, %v181
    %217 = vst.msk [vmem:[#allocation3 + $0x150] sm:$0xff] %vm202, %v183
    %218 = vst.msk [vmem:[#allocation3 + $0x168] sm:$0xff] %vm202, %v185
    %v219 = vld [vmem:[#allocation2 + $0x2] sm:$0xff]
    %v220 = vld [vmem:[#allocation2 + $0x12] sm:$0xff]
    %v221 = vld [vmem:[#allocation2 + $0x22] sm:$0xff]
    %v222 = vld [vmem:[#allocation2 + $0x32] sm:$0xff]
    %v223 = vld [vmem:[#allocation2 + $0x42] sm:$0xff]
    %v224 = vld [vmem:[#allocation2 + $0x52] sm:$0xff]
    %v225 = vld [vmem:[#allocation2 + $0x62] sm:$0xff]
    %v226 = vld [vmem:[#allocation2 + $0x72] sm:$0xff]
    %v227 = vld [vmem:[#allocation2 + $0xa2] sm:$0xff]
    %v228 = vld [vmem:[#allocation2 + $0xb2] sm:$0xff]
    %v229 = vld [vmem:[#allocation2 + $0xc2] sm:$0xff]
    %v230 = vld [vmem:[#allocation2 + $0xd2] sm:$0xff]
    %v231 = vld [vmem:[#allocation2 + $0xe2] sm:$0xff]
    %v232 = vld [vmem:[#allocation2 + $0xf2] sm:$0xff]
    %v233 = vld [vmem:[#allocation2 + $0x102] sm:$0xff]
    %v234 = vld [vmem:[#allocation2 + $0x112] sm:$0xff]
    %251 = vrot.lane.b32.xlu0 %v219, 64
    %v252 = vpop.permute.xlu0 %251
    %253 = vrot.lane.b32.xlu0 %v220, 64
    %v254 = vpop.permute.xlu0 %253
    %255 = vrot.lane.b32.xlu0 %v221, 64
    %v256 = vpop.permute.xlu0 %255
    %257 = vrot.lane.b32.xlu0 %v222, 64
    %v258 = vpop.permute.xlu0 %257
    %259 = vrot.lane.b32.xlu0 %v223, 64
    %v260 = vpop.permute.xlu0 %259
    %261 = vrot.lane.b32.xlu0 %v224, 64
    %v262 = vpop.permute.xlu0 %261
    %263 = vrot.lane.b32.xlu0 %v225, 64
    %v264 = vpop.permute.xlu0 %263
    %265 = vrot.lane.b32.xlu0 %v226, 64
    %v266 = vpop.permute.xlu0 %265
    %267 = vrot.lane.b32.xlu0 %v227, 64
    %v268 = vpop.permute.xlu0 %267
    %269 = vrot.lane.b32.xlu0 %v228, 64
    %v270 = vpop.permute.xlu0 %269
    %271 = vrot.lane.b32.xlu0 %v229, 64
    %v272 = vpop.permute.xlu0 %271
    %273 = vrot.lane.b32.xlu0 %v230, 64
    %v274 = vpop.permute.xlu0 %273
    %275 = vrot.lane.b32.xlu0 %v231, 64
    %v276 = vpop.permute.xlu0 %275
    %277 = vrot.lane.b32.xlu0 %v232, 64
    %v278 = vpop.permute.xlu0 %277
    %279 = vrot.lane.b32.xlu0 %v233, 64
    %v280 = vpop.permute.xlu0 %279
    %281 = vrot.lane.b32.xlu0 %v234, 64
    %v282 = vpop.permute.xlu0 %281
    %vm299 = vcmask 785920
    %300 = vst.msk [vmem:[#allocation3] sm:$0xff] %vm299, %v252
    %301 = vst.msk [vmem:[#allocation3 + $0x18] sm:$0xff] %vm299, %v254
    %302 = vst.msk [vmem:[#allocation3 + $0x30] sm:$0xff] %vm299, %v256
    %303 = vst.msk [vmem:[#allocation3 + $0x48] sm:$0xff] %vm299, %v258
    %304 = vst.msk [vmem:[#allocation3 + $0x60] sm:$0xff] %vm299, %v260
    %305 = vst.msk [vmem:[#allocation3 + $0x78] sm:$0xff] %vm299, %v262
    %306 = vst.msk [vmem:[#allocation3 + $0x90] sm:$0xff] %vm299, %v264
    %307 = vst.msk [vmem:[#allocation3 + $0xa8] sm:$0xff] %vm299, %v266
    %308 = vst.msk [vmem:[#allocation3 + $0xc0] sm:$0xff] %vm299, %v268
    %309 = vst.msk [vmem:[#allocation3 + $0xd8] sm:$0xff] %vm299, %v270
    %310 = vst.msk [vmem:[#allocation3 + $0xf0] sm:$0xff] %vm299, %v272
    %311 = vst.msk [vmem:[#allocation3 + $0x108] sm:$0xff] %vm299, %v274
    %312 = vst.msk [vmem:[#allocation3 + $0x120] sm:$0xff] %vm299, %v276
    %313 = vst.msk [vmem:[#allocation3 + $0x138] sm:$0xff] %vm299, %v278
    %314 = vst.msk [vmem:[#allocation3 + $0x150] sm:$0xff] %vm299, %v280
    %315 = vst.msk [vmem:[#allocation3 + $0x168] sm:$0xff] %vm299, %v282
    %v316 = vld [vmem:[%s73] sm:$0xff]
    %v317 = vld [vmem:[%s73 + $0x10] sm:$0xff]
    %v318 = vld [vmem:[%s73 + $0x20] sm:$0xff]
    %v319 = vld [vmem:[%s73 + $0x30] sm:$0xff]
    %v320 = vld [vmem:[%s73 + $0x40] sm:$0xff]
    %v321 = vld [vmem:[%s73 + $0x50] sm:$0xff]
    %v322 = vld [vmem:[%s73 + $0x60] sm:$0xff]
    %v323 = vld [vmem:[%s73 + $0x70] sm:$0xff]
    %v324 = vld [vmem:[%s73 + $0xa0] sm:$0xff]
    %v325 = vld [vmem:[%s73 + $0xb0] sm:$0xff]
    %v326 = vld [vmem:[%s73 + $0xc0] sm:$0xff]
    %v327 = vld [vmem:[%s73 + $0xd0] sm:$0xff]
    %v328 = vld [vmem:[%s73 + $0xe0] sm:$0xff]
    %v329 = vld [vmem:[%s73 + $0xf0] sm:$0xff]
    %v330 = vld [vmem:[%s73 + $0x100] sm:$0xff]
    %v331 = vld [vmem:[%s73 + $0x110] sm:$0xff]
    %348 = vrot.lane.b32.xlu0 %v316, 96
    %v349 = vpop.permute.xlu0 %348
    %350 = vrot.lane.b32.xlu0 %v317, 96
    %v351 = vpop.permute.xlu0 %350
    %352 = vrot.lane.b32.xlu0 %v318, 96
    %v353 = vpop.permute.xlu0 %352
    %354 = vrot.lane.b32.xlu0 %v319, 96
    %v355 = vpop.permute.xlu0 %354
    %356 = vrot.lane.b32.xlu0 %v320, 96
    %v357 = vpop.permute.xlu0 %356
    %358 = vrot.lane.b32.xlu0 %v321, 96
    %v359 = vpop.permute.xlu0 %358
    %360 = vrot.lane.b32.xlu0 %v322, 96
    %v361 = vpop.permute.xlu0 %360
    %362 = vrot.lane.b32.xlu0 %v323, 96
    %v363 = vpop.permute.xlu0 %362
    %364 = vrot.lane.b32.xlu0 %v324, 96
    %v365 = vpop.permute.xlu0 %364
    %366 = vrot.lane.b32.xlu0 %v325, 96
    %v367 = vpop.permute.xlu0 %366
    %368 = vrot.lane.b32.xlu0 %v326, 96
    %v369 = vpop.permute.xlu0 %368
    %370 = vrot.lane.b32.xlu0 %v327, 96
    %v371 = vpop.permute.xlu0 %370
    %372 = vrot.lane.b32.xlu0 %v328, 96
    %v373 = vpop.permute.xlu0 %372
    %374 = vrot.lane.b32.xlu0 %v329, 96
    %v375 = vpop.permute.xlu0 %374
    %376 = vrot.lane.b32.xlu0 %v330, 96
    %v377 = vpop.permute.xlu0 %376
    %378 = vrot.lane.b32.xlu0 %v331, 96
    %v379 = vpop.permute.xlu0 %378
    %vm396 = vcmask 1048320
    %397 = vst.msk [vmem:[#allocation3] sm:$0xff] %vm396, %v349
    %398 = vst.msk [vmem:[#allocation3 + $0x18] sm:$0xff] %vm396, %v351
    %399 = vst.msk [vmem:[#allocation3 + $0x30] sm:$0xff] %vm396, %v353
    %400 = vst.msk [vmem:[#allocation3 + $0x48] sm:$0xff] %vm396, %v355
    %401 = vst.msk [vmem:[#allocation3 + $0x60] sm:$0xff] %vm396, %v357
    %402 = vst.msk [vmem:[#allocation3 + $0x78] sm:$0xff] %vm396, %v359
    %403 = vst.msk [vmem:[#allocation3 + $0x90] sm:$0xff] %vm396, %v361
    %404 = vst.msk [vmem:[#allocation3 + $0xa8] sm:$0xff] %vm396, %v363
    %405 = vst.msk [vmem:[#allocation3 + $0xc0] sm:$0xff] %vm396, %v365
    %406 = vst.msk [vmem:[#allocation3 + $0xd8] sm:$0xff] %vm396, %v367
    %407 = vst.msk [vmem:[#allocation3 + $0xf0] sm:$0xff] %vm396, %v369
    %408 = vst.msk [vmem:[#allocation3 + $0x108] sm:$0xff] %vm396, %v371
    %409 = vst.msk [vmem:[#allocation3 + $0x120] sm:$0xff] %vm396, %v373
    %410 = vst.msk [vmem:[#allocation3 + $0x138] sm:$0xff] %vm396, %v375
    %411 = vst.msk [vmem:[#allocation3 + $0x150] sm:$0xff] %vm396, %v377
    %412 = vst.msk [vmem:[#allocation3 + $0x168] sm:$0xff] %vm396, %v379
    %v413 = vld [vmem:[%s73 + $0x1] sm:$0xff]
    %v414 = vld [vmem:[%s73 + $0x11] sm:$0xff]
    %v415 = vld [vmem:[%s73 + $0x21] sm:$0xff]
    %v416 = vld [vmem:[%s73 + $0x31] sm:$0xff]
    %v417 = vld [vmem:[%s73 + $0x41] sm:$0xff]
    %v418 = vld [vmem:[%s73 + $0x51] sm:$0xff]
    %v419 = vld [vmem:[%s73 + $0x61] sm:$0xff]
    %v420 = vld [vmem:[%s73 + $0x71] sm:$0xff]
    %v421 = vld [vmem:[%s73 + $0xa1] sm:$0xff]
    %v422 = vld [vmem:[%s73 + $0xb1] sm:$0xff]
    %v423 = vld [vmem:[%s73 + $0xc1] sm:$0xff]
    %v424 = vld [vmem:[%s73 + $0xd1] sm:$0xff]
    %v425 = vld [vmem:[%s73 + $0xe1] sm:$0xff]
    %v426 = vld [vmem:[%s73 + $0xf1] sm:$0xff]
    %v427 = vld [vmem:[%s73 + $0x101] sm:$0xff]
    %v428 = vld [vmem:[%s73 + $0x111] sm:$0xff]
    %429 = vst.msk [vmem:[#allocation3 + $0x8] sm:$0xff] %vm15, %v413
    %430 = vst.msk [vmem:[#allocation3 + $0x20] sm:$0xff] %vm15, %v414
    %431 = vst.msk [vmem:[#allocation3 + $0x38] sm:$0xff] %vm15, %v415
    %432 = vst.msk [vmem:[#allocation3 + $0x50] sm:$0xff] %vm15, %v416
    %433 = vst.msk [vmem:[#allocation3 + $0x68] sm:$0xff] %vm15, %v417
    %434 = vst.msk [vmem:[#allocation3 + $0x80] sm:$0xff] %vm15, %v418
    %435 = vst.msk [vmem:[#allocation3 + $0x98] sm:$0xff] %vm15, %v419
    %436 = vst.msk [vmem:[#allocation3 + $0xb0] sm:$0xff] %vm15, %v420
    %437 = vst.msk [vmem:[#allocation3 + $0xc8] sm:$0xff] %vm15, %v421
    %438 = vst.msk [vmem:[#allocation3 + $0xe0] sm:$0xff] %vm15, %v422
    %439 = vst.msk [vmem:[#allocation3 + $0xf8] sm:$0xff] %vm15, %v423
    %440 = vst.msk [vmem:[#allocation3 + $0x110] sm:$0xff] %vm15, %v424
    %441 = vst.msk [vmem:[#allocation3 + $0x128] sm:$0xff] %vm15, %v425
    %442 = vst.msk [vmem:[#allocation3 + $0x140] sm:$0xff] %vm15, %v426
    %443 = vst.msk [vmem:[#allocation3 + $0x158] sm:$0xff] %vm15, %v427
    %444 = vst.msk [vmem:[#allocation3 + $0x170] sm:$0xff] %vm15, %v428
    %v445 = vld [vmem:[%s73 + $0x2] sm:$0xff]
    %v446 = vld [vmem:[%s73 + $0x12] sm:$0xff]
    %v447 = vld [vmem:[%s73 + $0x22] sm:$0xff]
    %v448 = vld [vmem:[%s73 + $0x32] sm:$0xff]
    %v449 = vld [vmem:[%s73 + $0x42] sm:$0xff]
    %v450 = vld [vmem:[%s73 + $0x52] sm:$0xff]
    %v451 = vld [vmem:[%s73 + $0x62] sm:$0xff]
    %v452 = vld [vmem:[%s73 + $0x72] sm:$0xff]
    %v453 = vld [vmem:[%s73 + $0xa2] sm:$0xff]
    %v454 = vld [vmem:[%s73 + $0xb2] sm:$0xff]
    %v455 = vld [vmem:[%s73 + $0xc2] sm:$0xff]
    %v456 = vld [vmem:[%s73 + $0xd2] sm:$0xff]
    %v457 = vld [vmem:[%s73 + $0xe2] sm:$0xff]
    %v458 = vld [vmem:[%s73 + $0xf2] sm:$0xff]
    %v459 = vld [vmem:[%s73 + $0x102] sm:$0xff]
    %v460 = vld [vmem:[%s73 + $0x112] sm:$0xff]
    %477 = vrot.lane.b32.xlu0 %v445, 32
    %v478 = vpop.permute.xlu0 %477
    %479 = vrot.lane.b32.xlu0 %v446, 32
    %v480 = vpop.permute.xlu0 %479
    %481 = vrot.lane.b32.xlu0 %v447, 32
    %v482 = vpop.permute.xlu0 %481
    %483 = vrot.lane.b32.xlu0 %v448, 32
    %v484 = vpop.permute.xlu0 %483
    %485 = vrot.lane.b32.xlu0 %v449, 32
    %v486 = vpop.permute.xlu0 %485
    %487 = vrot.lane.b32.xlu0 %v450, 32
    %v488 = vpop.permute.xlu0 %487
    %489 = vrot.lane.b32.xlu0 %v451, 32
    %v490 = vpop.permute.xlu0 %489
    %491 = vrot.lane.b32.xlu0 %v452, 32
    %v492 = vpop.permute.xlu0 %491
    %493 = vrot.lane.b32.xlu0 %v453, 32
    %v494 = vpop.permute.xlu0 %493
    %495 = vrot.lane.b32.xlu0 %v454, 32
    %v496 = vpop.permute.xlu0 %495
    %497 = vrot.lane.b32.xlu0 %v455, 32
    %v498 = vpop.permute.xlu0 %497
    %499 = vrot.lane.b32.xlu0 %v456, 32
    %v500 = vpop.permute.xlu0 %499
    %501 = vrot.lane.b32.xlu0 %v457, 32
    %v502 = vpop.permute.xlu0 %501
    %503 = vrot.lane.b32.xlu0 %v458, 32
    %v504 = vpop.permute.xlu0 %503
    %505 = vrot.lane.b32.xlu0 %v459, 32
    %v506 = vpop.permute.xlu0 %505
    %507 = vrot.lane.b32.xlu0 %v460, 32
    %v508 = vpop.permute.xlu0 %507
    %525 = vst.msk [vmem:[#allocation3 + $0x8] sm:$0xff] %vm202, %v478
    %526 = vst.msk [vmem:[#allocation3 + $0x20] sm:$0xff] %vm202, %v480
    %527 = vst.msk [vmem:[#allocation3 + $0x38] sm:$0xff] %vm202, %v482
    %528 = vst.msk [vmem:[#allocation3 + $0x50] sm:$0xff] %vm202, %v484
    %529 = vst.msk [vmem:[#allocation3 + $0x68] sm:$0xff] %vm202, %v486
    %530 = vst.msk [vmem:[#allocation3 + $0x80] sm:$0xff] %vm202, %v488
    %531 = vst.msk [vmem:[#allocation3 + $0x98] sm:$0xff] %vm202, %v490
    %532 = vst.msk [vmem:[#allocation3 + $0xb0] sm:$0xff] %vm202, %v492
    %533 = vst.msk [vmem:[#allocation3 + $0xc8] sm:$0xff] %vm202, %v494
    %534 = vst.msk [vmem:[#allocation3 + $0xe0] sm:$0xff] %vm202, %v496
    %535 = vst.msk [vmem:[#allocation3 + $0xf8] sm:$0xff] %vm202, %v498
    %536 = vst.msk [vmem:[#allocation3 + $0x110] sm:$0xff] %vm202, %v500
    %537 = vst.msk [vmem:[#allocation3 + $0x128] sm:$0xff] %vm202, %v502
    %538 = vst.msk [vmem:[#allocation3 + $0x140] sm:$0xff] %vm202, %v504
    %539 = vst.msk [vmem:[#allocation3 + $0x158] sm:$0xff] %vm202, %v506
    %540 = vst.msk [vmem:[#allocation3 + $0x170] sm:$0xff] %vm202, %v508
    %s541 = scalar_lea.vmem [#allocation2], 32
    %v542 = vld [vmem:[%s541] sm:$0xff]
    %v543 = vld [vmem:[%s541 + $0x10] sm:$0xff]
    %v544 = vld [vmem:[%s541 + $0x20] sm:$0xff]
    %v545 = vld [vmem:[%s541 + $0x30] sm:$0xff]
    %v546 = vld [vmem:[%s541 + $0x40] sm:$0xff]
    %v547 = vld [vmem:[%s541 + $0x50] sm:$0xff]
    %v548 = vld [vmem:[%s541 + $0x60] sm:$0xff]
    %v549 = vld [vmem:[%s541 + $0x70] sm:$0xff]
    %v550 = vld [vmem:[%s541 + $0xa0] sm:$0xff]
    %v551 = vld [vmem:[%s541 + $0xb0] sm:$0xff]
    %v552 = vld [vmem:[%s541 + $0xc0] sm:$0xff]
    %v553 = vld [vmem:[%s541 + $0xd0] sm:$0xff]
    %v554 = vld [vmem:[%s541 + $0xe0] sm:$0xff]
    %v555 = vld [vmem:[%s541 + $0xf0] sm:$0xff]
    %v556 = vld [vmem:[%s541 + $0x100] sm:$0xff]
    %v557 = vld [vmem:[%s541 + $0x110] sm:$0xff]
    %574 = vrot.lane.b32.xlu0 %v542, 64
    %v575 = vpop.permute.xlu0 %574
    %576 = vrot.lane.b32.xlu0 %v543, 64
    %v577 = vpop.permute.xlu0 %576
    %578 = vrot.lane.b32.xlu0 %v544, 64
    %v579 = vpop.permute.xlu0 %578
    %580 = vrot.lane.b32.xlu0 %v545, 64
    %v581 = vpop.permute.xlu0 %580
    %582 = vrot.lane.b32.xlu0 %v546, 64
    %v583 = vpop.permute.xlu0 %582
    %584 = vrot.lane.b32.xlu0 %v547, 64
    %v585 = vpop.permute.xlu0 %584
    %586 = vrot.lane.b32.xlu0 %v548, 64
    %v587 = vpop.permute.xlu0 %586
    %588 = vrot.lane.b32.xlu0 %v549, 64
    %v589 = vpop.permute.xlu0 %588
    %590 = vrot.lane.b32.xlu0 %v550, 64
    %v591 = vpop.permute.xlu0 %590
    %592 = vrot.lane.b32.xlu0 %v551, 64
    %v593 = vpop.permute.xlu0 %592
    %594 = vrot.lane.b32.xlu0 %v552, 64
    %v595 = vpop.permute.xlu0 %594
    %596 = vrot.lane.b32.xlu0 %v553, 64
    %v597 = vpop.permute.xlu0 %596
    %598 = vrot.lane.b32.xlu0 %v554, 64
    %v599 = vpop.permute.xlu0 %598
    %600 = vrot.lane.b32.xlu0 %v555, 64
    %v601 = vpop.permute.xlu0 %600
    %602 = vrot.lane.b32.xlu0 %v556, 64
    %v603 = vpop.permute.xlu0 %602
    %604 = vrot.lane.b32.xlu0 %v557, 64
    %v605 = vpop.permute.xlu0 %604
    %622 = vst.msk [vmem:[#allocation3 + $0x8] sm:$0xff] %vm299, %v575
    %623 = vst.msk [vmem:[#allocation3 + $0x20] sm:$0xff] %vm299, %v577
    %624 = vst.msk [vmem:[#allocation3 + $0x38] sm:$0xff] %vm299, %v579
    %625 = vst.msk [vmem:[#allocation3 + $0x50] sm:$0xff] %vm299, %v581
    %626 = vst.msk [vmem:[#allocation3 + $0x68] sm:$0xff] %vm299, %v583
    %627 = vst.msk [vmem:[#allocation3 + $0x80] sm:$0xff] %vm299, %v585
    %628 = vst.msk [vmem:[#allocation3 + $0x98] sm:$0xff] %vm299, %v587
    %629 = vst.msk [vmem:[#allocation3 + $0xb0] sm:$0xff] %vm299, %v589
    %630 = vst.msk [vmem:[#allocation3 + $0xc8] sm:$0xff] %vm299, %v591
    %631 = vst.msk [vmem:[#allocation3 + $0xe0] sm:$0xff] %vm299, %v593
    %632 = vst.msk [vmem:[#allocation3 + $0xf8] sm:$0xff] %vm299, %v595
    %633 = vst.msk [vmem:[#allocation3 + $0x110] sm:$0xff] %vm299, %v597
    %634 = vst.msk [vmem:[#allocation3 + $0x128] sm:$0xff] %vm299, %v599
    %635 = vst.msk [vmem:[#allocation3 + $0x140] sm:$0xff] %vm299, %v601
    %636 = vst.msk [vmem:[#allocation3 + $0x158] sm:$0xff] %vm299, %v603
    %637 = vst.msk [vmem:[#allocation3 + $0x170] sm:$0xff] %vm299, %v605
    %v638 = vld [vmem:[%s541 + $0x1] sm:$0xff]
    %v639 = vld [vmem:[%s541 + $0x11] sm:$0xff]
    %v640 = vld [vmem:[%s541 + $0x21] sm:$0xff]
    %v641 = vld [vmem:[%s541 + $0x31] sm:$0xff]
    %v642 = vld [vmem:[%s541 + $0x41] sm:$0xff]
    %v643 = vld [vmem:[%s541 + $0x51] sm:$0xff]
    %v644 = vld [vmem:[%s541 + $0x61] sm:$0xff]
    %v645 = vld [vmem:[%s541 + $0x71] sm:$0xff]
    %v646 = vld [vmem:[%s541 + $0xa1] sm:$0xff]
    %v647 = vld [vmem:[%s541 + $0xb1] sm:$0xff]
    %v648 = vld [vmem:[%s541 + $0xc1] sm:$0xff]
    %v649 = vld [vmem:[%s541 + $0xd1] sm:$0xff]
    %v650 = vld [vmem:[%s541 + $0xe1] sm:$0xff]
    %v651 = vld [vmem:[%s541 + $0xf1] sm:$0xff]
    %v652 = vld [vmem:[%s541 + $0x101] sm:$0xff]
    %v653 = vld [vmem:[%s541 + $0x111] sm:$0xff]
    %670 = vrot.lane.b32.xlu0 %v638, 96
    %v671 = vpop.permute.xlu0 %670
    %672 = vrot.lane.b32.xlu0 %v639, 96
    %v673 = vpop.permute.xlu0 %672
    %674 = vrot.lane.b32.xlu0 %v640, 96
    %v675 = vpop.permute.xlu0 %674
    %676 = vrot.lane.b32.xlu0 %v641, 96
    %v677 = vpop.permute.xlu0 %676
    %678 = vrot.lane.b32.xlu0 %v642, 96
    %v679 = vpop.permute.xlu0 %678
    %680 = vrot.lane.b32.xlu0 %v643, 96
    %v681 = vpop.permute.xlu0 %680
    %682 = vrot.lane.b32.xlu0 %v644, 96
    %v683 = vpop.permute.xlu0 %682
    %684 = vrot.lane.b32.xlu0 %v645, 96
    %v685 = vpop.permute.xlu0 %684
    %686 = vrot.lane.b32.xlu0 %v646, 96
    %v687 = vpop.permute.xlu0 %686
    %688 = vrot.lane.b32.xlu0 %v647, 96
    %v689 = vpop.permute.xlu0 %688
    %690 = vrot.lane.b32.xlu0 %v648, 96
    %v691 = vpop.permute.xlu0 %690
    %692 = vrot.lane.b32.xlu0 %v649, 96
    %v693 = vpop.permute.xlu0 %692
    %694 = vrot.lane.b32.xlu0 %v650, 96
    %v695 = vpop.permute.xlu0 %694
    %696 = vrot.lane.b32.xlu0 %v651, 96
    %v697 = vpop.permute.xlu0 %696
    %698 = vrot.lane.b32.xlu0 %v652, 96
    %v699 = vpop.permute.xlu0 %698
    %700 = vrot.lane.b32.xlu0 %v653, 96
    %v701 = vpop.permute.xlu0 %700
    %718 = vst.msk [vmem:[#allocation3 + $0x8] sm:$0xff] %vm396, %v671
    %719 = vst.msk [vmem:[#allocation3 + $0x20] sm:$0xff] %vm396, %v673
    %720 = vst.msk [vmem:[#allocation3 + $0x38] sm:$0xff] %vm396, %v675
    %721 = vst.msk [vmem:[#allocation3 + $0x50] sm:$0xff] %vm396, %v677
    %722 = vst.msk [vmem:[#allocation3 + $0x68] sm:$0xff] %vm396, %v679
    %723 = vst.msk [vmem:[#allocation3 + $0x80] sm:$0xff] %vm396, %v681
    %724 = vst.msk [vmem:[#allocation3 + $0x98] sm:$0xff] %vm396, %v683
    %725 = vst.msk [vmem:[#allocation3 + $0xb0] sm:$0xff] %vm396, %v685
    %726 = vst.msk [vmem:[#allocation3 + $0xc8] sm:$0xff] %vm396, %v687
    %727 = vst.msk [vmem:[#allocation3 + $0xe0] sm:$0xff] %vm396, %v689
    %728 = vst.msk [vmem:[#allocation3 + $0xf8] sm:$0xff] %vm396, %v691
    %729 = vst.msk [vmem:[#allocation3 + $0x110] sm:$0xff] %vm396, %v693
    %730 = vst.msk [vmem:[#allocation3 + $0x128] sm:$0xff] %vm396, %v695
    %731 = vst.msk [vmem:[#allocation3 + $0x140] sm:$0xff] %vm396, %v697
    %732 = vst.msk [vmem:[#allocation3 + $0x158] sm:$0xff] %vm396, %v699
    %733 = vst.msk [vmem:[#allocation3 + $0x170] sm:$0xff] %vm396, %v701
    %v734 = vld [vmem:[%s541 + $0x2] sm:$0xff]
    %v735 = vld [vmem:[%s541 + $0x12] sm:$0xff]
    %v736 = vld [vmem:[%s541 + $0x22] sm:$0xff]
    %v737 = vld [vmem:[%s541 + $0x32] sm:$0xff]
    %v738 = vld [vmem:[%s541 + $0x42] sm:$0xff]
    %v739 = vld [vmem:[%s541 + $0x52] sm:$0xff]
    %v740 = vld [vmem:[%s541 + $0x62] sm:$0xff]
    %v741 = vld [vmem:[%s541 + $0x72] sm:$0xff]
    %v742 = vld [vmem:[%s541 + $0xa2] sm:$0xff]
    %v743 = vld [vmem:[%s541 + $0xb2] sm:$0xff]
    %v744 = vld [vmem:[%s541 + $0xc2] sm:$0xff]
    %v745 = vld [vmem:[%s541 + $0xd2] sm:$0xff]
    %v746 = vld [vmem:[%s541 + $0xe2] sm:$0xff]
    %v747 = vld [vmem:[%s541 + $0xf2] sm:$0xff]
    %v748 = vld [vmem:[%s541 + $0x102] sm:$0xff]
    %v749 = vld [vmem:[%s541 + $0x112] sm:$0xff]
    %750 = vst.msk [vmem:[#allocation3 + $0x10] sm:$0xff] %vm15, %v734
    %751 = vst.msk [vmem:[#allocation3 + $0x28] sm:$0xff] %vm15, %v735
    %752 = vst.msk [vmem:[#allocation3 + $0x40] sm:$0xff] %vm15, %v736
    %753 = vst.msk [vmem:[#allocation3 + $0x58] sm:$0xff] %vm15, %v737
    %754 = vst.msk [vmem:[#allocation3 + $0x70] sm:$0xff] %vm15, %v738
    %755 = vst.msk [vmem:[#allocation3 + $0x88] sm:$0xff] %vm15, %v739
    %756 = vst.msk [vmem:[#allocation3 + $0xa0] sm:$0xff] %vm15, %v740
    %757 = vst.msk [vmem:[#allocation3 + $0xb8] sm:$0xff] %vm15, %v741
    %758 = vst.msk [vmem:[#allocation3 + $0xd0] sm:$0xff] %vm15, %v742
    %759 = vst.msk [vmem:[#allocation3 + $0xe8] sm:$0xff] %vm15, %v743
    %760 = vst.msk [vmem:[#allocation3 + $0x100] sm:$0xff] %vm15, %v744
    %761 = vst.msk [vmem:[#allocation3 + $0x118] sm:$0xff] %vm15, %v745
    %762 = vst.msk [vmem:[#allocation3 + $0x130] sm:$0xff] %vm15, %v746
    %763 = vst.msk [vmem:[#allocation3 + $0x148] sm:$0xff] %vm15, %v747
    %764 = vst.msk [vmem:[#allocation3 + $0x160] sm:$0xff] %vm15, %v748
    %765 = vst.msk [vmem:[#allocation3 + $0x178] sm:$0xff] %vm15, %v749
    %v766 = vld [vmem:[#allocation3] sm:$0xff]
    %v767 = vld [vmem:[#allocation3 + $0x8] sm:$0xff]
    %v768 = vld [vmem:[#allocation3 + $0x10] sm:$0xff]
    %v769 = vld [vmem:[#allocation3 + $0x18] sm:$0xff]
    %v770 = vld [vmem:[#allocation3 + $0x20] sm:$0xff]
    %v771 = vld [vmem:[#allocation3 + $0x28] sm:$0xff]
    %v772 = vld [vmem:[#allocation3 + $0x30] sm:$0xff]
    %v773 = vld [vmem:[#allocation3 + $0x38] sm:$0xff]
    %v774 = vld [vmem:[#allocation3 + $0x40] sm:$0xff]
    %v775 = vld [vmem:[#allocation3 + $0x48] sm:$0xff]
    %v776 = vld [vmem:[#allocation3 + $0x50] sm:$0xff]
    %v777 = vld [vmem:[#allocation3 + $0x58] sm:$0xff]
    %v778 = vld [vmem:[#allocation3 + $0x60] sm:$0xff]
    %v779 = vld [vmem:[#allocation3 + $0x68] sm:$0xff]
    %v780 = vld [vmem:[#allocation3 + $0x70] sm:$0xff]
    %v781 = vld [vmem:[#allocation3 + $0x78] sm:$0xff]
    %v782 = vld [vmem:[#allocation3 + $0x80] sm:$0xff]
    %v783 = vld [vmem:[#allocation3 + $0x88] sm:$0xff]
    %v784 = vld [vmem:[#allocation3 + $0x90] sm:$0xff]
    %v785 = vld [vmem:[#allocation3 + $0x98] sm:$0xff]
    %v786 = vld [vmem:[#allocation3 + $0xa0] sm:$0xff]
    %v787 = vld [vmem:[#allocation3 + $0xa8] sm:$0xff]
    %v788 = vld [vmem:[#allocation3 + $0xb0] sm:$0xff]
    %v789 = vld [vmem:[#allocation3 + $0xb8] sm:$0xff]
    %v790 = vld [vmem:[#allocation3 + $0xc0] sm:$0xff]
    %v791 = vld [vmem:[#allocation3 + $0xc8] sm:$0xff]
    %v792 = vld [vmem:[#allocation3 + $0xd0] sm:$0xff]
    %v793 = vld [vmem:[#allocation3 + $0xd8] sm:$0xff]
    %v794 = vld [vmem:[#allocation3 + $0xe0] sm:$0xff]
    %v795 = vld [vmem:[#allocation3 + $0xe8] sm:$0xff]
    %v796 = vld [vmem:[#allocation3 + $0xf0] sm:$0xff]
    %v797 = vld [vmem:[#allocation3 + $0xf8] sm:$0xff]
    %v798 = vld [vmem:[#allocation3 + $0x100] sm:$0xff]
    %v799 = vld [vmem:[#allocation3 + $0x108] sm:$0xff]
    %v800 = vld [vmem:[#allocation3 + $0x110] sm:$0xff]
    %v801 = vld [vmem:[#allocation3 + $0x118] sm:$0xff]
    %v802 = vld [vmem:[#allocation3 + $0x120] sm:$0xff]
    %v803 = vld [vmem:[#allocation3 + $0x128] sm:$0xff]
    %v804 = vld [vmem:[#allocation3 + $0x130] sm:$0xff]
    %v805 = vld [vmem:[#allocation3 + $0x138] sm:$0xff]
    %v806 = vld [vmem:[#allocation3 + $0x140] sm:$0xff]
    %v807 = vld [vmem:[#allocation3 + $0x148] sm:$0xff]
    %v808 = vld [vmem:[#allocation3 + $0x150] sm:$0xff]
    %v809 = vld [vmem:[#allocation3 + $0x158] sm:$0xff]
    %v810 = vld [vmem:[#allocation3 + $0x160] sm:$0xff]
    %v811 = vld [vmem:[#allocation3 + $0x168] sm:$0xff]
    %v812 = vld [vmem:[#allocation3 + $0x170] sm:$0xff]
    %v813 = vld [vmem:[#allocation3 + $0x178] sm:$0xff]
    %v814 = vld [vmem:[%s1] sm:$0xff]
    %v815 = vld [vmem:[%s1 + $0x8] sm:$0xff]
    %v816 = vld [vmem:[%s1 + $0x10] sm:$0xff]
    %v817 = vld [vmem:[%s1 + $0x18] sm:$0xff]
    %v818 = vld [vmem:[%s1 + $0x20] sm:$0xff]
    %v819 = vld [vmem:[%s1 + $0x28] sm:$0xff]
    %v820 = vld [vmem:[%s1 + $0x30] sm:$0xff]
    %v821 = vld [vmem:[%s1 + $0x38] sm:$0xff]
    %v822 = vld [vmem:[%s1 + $0x40] sm:$0xff]
    %v823 = vld [vmem:[%s1 + $0x48] sm:$0xff]
    %v824 = vld [vmem:[%s1 + $0x50] sm:$0xff]
    %v825 = vld [vmem:[%s1 + $0x58] sm:$0xff]
    %v826 = vld [vmem:[%s1 + $0x60] sm:$0xff]
    %v827 = vld [vmem:[%s1 + $0x68] sm:$0xff]
    %v828 = vld [vmem:[%s1 + $0x70] sm:$0xff]
    %v829 = vld [vmem:[%s1 + $0x78] sm:$0xff]
    %v830 = vld [vmem:[%s1 + $0x80] sm:$0xff]
    %v831 = vld [vmem:[%s1 + $0x88] sm:$0xff]
    %v832 = vld [vmem:[%s1 + $0x90] sm:$0xff]
    %v833 = vld [vmem:[%s1 + $0x98] sm:$0xff]
    %v834 = vld [vmem:[%s1 + $0xa0] sm:$0xff]
    %v835 = vld [vmem:[%s1 + $0xa8] sm:$0xff]
    %v836 = vld [vmem:[%s1 + $0xb0] sm:$0xff]
    %v837 = vld [vmem:[%s1 + $0xb8] sm:$0xff]
    %v838 = vld [vmem:[%s1 + $0xc0] sm:$0xff]
    %v839 = vld [vmem:[%s1 + $0xc8] sm:$0xff]
    %v840 = vld [vmem:[%s1 + $0xd0] sm:$0xff]
    %v841 = vld [vmem:[%s1 + $0xd8] sm:$0xff]
    %v842 = vld [vmem:[%s1 + $0xe0] sm:$0xff]
    %v843 = vld [vmem:[%s1 + $0xe8] sm:$0xff]
    %v844 = vld [vmem:[%s1 + $0xf0] sm:$0xff]
    %v845 = vld [vmem:[%s1 + $0xf8] sm:$0xff]
    %v846 = vld [vmem:[%s1 + $0x100] sm:$0xff]
    %v847 = vld [vmem:[%s1 + $0x108] sm:$0xff]
    %v848 = vld [vmem:[%s1 + $0x110] sm:$0xff]
    %v849 = vld [vmem:[%s1 + $0x118] sm:$0xff]
    %v850 = vld [vmem:[%s2] sm:$0x1]
    %v852 = vlaneseq
    %v853 = vshrl.u32 %v852, 7
    %v854 = vsub.s32 0, %v853
    %v855 = vrot.slane %v850, %v854
    %v858 = vsel %vm15, %v768, 0
    %v861 = vsel %vm15, %v771, 0
    %v864 = vsel %vm15, %v774, 0
    %v867 = vsel %vm15, %v777, 0
    %v870 = vsel %vm15, %v780, 0
    %v873 = vsel %vm15, %v783, 0
    %v876 = vsel %vm15, %v786, 0
    %v879 = vsel %vm15, %v789, 0
    %v882 = vsel %vm15, %v792, 0
    %v885 = vsel %vm15, %v795, 0
    %v888 = vsel %vm15, %v798, 0
    %v891 = vsel %vm15, %v801, 0
    %v894 = vsel %vm15, %v804, 0
    %v897 = vsel %vm15, %v807, 0
    %v900 = vsel %vm15, %v810, 0
    %v903 = vsel %vm15, %v813, 0
    %905 = vmatprep.subr.mxu0 0.0
    %906 = vmatpush1.msra.mxu0 %v814
    %907 = vmatprep.subr.mxu0 0.0
    %908 = vmatpush1.msra.mxu0 %v815
    %909 = vmatprep.subr.mxu0 0.0
    %910 = vmatpush1.msra.mxu0 %v816
    %911 = vmatprep.subr.mxu0 0.0
    %912 = vmatpush1.msra.mxu0 %v817
    %913 = vmatprep.subr.mxu0 0.0
    %914 = vmatpush1.msra.mxu0 %v818
    %915 = vmatprep.subr.mxu0 0.0
    %916 = vmatpush1.msra.mxu0 %v819
    %917 = vmatprep.subr.mxu0 0.0
    %918 = vmatpush1.msra.mxu0 %v820
    %919 = vmatprep.subr.mxu0 0.0
    %920 = vmatpush1.msra.mxu0 %v821
    %921 = vmatprep.subr.mxu0 0.0
    %922 = vmatpush1.msra.mxu0 %v822
    %923 = vmatprep.subr.mxu0 0.0
    %924 = vmatpush1.msra.mxu0 %v823
    %925 = vmatprep.subr.mxu0 0.0
    %926 = vmatpush1.msra.mxu0 %v824
    %927 = vmatprep.subr.mxu0 0.0
    %928 = vmatpush1.msra.mxu0 %v825
    %929 = vmatprep.subr.mxu0 0.0
    %930 = vmatpush1.msra.mxu0 %v826
    %931 = vmatprep.subr.mxu0 0.0
    %932 = vmatpush1.msra.mxu0 %v827
    %933 = vmatprep.subr.mxu0 0.0
    %934 = vmatpush1.msra.mxu0 %v828
    %935 = vmatprep.subr.mxu0 0.0
    %936 = vmatpush1.msra.mxu0 %v829
    %937 = vmatprep.subr.mxu0 0.0
    %938 = vmatpush1.msra.mxu0 %v830
    %939 = vmatprep.subr.mxu0 0.0
    %940 = vmatpush1.msra.mxu0 %v831
    %941 = vmatprep.subr.mxu0 0.0
    %942 = vmatpush1.msra.mxu0 %v832
    %943 = vmatprep.subr.mxu0 0.0
    %944 = vmatpush1.msra.mxu0 %v833
    %945 = vmatprep.subr.mxu0 0.0
    %946 = vmatpush1.msra.mxu0 %v834
    %947 = vmatprep.subr.mxu0 0.0
    %948 = vmatpush1.msra.mxu0 %v835
    %949 = vmatprep.subr.mxu0 0.0
    %950 = vmatpush1.msra.mxu0 %v836
    %951 = vmatprep.subr.mxu0 0.0
    %952 = vmatpush1.msra.mxu0 %v837
    %953 = vmatprep.subr.mxu0 0.0
    %954 = vmatpush1.msra.mxu0 %v838
    %955 = vmatprep.subr.mxu0 0.0
    %956 = vmatpush1.msra.mxu0 %v839
    %957 = vmatprep.subr.mxu0 0.0
    %958 = vmatpush1.msra.mxu0 %v840
    %959 = vmatprep.subr.mxu0 0.0
    %960 = vmatpush1.msra.mxu0 %v841
    %961 = vmatprep.subr.mxu0 0.0
    %962 = vmatpush1.msra.mxu0 %v842
    %963 = vmatprep.subr.mxu0 0.0
    %964 = vmatpush1.msra.mxu0 %v843
    %965 = vmatprep.subr.mxu0 0.0
    %966 = vmatpush1.msra.mxu0 %v844
    %967 = vmatprep.subr.mxu0 0.0
    %968 = vmatpush1.msra.mxu0 %v845
    %969 = vmatprep.mubr.f32.mxu0 %v767
    %970 = vmatmul.mubr.f32.gmra.mrb[0].mxu0 %v766
    %v971 = vpop.f32.mrb[0].mxu0
    %v972 = vadd.f32 %v855, %v971
    %v973 = vpop.f32.mrb[0].mxu0
    %974 = vmatprep.mubr.f32.mxu0 %v770
    %975 = vmatmul.mubr.f32.gmra.mrb[0].mxu0 %v769
    %v976 = vpop.f32.mrb[0].mxu0
    %v977 = vadd.f32 %v855, %v976
    %v978 = vpop.f32.mrb[0].mxu0
    %979 = vmatprep.mubr.f32.mxu0 %v773
    %980 = vmatmul.mubr.f32.gmra.mrb[0].mxu0 %v772
    %v981 = vpop.f32.mrb[0].mxu0
    %v982 = vadd.f32 %v855, %v981
    %v983 = vpop.f32.mrb[0].mxu0
    %984 = vmatprep.mubr.f32.mxu0 %v776
    %985 = vmatmul.mubr.f32.gmra.mrb[0].mxu0 %v775
    %v986 = vpop.f32.mrb[0].mxu0
    %v987 = vadd.f32 %v855, %v986
    %v988 = vpop.f32.mrb[0].mxu0
    %989 = vmatprep.mubr.f32.mxu0 %v779
    %990 = vmatmul.mubr.f32.gmra.mrb[0].mxu0 %v778
    %v991 = vpop.f32.mrb[0].mxu0
    %v992 = vadd.f32 %v855, %v991
    %v993 = vpop.f32.mrb[0].mxu0
    %994 = vmatprep.mubr.f32.mxu0 %v782
    %995 = vmatmul.mubr.f32.gmra.mrb[0].mxu0 %v781
    %v996 = vpop.f32.mrb[0].mxu0
    %v997 = vadd.f32 %v855, %v996
    %v998 = vpop.f32.mrb[0].mxu0
    %999 = vmatprep.mubr.f32.mxu0 %v785
    %1000 = vmatmul.mubr.f32.gmra.mrb[0].mxu0 %v784
    %v1001 = vpop.f32.mrb[0].mxu0
    %v1002 = vadd.f32 %v855, %v1001
    %v1003 = vpop.f32.mrb[0].mxu0
    %1004 = vmatprep.mubr.f32.mxu0 %v788
    %1005 = vmatmul.mubr.f32.gmra.mrb[0].mxu0 %v787
    %v1006 = vpop.f32.mrb[0].mxu0
    %v1007 = vadd.f32 %v855, %v1006
    %v1008 = vpop.f32.mrb[0].mxu0
    %1009 = vmatprep.mubr.f32.mxu0 %v791
    %1010 = vmatmul.mubr.f32.gmra.mrb[0].mxu0 %v790
    %v1011 = vpop.f32.mrb[0].mxu0
    %v1012 = vadd.f32 %v855, %v1011
    %v1013 = vpop.f32.mrb[0].mxu0
    %1014 = vmatprep.mubr.f32.mxu0 %v794
    %1015 = vmatmul.mubr.f32.gmra.mrb[0].mxu0 %v793
    %v1016 = vpop.f32.mrb[0].mxu0
    %v1017 = vadd.f32 %v855, %v1016
    %v1018 = vpop.f32.mrb[0].mxu0
    %1019 = vmatprep.mubr.f32.mxu0 %v797
    %1020 = vmatmul.mubr.f32.gmra.mrb[0].mxu0 %v796
    %v1021 = vpop.f32.mrb[0].mxu0
    %v1022 = vadd.f32 %v855, %v1021
    %v1023 = vpop.f32.mrb[0].mxu0
    %1024 = vmatprep.mubr.f32.mxu0 %v800
    %1025 = vmatmul.mubr.f32.gmra.mrb[0].mxu0 %v799
    %v1026 = vpop.f32.mrb[0].mxu0
    %v1027 = vadd.f32 %v855, %v1026
    %v1028 = vpop.f32.mrb[0].mxu0
    %1029 = vmatprep.mubr.f32.mxu0 %v803
    %1030 = vmatmul.mubr.f32.gmra.mrb[0].mxu0 %v802
    %v1031 = vpop.f32.mrb[0].mxu0
    %v1032 = vadd.f32 %v855, %v1031
    %v1033 = vpop.f32.mrb[0].mxu0
    %1034 = vmatprep.mubr.f32.mxu0 %v806
    %1035 = vmatmul.mubr.f32.gmra.mrb[0].mxu0 %v805
    %v1036 = vpop.f32.mrb[0].mxu0
    %v1037 = vadd.f32 %v855, %v1036
    %v1038 = vpop.f32.mrb[0].mxu0
    %1039 = vmatprep.mubr.f32.mxu0 %v809
    %1040 = vmatmul.mubr.f32.gmra.mrb[0].mxu0 %v808
    %v1041 = vpop.f32.mrb[0].mxu0
    %v1042 = vadd.f32 %v855, %v1041
    %v1043 = vpop.f32.mrb[0].mxu0
    %1044 = vmatprep.mubr.f32.mxu0 %v812
    %1045 = vmatmul.mubr.f32.gmra.mrb[0].mxu0 %v811
    %v1046 = vpop.f32.mrb[0].mxu0
    %v1047 = vadd.f32 %v855, %v1046
    %v1048 = vpop.f32.mrb[0].mxu0
    %1049 = vdwg.mxu0
    %1050 = vmatprep.subr.mxu0 0.0
    %1051 = vmatpush1.msra.mxu0 %v846
    %1052 = vmatprep.subr.mxu0 0.0
    %1053 = vmatpush1.msra.mxu0 %v847
    %1054 = vmatprep.subr.mxu0 0.0
    %1055 = vmatpush1.msra.mxu0 %v848
    %1056 = vmatprep.subr.mxu0 0.0
    %1057 = vmatpush1.msra.mxu0 %v849
    %1058 = vmatprep.subr.mxu0 0.0
    %1059 = vmatpush1.msra.mxu0 0.0
    %1060 = vmatprep.subr.mxu0 0.0
    %1061 = vmatpush1.msra.mxu0 0.0
    %1062 = vmatprep.subr.mxu0 0.0
    %1063 = vmatpush1.msra.mxu0 0.0
    %1064 = vmatprep.subr.mxu0 0.0
    %1065 = vmatpush1.msra.mxu0 0.0
    %1066 = vmatprep.subr.mxu0 0.0
    %1067 = vmatpush1.msra.mxu0 0.0
    %1068 = vmatprep.subr.mxu0 0.0
    %1069 = vmatpush1.msra.mxu0 0.0
    %1070 = vmatprep.subr.mxu0 0.0
    %1071 = vmatpush1.msra.mxu0 0.0
    %1072 = vmatprep.subr.mxu0 0.0
    %1073 = vmatpush1.msra.mxu0 0.0
    %1074 = vmatprep.subr.mxu0 0.0
    %1075 = vmatpush1.msra.mxu0 0.0
    %1076 = vmatprep.subr.mxu0 0.0
    %1077 = vmatpush1.msra.mxu0 0.0
    %1078 = vmatprep.subr.mxu0 0.0
    %1079 = vmatpush1.msra.mxu0 0.0
    %1080 = vmatprep.subr.mxu0 0.0
    %1081 = vmatpush1.msra.mxu0 0.0
    %1082 = vmatprep.subr.mxu0 0.0
    %1083 = vmatpush1.msra.mxu0 0.0
    %1084 = vmatprep.subr.mxu0 0.0
    %1085 = vmatpush1.msra.mxu0 0.0
    %1086 = vmatprep.subr.mxu0 0.0
    %1087 = vmatpush1.msra.mxu0 0.0
    %1088 = vmatprep.subr.mxu0 0.0
    %1089 = vmatpush1.msra.mxu0 0.0
    %1090 = vmatprep.subr.mxu0 0.0
    %1091 = vmatpush1.msra.mxu0 0.0
    %1092 = vmatprep.subr.mxu0 0.0
    %1093 = vmatpush1.msra.mxu0 0.0
    %1094 = vmatprep.subr.mxu0 0.0
    %1095 = vmatpush1.msra.mxu0 0.0
    %1096 = vmatprep.subr.mxu0 0.0
    %1097 = vmatpush1.msra.mxu0 0.0
    %1098 = vmatprep.subr.mxu0 0.0
    %1099 = vmatpush1.msra.mxu0 0.0
    %1100 = vmatprep.subr.mxu0 0.0
    %1101 = vmatpush1.msra.mxu0 0.0
    %1102 = vmatprep.subr.mxu0 0.0
    %1103 = vmatpush1.msra.mxu0 0.0
    %1104 = vmatprep.subr.mxu0 0.0
    %1105 = vmatpush1.msra.mxu0 0.0
    %1106 = vmatprep.subr.mxu0 0.0
    %1107 = vmatpush1.msra.mxu0 0.0
    %1108 = vmatprep.subr.mxu0 0.0
    %1109 = vmatpush1.msra.mxu0 0.0
    %1110 = vmatprep.subr.mxu0 0.0
    %1111 = vmatpush1.msra.mxu0 0.0
    %1112 = vmatprep.subr.mxu0 0.0
    %1113 = vmatpush1.msra.mxu0 0.0
    %1114 = vmatprep.mubr.f32.mxu0 0.0
    %1115 = vmatmul.mubr.f32.gmra.mrb[0].mxu0 %v858
    %v1116 = vpop.f32.mrb[0].mxu0
    %v1117 = vadd.f32 %v972, %v1116
    %v1118 = vpop.f32.mrb[0].mxu0
    %1119 = vmatprep.mubr.f32.mxu0 0.0
    %1120 = vmatmul.mubr.f32.gmra.mrb[0].mxu0 %v861
    %v1121 = vpop.f32.mrb[0].mxu0
    %v1122 = vadd.f32 %v977, %v1121
    %v1123 = vpop.f32.mrb[0].mxu0
    %1124 = vmatprep.mubr.f32.mxu0 0.0
    %1125 = vmatmul.mubr.f32.gmra.mrb[0].mxu0 %v864
    %v1126 = vpop.f32.mrb[0].mxu0
    %v1127 = vadd.f32 %v982, %v1126
    %v1128 = vpop.f32.mrb[0].mxu0
    %1129 = vmatprep.mubr.f32.mxu0 0.0
    %1130 = vmatmul.mubr.f32.gmra.mrb[0].mxu0 %v867
    %v1131 = vpop.f32.mrb[0].mxu0
    %v1132 = vadd.f32 %v987, %v1131
    %v1133 = vpop.f32.mrb[0].mxu0
    %1134 = vmatprep.mubr.f32.mxu0 0.0
    %1135 = vmatmul.mubr.f32.gmra.mrb[0].mxu0 %v870
    %v1136 = vpop.f32.mrb[0].mxu0
    %v1137 = vadd.f32 %v992, %v1136
    %v1138 = vpop.f32.mrb[0].mxu0
    %1139 = vmatprep.mubr.f32.mxu0 0.0
    %1140 = vmatmul.mubr.f32.gmra.mrb[0].mxu0 %v873
    %v1141 = vpop.f32.mrb[0].mxu0
    %v1142 = vadd.f32 %v997, %v1141
    %v1143 = vpop.f32.mrb[0].mxu0
    %1144 = vmatprep.mubr.f32.mxu0 0.0
    %1145 = vmatmul.mubr.f32.gmra.mrb[0].mxu0 %v876
    %v1146 = vpop.f32.mrb[0].mxu0
    %v1147 = vadd.f32 %v1002, %v1146
    %v1148 = vpop.f32.mrb[0].mxu0
    %1149 = vmatprep.mubr.f32.mxu0 0.0
    %1150 = vmatmul.mubr.f32.gmra.mrb[0].mxu0 %v879
    %v1151 = vpop.f32.mrb[0].mxu0
    %v1152 = vadd.f32 %v1007, %v1151
    %v1153 = vpop.f32.mrb[0].mxu0
    %1154 = vmatprep.mubr.f32.mxu0 0.0
    %1155 = vmatmul.mubr.f32.gmra.mrb[0].mxu0 %v882
    %v1156 = vpop.f32.mrb[0].mxu0
    %v1157 = vadd.f32 %v1012, %v1156
    %v1158 = vpop.f32.mrb[0].mxu0
    %1159 = vmatprep.mubr.f32.mxu0 0.0
    %1160 = vmatmul.mubr.f32.gmra.mrb[0].mxu0 %v885
    %v1161 = vpop.f32.mrb[0].mxu0
    %v1162 = vadd.f32 %v1017, %v1161
    %v1163 = vpop.f32.mrb[0].mxu0
    %1164 = vmatprep.mubr.f32.mxu0 0.0
    %1165 = vmatmul.mubr.f32.gmra.mrb[0].mxu0 %v888
    %v1166 = vpop.f32.mrb[0].mxu0
    %v1167 = vadd.f32 %v1022, %v1166
    %v1168 = vpop.f32.mrb[0].mxu0
    %1169 = vmatprep.mubr.f32.mxu0 0.0
    %1170 = vmatmul.mubr.f32.gmra.mrb[0].mxu0 %v891
    %v1171 = vpop.f32.mrb[0].mxu0
    %v1172 = vadd.f32 %v1027, %v1171
    %v1173 = vpop.f32.mrb[0].mxu0
    %1174 = vmatprep.mubr.f32.mxu0 0.0
    %1175 = vmatmul.mubr.f32.gmra.mrb[0].mxu0 %v894
    %v1176 = vpop.f32.mrb[0].mxu0
    %v1177 = vadd.f32 %v1032, %v1176
    %v1178 = vpop.f32.mrb[0].mxu0
    %1179 = vmatprep.mubr.f32.mxu0 0.0
    %1180 = vmatmul.mubr.f32.gmra.mrb[0].mxu0 %v897
    %v1181 = vpop.f32.mrb[0].mxu0
    %v1182 = vadd.f32 %v1037, %v1181
    %v1183 = vpop.f32.mrb[0].mxu0
    %1184 = vmatprep.mubr.f32.mxu0 0.0
    %1185 = vmatmul.mubr.f32.gmra.mrb[0].mxu0 %v900
    %v1186 = vpop.f32.mrb[0].mxu0
    %v1187 = vadd.f32 %v1042, %v1186
    %v1188 = vpop.f32.mrb[0].mxu0
    %1189 = vmatprep.mubr.f32.mxu0 0.0
    %1190 = vmatmul.mubr.f32.gmra.mrb[0].mxu0 %v903
    %v1191 = vpop.f32.mrb[0].mxu0
    %v1192 = vadd.f32 %v1047, %v1191
    %v1193 = vpop.f32.mrb[0].mxu0
    %1194 = vdwg.mxu0
    %v1195 = vmax.f32 %v1117, 0.0
    %v1196 = vmax.f32 %v1122, 0.0
    %v1197 = vmax.f32 %v1127, 0.0
    %v1198 = vmax.f32 %v1132, 0.0
    %v1199 = vmax.f32 %v1137, 0.0
    %v1200 = vmax.f32 %v1142, 0.0
    %v1201 = vmax.f32 %v1147, 0.0
    %v1202 = vmax.f32 %v1152, 0.0
    %v1203 = vmax.f32 %v1157, 0.0
    %v1204 = vmax.f32 %v1162, 0.0
    %v1205 = vmax.f32 %v1167, 0.0
    %v1206 = vmax.f32 %v1172, 0.0
    %v1207 = vmax.f32 %v1177, 0.0
    %v1208 = vmax.f32 %v1182, 0.0
    %v1209 = vmax.f32 %v1187, 0.0
    %v1210 = vmax.f32 %v1192, 0.0
    %1211 = vst.msk [vmem:[%s73 + $0x1] sm:$0xff] %vm15, %v1195
    %1212 = vst.msk [vmem:[%s73 + $0x11] sm:$0xff] %vm15, %v1196
    %1213 = vst.msk [vmem:[%s73 + $0x21] sm:$0xff] %vm15, %v1197
    %1214 = vst.msk [vmem:[%s73 + $0x31] sm:$0xff] %vm15, %v1198
    %1215 = vst.msk [vmem:[%s73 + $0x41] sm:$0xff] %vm15, %v1199
    %1216 = vst.msk [vmem:[%s73 + $0x51] sm:$0xff] %vm15, %v1200
    %1217 = vst.msk [vmem:[%s73 + $0x61] sm:$0xff] %vm15, %v1201
    %1218 = vst.msk [vmem:[%s73 + $0x71] sm:$0xff] %vm15, %v1202
    %1219 = vst.msk [vmem:[%s73 + $0xa1] sm:$0xff] %vm15, %v1203
    %1220 = vst.msk [vmem:[%s73 + $0xb1] sm:$0xff] %vm15, %v1204
    %1221 = vst.msk [vmem:[%s73 + $0xc1] sm:$0xff] %vm15, %v1205
    %1222 = vst.msk [vmem:[%s73 + $0xd1] sm:$0xff] %vm15, %v1206
    %1223 = vst.msk [vmem:[%s73 + $0xe1] sm:$0xff] %vm15, %v1207
    %1224 = vst.msk [vmem:[%s73 + $0xf1] sm:$0xff] %vm15, %v1208
    %1225 = vst.msk [vmem:[%s73 + $0x101] sm:$0xff] %vm15, %v1209
    %1226 = vst.msk [vmem:[%s73 + $0x111] sm:$0xff] %vm15, %v1210
    %v1227 = vld [vmem:[%s73 + $0x1] sm:$0xff]
    %v1228 = vld [vmem:[%s73 + $0x11] sm:$0xff]
    %v1229 = vld [vmem:[%s73 + $0x21] sm:$0xff]
    %v1230 = vld [vmem:[%s73 + $0x31] sm:$0xff]
    %v1231 = vld [vmem:[%s73 + $0x41] sm:$0xff]
    %v1232 = vld [vmem:[%s73 + $0x51] sm:$0xff]
    %v1233 = vld [vmem:[%s73 + $0x61] sm:$0xff]
    %v1234 = vld [vmem:[%s73 + $0x71] sm:$0xff]
    %v1235 = vld [vmem:[%s73 + $0xa1] sm:$0xff]
    %v1236 = vld [vmem:[%s73 + $0xb1] sm:$0xff]
    %v1237 = vld [vmem:[%s73 + $0xc1] sm:$0xff]
    %v1238 = vld [vmem:[%s73 + $0xd1] sm:$0xff]
    %v1239 = vld [vmem:[%s73 + $0xe1] sm:$0xff]
    %v1240 = vld [vmem:[%s73 + $0xf1] sm:$0xff]
    %v1241 = vld [vmem:[%s73 + $0x101] sm:$0xff]
    %v1242 = vld [vmem:[%s73 + $0x111] sm:$0xff]
    %v1243 = vld [vmem:[#allocation2] sm:$0xff]
    %v1244 = vld [vmem:[#allocation2 + $0x10] sm:$0xff]
    %v1245 = vld [vmem:[#allocation2 + $0x20] sm:$0xff]
    %v1246 = vld [vmem:[#allocation2 + $0x30] sm:$0xff]
    %v1247 = vld [vmem:[#allocation2 + $0x40] sm:$0xff]
    %v1248 = vld [vmem:[#allocation2 + $0x50] sm:$0xff]
    %v1249 = vld [vmem:[#allocation2 + $0x60] sm:$0xff]
    %v1250 = vld [vmem:[#allocation2 + $0x70] sm:$0xff]
    %v1251 = vld [vmem:[#allocation2 + $0xa0] sm:$0xff]
    %v1252 = vld [vmem:[#allocation2 + $0xb0] sm:$0xff]
    %v1253 = vld [vmem:[#allocation2 + $0xc0] sm:$0xff]
    %v1254 = vld [vmem:[#allocation2 + $0xd0] sm:$0xff]
    %v1255 = vld [vmem:[#allocation2 + $0xe0] sm:$0xff]
    %v1256 = vld [vmem:[#allocation2 + $0xf0] sm:$0xff]
    %v1257 = vld [vmem:[#allocation2 + $0x100] sm:$0xff]
    %v1258 = vld [vmem:[#allocation2 + $0x110] sm:$0xff]
    %1259 = vst.msk [vmem:[#allocation3] sm:$0xff] %vm15, %v1243
    %1260 = vst.msk [vmem:[#allocation3 + $0x18] sm:$0xff] %vm15, %v1244
    %1261 = vst.msk [vmem:[#allocation3 + $0x30] sm:$0xff] %vm15, %v1245
    %1262 = vst.msk [vmem:[#allocation3 + $0x48] sm:$0xff] %vm15, %v1246
    %1263 = vst.msk [vmem:[#allocation3 + $0x60] sm:$0xff] %vm15, %v1247
    %1264 = vst.msk [vmem:[#allocation3 + $0x78] sm:$0xff] %vm15, %v1248
    %1265 = vst.msk [vmem:[#allocation3 + $0x90] sm:$0xff] %vm15, %v1249
    %1266 = vst.msk [vmem:[#allocation3 + $0xa8] sm:$0xff] %vm15, %v1250
    %1267 = vst.msk [vmem:[#allocation3 + $0xc0] sm:$0xff] %vm15, %v1251
    %1268 = vst.msk [vmem:[#allocation3 + $0xd8] sm:$0xff] %vm15, %v1252
    %1269 = vst.msk [vmem:[#allocation3 + $0xf0] sm:$0xff] %vm15, %v1253
    %1270 = vst.msk [vmem:[#allocation3 + $0x108] sm:$0xff] %vm15, %v1254
    %1271 = vst.msk [vmem:[#allocation3 + $0x120] sm:$0xff] %vm15, %v1255
    %1272 = vst.msk [vmem:[#allocation3 + $0x138] sm:$0xff] %vm15, %v1256
    %1273 = vst.msk [vmem:[#allocation3 + $0x150] sm:$0xff] %vm15, %v1257
    %1274 = vst.msk [vmem:[#allocation3 + $0x168] sm:$0xff] %vm15, %v1258
    %v1275 = vld [vmem:[#allocation2 + $0x1] sm:$0xff]
    %v1276 = vld [vmem:[#allocation2 + $0x11] sm:$0xff]
    %v1277 = vld [vmem:[#allocation2 + $0x21] sm:$0xff]
    %v1278 = vld [vmem:[#allocation2 + $0x31] sm:$0xff]
    %v1279 = vld [vmem:[#allocation2 + $0x41] sm:$0xff]
    %v1280 = vld [vmem:[#allocation2 + $0x51] sm:$0xff]
    %v1281 = vld [vmem:[#allocation2 + $0x61] sm:$0xff]
    %v1282 = vld [vmem:[#allocation2 + $0x71] sm:$0xff]
    %v1283 = vld [vmem:[#allocation2 + $0xa1] sm:$0xff]
    %v1284 = vld [vmem:[#allocation2 + $0xb1] sm:$0xff]
    %v1285 = vld [vmem:[#allocation2 + $0xc1] sm:$0xff]
    %v1286 = vld [vmem:[#allocation2 + $0xd1] sm:$0xff]
    %v1287 = vld [vmem:[#allocation2 + $0xe1] sm:$0xff]
    %v1288 = vld [vmem:[#allocation2 + $0xf1] sm:$0xff]
    %v1289 = vld [vmem:[#allocation2 + $0x101] sm:$0xff]
    %v1290 = vld [vmem:[#allocation2 + $0x111] sm:$0xff]
    %1307 = vrot.lane.b32.xlu0 %v1275, 32
    %v1308 = vpop.permute.xlu0 %1307
    %1309 = vrot.lane.b32.xlu0 %v1276, 32
    %v1310 = vpop.permute.xlu0 %1309
    %1311 = vrot.lane.b32.xlu0 %v1277, 32
    %v1312 = vpop.permute.xlu0 %1311
    %1313 = vrot.lane.b32.xlu0 %v1278, 32
    %v1314 = vpop.permute.xlu0 %1313
    %1315 = vrot.lane.b32.xlu0 %v1279, 32
    %v1316 = vpop.permute.xlu0 %1315
    %1317 = vrot.lane.b32.xlu0 %v1280, 32
    %v1318 = vpop.permute.xlu0 %1317
    %1319 = vrot.lane.b32.xlu0 %v1281, 32
    %v1320 = vpop.permute.xlu0 %1319
    %1321 = vrot.lane.b32.xlu0 %v1282, 32
    %v1322 = vpop.permute.xlu0 %1321
    %1323 = vrot.lane.b32.xlu0 %v1283, 32
    %v1324 = vpop.permute.xlu0 %1323
    %1325 = vrot.lane.b32.xlu0 %v1284, 32
    %v1326 = vpop.permute.xlu0 %1325
    %1327 = vrot.lane.b32.xlu0 %v1285, 32
    %v1328 = vpop.permute.xlu0 %1327
    %1329 = vrot.lane.b32.xlu0 %v1286, 32
    %v1330 = vpop.permute.xlu0 %1329
    %1331 = vrot.lane.b32.xlu0 %v1287, 32
    %v1332 = vpop.permute.xlu0 %1331
    %1333 = vrot.lane.b32.xlu0 %v1288, 32
    %v1334 = vpop.permute.xlu0 %1333
    %1335 = vrot.lane.b32.xlu0 %v1289, 32
    %v1336 = vpop.permute.xlu0 %1335
    %1337 = vrot.lane.b32.xlu0 %v1290, 32
    %v1338 = vpop.permute.xlu0 %1337
    %1355 = vst.msk [vmem:[#allocation3] sm:$0xff] %vm202, %v1308
    %1356 = vst.msk [vmem:[#allocation3 + $0x18] sm:$0xff] %vm202, %v1310
    %1357 = vst.msk [vmem:[#allocation3 + $0x30] sm:$0xff] %vm202, %v1312
    %1358 = vst.msk [vmem:[#allocation3 + $0x48] sm:$0xff] %vm202, %v1314
    %1359 = vst.msk [vmem:[#allocation3 + $0x60] sm:$0xff] %vm202, %v1316
    %1360 = vst.msk [vmem:[#allocation3 + $0x78] sm:$0xff] %vm202, %v1318
    %1361 = vst.msk [vmem:[#allocation3 + $0x90] sm:$0xff] %vm202, %v1320
    %1362 = vst.msk [vmem:[#allocation3 + $0xa8] sm:$0xff] %vm202, %v1322
    %1363 = vst.msk [vmem:[#allocation3 + $0xc0] sm:$0xff] %vm202, %v1324
    %1364 = vst.msk [vmem:[#allocation3 + $0xd8] sm:$0xff] %vm202, %v1326
    %1365 = vst.msk [vmem:[#allocation3 + $0xf0] sm:$0xff] %vm202, %v1328
    %1366 = vst.msk [vmem:[#allocation3 + $0x108] sm:$0xff] %vm202, %v1330
    %1367 = vst.msk [vmem:[#allocation3 + $0x120] sm:$0xff] %vm202, %v1332
    %1368 = vst.msk [vmem:[#allocation3 + $0x138] sm:$0xff] %vm202, %v1334
    %1369 = vst.msk [vmem:[#allocation3 + $0x150] sm:$0xff] %vm202, %v1336
    %1370 = vst.msk [vmem:[#allocation3 + $0x168] sm:$0xff] %vm202, %v1338
    %v1371 = vld [vmem:[#allocation2 + $0x2] sm:$0xff]
    %v1372 = vld [vmem:[#allocation2 + $0x12] sm:$0xff]
    %v1373 = vld [vmem:[#allocation2 + $0x22] sm:$0xff]
    %v1374 = vld [vmem:[#allocation2 + $0x32] sm:$0xff]
    %v1375 = vld [vmem:[#allocation2 + $0x42] sm:$0xff]
    %v1376 = vld [vmem:[#allocation2 + $0x52] sm:$0xff]
    %v1377 = vld [vmem:[#allocation2 + $0x62] sm:$0xff]
    %v1378 = vld [vmem:[#allocation2 + $0x72] sm:$0xff]
    %v1379 = vld [vmem:[#allocation2 + $0xa2] sm:$0xff]
    %v1380 = vld [vmem:[#allocation2 + $0xb2] sm:$0xff]
    %v1381 = vld [vmem:[#allocation2 + $0xc2] sm:$0xff]
    %v1382 = vld [vmem:[#allocation2 + $0xd2] sm:$0xff]
    %v1383 = vld [vmem:[#allocation2 + $0xe2] sm:$0xff]
    %v1384 = vld [vmem:[#allocation2 + $0xf2] sm:$0xff]
    %v1385 = vld [vmem:[#allocation2 + $0x102] sm:$0xff]
    %v1386 = vld [vmem:[#allocation2 + $0x112] sm:$0xff]
    %1403 = vrot.lane.b32.xlu0 %v1371, 64
    %v1404 = vpop.permute.xlu0 %1403
    %1405 = vrot.lane.b32.xlu0 %v1372, 64
    %v1406 = vpop.permute.xlu0 %1405
    %1407 = vrot.lane.b32.xlu0 %v1373, 64
    %v1408 = vpop.permute.xlu0 %1407
    %1409 = vrot.lane.b32.xlu0 %v1374, 64
    %v1410 = vpop.permute.xlu0 %1409
    %1411 = vrot.lane.b32.xlu0 %v1375, 64
    %v1412 = vpop.permute.xlu0 %1411
    %1413 = vrot.lane.b32.xlu0 %v1376, 64
    %v1414 = vpop.permute.xlu0 %1413
    %1415 = vrot.lane.b32.xlu0 %v1377, 64
    %v1416 = vpop.permute.xlu0 %1415
    %1417 = vrot.lane.b32.xlu0 %v1378, 64
    %v1418 = vpop.permute.xlu0 %1417
    %1419 = vrot.lane.b32.xlu0 %v1379, 64
    %v1420 = vpop.permute.xlu0 %1419
    %1421 = vrot.lane.b32.xlu0 %v1380, 64
    %v1422 = vpop.permute.xlu0 %1421
    %1423 = vrot.lane.b32.xlu0 %v1381, 64
    %v1424 = vpop.permute.xlu0 %1423
    %1425 = vrot.lane.b32.xlu0 %v1382, 64
    %v1426 = vpop.permute.xlu0 %1425
    %1427 = vrot.lane.b32.xlu0 %v1383, 64
    %v1428 = vpop.permute.xlu0 %1427
    %1429 = vrot.lane.b32.xlu0 %v1384, 64
    %v1430 = vpop.permute.xlu0 %1429
    %1431 = vrot.lane.b32.xlu0 %v1385, 64
    %v1432 = vpop.permute.xlu0 %1431
    %1433 = vrot.lane.b32.xlu0 %v1386, 64
    %v1434 = vpop.permute.xlu0 %1433
    %1451 = vst.msk [vmem:[#allocation3] sm:$0xff] %vm299, %v1404
    %1452 = vst.msk [vmem:[#allocation3 + $0x18] sm:$0xff] %vm299, %v1406
    %1453 = vst.msk [vmem:[#allocation3 + $0x30] sm:$0xff] %vm299, %v1408
    %1454 = vst.msk [vmem:[#allocation3 + $0x48] sm:$0xff] %vm299, %v1410
    %1455 = vst.msk [vmem:[#allocation3 + $0x60] sm:$0xff] %vm299, %v1412
    %1456 = vst.msk [vmem:[#allocation3 + $0x78] sm:$0xff] %vm299, %v1414
    %1457 = vst.msk [vmem:[#allocation3 + $0x90] sm:$0xff] %vm299, %v1416
    %1458 = vst.msk [vmem:[#allocation3 + $0xa8] sm:$0xff] %vm299, %v1418
    %1459 = vst.msk [vmem:[#allocation3 + $0xc0] sm:$0xff] %vm299, %v1420
    %1460 = vst.msk [vmem:[#allocation3 + $0xd8] sm:$0xff] %vm299, %v1422
    %1461 = vst.msk [vmem:[#allocation3 + $0xf0] sm:$0xff] %vm299, %v1424
    %1462 = vst.msk [vmem:[#allocation3 + $0x108] sm:$0xff] %vm299, %v1426
    %1463 = vst.msk [vmem:[#allocation3 + $0x120] sm:$0xff] %vm299, %v1428
    %1464 = vst.msk [vmem:[#allocation3 + $0x138] sm:$0xff] %vm299, %v1430
    %1465 = vst.msk [vmem:[#allocation3 + $0x150] sm:$0xff] %vm299, %v1432
    %1466 = vst.msk [vmem:[#allocation3 + $0x168] sm:$0xff] %vm299, %v1434
    %v1467 = vld [vmem:[%s73] sm:$0xff]
    %v1468 = vld [vmem:[%s73 + $0x10] sm:$0xff]
    %v1469 = vld [vmem:[%s73 + $0x20] sm:$0xff]
    %v1470 = vld [vmem:[%s73 + $0x30] sm:$0xff]
    %v1471 = vld [vmem:[%s73 + $0x40] sm:$0xff]
    %v1472 = vld [vmem:[%s73 + $0x50] sm:$0xff]
    %v1473 = vld [vmem:[%s73 + $0x60] sm:$0xff]
    %v1474 = vld [vmem:[%s73 + $0x70] sm:$0xff]
    %v1475 = vld [vmem:[%s73 + $0xa0] sm:$0xff]
    %v1476 = vld [vmem:[%s73 + $0xb0] sm:$0xff]
    %v1477 = vld [vmem:[%s73 + $0xc0] sm:$0xff]
    %v1478 = vld [vmem:[%s73 + $0xd0] sm:$0xff]
    %v1479 = vld [vmem:[%s73 + $0xe0] sm:$0xff]
    %v1480 = vld [vmem:[%s73 + $0xf0] sm:$0xff]
    %v1481 = vld [vmem:[%s73 + $0x100] sm:$0xff]
    %v1482 = vld [vmem:[%s73 + $0x110] sm:$0xff]
    %1499 = vrot.lane.b32.xlu0 %v1467, 96
    %v1500 = vpop.permute.xlu0 %1499
    %1501 = vrot.lane.b32.xlu0 %v1468, 96
    %v1502 = vpop.permute.xlu0 %1501
    %1503 = vrot.lane.b32.xlu0 %v1469, 96
    %v1504 = vpop.permute.xlu0 %1503
    %1505 = vrot.lane.b32.xlu0 %v1470, 96
    %v1506 = vpop.permute.xlu0 %1505
    %1507 = vrot.lane.b32.xlu0 %v1471, 96
    %v1508 = vpop.permute.xlu0 %1507
    %1509 = vrot.lane.b32.xlu0 %v1472, 96
    %v1510 = vpop.permute.xlu0 %1509
    %1511 = vrot.lane.b32.xlu0 %v1473, 96
    %v1512 = vpop.permute.xlu0 %1511
    %1513 = vrot.lane.b32.xlu0 %v1474, 96
    %v1514 = vpop.permute.xlu0 %1513
    %1515 = vrot.lane.b32.xlu0 %v1475, 96
    %v1516 = vpop.permute.xlu0 %1515
    %1517 = vrot.lane.b32.xlu0 %v1476, 96
    %v1518 = vpop.permute.xlu0 %1517
    %1519 = vrot.lane.b32.xlu0 %v1477, 96
    %v1520 = vpop.permute.xlu0 %1519
    %1521 = vrot.lane.b32.xlu0 %v1478, 96
    %v1522 = vpop.permute.xlu0 %1521
    %1523 = vrot.lane.b32.xlu0 %v1479, 96
    %v1524 = vpop.permute.xlu0 %1523
    %1525 = vrot.lane.b32.xlu0 %v1480, 96
    %v1526 = vpop.permute.xlu0 %1525
    %1527 = vrot.lane.b32.xlu0 %v1481, 96
    %v1528 = vpop.permute.xlu0 %1527
    %1529 = vrot.lane.b32.xlu0 %v1482, 96
    %v1530 = vpop.permute.xlu0 %1529
    %1547 = vst.msk [vmem:[#allocation3] sm:$0xff] %vm396, %v1500
    %1548 = vst.msk [vmem:[#allocation3 + $0x18] sm:$0xff] %vm396, %v1502
    %1549 = vst.msk [vmem:[#allocation3 + $0x30] sm:$0xff] %vm396, %v1504
    %1550 = vst.msk [vmem:[#allocation3 + $0x48] sm:$0xff] %vm396, %v1506
    %1551 = vst.msk [vmem:[#allocation3 + $0x60] sm:$0xff] %vm396, %v1508
    %1552 = vst.msk [vmem:[#allocation3 + $0x78] sm:$0xff] %vm396, %v1510
    %1553 = vst.msk [vmem:[#allocation3 + $0x90] sm:$0xff] %vm396, %v1512
    %1554 = vst.msk [vmem:[#allocation3 + $0xa8] sm:$0xff] %vm396, %v1514
    %1555 = vst.msk [vmem:[#allocation3 + $0xc0] sm:$0xff] %vm396, %v1516
    %1556 = vst.msk [vmem:[#allocation3 + $0xd8] sm:$0xff] %vm396, %v1518
    %1557 = vst.msk [vmem:[#allocation3 + $0xf0] sm:$0xff] %vm396, %v1520
    %1558 = vst.msk [vmem:[#allocation3 + $0x108] sm:$0xff] %vm396, %v1522
    %1559 = vst.msk [vmem:[#allocation3 + $0x120] sm:$0xff] %vm396, %v1524
    %1560 = vst.msk [vmem:[#allocation3 + $0x138] sm:$0xff] %vm396, %v1526
    %1561 = vst.msk [vmem:[#allocation3 + $0x150] sm:$0xff] %vm396, %v1528
    %1562 = vst.msk [vmem:[#allocation3 + $0x168] sm:$0xff] %vm396, %v1530
    %v1563 = vld [vmem:[%s73 + $0x1] sm:$0xff]
    %v1564 = vld [vmem:[%s73 + $0x11] sm:$0xff]
    %v1565 = vld [vmem:[%s73 + $0x21] sm:$0xff]
    %v1566 = vld [vmem:[%s73 + $0x31] sm:$0xff]
    %v1567 = vld [vmem:[%s73 + $0x41] sm:$0xff]
    %v1568 = vld [vmem:[%s73 + $0x51] sm:$0xff]
    %v1569 = vld [vmem:[%s73 + $0x61] sm:$0xff]
    %v1570 = vld [vmem:[%s73 + $0x71] sm:$0xff]
    %v1571 = vld [vmem:[%s73 + $0xa1] sm:$0xff]
    %v1572 = vld [vmem:[%s73 + $0xb1] sm:$0xff]
    %v1573 = vld [vmem:[%s73 + $0xc1] sm:$0xff]
    %v1574 = vld [vmem:[%s73 + $0xd1] sm:$0xff]
    %v1575 = vld [vmem:[%s73 + $0xe1] sm:$0xff]
    %v1576 = vld [vmem:[%s73 + $0xf1] sm:$0xff]
    %v1577 = vld [vmem:[%s73 + $0x101] sm:$0xff]
    %v1578 = vld [vmem:[%s73 + $0x111] sm:$0xff]
    %1579 = vst.msk [vmem:[#allocation3 + $0x8] sm:$0xff] %vm15, %v1563
    %1580 = vst.msk [vmem:[#allocation3 + $0x20] sm:$0xff] %vm15, %v1564
    %1581 = vst.msk [vmem:[#allocation3 + $0x38] sm:$0xff] %vm15, %v1565
    %1582 = vst.msk [vmem:[#allocation3 + $0x50] sm:$0xff] %vm15, %v1566
    %1583 = vst.msk [vmem:[#allocation3 + $0x68] sm:$0xff] %vm15, %v1567
    %1584 = vst.msk [vmem:[#allocation3 + $0x80] sm:$0xff] %vm15, %v1568
    %1585 = vst.msk [vmem:[#allocation3 + $0x98] sm:$0xff] %vm15, %v1569
    %1586 = vst.msk [vmem:[#allocation3 + $0xb0] sm:$0xff] %vm15, %v1570
    %1587 = vst.msk [vmem:[#allocation3 + $0xc8] sm:$0xff] %vm15, %v1571
    %1588 = vst.msk [vmem:[#allocation3 + $0xe0] sm:$0xff] %vm15, %v1572
    %1589 = vst.msk [vmem:[#allocation3 + $0xf8] sm:$0xff] %vm15, %v1573
    %1590 = vst.msk [vmem:[#allocation3 + $0x110] sm:$0xff] %vm15, %v1574
    %1591 = vst.msk [vmem:[#allocation3 + $0x128] sm:$0xff] %vm15, %v1575
    %1592 = vst.msk [vmem:[#allocation3 + $0x140] sm:$0xff] %vm15, %v1576
    %1593 = vst.msk [vmem:[#allocation3 + $0x158] sm:$0xff] %vm15, %v1577
    %1594 = vst.msk [vmem:[#allocation3 + $0x170] sm:$0xff] %vm15, %v1578
    %v1595 = vld [vmem:[%s73 + $0x2] sm:$0xff]
    %v1596 = vld [vmem:[%s73 + $0x12] sm:$0xff]
    %v1597 = vld [vmem:[%s73 + $0x22] sm:$0xff]
    %v1598 = vld [vmem:[%s73 + $0x32] sm:$0xff]
    %v1599 = vld [vmem:[%s73 + $0x42] sm:$0xff]
    %v1600 = vld [vmem:[%s73 + $0x52] sm:$0xff]
    %v1601 = vld [vmem:[%s73 + $0x62] sm:$0xff]
    %v1602 = vld [vmem:[%s73 + $0x72] sm:$0xff]
    %v1603 = vld [vmem:[%s73 + $0xa2] sm:$0xff]
    %v1604 = vld [vmem:[%s73 + $0xb2] sm:$0xff]
    %v1605 = vld [vmem:[%s73 + $0xc2] sm:$0xff]
    %v1606 = vld [vmem:[%s73 + $0xd2] sm:$0xff]
    %v1607 = vld [vmem:[%s73 + $0xe2] sm:$0xff]
    %v1608 = vld [vmem:[%s73 + $0xf2] sm:$0xff]
    %v1609 = vld [vmem:[%s73 + $0x102] sm:$0xff]
    %v1610 = vld [vmem:[%s73 + $0x112] sm:$0xff]
    %1627 = vrot.lane.b32.xlu0 %v1595, 32
    %v1628 = vpop.permute.xlu0 %1627
    %1629 = vrot.lane.b32.xlu0 %v1596, 32
    %v1630 = vpop.permute.xlu0 %1629
    %1631 = vrot.lane.b32.xlu0 %v1597, 32
    %v1632 = vpop.permute.xlu0 %1631
    %1633 = vrot.lane.b32.xlu0 %v1598, 32
    %v1634 = vpop.permute.xlu0 %1633
    %1635 = vrot.lane.b32.xlu0 %v1599, 32
    %v1636 = vpop.permute.xlu0 %1635
    %1637 = vrot.lane.b32.xlu0 %v1600, 32
    %v1638 = vpop.permute.xlu0 %1637
    %1639 = vrot.lane.b32.xlu0 %v1601, 32
    %v1640 = vpop.permute.xlu0 %1639
    %1641 = vrot.lane.b32.xlu0 %v1602, 32
    %v1642 = vpop.permute.xlu0 %1641
    %1643 = vrot.lane.b32.xlu0 %v1603, 32
    %v1644 = vpop.permute.xlu0 %1643
    %1645 = vrot.lane.b32.xlu0 %v1604, 32
    %v1646 = vpop.permute.xlu0 %1645
    %1647 = vrot.lane.b32.xlu0 %v1605, 32
    %v1648 = vpop.permute.xlu0 %1647
    %1649 = vrot.lane.b32.xlu0 %v1606, 32
    %v1650 = vpop.permute.xlu0 %1649
    %1651 = vrot.lane.b32.xlu0 %v1607, 32
    %v1652 = vpop.permute.xlu0 %1651
    %1653 = vrot.lane.b32.xlu0 %v1608, 32
    %v1654 = vpop.permute.xlu0 %1653
    %1655 = vrot.lane.b32.xlu0 %v1609, 32
    %v1656 = vpop.permute.xlu0 %1655
    %1657 = vrot.lane.b32.xlu0 %v1610, 32
    %v1658 = vpop.permute.xlu0 %1657
    %1675 = vst.msk [vmem:[#allocation3 + $0x8] sm:$0xff] %vm202, %v1628
    %1676 = vst.msk [vmem:[#allocation3 + $0x20] sm:$0xff] %vm202, %v1630
    %1677 = vst.msk [vmem:[#allocation3 + $0x38] sm:$0xff] %vm202, %v1632
    %1678 = vst.msk [vmem:[#allocation3 + $0x50] sm:$0xff] %vm202, %v1634
    %1679 = vst.msk [vmem:[#allocation3 + $0x68] sm:$0xff] %vm202, %v1636
    %1680 = vst.msk [vmem:[#allocation3 + $0x80] sm:$0xff] %vm202, %v1638
    %1681 = vst.msk [vmem:[#allocation3 + $0x98] sm:$0xff] %vm202, %v1640
    %1682 = vst.msk [vmem:[#allocation3 + $0xb0] sm:$0xff] %vm202, %v1642
    %1683 = vst.msk [vmem:[#allocation3 + $0xc8] sm:$0xff] %vm202, %v1644
    %1684 = vst.msk [vmem:[#allocation3 + $0xe0] sm:$0xff] %vm202, %v1646
    %1685 = vst.msk [vmem:[#allocation3 + $0xf8] sm:$0xff] %vm202, %v1648
    %1686 = vst.msk [vmem:[#allocation3 + $0x110] sm:$0xff] %vm202, %v1650
    %1687 = vst.msk [vmem:[#allocation3 + $0x128] sm:$0xff] %vm202, %v1652
    %1688 = vst.msk [vmem:[#allocation3 + $0x140] sm:$0xff] %vm202, %v1654
    %1689 = vst.msk [vmem:[#allocation3 + $0x158] sm:$0xff] %vm202, %v1656
    %1690 = vst.msk [vmem:[#allocation3 + $0x170] sm:$0xff] %vm202, %v1658
    %v1691 = vld [vmem:[%s541] sm:$0xff]
    %v1692 = vld [vmem:[%s541 + $0x10] sm:$0xff]
    %v1693 = vld [vmem:[%s541 + $0x20] sm:$0xff]
    %v1694 = vld [vmem:[%s541 + $0x30] sm:$0xff]
    %v1695 = vld [vmem:[%s541 + $0x40] sm:$0xff]
    %v1696 = vld [vmem:[%s541 + $0x50] sm:$0xff]
    %v1697 = vld [vmem:[%s541 + $0x60] sm:$0xff]
    %v1698 = vld [vmem:[%s541 + $0x70] sm:$0xff]
    %v1699 = vld [vmem:[%s541 + $0xa0] sm:$0xff]
    %v1700 = vld [vmem:[%s541 + $0xb0] sm:$0xff]
    %v1701 = vld [vmem:[%s541 + $0xc0] sm:$0xff]
    %v1702 = vld [vmem:[%s541 + $0xd0] sm:$0xff]
    %v1703 = vld [vmem:[%s541 + $0xe0] sm:$0xff]
    %v1704 = vld [vmem:[%s541 + $0xf0] sm:$0xff]
    %v1705 = vld [vmem:[%s541 + $0x100] sm:$0xff]
    %v1706 = vld [vmem:[%s541 + $0x110] sm:$0xff]
    %1723 = vrot.lane.b32.xlu0 %v1691, 64
    %v1724 = vpop.permute.xlu0 %1723
    %1725 = vrot.lane.b32.xlu0 %v1692, 64
    %v1726 = vpop.permute.xlu0 %1725
    %1727 = vrot.lane.b32.xlu0 %v1693, 64
    %v1728 = vpop.permute.xlu0 %1727
    %1729 = vrot.lane.b32.xlu0 %v1694, 64
    %v1730 = vpop.permute.xlu0 %1729
    %1731 = vrot.lane.b32.xlu0 %v1695, 64
    %v1732 = vpop.permute.xlu0 %1731
    %1733 = vrot.lane.b32.xlu0 %v1696, 64
    %v1734 = vpop.permute.xlu0 %1733
    %1735 = vrot.lane.b32.xlu0 %v1697, 64
    %v1736 = vpop.permute.xlu0 %1735
    %1737 = vrot.lane.b32.xlu0 %v1698, 64
    %v1738 = vpop.permute.xlu0 %1737
    %1739 = vrot.lane.b32.xlu0 %v1699, 64
    %v1740 = vpop.permute.xlu0 %1739
    %1741 = vrot.lane.b32.xlu0 %v1700, 64
    %v1742 = vpop.permute.xlu0 %1741
    %1743 = vrot.lane.b32.xlu0 %v1701, 64
    %v1744 = vpop.permute.xlu0 %1743
    %1745 = vrot.lane.b32.xlu0 %v1702, 64
    %v1746 = vpop.permute.xlu0 %1745
    %1747 = vrot.lane.b32.xlu0 %v1703, 64
    %v1748 = vpop.permute.xlu0 %1747
    %1749 = vrot.lane.b32.xlu0 %v1704, 64
    %v1750 = vpop.permute.xlu0 %1749
    %1751 = vrot.lane.b32.xlu0 %v1705, 64
    %v1752 = vpop.permute.xlu0 %1751
    %1753 = vrot.lane.b32.xlu0 %v1706, 64
    %v1754 = vpop.permute.xlu0 %1753
    %1771 = vst.msk [vmem:[#allocation3 + $0x8] sm:$0xff] %vm299, %v1724
    %1772 = vst.msk [vmem:[#allocation3 + $0x20] sm:$0xff] %vm299, %v1726
    %1773 = vst.msk [vmem:[#allocation3 + $0x38] sm:$0xff] %vm299, %v1728
    %1774 = vst.msk [vmem:[#allocation3 + $0x50] sm:$0xff] %vm299, %v1730
    %1775 = vst.msk [vmem:[#allocation3 + $0x68] sm:$0xff] %vm299, %v1732
    %1776 = vst.msk [vmem:[#allocation3 + $0x80] sm:$0xff] %vm299, %v1734
    %1777 = vst.msk [vmem:[#allocation3 + $0x98] sm:$0xff] %vm299, %v1736
    %1778 = vst.msk [vmem:[#allocation3 + $0xb0] sm:$0xff] %vm299, %v1738
    %1779 = vst.msk [vmem:[#allocation3 + $0xc8] sm:$0xff] %vm299, %v1740
    %1780 = vst.msk [vmem:[#allocation3 + $0xe0] sm:$0xff] %vm299, %v1742
    %1781 = vst.msk [vmem:[#allocation3 + $0xf8] sm:$0xff] %vm299, %v1744
    %1782 = vst.msk [vmem:[#allocation3 + $0x110] sm:$0xff] %vm299, %v1746
    %1783 = vst.msk [vmem:[#allocation3 + $0x128] sm:$0xff] %vm299, %v1748
    %1784 = vst.msk [vmem:[#allocation3 + $0x140] sm:$0xff] %vm299, %v1750
    %1785 = vst.msk [vmem:[#allocation3 + $0x158] sm:$0xff] %vm299, %v1752
    %1786 = vst.msk [vmem:[#allocation3 + $0x170] sm:$0xff] %vm299, %v1754
    %v1787 = vld [vmem:[%s541 + $0x1] sm:$0xff]
    %v1788 = vld [vmem:[%s541 + $0x11] sm:$0xff]
    %v1789 = vld [vmem:[%s541 + $0x21] sm:$0xff]
    %v1790 = vld [vmem:[%s541 + $0x31] sm:$0xff]
    %v1791 = vld [vmem:[%s541 + $0x41] sm:$0xff]
    %v1792 = vld [vmem:[%s541 + $0x51] sm:$0xff]
    %v1793 = vld [vmem:[%s541 + $0x61] sm:$0xff]
    %v1794 = vld [vmem:[%s541 + $0x71] sm:$0xff]
    %v1795 = vld [vmem:[%s541 + $0xa1] sm:$0xff]
    %v1796 = vld [vmem:[%s541 + $0xb1] sm:$0xff]
    %v1797 = vld [vmem:[%s541 + $0xc1] sm:$0xff]
    %v1798 = vld [vmem:[%s541 + $0xd1] sm:$0xff]
    %v1799 = vld [vmem:[%s541 + $0xe1] sm:$0xff]
    %v1800 = vld [vmem:[%s541 + $0xf1] sm:$0xff]
    %v1801 = vld [vmem:[%s541 + $0x101] sm:$0xff]
    %v1802 = vld [vmem:[%s541 + $0x111] sm:$0xff]
    %1819 = vrot.lane.b32.xlu0 %v1787, 96
    %v1820 = vpop.permute.xlu0 %1819
    %1821 = vrot.lane.b32.xlu0 %v1788, 96
    %v1822 = vpop.permute.xlu0 %1821
    %1823 = vrot.lane.b32.xlu0 %v1789, 96
    %v1824 = vpop.permute.xlu0 %1823
    %1825 = vrot.lane.b32.xlu0 %v1790, 96
    %v1826 = vpop.permute.xlu0 %1825
    %1827 = vrot.lane.b32.xlu0 %v1791, 96
    %v1828 = vpop.permute.xlu0 %1827
    %1829 = vrot.lane.b32.xlu0 %v1792, 96
    %v1830 = vpop.permute.xlu0 %1829
    %1831 = vrot.lane.b32.xlu0 %v1793, 96
    %v1832 = vpop.permute.xlu0 %1831
    %1833 = vrot.lane.b32.xlu0 %v1794, 96
    %v1834 = vpop.permute.xlu0 %1833
    %1835 = vrot.lane.b32.xlu0 %v1795, 96
    %v1836 = vpop.permute.xlu0 %1835
    %1837 = vrot.lane.b32.xlu0 %v1796, 96
    %v1838 = vpop.permute.xlu0 %1837
    %1839 = vrot.lane.b32.xlu0 %v1797, 96
    %v1840 = vpop.permute.xlu0 %1839
    %1841 = vrot.lane.b32.xlu0 %v1798, 96
    %v1842 = vpop.permute.xlu0 %1841
    %1843 = vrot.lane.b32.xlu0 %v1799, 96
    %v1844 = vpop.permute.xlu0 %1843
    %1845 = vrot.lane.b32.xlu0 %v1800, 96
    %v1846 = vpop.permute.xlu0 %1845
    %1847 = vrot.lane.b32.xlu0 %v1801, 96
    %v1848 = vpop.permute.xlu0 %1847
    %1849 = vrot.lane.b32.xlu0 %v1802, 96
    %v1850 = vpop.permute.xlu0 %1849
    %1867 = vst.msk [vmem:[#allocation3 + $0x8] sm:$0xff] %vm396, %v1820
    %1868 = vst.msk [vmem:[#allocation3 + $0x20] sm:$0xff] %vm396, %v1822
    %1869 = vst.msk [vmem:[#allocation3 + $0x38] sm:$0xff] %vm396, %v1824
    %1870 = vst.msk [vmem:[#allocation3 + $0x50] sm:$0xff] %vm396, %v1826
    %1871 = vst.msk [vmem:[#allocation3 + $0x68] sm:$0xff] %vm396, %v1828
    %1872 = vst.msk [vmem:[#allocation3 + $0x80] sm:$0xff] %vm396, %v1830
    %1873 = vst.msk [vmem:[#allocation3 + $0x98] sm:$0xff] %vm396, %v1832
    %1874 = vst.msk [vmem:[#allocation3 + $0xb0] sm:$0xff] %vm396, %v1834
    %1875 = vst.msk [vmem:[#allocation3 + $0xc8] sm:$0xff] %vm396, %v1836
    %1876 = vst.msk [vmem:[#allocation3 + $0xe0] sm:$0xff] %vm396, %v1838
    %1877 = vst.msk [vmem:[#allocation3 + $0xf8] sm:$0xff] %vm396, %v1840
    %1878 = vst.msk [vmem:[#allocation3 + $0x110] sm:$0xff] %vm396, %v1842
    %1879 = vst.msk [vmem:[#allocation3 + $0x128] sm:$0xff] %vm396, %v1844
    %1880 = vst.msk [vmem:[#allocation3 + $0x140] sm:$0xff] %vm396, %v1846
    %1881 = vst.msk [vmem:[#allocation3 + $0x158] sm:$0xff] %vm396, %v1848
    %1882 = vst.msk [vmem:[#allocation3 + $0x170] sm:$0xff] %vm396, %v1850
    %v1883 = vld [vmem:[%s541 + $0x2] sm:$0xff]
    %v1884 = vld [vmem:[%s541 + $0x12] sm:$0xff]
    %v1885 = vld [vmem:[%s541 + $0x22] sm:$0xff]
    %v1886 = vld [vmem:[%s541 + $0x32] sm:$0xff]
    %v1887 = vld [vmem:[%s541 + $0x42] sm:$0xff]
    %v1888 = vld [vmem:[%s541 + $0x52] sm:$0xff]
    %v1889 = vld [vmem:[%s541 + $0x62] sm:$0xff]
    %v1890 = vld [vmem:[%s541 + $0x72] sm:$0xff]
    %v1891 = vld [vmem:[%s541 + $0xa2] sm:$0xff]
    %v1892 = vld [vmem:[%s541 + $0xb2] sm:$0xff]
    %v1893 = vld [vmem:[%s541 + $0xc2] sm:$0xff]
    %v1894 = vld [vmem:[%s541 + $0xd2] sm:$0xff]
    %v1895 = vld [vmem:[%s541 + $0xe2] sm:$0xff]
    %v1896 = vld [vmem:[%s541 + $0xf2] sm:$0xff]
    %v1897 = vld [vmem:[%s541 + $0x102] sm:$0xff]
    %v1898 = vld [vmem:[%s541 + $0x112] sm:$0xff]
    %1899 = vst.msk [vmem:[#allocation3 + $0x10] sm:$0xff] %vm15, %v1883
    %1900 = vst.msk [vmem:[#allocation3 + $0x28] sm:$0xff] %vm15, %v1884
    %1901 = vst.msk [vmem:[#allocation3 + $0x40] sm:$0xff] %vm15, %v1885
    %1902 = vst.msk [vmem:[#allocation3 + $0x58] sm:$0xff] %vm15, %v1886
    %1903 = vst.msk [vmem:[#allocation3 + $0x70] sm:$0xff] %vm15, %v1887
    %1904 = vst.msk [vmem:[#allocation3 + $0x88] sm:$0xff] %vm15, %v1888
    %1905 = vst.msk [vmem:[#allocation3 + $0xa0] sm:$0xff] %vm15, %v1889
    %1906 = vst.msk [vmem:[#allocation3 + $0xb8] sm:$0xff] %vm15, %v1890
    %1907 = vst.msk [vmem:[#allocation3 + $0xd0] sm:$0xff] %vm15, %v1891
    %1908 = vst.msk [vmem:[#allocation3 + $0xe8] sm:$0xff] %vm15, %v1892
    %1909 = vst.msk [vmem:[#allocation3 + $0x100] sm:$0xff] %vm15, %v1893
    %1910 = vst.msk [vmem:[#allocation3 + $0x118] sm:$0xff] %vm15, %v1894
    %1911 = vst.msk [vmem:[#allocation3 + $0x130] sm:$0xff] %vm15, %v1895
    %1912 = vst.msk [vmem:[#allocation3 + $0x148] sm:$0xff] %vm15, %v1896
    %1913 = vst.msk [vmem:[#allocation3 + $0x160] sm:$0xff] %vm15, %v1897
    %1914 = vst.msk [vmem:[#allocation3 + $0x178] sm:$0xff] %vm15, %v1898
    %v1915 = vld [vmem:[#allocation3] sm:$0xff]
    %v1916 = vld [vmem:[#allocation3 + $0x8] sm:$0xff]
    %v1917 = vld [vmem:[#allocation3 + $0x10] sm:$0xff]
    %v1918 = vld [vmem:[#allocation3 + $0x18] sm:$0xff]
    %v1919 = vld [vmem:[#allocation3 + $0x20] sm:$0xff]
    %v1920 = vld [vmem:[#allocation3 + $0x28] sm:$0xff]
    %v1921 = vld [vmem:[#allocation3 + $0x30] sm:$0xff]
    %v1922 = vld [vmem:[#allocation3 + $0x38] sm:$0xff]
    %v1923 = vld [vmem:[#allocation3 + $0x40] sm:$0xff]
    %v1924 = vld [vmem:[#allocation3 + $0x48] sm:$0xff]
    %v1925 = vld [vmem:[#allocation3 + $0x50] sm:$0xff]
    %v1926 = vld [vmem:[#allocation3 + $0x58] sm:$0xff]
    %v1927 = vld [vmem:[#allocation3 + $0x60] sm:$0xff]
    %v1928 = vld [vmem:[#allocation3 + $0x68] sm:$0xff]
    %v1929 = vld [vmem:[#allocation3 + $0x70] sm:$0xff]
    %v1930 = vld [vmem:[#allocation3 + $0x78] sm:$0xff]
    %v1931 = vld [vmem:[#allocation3 + $0x80] sm:$0xff]
    %v1932 = vld [vmem:[#allocation3 + $0x88] sm:$0xff]
    %v1933 = vld [vmem:[#allocation3 + $0x90] sm:$0xff]
    %v1934 = vld [vmem:[#allocation3 + $0x98] sm:$0xff]
    %v1935 = vld [vmem:[#allocation3 + $0xa0] sm:$0xff]
    %v1936 = vld [vmem:[#allocation3 + $0xa8] sm:$0xff]
    %v1937 = vld [vmem:[#allocation3 + $0xb0] sm:$0xff]
    %v1938 = vld [vmem:[#allocation3 + $0xb8] sm:$0xff]
    %v1939 = vld [vmem:[#allocation3 + $0xc0] sm:$0xff]
    %v1940 = vld [vmem:[#allocation3 + $0xc8] sm:$0xff]
    %v1941 = vld [vmem:[#allocation3 + $0xd0] sm:$0xff]
    %v1942 = vld [vmem:[#allocation3 + $0xd8] sm:$0xff]
    %v1943 = vld [vmem:[#allocation3 + $0xe0] sm:$0xff]
    %v1944 = vld [vmem:[#allocation3 + $0xe8] sm:$0xff]
    %v1945 = vld [vmem:[#allocation3 + $0xf0] sm:$0xff]
    %v1946 = vld [vmem:[#allocation3 + $0xf8] sm:$0xff]
    %v1947 = vld [vmem:[#allocation3 + $0x100] sm:$0xff]
    %v1948 = vld [vmem:[#allocation3 + $0x108] sm:$0xff]
    %v1949 = vld [vmem:[#allocation3 + $0x110] sm:$0xff]
    %v1950 = vld [vmem:[#allocation3 + $0x118] sm:$0xff]
    %v1951 = vld [vmem:[#allocation3 + $0x120] sm:$0xff]
    %v1952 = vld [vmem:[#allocation3 + $0x128] sm:$0xff]
    %v1953 = vld [vmem:[#allocation3 + $0x130] sm:$0xff]
    %v1954 = vld [vmem:[#allocation3 + $0x138] sm:$0xff]
    %v1955 = vld [vmem:[#allocation3 + $0x140] sm:$0xff]
    %v1956 = vld [vmem:[#allocation3 + $0x148] sm:$0xff]
    %v1957 = vld [vmem:[#allocation3 + $0x150] sm:$0xff]
    %v1958 = vld [vmem:[#allocation3 + $0x158] sm:$0xff]
    %v1959 = vld [vmem:[#allocation3 + $0x160] sm:$0xff]
    %v1960 = vld [vmem:[#allocation3 + $0x168] sm:$0xff]
    %v1961 = vld [vmem:[#allocation3 + $0x170] sm:$0xff]
    %v1962 = vld [vmem:[#allocation3 + $0x178] sm:$0xff]
    %s1963 = scalar_lea.vmem %s1, 288
    %v1964 = vld [vmem:[%s1963] sm:$0xff]
    %v1965 = vld [vmem:[%s1963 + $0x8] sm:$0xff]
    %v1966 = vld [vmem:[%s1963 + $0x10] sm:$0xff]
    %v1967 = vld [vmem:[%s1963 + $0x18] sm:$0xff]
    %v1968 = vld [vmem:[%s1963 + $0x20] sm:$0xff]
    %v1969 = vld [vmem:[%s1963 + $0x28] sm:$0xff]
    %v1970 = vld [vmem:[%s1963 + $0x30] sm:$0xff]
    %v1971 = vld [vmem:[%s1963 + $0x38] sm:$0xff]
    %v1972 = vld [vmem:[%s1963 + $0x40] sm:$0xff]
    %v1973 = vld [vmem:[%s1963 + $0x48] sm:$0xff]
    %v1974 = vld [vmem:[%s1963 + $0x50] sm:$0xff]
    %v1975 = vld [vmem:[%s1963 + $0x58] sm:$0xff]
    %v1976 = vld [vmem:[%s1963 + $0x60] sm:$0xff]
    %v1977 = vld [vmem:[%s1963 + $0x68] sm:$0xff]
    %v1978 = vld [vmem:[%s1963 + $0x70] sm:$0xff]
    %v1979 = vld [vmem:[%s1963 + $0x78] sm:$0xff]
    %v1980 = vld [vmem:[%s1963 + $0x80] sm:$0xff]
    %v1981 = vld [vmem:[%s1963 + $0x88] sm:$0xff]
    %v1982 = vld [vmem:[%s1963 + $0x90] sm:$0xff]
    %v1983 = vld [vmem:[%s1963 + $0x98] sm:$0xff]
    %v1984 = vld [vmem:[%s1963 + $0xa0] sm:$0xff]
    %v1985 = vld [vmem:[%s1963 + $0xa8] sm:$0xff]
    %v1986 = vld [vmem:[%s1963 + $0xb0] sm:$0xff]
    %v1987 = vld [vmem:[%s1963 + $0xb8] sm:$0xff]
    %v1988 = vld [vmem:[%s1963 + $0xc0] sm:$0xff]
    %v1989 = vld [vmem:[%s1963 + $0xc8] sm:$0xff]
    %v1990 = vld [vmem:[%s1963 + $0xd0] sm:$0xff]
    %v1991 = vld [vmem:[%s1963 + $0xd8] sm:$0xff]
    %v1992 = vld [vmem:[%s1963 + $0xe0] sm:$0xff]
    %v1993 = vld [vmem:[%s1963 + $0xe8] sm:$0xff]
    %v1994 = vld [vmem:[%s1963 + $0xf0] sm:$0xff]
    %v1995 = vld [vmem:[%s1963 + $0xf8] sm:$0xff]
    %v1996 = vld [vmem:[%s1963 + $0x100] sm:$0xff]
    %v1997 = vld [vmem:[%s1963 + $0x108] sm:$0xff]
    %v1998 = vld [vmem:[%s1963 + $0x110] sm:$0xff]
    %v1999 = vld [vmem:[%s1963 + $0x118] sm:$0xff]
    %s2000 = scalar_lea.vmem %s2, 1
    %v2001 = vld [vmem:[%s2000] sm:$0x1]
    %v2003 = vlaneseq
    %v2004 = vshrl.u32 %v2003, 7
    %v2005 = vsub.s32 0, %v2004
    %v2006 = vrot.slane %v2001, %v2005
    %v2009 = vsel %vm15, %v1917, 0
    %v2012 = vsel %vm15, %v1920, 0
    %v2015 = vsel %vm15, %v1923, 0
    %v2018 = vsel %vm15, %v1926, 0
    %v2021 = vsel %vm15, %v1929, 0
    %v2024 = vsel %vm15, %v1932, 0
    %v2027 = vsel %vm15, %v1935, 0
    %v2030 = vsel %vm15, %v1938, 0
    %v2033 = vsel %vm15, %v1941, 0
    %v2036 = vsel %vm15, %v1944, 0
    %v2039 = vsel %vm15, %v1947, 0
    %v2042 = vsel %vm15, %v1950, 0
    %v2045 = vsel %vm15, %v1953, 0
    %v2048 = vsel %vm15, %v1956, 0
    %v2051 = vsel %vm15, %v1959, 0
    %v2054 = vsel %vm15, %v1962, 0
    %2056 = vmatprep.subr.mxu0 0.0
    %2057 = vmatpush1.msra.mxu0 %v1964
    %2058 = vmatprep.subr.mxu0 0.0
    %2059 = vmatpush1.msra.mxu0 %v1965
    %2060 = vmatprep.subr.mxu0 0.0
    %2061 = vmatpush1.msra.mxu0 %v1966
    %2062 = vmatprep.subr.mxu0 0.0
    %2063 = vmatpush1.msra.mxu0 %v1967
    %2064 = vmatprep.subr.mxu0 0.0
    %2065 = vmatpush1.msra.mxu0 %v1968
    %2066 = vmatprep.subr.mxu0 0.0
    %2067 = vmatpush1.msra.mxu0 %v1969
    %2068 = vmatprep.subr.mxu0 0.0
    %2069 = vmatpush1.msra.mxu0 %v1970
    %2070 = vmatprep.subr.mxu0 0.0
    %2071 = vmatpush1.msra.mxu0 %v1971
    %2072 = vmatprep.subr.mxu0 0.0
    %2073 = vmatpush1.msra.mxu0 %v1972
    %2074 = vmatprep.subr.mxu0 0.0
    %2075 = vmatpush1.msra.mxu0 %v1973
    %2076 = vmatprep.subr.mxu0 0.0
    %2077 = vmatpush1.msra.mxu0 %v1974
    %2078 = vmatprep.subr.mxu0 0.0
    %2079 = vmatpush1.msra.mxu0 %v1975
    %2080 = vmatprep.subr.mxu0 0.0
    %2081 = vmatpush1.msra.mxu0 %v1976
    %2082 = vmatprep.subr.mxu0 0.0
    %2083 = vmatpush1.msra.mxu0 %v1977
    %2084 = vmatprep.subr.mxu0 0.0
    %2085 = vmatpush1.msra.mxu0 %v1978
    %2086 = vmatprep.subr.mxu0 0.0
    %2087 = vmatpush1.msra.mxu0 %v1979
    %2088 = vmatprep.subr.mxu0 0.0
    %2089 = vmatpush1.msra.mxu0 %v1980
    %2090 = vmatprep.subr.mxu0 0.0
    %2091 = vmatpush1.msra.mxu0 %v1981
    %2092 = vmatprep.subr.mxu0 0.0
    %2093 = vmatpush1.msra.mxu0 %v1982
    %2094 = vmatprep.subr.mxu0 0.0
    %2095 = vmatpush1.msra.mxu0 %v1983
    %2096 = vmatprep.subr.mxu0 0.0
    %2097 = vmatpush1.msra.mxu0 %v1984
    %2098 = vmatprep.subr.mxu0 0.0
    %2099 = vmatpush1.msra.mxu0 %v1985
    %2100 = vmatprep.subr.mxu0 0.0
    %2101 = vmatpush1.msra.mxu0 %v1986
    %2102 = vmatprep.subr.mxu0 0.0
    %2103 = vmatpush1.msra.mxu0 %v1987
    %2104 = vmatprep.subr.mxu0 0.0
    %2105 = vmatpush1.msra.mxu0 %v1988
    %2106 = vmatprep.subr.mxu0 0.0
    %2107 = vmatpush1.msra.mxu0 %v1989
    %2108 = vmatprep.subr.mxu0 0.0
    %2109 = vmatpush1.msra.mxu0 %v1990
    %2110 = vmatprep.subr.mxu0 0.0
    %2111 = vmatpush1.msra.mxu0 %v1991
    %2112 = vmatprep.subr.mxu0 0.0
    %2113 = vmatpush1.msra.mxu0 %v1992
    %2114 = vmatprep.subr.mxu0 0.0
    %2115 = vmatpush1.msra.mxu0 %v1993
    %2116 = vmatprep.subr.mxu0 0.0
    %2117 = vmatpush1.msra.mxu0 %v1994
    %2118 = vmatprep.subr.mxu0 0.0
    %2119 = vmatpush1.msra.mxu0 %v1995
    %2120 = vmatprep.mubr.f32.mxu0 %v1916
    %2121 = vmatmul.mubr.f32.gmra.mrb[0].mxu0 %v1915
    %v2122 = vpop.f32.mrb[0].mxu0
    %v2123 = vadd.f32 %v2006, %v2122
    %v2124 = vpop.f32.mrb[0].mxu0
    %2125 = vmatprep.mubr.f32.mxu0 %v1919
    %2126 = vmatmul.mubr.f32.gmra.mrb[0].mxu0 %v1918
    %v2127 = vpop.f32.mrb[0].mxu0
    %v2128 = vadd.f32 %v2006, %v2127
    %v2129 = vpop.f32.mrb[0].mxu0
    %2130 = vmatprep.mubr.f32.mxu0 %v1922
    %2131 = vmatmul.mubr.f32.gmra.mrb[0].mxu0 %v1921
    %v2132 = vpop.f32.mrb[0].mxu0
    %v2133 = vadd.f32 %v2006, %v2132
    %v2134 = vpop.f32.mrb[0].mxu0
    %2135 = vmatprep.mubr.f32.mxu0 %v1925
    %2136 = vmatmul.mubr.f32.gmra.mrb[0].mxu0 %v1924
    %v2137 = vpop.f32.mrb[0].mxu0
    %v2138 = vadd.f32 %v2006, %v2137
    %v2139 = vpop.f32.mrb[0].mxu0
    %2140 = vmatprep.mubr.f32.mxu0 %v1928
    %2141 = vmatmul.mubr.f32.gmra.mrb[0].mxu0 %v1927
    %v2142 = vpop.f32.mrb[0].mxu0
    %v2143 = vadd.f32 %v2006, %v2142
    %v2144 = vpop.f32.mrb[0].mxu0
    %2145 = vmatprep.mubr.f32.mxu0 %v1931
    %2146 = vmatmul.mubr.f32.gmra.mrb[0].mxu0 %v1930
    %v2147 = vpop.f32.mrb[0].mxu0
    %v2148 = vadd.f32 %v2006, %v2147
    %v2149 = vpop.f32.mrb[0].mxu0
    %2150 = vmatprep.mubr.f32.mxu0 %v1934
    %2151 = vmatmul.mubr.f32.gmra.mrb[0].mxu0 %v1933
    %v2152 = vpop.f32.mrb[0].mxu0
    %v2153 = vadd.f32 %v2006, %v2152
    %v2154 = vpop.f32.mrb[0].mxu0
    %2155 = vmatprep.mubr.f32.mxu0 %v1937
    %2156 = vmatmul.mubr.f32.gmra.mrb[0].mxu0 %v1936
    %v2157 = vpop.f32.mrb[0].mxu0
    %v2158 = vadd.f32 %v2006, %v2157
    %v2159 = vpop.f32.mrb[0].mxu0
    %2160 = vmatprep.mubr.f32.mxu0 %v1940
    %2161 = vmatmul.mubr.f32.gmra.mrb[0].mxu0 %v1939
    %v2162 = vpop.f32.mrb[0].mxu0
    %v2163 = vadd.f32 %v2006, %v2162
    %v2164 = vpop.f32.mrb[0].mxu0
    %2165 = vmatprep.mubr.f32.mxu0 %v1943
    %2166 = vmatmul.mubr.f32.gmra.mrb[0].mxu0 %v1942
    %v2167 = vpop.f32.mrb[0].mxu0
    %v2168 = vadd.f32 %v2006, %v2167
    %v2169 = vpop.f32.mrb[0].mxu0
    %2170 = vmatprep.mubr.f32.mxu0 %v1946
    %2171 = vmatmul.mubr.f32.gmra.mrb[0].mxu0 %v1945
    %v2172 = vpop.f32.mrb[0].mxu0
    %v2173 = vadd.f32 %v2006, %v2172
    %v2174 = vpop.f32.mrb[0].mxu0
    %2175 = vmatprep.mubr.f32.mxu0 %v1949
    %2176 = vmatmul.mubr.f32.gmra.mrb[0].mxu0 %v1948
    %v2177 = vpop.f32.mrb[0].mxu0
    %v2178 = vadd.f32 %v2006, %v2177
    %v2179 = vpop.f32.mrb[0].mxu0
    %2180 = vmatprep.mubr.f32.mxu0 %v1952
    %2181 = vmatmul.mubr.f32.gmra.mrb[0].mxu0 %v1951
    %v2182 = vpop.f32.mrb[0].mxu0
    %v2183 = vadd.f32 %v2006, %v2182
    %v2184 = vpop.f32.mrb[0].mxu0
    %2185 = vmatprep.mubr.f32.mxu0 %v1955
    %2186 = vmatmul.mubr.f32.gmra.mrb[0].mxu0 %v1954
    %v2187 = vpop.f32.mrb[0].mxu0
    %v2188 = vadd.f32 %v2006, %v2187
    %v2189 = vpop.f32.mrb[0].mxu0
    %2190 = vmatprep.mubr.f32.mxu0 %v1958
    %2191 = vmatmul.mubr.f32.gmra.mrb[0].mxu0 %v1957
    %v2192 = vpop.f32.mrb[0].mxu0
    %v2193 = vadd.f32 %v2006, %v2192
    %v2194 = vpop.f32.mrb[0].mxu0
    %2195 = vmatprep.mubr.f32.mxu0 %v1961
    %2196 = vmatmul.mubr.f32.gmra.mrb[0].mxu0 %v1960
    %v2197 = vpop.f32.mrb[0].mxu0
    %v2198 = vadd.f32 %v2006, %v2197
    %v2199 = vpop.f32.mrb[0].mxu0
    %2200 = vdwg.mxu0
    %2201 = vmatprep.subr.mxu0 0.0
    %2202 = vmatpush1.msra.mxu0 %v1996
    %2203 = vmatprep.subr.mxu0 0.0
    %2204 = vmatpush1.msra.mxu0 %v1997
    %2205 = vmatprep.subr.mxu0 0.0
    %2206 = vmatpush1.msra.mxu0 %v1998
    %2207 = vmatprep.subr.mxu0 0.0
    %2208 = vmatpush1.msra.mxu0 %v1999
    %2209 = vmatprep.subr.mxu0 0.0
    %2210 = vmatpush1.msra.mxu0 0.0
    %2211 = vmatprep.subr.mxu0 0.0
    %2212 = vmatpush1.msra.mxu0 0.0
    %2213 = vmatprep.subr.mxu0 0.0
    %2214 = vmatpush1.msra.mxu0 0.0
    %2215 = vmatprep.subr.mxu0 0.0
    %2216 = vmatpush1.msra.mxu0 0.0
    %2217 = vmatprep.subr.mxu0 0.0
    %2218 = vmatpush1.msra.mxu0 0.0
    %2219 = vmatprep.subr.mxu0 0.0
    %2220 = vmatpush1.msra.mxu0 0.0
    %2221 = vmatprep.subr.mxu0 0.0
    %2222 = vmatpush1.msra.mxu0 0.0
    %2223 = vmatprep.subr.mxu0 0.0
    %2224 = vmatpush1.msra.mxu0 0.0
    %2225 = vmatprep.subr.mxu0 0.0
    %2226 = vmatpush1.msra.mxu0 0.0
    %2227 = vmatprep.subr.mxu0 0.0
    %2228 = vmatpush1.msra.mxu0 0.0
    %2229 = vmatprep.subr.mxu0 0.0
    %2230 = vmatpush1.msra.mxu0 0.0
    %2231 = vmatprep.subr.mxu0 0.0
    %2232 = vmatpush1.msra.mxu0 0.0
    %2233 = vmatprep.subr.mxu0 0.0
    %2234 = vmatpush1.msra.mxu0 0.0
    %2235 = vmatprep.subr.mxu0 0.0
    %2236 = vmatpush1.msra.mxu0 0.0
    %2237 = vmatprep.subr.mxu0 0.0
    %2238 = vmatpush1.msra.mxu0 0.0
    %2239 = vmatprep.subr.mxu0 0.0
    %2240 = vmatpush1.msra.mxu0 0.0
    %2241 = vmatprep.subr.mxu0 0.0
    %2242 = vmatpush1.msra.mxu0 0.0
    %2243 = vmatprep.subr.mxu0 0.0
    %2244 = vmatpush1.msra.mxu0 0.0
    %2245 = vmatprep.subr.mxu0 0.0
    %2246 = vmatpush1.msra.mxu0 0.0
    %2247 = vmatprep.subr.mxu0 0.0
    %2248 = vmatpush1.msra.mxu0 0.0
    %2249 = vmatprep.subr.mxu0 0.0
    %2250 = vmatpush1.msra.mxu0 0.0
    %2251 = vmatprep.subr.mxu0 0.0
    %2252 = vmatpush1.msra.mxu0 0.0
    %2253 = vmatprep.subr.mxu0 0.0
    %2254 = vmatpush1.msra.mxu0 0.0
    %2255 = vmatprep.subr.mxu0 0.0
    %2256 = vmatpush1.msra.mxu0 0.0
    %2257 = vmatprep.subr.mxu0 0.0
    %2258 = vmatpush1.msra.mxu0 0.0
    %2259 = vmatprep.subr.mxu0 0.0
    %2260 = vmatpush1.msra.mxu0 0.0
    %2261 = vmatprep.subr.mxu0 0.0
    %2262 = vmatpush1.msra.mxu0 0.0
    %2263 = vmatprep.subr.mxu0 0.0
    %2264 = vmatpush1.msra.mxu0 0.0
    %2265 = vmatprep.mubr.f32.mxu0 0.0
    %2266 = vmatmul.mubr.f32.gmra.mrb[0].mxu0 %v2009
    %v2267 = vpop.f32.mrb[0].mxu0
    %v2268 = vadd.f32 %v2123, %v2267
    %v2269 = vpop.f32.mrb[0].mxu0
    %2270 = vmatprep.mubr.f32.mxu0 0.0
    %2271 = vmatmul.mubr.f32.gmra.mrb[0].mxu0 %v2012
    %v2272 = vpop.f32.mrb[0].mxu0
    %v2273 = vadd.f32 %v2128, %v2272
    %v2274 = vpop.f32.mrb[0].mxu0
    %2275 = vmatprep.mubr.f32.mxu0 0.0
    %2276 = vmatmul.mubr.f32.gmra.mrb[0].mxu0 %v2015
    %v2277 = vpop.f32.mrb[0].mxu0
    %v2278 = vadd.f32 %v2133, %v2277
    %v2279 = vpop.f32.mrb[0].mxu0
    %2280 = vmatprep.mubr.f32.mxu0 0.0
    %2281 = vmatmul.mubr.f32.gmra.mrb[0].mxu0 %v2018
    %v2282 = vpop.f32.mrb[0].mxu0
    %v2283 = vadd.f32 %v2138, %v2282
    %v2284 = vpop.f32.mrb[0].mxu0
    %2285 = vmatprep.mubr.f32.mxu0 0.0
    %2286 = vmatmul.mubr.f32.gmra.mrb[0].mxu0 %v2021
    %v2287 = vpop.f32.mrb[0].mxu0
    %v2288 = vadd.f32 %v2143, %v2287
    %v2289 = vpop.f32.mrb[0].mxu0
    %2290 = vmatprep.mubr.f32.mxu0 0.0
    %2291 = vmatmul.mubr.f32.gmra.mrb[0].mxu0 %v2024
    %v2292 = vpop.f32.mrb[0].mxu0
    %v2293 = vadd.f32 %v2148, %v2292
    %v2294 = vpop.f32.mrb[0].mxu0
    %2295 = vmatprep.mubr.f32.mxu0 0.0
    %2296 = vmatmul.mubr.f32.gmra.mrb[0].mxu0 %v2027
    %v2297 = vpop.f32.mrb[0].mxu0
    %v2298 = vadd.f32 %v2153, %v2297
    %v2299 = vpop.f32.mrb[0].mxu0
    %2300 = vmatprep.mubr.f32.mxu0 0.0
    %2301 = vmatmul.mubr.f32.gmra.mrb[0].mxu0 %v2030
    %v2302 = vpop.f32.mrb[0].mxu0
    %v2303 = vadd.f32 %v2158, %v2302
    %v2304 = vpop.f32.mrb[0].mxu0
    %2305 = vmatprep.mubr.f32.mxu0 0.0
    %2306 = vmatmul.mubr.f32.gmra.mrb[0].mxu0 %v2033
    %v2307 = vpop.f32.mrb[0].mxu0
    %v2308 = vadd.f32 %v2163, %v2307
    %v2309 = vpop.f32.mrb[0].mxu0
    %2310 = vmatprep.mubr.f32.mxu0 0.0
    %2311 = vmatmul.mubr.f32.gmra.mrb[0].mxu0 %v2036
    %v2312 = vpop.f32.mrb[0].mxu0
    %v2313 = vadd.f32 %v2168, %v2312
    %v2314 = vpop.f32.mrb[0].mxu0
    %2315 = vmatprep.mubr.f32.mxu0 0.0
    %2316 = vmatmul.mubr.f32.gmra.mrb[0].mxu0 %v2039
    %v2317 = vpop.f32.mrb[0].mxu0
    %v2318 = vadd.f32 %v2173, %v2317
    %v2319 = vpop.f32.mrb[0].mxu0
    %2320 = vmatprep.mubr.f32.mxu0 0.0
    %2321 = vmatmul.mubr.f32.gmra.mrb[0].mxu0 %v2042
    %v2322 = vpop.f32.mrb[0].mxu0
    %v2323 = vadd.f32 %v2178, %v2322
    %v2324 = vpop.f32.mrb[0].mxu0
    %2325 = vmatprep.mubr.f32.mxu0 0.0
    %2326 = vmatmul.mubr.f32.gmra.mrb[0].mxu0 %v2045
    %v2327 = vpop.f32.mrb[0].mxu0
    %v2328 = vadd.f32 %v2183, %v2327
    %v2329 = vpop.f32.mrb[0].mxu0
    %2330 = vmatprep.mubr.f32.mxu0 0.0
    %2331 = vmatmul.mubr.f32.gmra.mrb[0].mxu0 %v2048
    %v2332 = vpop.f32.mrb[0].mxu0
    %v2333 = vadd.f32 %v2188, %v2332
    %v2334 = vpop.f32.mrb[0].mxu0
    %2335 = vmatprep.mubr.f32.mxu0 0.0
    %2336 = vmatmul.mubr.f32.gmra.mrb[0].mxu0 %v2051
    %v2337 = vpop.f32.mrb[0].mxu0
    %v2338 = vadd.f32 %v2193, %v2337
    %v2339 = vpop.f32.mrb[0].mxu0
    %2340 = vmatprep.mubr.f32.mxu0 0.0
    %2341 = vmatmul.mubr.f32.gmra.mrb[0].mxu0 %v2054
    %v2342 = vpop.f32.mrb[0].mxu0
    %v2343 = vadd.f32 %v2198, %v2342
    %v2344 = vpop.f32.mrb[0].mxu0
    %2345 = vdwg.mxu0
    %v2346 = vmax.f32 %v2268, 0.0
    %v2347 = vmax.f32 %v2273, 0.0
    %v2348 = vmax.f32 %v2278, 0.0
    %v2349 = vmax.f32 %v2283, 0.0
    %v2350 = vmax.f32 %v2288, 0.0
    %v2351 = vmax.f32 %v2293, 0.0
    %v2352 = vmax.f32 %v2298, 0.0
    %v2353 = vmax.f32 %v2303, 0.0
    %v2354 = vmax.f32 %v2308, 0.0
    %v2355 = vmax.f32 %v2313, 0.0
    %v2356 = vmax.f32 %v2318, 0.0
    %v2357 = vmax.f32 %v2323, 0.0
    %v2358 = vmax.f32 %v2328, 0.0
    %v2359 = vmax.f32 %v2333, 0.0
    %v2360 = vmax.f32 %v2338, 0.0
    %v2361 = vmax.f32 %v2343, 0.0
    %2362 = vst.msk [vmem:[%s73 + $0x1] sm:$0xff] %vm15, %v2346
    %2363 = vst.msk [vmem:[%s73 + $0x11] sm:$0xff] %vm15, %v2347
    %2364 = vst.msk [vmem:[%s73 + $0x21] sm:$0xff] %vm15, %v2348
    %2365 = vst.msk [vmem:[%s73 + $0x31] sm:$0xff] %vm15, %v2349
    %2366 = vst.msk [vmem:[%s73 + $0x41] sm:$0xff] %vm15, %v2350
    %2367 = vst.msk [vmem:[%s73 + $0x51] sm:$0xff] %vm15, %v2351
    %2368 = vst.msk [vmem:[%s73 + $0x61] sm:$0xff] %vm15, %v2352
    %2369 = vst.msk [vmem:[%s73 + $0x71] sm:$0xff] %vm15, %v2353
    %2370 = vst.msk [vmem:[%s73 + $0xa1] sm:$0xff] %vm15, %v2354
    %2371 = vst.msk [vmem:[%s73 + $0xb1] sm:$0xff] %vm15, %v2355
    %2372 = vst.msk [vmem:[%s73 + $0xc1] sm:$0xff] %vm15, %v2356
    %2373 = vst.msk [vmem:[%s73 + $0xd1] sm:$0xff] %vm15, %v2357
    %2374 = vst.msk [vmem:[%s73 + $0xe1] sm:$0xff] %vm15, %v2358
    %2375 = vst.msk [vmem:[%s73 + $0xf1] sm:$0xff] %vm15, %v2359
    %2376 = vst.msk [vmem:[%s73 + $0x101] sm:$0xff] %vm15, %v2360
    %2377 = vst.msk [vmem:[%s73 + $0x111] sm:$0xff] %vm15, %v2361
    %v2378 = vld [vmem:[#allocation2] sm:$0xff]
    %v2379 = vld [vmem:[#allocation2 + $0x10] sm:$0xff]
    %v2380 = vld [vmem:[#allocation2 + $0x20] sm:$0xff]
    %v2381 = vld [vmem:[#allocation2 + $0x30] sm:$0xff]
    %v2382 = vld [vmem:[#allocation2 + $0x40] sm:$0xff]
    %v2383 = vld [vmem:[#allocation2 + $0x50] sm:$0xff]
    %v2384 = vld [vmem:[#allocation2 + $0x60] sm:$0xff]
    %v2385 = vld [vmem:[#allocation2 + $0x70] sm:$0xff]
    %v2386 = vld [vmem:[#allocation2 + $0xa0] sm:$0xff]
    %v2387 = vld [vmem:[#allocation2 + $0xb0] sm:$0xff]
    %v2388 = vld [vmem:[#allocation2 + $0xc0] sm:$0xff]
    %v2389 = vld [vmem:[#allocation2 + $0xd0] sm:$0xff]
    %v2390 = vld [vmem:[#allocation2 + $0xe0] sm:$0xff]
    %v2391 = vld [vmem:[#allocation2 + $0xf0] sm:$0xff]
    %v2392 = vld [vmem:[#allocation2 + $0x100] sm:$0xff]
    %v2393 = vld [vmem:[#allocation2 + $0x110] sm:$0xff]
    %2394 = vst.msk [vmem:[#allocation3] sm:$0xff] %vm15, %v2378
    %2395 = vst.msk [vmem:[#allocation3 + $0x18] sm:$0xff] %vm15, %v2379
    %2396 = vst.msk [vmem:[#allocation3 + $0x30] sm:$0xff] %vm15, %v2380
    %2397 = vst.msk [vmem:[#allocation3 + $0x48] sm:$0xff] %vm15, %v2381
    %2398 = vst.msk [vmem:[#allocation3 + $0x60] sm:$0xff] %vm15, %v2382
    %2399 = vst.msk [vmem:[#allocation3 + $0x78] sm:$0xff] %vm15, %v2383
    %2400 = vst.msk [vmem:[#allocation3 + $0x90] sm:$0xff] %vm15, %v2384
    %2401 = vst.msk [vmem:[#allocation3 + $0xa8] sm:$0xff] %vm15, %v2385
    %2402 = vst.msk [vmem:[#allocation3 + $0xc0] sm:$0xff] %vm15, %v2386
    %2403 = vst.msk [vmem:[#allocation3 + $0xd8] sm:$0xff] %vm15, %v2387
    %2404 = vst.msk [vmem:[#allocation3 + $0xf0] sm:$0xff] %vm15, %v2388
    %2405 = vst.msk [vmem:[#allocation3 + $0x108] sm:$0xff] %vm15, %v2389
    %2406 = vst.msk [vmem:[#allocation3 + $0x120] sm:$0xff] %vm15, %v2390
    %2407 = vst.msk [vmem:[#allocation3 + $0x138] sm:$0xff] %vm15, %v2391
    %2408 = vst.msk [vmem:[#allocation3 + $0x150] sm:$0xff] %vm15, %v2392
    %2409 = vst.msk [vmem:[#allocation3 + $0x168] sm:$0xff] %vm15, %v2393
    %v2410 = vld [vmem:[#allocation2 + $0x1] sm:$0xff]
    %v2411 = vld [vmem:[#allocation2 + $0x11] sm:$0xff]
    %v2412 = vld [vmem:[#allocation2 + $0x21] sm:$0xff]
    %v2413 = vld [vmem:[#allocation2 + $0x31] sm:$0xff]
    %v2414 = vld [vmem:[#allocation2 + $0x41] sm:$0xff]
    %v2415 = vld [vmem:[#allocation2 + $0x51] sm:$0xff]
    %v2416 = vld [vmem:[#allocation2 + $0x61] sm:$0xff]
    %v2417 = vld [vmem:[#allocation2 + $0x71] sm:$0xff]
    %v2418 = vld [vmem:[#allocation2 + $0xa1] sm:$0xff]
    %v2419 = vld [vmem:[#allocation2 + $0xb1] sm:$0xff]
    %v2420 = vld [vmem:[#allocation2 + $0xc1] sm:$0xff]
    %v2421 = vld [vmem:[#allocation2 + $0xd1] sm:$0xff]
    %v2422 = vld [vmem:[#allocation2 + $0xe1] sm:$0xff]
    %v2423 = vld [vmem:[#allocation2 + $0xf1] sm:$0xff]
    %v2424 = vld [vmem:[#allocation2 + $0x101] sm:$0xff]
    %v2425 = vld [vmem:[#allocation2 + $0x111] sm:$0xff]
    %2442 = vrot.lane.b32.xlu0 %v2410, 32
    %v2443 = vpop.permute.xlu0 %2442
    %2444 = vrot.lane.b32.xlu0 %v2411, 32
    %v2445 = vpop.permute.xlu0 %2444
    %2446 = vrot.lane.b32.xlu0 %v2412, 32
    %v2447 = vpop.permute.xlu0 %2446
    %2448 = vrot.lane.b32.xlu0 %v2413, 32
    %v2449 = vpop.permute.xlu0 %2448
    %2450 = vrot.lane.b32.xlu0 %v2414, 32
    %v2451 = vpop.permute.xlu0 %2450
    %2452 = vrot.lane.b32.xlu0 %v2415, 32
    %v2453 = vpop.permute.xlu0 %2452
    %2454 = vrot.lane.b32.xlu0 %v2416, 32
    %v2455 = vpop.permute.xlu0 %2454
    %2456 = vrot.lane.b32.xlu0 %v2417, 32
    %v2457 = vpop.permute.xlu0 %2456
    %2458 = vrot.lane.b32.xlu0 %v2418, 32
    %v2459 = vpop.permute.xlu0 %2458
    %2460 = vrot.lane.b32.xlu0 %v2419, 32
    %v2461 = vpop.permute.xlu0 %2460
    %2462 = vrot.lane.b32.xlu0 %v2420, 32
    %v2463 = vpop.permute.xlu0 %2462
    %2464 = vrot.lane.b32.xlu0 %v2421, 32
    %v2465 = vpop.permute.xlu0 %2464
    %2466 = vrot.lane.b32.xlu0 %v2422, 32
    %v2467 = vpop.permute.xlu0 %2466
    %2468 = vrot.lane.b32.xlu0 %v2423, 32
    %v2469 = vpop.permute.xlu0 %2468
    %2470 = vrot.lane.b32.xlu0 %v2424, 32
    %v2471 = vpop.permute.xlu0 %2470
    %2472 = vrot.lane.b32.xlu0 %v2425, 32
    %v2473 = vpop.permute.xlu0 %2472
    %2490 = vst.msk [vmem:[#allocation3] sm:$0xff] %vm202, %v2443
    %2491 = vst.msk [vmem:[#allocation3 + $0x18] sm:$0xff] %vm202, %v2445
    %2492 = vst.msk [vmem:[#allocation3 + $0x30] sm:$0xff] %vm202, %v2447
    %2493 = vst.msk [vmem:[#allocation3 + $0x48] sm:$0xff] %vm202, %v2449
    %2494 = vst.msk [vmem:[#allocation3 + $0x60] sm:$0xff] %vm202, %v2451
    %2495 = vst.msk [vmem:[#allocation3 + $0x78] sm:$0xff] %vm202, %v2453
    %2496 = vst.msk [vmem:[#allocation3 + $0x90] sm:$0xff] %vm202, %v2455
    %2497 = vst.msk [vmem:[#allocation3 + $0xa8] sm:$0xff] %vm202, %v2457
    %2498 = vst.msk [vmem:[#allocation3 + $0xc0] sm:$0xff] %vm202, %v2459
    %2499 = vst.msk [vmem:[#allocation3 + $0xd8] sm:$0xff] %vm202, %v2461
    %2500 = vst.msk [vmem:[#allocation3 + $0xf0] sm:$0xff] %vm202, %v2463
    %2501 = vst.msk [vmem:[#allocation3 + $0x108] sm:$0xff] %vm202, %v2465
    %2502 = vst.msk [vmem:[#allocation3 + $0x120] sm:$0xff] %vm202, %v2467
    %2503 = vst.msk [vmem:[#allocation3 + $0x138] sm:$0xff] %vm202, %v2469
    %2504 = vst.msk [vmem:[#allocation3 + $0x150] sm:$0xff] %vm202, %v2471
    %2505 = vst.msk [vmem:[#allocation3 + $0x168] sm:$0xff] %vm202, %v2473
    %v2506 = vld [vmem:[#allocation2 + $0x2] sm:$0xff]
    %v2507 = vld [vmem:[#allocation2 + $0x12] sm:$0xff]
    %v2508 = vld [vmem:[#allocation2 + $0x22] sm:$0xff]
    %v2509 = vld [vmem:[#allocation2 + $0x32] sm:$0xff]
    %v2510 = vld [vmem:[#allocation2 + $0x42] sm:$0xff]
    %v2511 = vld [vmem:[#allocation2 + $0x52] sm:$0xff]
    %v2512 = vld [vmem:[#allocation2 + $0x62] sm:$0xff]
    %v2513 = vld [vmem:[#allocation2 + $0x72] sm:$0xff]
    %v2514 = vld [vmem:[#allocation2 + $0xa2] sm:$0xff]
    %v2515 = vld [vmem:[#allocation2 + $0xb2] sm:$0xff]
    %v2516 = vld [vmem:[#allocation2 + $0xc2] sm:$0xff]
    %v2517 = vld [vmem:[#allocation2 + $0xd2] sm:$0xff]
    %v2518 = vld [vmem:[#allocation2 + $0xe2] sm:$0xff]
    %v2519 = vld [vmem:[#allocation2 + $0xf2] sm:$0xff]
    %v2520 = vld [vmem:[#allocation2 + $0x102] sm:$0xff]
    %v2521 = vld [vmem:[#allocation2 + $0x112] sm:$0xff]
    %2538 = vrot.lane.b32.xlu0 %v2506, 64
    %v2539 = vpop.permute.xlu0 %2538
    %2540 = vrot.lane.b32.xlu0 %v2507, 64
    %v2541 = vpop.permute.xlu0 %2540
    %2542 = vrot.lane.b32.xlu0 %v2508, 64
    %v2543 = vpop.permute.xlu0 %2542
    %2544 = vrot.lane.b32.xlu0 %v2509, 64
    %v2545 = vpop.permute.xlu0 %2544
    %2546 = vrot.lane.b32.xlu0 %v2510, 64
    %v2547 = vpop.permute.xlu0 %2546
    %2548 = vrot.lane.b32.xlu0 %v2511, 64
    %v2549 = vpop.permute.xlu0 %2548
    %2550 = vrot.lane.b32.xlu0 %v2512, 64
    %v2551 = vpop.permute.xlu0 %2550
    %2552 = vrot.lane.b32.xlu0 %v2513, 64
    %v2553 = vpop.permute.xlu0 %2552
    %2554 = vrot.lane.b32.xlu0 %v2514, 64
    %v2555 = vpop.permute.xlu0 %2554
    %2556 = vrot.lane.b32.xlu0 %v2515, 64
    %v2557 = vpop.permute.xlu0 %2556
    %2558 = vrot.lane.b32.xlu0 %v2516, 64
    %v2559 = vpop.permute.xlu0 %2558
    %2560 = vrot.lane.b32.xlu0 %v2517, 64
    %v2561 = vpop.permute.xlu0 %2560
    %2562 = vrot.lane.b32.xlu0 %v2518, 64
    %v2563 = vpop.permute.xlu0 %2562
    %2564 = vrot.lane.b32.xlu0 %v2519, 64
    %v2565 = vpop.permute.xlu0 %2564
    %2566 = vrot.lane.b32.xlu0 %v2520, 64
    %v2567 = vpop.permute.xlu0 %2566
    %2568 = vrot.lane.b32.xlu0 %v2521, 64
    %v2569 = vpop.permute.xlu0 %2568
    %2586 = vst.msk [vmem:[#allocation3] sm:$0xff] %vm299, %v2539
    %2587 = vst.msk [vmem:[#allocation3 + $0x18] sm:$0xff] %vm299, %v2541
    %2588 = vst.msk [vmem:[#allocation3 + $0x30] sm:$0xff] %vm299, %v2543
    %2589 = vst.msk [vmem:[#allocation3 + $0x48] sm:$0xff] %vm299, %v2545
    %2590 = vst.msk [vmem:[#allocation3 + $0x60] sm:$0xff] %vm299, %v2547
    %2591 = vst.msk [vmem:[#allocation3 + $0x78] sm:$0xff] %vm299, %v2549
    %2592 = vst.msk [vmem:[#allocation3 + $0x90] sm:$0xff] %vm299, %v2551
    %2593 = vst.msk [vmem:[#allocation3 + $0xa8] sm:$0xff] %vm299, %v2553
    %2594 = vst.msk [vmem:[#allocation3 + $0xc0] sm:$0xff] %vm299, %v2555
    %2595 = vst.msk [vmem:[#allocation3 + $0xd8] sm:$0xff] %vm299, %v2557
    %2596 = vst.msk [vmem:[#allocation3 + $0xf0] sm:$0xff] %vm299, %v2559
    %2597 = vst.msk [vmem:[#allocation3 + $0x108] sm:$0xff] %vm299, %v2561
    %2598 = vst.msk [vmem:[#allocation3 + $0x120] sm:$0xff] %vm299, %v2563
    %2599 = vst.msk [vmem:[#allocation3 + $0x138] sm:$0xff] %vm299, %v2565
    %2600 = vst.msk [vmem:[#allocation3 + $0x150] sm:$0xff] %vm299, %v2567
    %2601 = vst.msk [vmem:[#allocation3 + $0x168] sm:$0xff] %vm299, %v2569
    %v2602 = vld [vmem:[%s73] sm:$0xff]
    %v2603 = vld [vmem:[%s73 + $0x10] sm:$0xff]
    %v2604 = vld [vmem:[%s73 + $0x20] sm:$0xff]
    %v2605 = vld [vmem:[%s73 + $0x30] sm:$0xff]
    %v2606 = vld [vmem:[%s73 + $0x40] sm:$0xff]
    %v2607 = vld [vmem:[%s73 + $0x50] sm:$0xff]
    %v2608 = vld [vmem:[%s73 + $0x60] sm:$0xff]
    %v2609 = vld [vmem:[%s73 + $0x70] sm:$0xff]
    %v2610 = vld [vmem:[%s73 + $0xa0] sm:$0xff]
    %v2611 = vld [vmem:[%s73 + $0xb0] sm:$0xff]
    %v2612 = vld [vmem:[%s73 + $0xc0] sm:$0xff]
    %v2613 = vld [vmem:[%s73 + $0xd0] sm:$0xff]
    %v2614 = vld [vmem:[%s73 + $0xe0] sm:$0xff]
    %v2615 = vld [vmem:[%s73 + $0xf0] sm:$0xff]
    %v2616 = vld [vmem:[%s73 + $0x100] sm:$0xff]
    %v2617 = vld [vmem:[%s73 + $0x110] sm:$0xff]
    %2634 = vrot.lane.b32.xlu0 %v2602, 96
    %v2635 = vpop.permute.xlu0 %2634
    %2636 = vrot.lane.b32.xlu0 %v2603, 96
    %v2637 = vpop.permute.xlu0 %2636
    %2638 = vrot.lane.b32.xlu0 %v2604, 96
    %v2639 = vpop.permute.xlu0 %2638
    %2640 = vrot.lane.b32.xlu0 %v2605, 96
    %v2641 = vpop.permute.xlu0 %2640
    %2642 = vrot.lane.b32.xlu0 %v2606, 96
    %v2643 = vpop.permute.xlu0 %2642
    %2644 = vrot.lane.b32.xlu0 %v2607, 96
    %v2645 = vpop.permute.xlu0 %2644
    %2646 = vrot.lane.b32.xlu0 %v2608, 96
    %v2647 = vpop.permute.xlu0 %2646
    %2648 = vrot.lane.b32.xlu0 %v2609, 96
    %v2649 = vpop.permute.xlu0 %2648
    %2650 = vrot.lane.b32.xlu0 %v2610, 96
    %v2651 = vpop.permute.xlu0 %2650
    %2652 = vrot.lane.b32.xlu0 %v2611, 96
    %v2653 = vpop.permute.xlu0 %2652
    %2654 = vrot.lane.b32.xlu0 %v2612, 96
    %v2655 = vpop.permute.xlu0 %2654
    %2656 = vrot.lane.b32.xlu0 %v2613, 96
    %v2657 = vpop.permute.xlu0 %2656
    %2658 = vrot.lane.b32.xlu0 %v2614, 96
    %v2659 = vpop.permute.xlu0 %2658
    %2660 = vrot.lane.b32.xlu0 %v2615, 96
    %v2661 = vpop.permute.xlu0 %2660
    %2662 = vrot.lane.b32.xlu0 %v2616, 96
    %v2663 = vpop.permute.xlu0 %2662
    %2664 = vrot.lane.b32.xlu0 %v2617, 96
    %v2665 = vpop.permute.xlu0 %2664
    %2682 = vst.msk [vmem:[#allocation3] sm:$0xff] %vm396, %v2635
    %2683 = vst.msk [vmem:[#allocation3 + $0x18] sm:$0xff] %vm396, %v2637
    %2684 = vst.msk [vmem:[#allocation3 + $0x30] sm:$0xff] %vm396, %v2639
    %2685 = vst.msk [vmem:[#allocation3 + $0x48] sm:$0xff] %vm396, %v2641
    %2686 = vst.msk [vmem:[#allocation3 + $0x60] sm:$0xff] %vm396, %v2643
    %2687 = vst.msk [vmem:[#allocation3 + $0x78] sm:$0xff] %vm396, %v2645
    %2688 = vst.msk [vmem:[#allocation3 + $0x90] sm:$0xff] %vm396, %v2647
    %2689 = vst.msk [vmem:[#allocation3 + $0xa8] sm:$0xff] %vm396, %v2649
    %2690 = vst.msk [vmem:[#allocation3 + $0xc0] sm:$0xff] %vm396, %v2651
    %2691 = vst.msk [vmem:[#allocation3 + $0xd8] sm:$0xff] %vm396, %v2653
    %2692 = vst.msk [vmem:[#allocation3 + $0xf0] sm:$0xff] %vm396, %v2655
    %2693 = vst.msk [vmem:[#allocation3 + $0x108] sm:$0xff] %vm396, %v2657
    %2694 = vst.msk [vmem:[#allocation3 + $0x120] sm:$0xff] %vm396, %v2659
    %2695 = vst.msk [vmem:[#allocation3 + $0x138] sm:$0xff] %vm396, %v2661
    %2696 = vst.msk [vmem:[#allocation3 + $0x150] sm:$0xff] %vm396, %v2663
    %2697 = vst.msk [vmem:[#allocation3 + $0x168] sm:$0xff] %vm396, %v2665
    %v2698 = vld [vmem:[%s73 + $0x1] sm:$0xff]
    %v2699 = vld [vmem:[%s73 + $0x11] sm:$0xff]
    %v2700 = vld [vmem:[%s73 + $0x21] sm:$0xff]
    %v2701 = vld [vmem:[%s73 + $0x31] sm:$0xff]
    %v2702 = vld [vmem:[%s73 + $0x41] sm:$0xff]
    %v2703 = vld [vmem:[%s73 + $0x51] sm:$0xff]
    %v2704 = vld [vmem:[%s73 + $0x61] sm:$0xff]
    %v2705 = vld [vmem:[%s73 + $0x71] sm:$0xff]
    %v2706 = vld [vmem:[%s73 + $0xa1] sm:$0xff]
    %v2707 = vld [vmem:[%s73 + $0xb1] sm:$0xff]
    %v2708 = vld [vmem:[%s73 + $0xc1] sm:$0xff]
    %v2709 = vld [vmem:[%s73 + $0xd1] sm:$0xff]
    %v2710 = vld [vmem:[%s73 + $0xe1] sm:$0xff]
    %v2711 = vld [vmem:[%s73 + $0xf1] sm:$0xff]
    %v2712 = vld [vmem:[%s73 + $0x101] sm:$0xff]
    %v2713 = vld [vmem:[%s73 + $0x111] sm:$0xff]
    %2714 = vst.msk [vmem:[#allocation3 + $0x8] sm:$0xff] %vm15, %v2698
    %2715 = vst.msk [vmem:[#allocation3 + $0x20] sm:$0xff] %vm15, %v2699
    %2716 = vst.msk [vmem:[#allocation3 + $0x38] sm:$0xff] %vm15, %v2700
    %2717 = vst.msk [vmem:[#allocation3 + $0x50] sm:$0xff] %vm15, %v2701
    %2718 = vst.msk [vmem:[#allocation3 + $0x68] sm:$0xff] %vm15, %v2702
    %2719 = vst.msk [vmem:[#allocation3 + $0x80] sm:$0xff] %vm15, %v2703
    %2720 = vst.msk [vmem:[#allocation3 + $0x98] sm:$0xff] %vm15, %v2704
    %2721 = vst.msk [vmem:[#allocation3 + $0xb0] sm:$0xff] %vm15, %v2705
    %2722 = vst.msk [vmem:[#allocation3 + $0xc8] sm:$0xff] %vm15, %v2706
    %2723 = vst.msk [vmem:[#allocation3 + $0xe0] sm:$0xff] %vm15, %v2707
    %2724 = vst.msk [vmem:[#allocation3 + $0xf8] sm:$0xff] %vm15, %v2708
    %2725 = vst.msk [vmem:[#allocation3 + $0x110] sm:$0xff] %vm15, %v2709
    %2726 = vst.msk [vmem:[#allocation3 + $0x128] sm:$0xff] %vm15, %v2710
    %2727 = vst.msk [vmem:[#allocation3 + $0x140] sm:$0xff] %vm15, %v2711
    %2728 = vst.msk [vmem:[#allocation3 + $0x158] sm:$0xff] %vm15, %v2712
    %2729 = vst.msk [vmem:[#allocation3 + $0x170] sm:$0xff] %vm15, %v2713
    %v2730 = vld [vmem:[%s73 + $0x2] sm:$0xff]
    %v2731 = vld [vmem:[%s73 + $0x12] sm:$0xff]
    %v2732 = vld [vmem:[%s73 + $0x22] sm:$0xff]
    %v2733 = vld [vmem:[%s73 + $0x32] sm:$0xff]
    %v2734 = vld [vmem:[%s73 + $0x42] sm:$0xff]
    %v2735 = vld [vmem:[%s73 + $0x52] sm:$0xff]
    %v2736 = vld [vmem:[%s73 + $0x62] sm:$0xff]
    %v2737 = vld [vmem:[%s73 + $0x72] sm:$0xff]
    %v2738 = vld [vmem:[%s73 + $0xa2] sm:$0xff]
    %v2739 = vld [vmem:[%s73 + $0xb2] sm:$0xff]
    %v2740 = vld [vmem:[%s73 + $0xc2] sm:$0xff]
    %v2741 = vld [vmem:[%s73 + $0xd2] sm:$0xff]
    %v2742 = vld [vmem:[%s73 + $0xe2] sm:$0xff]
    %v2743 = vld [vmem:[%s73 + $0xf2] sm:$0xff]
    %v2744 = vld [vmem:[%s73 + $0x102] sm:$0xff]
    %v2745 = vld [vmem:[%s73 + $0x112] sm:$0xff]
    %2762 = vrot.lane.b32.xlu0 %v2730, 32
    %v2763 = vpop.permute.xlu0 %2762
    %2764 = vrot.lane.b32.xlu0 %v2731, 32
    %v2765 = vpop.permute.xlu0 %2764
    %2766 = vrot.lane.b32.xlu0 %v2732, 32
    %v2767 = vpop.permute.xlu0 %2766
    %2768 = vrot.lane.b32.xlu0 %v2733, 32
    %v2769 = vpop.permute.xlu0 %2768
    %2770 = vrot.lane.b32.xlu0 %v2734, 32
    %v2771 = vpop.permute.xlu0 %2770
    %2772 = vrot.lane.b32.xlu0 %v2735, 32
    %v2773 = vpop.permute.xlu0 %2772
    %2774 = vrot.lane.b32.xlu0 %v2736, 32
    %v2775 = vpop.permute.xlu0 %2774
    %2776 = vrot.lane.b32.xlu0 %v2737, 32
    %v2777 = vpop.permute.xlu0 %2776
    %2778 = vrot.lane.b32.xlu0 %v2738, 32
    %v2779 = vpop.permute.xlu0 %2778
    %2780 = vrot.lane.b32.xlu0 %v2739, 32
    %v2781 = vpop.permute.xlu0 %2780
    %2782 = vrot.lane.b32.xlu0 %v2740, 32
    %v2783 = vpop.permute.xlu0 %2782
    %2784 = vrot.lane.b32.xlu0 %v2741, 32
    %v2785 = vpop.permute.xlu0 %2784
    %2786 = vrot.lane.b32.xlu0 %v2742, 32
    %v2787 = vpop.permute.xlu0 %2786
    %2788 = vrot.lane.b32.xlu0 %v2743, 32
    %v2789 = vpop.permute.xlu0 %2788
    %2790 = vrot.lane.b32.xlu0 %v2744, 32
    %v2791 = vpop.permute.xlu0 %2790
    %2792 = vrot.lane.b32.xlu0 %v2745, 32
    %v2793 = vpop.permute.xlu0 %2792
    %2810 = vst.msk [vmem:[#allocation3 + $0x8] sm:$0xff] %vm202, %v2763
    %2811 = vst.msk [vmem:[#allocation3 + $0x20] sm:$0xff] %vm202, %v2765
    %2812 = vst.msk [vmem:[#allocation3 + $0x38] sm:$0xff] %vm202, %v2767
    %2813 = vst.msk [vmem:[#allocation3 + $0x50] sm:$0xff] %vm202, %v2769
    %2814 = vst.msk [vmem:[#allocation3 + $0x68] sm:$0xff] %vm202, %v2771
    %2815 = vst.msk [vmem:[#allocation3 + $0x80] sm:$0xff] %vm202, %v2773
    %2816 = vst.msk [vmem:[#allocation3 + $0x98] sm:$0xff] %vm202, %v2775
    %2817 = vst.msk [vmem:[#allocation3 + $0xb0] sm:$0xff] %vm202, %v2777
    %2818 = vst.msk [vmem:[#allocation3 + $0xc8] sm:$0xff] %vm202, %v2779
    %2819 = vst.msk [vmem:[#allocation3 + $0xe0] sm:$0xff] %vm202, %v2781
    %2820 = vst.msk [vmem:[#allocation3 + $0xf8] sm:$0xff] %vm202, %v2783
    %2821 = vst.msk [vmem:[#allocation3 + $0x110] sm:$0xff] %vm202, %v2785
    %2822 = vst.msk [vmem:[#allocation3 + $0x128] sm:$0xff] %vm202, %v2787
    %2823 = vst.msk [vmem:[#allocation3 + $0x140] sm:$0xff] %vm202, %v2789
    %2824 = vst.msk [vmem:[#allocation3 + $0x158] sm:$0xff] %vm202, %v2791
    %2825 = vst.msk [vmem:[#allocation3 + $0x170] sm:$0xff] %vm202, %v2793
    %v2826 = vld [vmem:[%s541] sm:$0xff]
    %v2827 = vld [vmem:[%s541 + $0x10] sm:$0xff]
    %v2828 = vld [vmem:[%s541 + $0x20] sm:$0xff]
    %v2829 = vld [vmem:[%s541 + $0x30] sm:$0xff]
    %v2830 = vld [vmem:[%s541 + $0x40] sm:$0xff]
    %v2831 = vld [vmem:[%s541 + $0x50] sm:$0xff]
    %v2832 = vld [vmem:[%s541 + $0x60] sm:$0xff]
    %v2833 = vld [vmem:[%s541 + $0x70] sm:$0xff]
    %v2834 = vld [vmem:[%s541 + $0xa0] sm:$0xff]
    %v2835 = vld [vmem:[%s541 + $0xb0] sm:$0xff]
    %v2836 = vld [vmem:[%s541 + $0xc0] sm:$0xff]
    %v2837 = vld [vmem:[%s541 + $0xd0] sm:$0xff]
    %v2838 = vld [vmem:[%s541 + $0xe0] sm:$0xff]
    %v2839 = vld [vmem:[%s541 + $0xf0] sm:$0xff]
    %v2840 = vld [vmem:[%s541 + $0x100] sm:$0xff]
    %v2841 = vld [vmem:[%s541 + $0x110] sm:$0xff]
    %2858 = vrot.lane.b32.xlu0 %v2826, 64
    %v2859 = vpop.permute.xlu0 %2858
    %2860 = vrot.lane.b32.xlu0 %v2827, 64
    %v2861 = vpop.permute.xlu0 %2860
    %2862 = vrot.lane.b32.xlu0 %v2828, 64
    %v2863 = vpop.permute.xlu0 %2862
    %2864 = vrot.lane.b32.xlu0 %v2829, 64
    %v2865 = vpop.permute.xlu0 %2864
    %2866 = vrot.lane.b32.xlu0 %v2830, 64
    %v2867 = vpop.permute.xlu0 %2866
    %2868 = vrot.lane.b32.xlu0 %v2831, 64
    %v2869 = vpop.permute.xlu0 %2868
    %2870 = vrot.lane.b32.xlu0 %v2832, 64
    %v2871 = vpop.permute.xlu0 %2870
    %2872 = vrot.lane.b32.xlu0 %v2833, 64
    %v2873 = vpop.permute.xlu0 %2872
    %2874 = vrot.lane.b32.xlu0 %v2834, 64
    %v2875 = vpop.permute.xlu0 %2874
    %2876 = vrot.lane.b32.xlu0 %v2835, 64
    %v2877 = vpop.permute.xlu0 %2876
    %2878 = vrot.lane.b32.xlu0 %v2836, 64
    %v2879 = vpop.permute.xlu0 %2878
    %2880 = vrot.lane.b32.xlu0 %v2837, 64
    %v2881 = vpop.permute.xlu0 %2880
    %2882 = vrot.lane.b32.xlu0 %v2838, 64
    %v2883 = vpop.permute.xlu0 %2882
    %2884 = vrot.lane.b32.xlu0 %v2839, 64
    %v2885 = vpop.permute.xlu0 %2884
    %2886 = vrot.lane.b32.xlu0 %v2840, 64
    %v2887 = vpop.permute.xlu0 %2886
    %2888 = vrot.lane.b32.xlu0 %v2841, 64
    %v2889 = vpop.permute.xlu0 %2888
    %2906 = vst.msk [vmem:[#allocation3 + $0x8] sm:$0xff] %vm299, %v2859
    %2907 = vst.msk [vmem:[#allocation3 + $0x20] sm:$0xff] %vm299, %v2861
    %2908 = vst.msk [vmem:[#allocation3 + $0x38] sm:$0xff] %vm299, %v2863
    %2909 = vst.msk [vmem:[#allocation3 + $0x50] sm:$0xff] %vm299, %v2865
    %2910 = vst.msk [vmem:[#allocation3 + $0x68] sm:$0xff] %vm299, %v2867
    %2911 = vst.msk [vmem:[#allocation3 + $0x80] sm:$0xff] %vm299, %v2869
    %2912 = vst.msk [vmem:[#allocation3 + $0x98] sm:$0xff] %vm299, %v2871
    %2913 = vst.msk [vmem:[#allocation3 + $0xb0] sm:$0xff] %vm299, %v2873
    %2914 = vst.msk [vmem:[#allocation3 + $0xc8] sm:$0xff] %vm299, %v2875
    %2915 = vst.msk [vmem:[#allocation3 + $0xe0] sm:$0xff] %vm299, %v2877
    %2916 = vst.msk [vmem:[#allocation3 + $0xf8] sm:$0xff] %vm299, %v2879
    %2917 = vst.msk [vmem:[#allocation3 + $0x110] sm:$0xff] %vm299, %v2881
    %2918 = vst.msk [vmem:[#allocation3 + $0x128] sm:$0xff] %vm299, %v2883
    %2919 = vst.msk [vmem:[#allocation3 + $0x140] sm:$0xff] %vm299, %v2885
    %2920 = vst.msk [vmem:[#allocation3 + $0x158] sm:$0xff] %vm299, %v2887
    %2921 = vst.msk [vmem:[#allocation3 + $0x170] sm:$0xff] %vm299, %v2889
    %v2922 = vld [vmem:[%s541 + $0x1] sm:$0xff]
    %v2923 = vld [vmem:[%s541 + $0x11] sm:$0xff]
    %v2924 = vld [vmem:[%s541 + $0x21] sm:$0xff]
    %v2925 = vld [vmem:[%s541 + $0x31] sm:$0xff]
    %v2926 = vld [vmem:[%s541 + $0x41] sm:$0xff]
    %v2927 = vld [vmem:[%s541 + $0x51] sm:$0xff]
    %v2928 = vld [vmem:[%s541 + $0x61] sm:$0xff]
    %v2929 = vld [vmem:[%s541 + $0x71] sm:$0xff]
    %v2930 = vld [vmem:[%s541 + $0xa1] sm:$0xff]
    %v2931 = vld [vmem:[%s541 + $0xb1] sm:$0xff]
    %v2932 = vld [vmem:[%s541 + $0xc1] sm:$0xff]
    %v2933 = vld [vmem:[%s541 + $0xd1] sm:$0xff]
    %v2934 = vld [vmem:[%s541 + $0xe1] sm:$0xff]
    %v2935 = vld [vmem:[%s541 + $0xf1] sm:$0xff]
    %v2936 = vld [vmem:[%s541 + $0x101] sm:$0xff]
    %v2937 = vld [vmem:[%s541 + $0x111] sm:$0xff]
    %2954 = vrot.lane.b32.xlu0 %v2922, 96
    %v2955 = vpop.permute.xlu0 %2954
    %2956 = vrot.lane.b32.xlu0 %v2923, 96
    %v2957 = vpop.permute.xlu0 %2956
    %2958 = vrot.lane.b32.xlu0 %v2924, 96
    %v2959 = vpop.permute.xlu0 %2958
    %2960 = vrot.lane.b32.xlu0 %v2925, 96
    %v2961 = vpop.permute.xlu0 %2960
    %2962 = vrot.lane.b32.xlu0 %v2926, 96
    %v2963 = vpop.permute.xlu0 %2962
    %2964 = vrot.lane.b32.xlu0 %v2927, 96
    %v2965 = vpop.permute.xlu0 %2964
    %2966 = vrot.lane.b32.xlu0 %v2928, 96
    %v2967 = vpop.permute.xlu0 %2966
    %2968 = vrot.lane.b32.xlu0 %v2929, 96
    %v2969 = vpop.permute.xlu0 %2968
    %2970 = vrot.lane.b32.xlu0 %v2930, 96
    %v2971 = vpop.permute.xlu0 %2970
    %2972 = vrot.lane.b32.xlu0 %v2931, 96
    %v2973 = vpop.permute.xlu0 %2972
    %2974 = vrot.lane.b32.xlu0 %v2932, 96
    %v2975 = vpop.permute.xlu0 %2974
    %2976 = vrot.lane.b32.xlu0 %v2933, 96
    %v2977 = vpop.permute.xlu0 %2976
    %2978 = vrot.lane.b32.xlu0 %v2934, 96
    %v2979 = vpop.permute.xlu0 %2978
    %2980 = vrot.lane.b32.xlu0 %v2935, 96
    %v2981 = vpop.permute.xlu0 %2980
    %2982 = vrot.lane.b32.xlu0 %v2936, 96
    %v2983 = vpop.permute.xlu0 %2982
    %2984 = vrot.lane.b32.xlu0 %v2937, 96
    %v2985 = vpop.permute.xlu0 %2984
    %3002 = vst.msk [vmem:[#allocation3 + $0x8] sm:$0xff] %vm396, %v2955
    %3003 = vst.msk [vmem:[#allocation3 + $0x20] sm:$0xff] %vm396, %v2957
    %3004 = vst.msk [vmem:[#allocation3 + $0x38] sm:$0xff] %vm396, %v2959
    %3005 = vst.msk [vmem:[#allocation3 + $0x50] sm:$0xff] %vm396, %v2961
    %3006 = vst.msk [vmem:[#allocation3 + $0x68] sm:$0xff] %vm396, %v2963
    %3007 = vst.msk [vmem:[#allocation3 + $0x80] sm:$0xff] %vm396, %v2965
    %3008 = vst.msk [vmem:[#allocation3 + $0x98] sm:$0xff] %vm396, %v2967
    %3009 = vst.msk [vmem:[#allocation3 + $0xb0] sm:$0xff] %vm396, %v2969
    %3010 = vst.msk [vmem:[#allocation3 + $0xc8] sm:$0xff] %vm396, %v2971
    %3011 = vst.msk [vmem:[#allocation3 + $0xe0] sm:$0xff] %vm396, %v2973
    %3012 = vst.msk [vmem:[#allocation3 + $0xf8] sm:$0xff] %vm396, %v2975
    %3013 = vst.msk [vmem:[#allocation3 + $0x110] sm:$0xff] %vm396, %v2977
    %3014 = vst.msk [vmem:[#allocation3 + $0x128] sm:$0xff] %vm396, %v2979
    %3015 = vst.msk [vmem:[#allocation3 + $0x140] sm:$0xff] %vm396, %v2981
    %3016 = vst.msk [vmem:[#allocation3 + $0x158] sm:$0xff] %vm396, %v2983
    %3017 = vst.msk [vmem:[#allocation3 + $0x170] sm:$0xff] %vm396, %v2985
    %v3018 = vld [vmem:[%s541 + $0x2] sm:$0xff]
    %v3019 = vld [vmem:[%s541 + $0x12] sm:$0xff]
    %v3020 = vld [vmem:[%s541 + $0x22] sm:$0xff]
    %v3021 = vld [vmem:[%s541 + $0x32] sm:$0xff]
    %v3022 = vld [vmem:[%s541 + $0x42] sm:$0xff]
    %v3023 = vld [vmem:[%s541 + $0x52] sm:$0xff]
    %v3024 = vld [vmem:[%s541 + $0x62] sm:$0xff]
    %v3025 = vld [vmem:[%s541 + $0x72] sm:$0xff]
    %v3026 = vld [vmem:[%s541 + $0xa2] sm:$0xff]
    %v3027 = vld [vmem:[%s541 + $0xb2] sm:$0xff]
    %v3028 = vld [vmem:[%s541 + $0xc2] sm:$0xff]
    %v3029 = vld [vmem:[%s541 + $0xd2] sm:$0xff]
    %v3030 = vld [vmem:[%s541 + $0xe2] sm:$0xff]
    %v3031 = vld [vmem:[%s541 + $0xf2] sm:$0xff]
    %v3032 = vld [vmem:[%s541 + $0x102] sm:$0xff]
    %v3033 = vld [vmem:[%s541 + $0x112] sm:$0xff]
    %3034 = vst.msk [vmem:[#allocation3 + $0x10] sm:$0xff] %vm15, %v3018
    %3035 = vst.msk [vmem:[#allocation3 + $0x28] sm:$0xff] %vm15, %v3019
    %3036 = vst.msk [vmem:[#allocation3 + $0x40] sm:$0xff] %vm15, %v3020
    %3037 = vst.msk [vmem:[#allocation3 + $0x58] sm:$0xff] %vm15, %v3021
    %3038 = vst.msk [vmem:[#allocation3 + $0x70] sm:$0xff] %vm15, %v3022
    %3039 = vst.msk [vmem:[#allocation3 + $0x88] sm:$0xff] %vm15, %v3023
    %3040 = vst.msk [vmem:[#allocation3 + $0xa0] sm:$0xff] %vm15, %v3024
    %3041 = vst.msk [vmem:[#allocation3 + $0xb8] sm:$0xff] %vm15, %v3025
    %3042 = vst.msk [vmem:[#allocation3 + $0xd0] sm:$0xff] %vm15, %v3026
    %3043 = vst.msk [vmem:[#allocation3 + $0xe8] sm:$0xff] %vm15, %v3027
    %3044 = vst.msk [vmem:[#allocation3 + $0x100] sm:$0xff] %vm15, %v3028
    %3045 = vst.msk [vmem:[#allocation3 + $0x118] sm:$0xff] %vm15, %v3029
    %3046 = vst.msk [vmem:[#allocation3 + $0x130] sm:$0xff] %vm15, %v3030
    %3047 = vst.msk [vmem:[#allocation3 + $0x148] sm:$0xff] %vm15, %v3031
    %3048 = vst.msk [vmem:[#allocation3 + $0x160] sm:$0xff] %vm15, %v3032
    %3049 = vst.msk [vmem:[#allocation3 + $0x178] sm:$0xff] %vm15, %v3033
    %v3050 = vld [vmem:[#allocation3] sm:$0xff]
    %v3051 = vld [vmem:[#allocation3 + $0x8] sm:$0xff]
    %v3052 = vld [vmem:[#allocation3 + $0x10] sm:$0xff]
    %v3053 = vld [vmem:[#allocation3 + $0x18] sm:$0xff]
    %v3054 = vld [vmem:[#allocation3 + $0x20] sm:$0xff]
    %v3055 = vld [vmem:[#allocation3 + $0x28] sm:$0xff]
    %v3056 = vld [vmem:[#allocation3 + $0x30] sm:$0xff]
    %v3057 = vld [vmem:[#allocation3 + $0x38] sm:$0xff]
    %v3058 = vld [vmem:[#allocation3 + $0x40] sm:$0xff]
    %v3059 = vld [vmem:[#allocation3 + $0x48] sm:$0xff]
    %v3060 = vld [vmem:[#allocation3 + $0x50] sm:$0xff]
    %v3061 = vld [vmem:[#allocation3 + $0x58] sm:$0xff]
    %v3062 = vld [vmem:[#allocation3 + $0x60] sm:$0xff]
    %v3063 = vld [vmem:[#allocation3 + $0x68] sm:$0xff]
    %v3064 = vld [vmem:[#allocation3 + $0x70] sm:$0xff]
    %v3065 = vld [vmem:[#allocation3 + $0x78] sm:$0xff]
    %v3066 = vld [vmem:[#allocation3 + $0x80] sm:$0xff]
    %v3067 = vld [vmem:[#allocation3 + $0x88] sm:$0xff]
    %v3068 = vld [vmem:[#allocation3 + $0x90] sm:$0xff]
    %v3069 = vld [vmem:[#allocation3 + $0x98] sm:$0xff]
    %v3070 = vld [vmem:[#allocation3 + $0xa0] sm:$0xff]
    %v3071 = vld [vmem:[#allocation3 + $0xa8] sm:$0xff]
    %v3072 = vld [vmem:[#allocation3 + $0xb0] sm:$0xff]
    %v3073 = vld [vmem:[#allocation3 + $0xb8] sm:$0xff]
    %v3074 = vld [vmem:[#allocation3 + $0xc0] sm:$0xff]
    %v3075 = vld [vmem:[#allocation3 + $0xc8] sm:$0xff]
    %v3076 = vld [vmem:[#allocation3 + $0xd0] sm:$0xff]
    %v3077 = vld [vmem:[#allocation3 + $0xd8] sm:$0xff]
    %v3078 = vld [vmem:[#allocation3 + $0xe0] sm:$0xff]
    %v3079 = vld [vmem:[#allocation3 + $0xe8] sm:$0xff]
    %v3080 = vld [vmem:[#allocation3 + $0xf0] sm:$0xff]
    %v3081 = vld [vmem:[#allocation3 + $0xf8] sm:$0xff]
    %v3082 = vld [vmem:[#allocation3 + $0x100] sm:$0xff]
    %v3083 = vld [vmem:[#allocation3 + $0x108] sm:$0xff]
    %v3084 = vld [vmem:[#allocation3 + $0x110] sm:$0xff]
    %v3085 = vld [vmem:[#allocation3 + $0x118] sm:$0xff]
    %v3086 = vld [vmem:[#allocation3 + $0x120] sm:$0xff]
    %v3087 = vld [vmem:[#allocation3 + $0x128] sm:$0xff]
    %v3088 = vld [vmem:[#allocation3 + $0x130] sm:$0xff]
    %v3089 = vld [vmem:[#allocation3 + $0x138] sm:$0xff]
    %v3090 = vld [vmem:[#allocation3 + $0x140] sm:$0xff]
    %v3091 = vld [vmem:[#allocation3 + $0x148] sm:$0xff]
    %v3092 = vld [vmem:[#allocation3 + $0x150] sm:$0xff]
    %v3093 = vld [vmem:[#allocation3 + $0x158] sm:$0xff]
    %v3094 = vld [vmem:[#allocation3 + $0x160] sm:$0xff]
    %v3095 = vld [vmem:[#allocation3 + $0x168] sm:$0xff]
    %v3096 = vld [vmem:[#allocation3 + $0x170] sm:$0xff]
    %v3097 = vld [vmem:[#allocation3 + $0x178] sm:$0xff]
    %s3098 = scalar_lea.vmem %s1, 576
    %v3099 = vld [vmem:[%s3098] sm:$0xff]
    %v3100 = vld [vmem:[%s3098 + $0x8] sm:$0xff]
    %v3101 = vld [vmem:[%s3098 + $0x10] sm:$0xff]
    %v3102 = vld [vmem:[%s3098 + $0x18] sm:$0xff]
    %v3103 = vld [vmem:[%s3098 + $0x20] sm:$0xff]
    %v3104 = vld [vmem:[%s3098 + $0x28] sm:$0xff]
    %v3105 = vld [vmem:[%s3098 + $0x30] sm:$0xff]
    %v3106 = vld [vmem:[%s3098 + $0x38] sm:$0xff]
    %v3107 = vld [vmem:[%s3098 + $0x40] sm:$0xff]
    %v3108 = vld [vmem:[%s3098 + $0x48] sm:$0xff]
    %v3109 = vld [vmem:[%s3098 + $0x50] sm:$0xff]
    %v3110 = vld [vmem:[%s3098 + $0x58] sm:$0xff]
    %v3111 = vld [vmem:[%s3098 + $0x60] sm:$0xff]
    %v3112 = vld [vmem:[%s3098 + $0x68] sm:$0xff]
    %v3113 = vld [vmem:[%s3098 + $0x70] sm:$0xff]
    %v3114 = vld [vmem:[%s3098 + $0x78] sm:$0xff]
    %v3115 = vld [vmem:[%s3098 + $0x80] sm:$0xff]
    %v3116 = vld [vmem:[%s3098 + $0x88] sm:$0xff]
    %v3117 = vld [vmem:[%s3098 + $0x90] sm:$0xff]
    %v3118 = vld [vmem:[%s3098 + $0x98] sm:$0xff]
    %v3119 = vld [vmem:[%s3098 + $0xa0] sm:$0xff]
    %v3120 = vld [vmem:[%s3098 + $0xa8] sm:$0xff]
    %v3121 = vld [vmem:[%s3098 + $0xb0] sm:$0xff]
    %v3122 = vld [vmem:[%s3098 + $0xb8] sm:$0xff]
    %v3123 = vld [vmem:[%s3098 + $0xc0] sm:$0xff]
    %v3124 = vld [vmem:[%s3098 + $0xc8] sm:$0xff]
    %v3125 = vld [vmem:[%s3098 + $0xd0] sm:$0xff]
    %v3126 = vld [vmem:[%s3098 + $0xd8] sm:$0xff]
    %v3127 = vld [vmem:[%s3098 + $0xe0] sm:$0xff]
    %v3128 = vld [vmem:[%s3098 + $0xe8] sm:$0xff]
    %v3129 = vld [vmem:[%s3098 + $0xf0] sm:$0xff]
    %v3130 = vld [vmem:[%s3098 + $0xf8] sm:$0xff]
    %v3131 = vld [vmem:[%s3098 + $0x100] sm:$0xff]
    %v3132 = vld [vmem:[%s3098 + $0x108] sm:$0xff]
    %v3133 = vld [vmem:[%s3098 + $0x110] sm:$0xff]
    %v3134 = vld [vmem:[%s3098 + $0x118] sm:$0xff]
    %s3135 = scalar_lea.vmem %s2, 2
    %v3136 = vld [vmem:[%s3135] sm:$0x1]
    %v3138 = vlaneseq
    %v3139 = vshrl.u32 %v3138, 7
    %v3140 = vsub.s32 0, %v3139
    %v3141 = vrot.slane %v3136, %v3140
    %v3144 = vsel %vm15, %v3052, 0
    %v3147 = vsel %vm15, %v3055, 0
    %v3150 = vsel %vm15, %v3058, 0
    %v3153 = vsel %vm15, %v3061, 0
    %v3156 = vsel %vm15, %v3064, 0
    %v3159 = vsel %vm15, %v3067, 0
    %v3162 = vsel %vm15, %v3070, 0
    %v3165 = vsel %vm15, %v3073, 0
    %v3168 = vsel %vm15, %v3076, 0
    %v3171 = vsel %vm15, %v3079, 0
    %v3174 = vsel %vm15, %v3082, 0
    %v3177 = vsel %vm15, %v3085, 0
    %v3180 = vsel %vm15, %v3088, 0
    %v3183 = vsel %vm15, %v3091, 0
    %v3186 = vsel %vm15, %v3094, 0
    %v3189 = vsel %vm15, %v3097, 0
    %3191 = vmatprep.subr.mxu0 0.0
    %3192 = vmatpush1.msra.mxu0 %v3099
    %3193 = vmatprep.subr.mxu0 0.0
    %3194 = vmatpush1.msra.mxu0 %v3100
    %3195 = vmatprep.subr.mxu0 0.0
    %3196 = vmatpush1.msra.mxu0 %v3101
    %3197 = vmatprep.subr.mxu0 0.0
    %3198 = vmatpush1.msra.mxu0 %v3102
    %3199 = vmatprep.subr.mxu0 0.0
    %3200 = vmatpush1.msra.mxu0 %v3103
    %3201 = vmatprep.subr.mxu0 0.0
    %3202 = vmatpush1.msra.mxu0 %v3104
    %3203 = vmatprep.subr.mxu0 0.0
    %3204 = vmatpush1.msra.mxu0 %v3105
    %3205 = vmatprep.subr.mxu0 0.0
    %3206 = vmatpush1.msra.mxu0 %v3106
    %3207 = vmatprep.subr.mxu0 0.0
    %3208 = vmatpush1.msra.mxu0 %v3107
    %3209 = vmatprep.subr.mxu0 0.0
    %3210 = vmatpush1.msra.mxu0 %v3108
    %3211 = vmatprep.subr.mxu0 0.0
    %3212 = vmatpush1.msra.mxu0 %v3109
    %3213 = vmatprep.subr.mxu0 0.0
    %3214 = vmatpush1.msra.mxu0 %v3110
    %3215 = vmatprep.subr.mxu0 0.0
    %3216 = vmatpush1.msra.mxu0 %v3111
    %3217 = vmatprep.subr.mxu0 0.0
    %3218 = vmatpush1.msra.mxu0 %v3112
    %3219 = vmatprep.subr.mxu0 0.0
    %3220 = vmatpush1.msra.mxu0 %v3113
    %3221 = vmatprep.subr.mxu0 0.0
    %3222 = vmatpush1.msra.mxu0 %v3114
    %3223 = vmatprep.subr.mxu0 0.0
    %3224 = vmatpush1.msra.mxu0 %v3115
    %3225 = vmatprep.subr.mxu0 0.0
    %3226 = vmatpush1.msra.mxu0 %v3116
    %3227 = vmatprep.subr.mxu0 0.0
    %3228 = vmatpush1.msra.mxu0 %v3117
    %3229 = vmatprep.subr.mxu0 0.0
    %3230 = vmatpush1.msra.mxu0 %v3118
    %3231 = vmatprep.subr.mxu0 0.0
    %3232 = vmatpush1.msra.mxu0 %v3119
    %3233 = vmatprep.subr.mxu0 0.0
    %3234 = vmatpush1.msra.mxu0 %v3120
    %3235 = vmatprep.subr.mxu0 0.0
    %3236 = vmatpush1.msra.mxu0 %v3121
    %3237 = vmatprep.subr.mxu0 0.0
    %3238 = vmatpush1.msra.mxu0 %v3122
    %3239 = vmatprep.subr.mxu0 0.0
    %3240 = vmatpush1.msra.mxu0 %v3123
    %3241 = vmatprep.subr.mxu0 0.0
    %3242 = vmatpush1.msra.mxu0 %v3124
    %3243 = vmatprep.subr.mxu0 0.0
    %3244 = vmatpush1.msra.mxu0 %v3125
    %3245 = vmatprep.subr.mxu0 0.0
    %3246 = vmatpush1.msra.mxu0 %v3126
    %3247 = vmatprep.subr.mxu0 0.0
    %3248 = vmatpush1.msra.mxu0 %v3127
    %3249 = vmatprep.subr.mxu0 0.0
    %3250 = vmatpush1.msra.mxu0 %v3128
    %3251 = vmatprep.subr.mxu0 0.0
    %3252 = vmatpush1.msra.mxu0 %v3129
    %3253 = vmatprep.subr.mxu0 0.0
    %3254 = vmatpush1.msra.mxu0 %v3130
    %3255 = vmatprep.mubr.f32.mxu0 %v3051
    %3256 = vmatmul.mubr.f32.gmra.mrb[0].mxu0 %v3050
    %v3257 = vpop.f32.mrb[0].mxu0
    %v3258 = vadd.f32 %v3141, %v3257
    %v3259 = vpop.f32.mrb[0].mxu0
    %3260 = vmatprep.mubr.f32.mxu0 %v3054
    %3261 = vmatmul.mubr.f32.gmra.mrb[0].mxu0 %v3053
    %v3262 = vpop.f32.mrb[0].mxu0
    %v3263 = vadd.f32 %v3141, %v3262
    %v3264 = vpop.f32.mrb[0].mxu0
    %3265 = vmatprep.mubr.f32.mxu0 %v3057
    %3266 = vmatmul.mubr.f32.gmra.mrb[0].mxu0 %v3056
    %v3267 = vpop.f32.mrb[0].mxu0
    %v3268 = vadd.f32 %v3141, %v3267
    %v3269 = vpop.f32.mrb[0].mxu0
    %3270 = vmatprep.mubr.f32.mxu0 %v3060
    %3271 = vmatmul.mubr.f32.gmra.mrb[0].mxu0 %v3059
    %v3272 = vpop.f32.mrb[0].mxu0
    %v3273 = vadd.f32 %v3141, %v3272
    %v3274 = vpop.f32.mrb[0].mxu0
    %3275 = vmatprep.mubr.f32.mxu0 %v3063
    %3276 = vmatmul.mubr.f32.gmra.mrb[0].mxu0 %v3062
    %v3277 = vpop.f32.mrb[0].mxu0
    %v3278 = vadd.f32 %v3141, %v3277
    %v3279 = vpop.f32.mrb[0].mxu0
    %3280 = vmatprep.mubr.f32.mxu0 %v3066
    %3281 = vmatmul.mubr.f32.gmra.mrb[0].mxu0 %v3065
    %v3282 = vpop.f32.mrb[0].mxu0
    %v3283 = vadd.f32 %v3141, %v3282
    %v3284 = vpop.f32.mrb[0].mxu0
    %3285 = vmatprep.mubr.f32.mxu0 %v3069
    %3286 = vmatmul.mubr.f32.gmra.mrb[0].mxu0 %v3068
    %v3287 = vpop.f32.mrb[0].mxu0
    %v3288 = vadd.f32 %v3141, %v3287
    %v3289 = vpop.f32.mrb[0].mxu0
    %3290 = vmatprep.mubr.f32.mxu0 %v3072
    %3291 = vmatmul.mubr.f32.gmra.mrb[0].mxu0 %v3071
    %v3292 = vpop.f32.mrb[0].mxu0
    %v3293 = vadd.f32 %v3141, %v3292
    %v3294 = vpop.f32.mrb[0].mxu0
    %3295 = vmatprep.mubr.f32.mxu0 %v3075
    %3296 = vmatmul.mubr.f32.gmra.mrb[0].mxu0 %v3074
    %v3297 = vpop.f32.mrb[0].mxu0
    %v3298 = vadd.f32 %v3141, %v3297
    %v3299 = vpop.f32.mrb[0].mxu0
    %3300 = vmatprep.mubr.f32.mxu0 %v3078
    %3301 = vmatmul.mubr.f32.gmra.mrb[0].mxu0 %v3077
    %v3302 = vpop.f32.mrb[0].mxu0
    %v3303 = vadd.f32 %v3141, %v3302
    %v3304 = vpop.f32.mrb[0].mxu0
    %3305 = vmatprep.mubr.f32.mxu0 %v3081
    %3306 = vmatmul.mubr.f32.gmra.mrb[0].mxu0 %v3080
    %v3307 = vpop.f32.mrb[0].mxu0
    %v3308 = vadd.f32 %v3141, %v3307
    %v3309 = vpop.f32.mrb[0].mxu0
    %3310 = vmatprep.mubr.f32.mxu0 %v3084
    %3311 = vmatmul.mubr.f32.gmra.mrb[0].mxu0 %v3083
    %v3312 = vpop.f32.mrb[0].mxu0
    %v3313 = vadd.f32 %v3141, %v3312
    %v3314 = vpop.f32.mrb[0].mxu0
    %3315 = vmatprep.mubr.f32.mxu0 %v3087
    %3316 = vmatmul.mubr.f32.gmra.mrb[0].mxu0 %v3086
    %v3317 = vpop.f32.mrb[0].mxu0
    %v3318 = vadd.f32 %v3141, %v3317
    %v3319 = vpop.f32.mrb[0].mxu0
    %3320 = vmatprep.mubr.f32.mxu0 %v3090
    %3321 = vmatmul.mubr.f32.gmra.mrb[0].mxu0 %v3089
    %v3322 = vpop.f32.mrb[0].mxu0
    %v3323 = vadd.f32 %v3141, %v3322
    %v3324 = vpop.f32.mrb[0].mxu0
    %3325 = vmatprep.mubr.f32.mxu0 %v3093
    %3326 = vmatmul.mubr.f32.gmra.mrb[0].mxu0 %v3092
    %v3327 = vpop.f32.mrb[0].mxu0
    %v3328 = vadd.f32 %v3141, %v3327
    %v3329 = vpop.f32.mrb[0].mxu0
    %3330 = vmatprep.mubr.f32.mxu0 %v3096
    %3331 = vmatmul.mubr.f32.gmra.mrb[0].mxu0 %v3095
    %v3332 = vpop.f32.mrb[0].mxu0
    %v3333 = vadd.f32 %v3141, %v3332
    %v3334 = vpop.f32.mrb[0].mxu0
    %3335 = vdwg.mxu0
    %3336 = vmatprep.subr.mxu0 0.0
    %3337 = vmatpush1.msra.mxu0 %v3131
    %3338 = vmatprep.subr.mxu0 0.0
    %3339 = vmatpush1.msra.mxu0 %v3132
    %3340 = vmatprep.subr.mxu0 0.0
    %3341 = vmatpush1.msra.mxu0 %v3133
    %3342 = vmatprep.subr.mxu0 0.0
    %3343 = vmatpush1.msra.mxu0 %v3134
    %3344 = vmatprep.subr.mxu0 0.0
    %3345 = vmatpush1.msra.mxu0 0.0
    %3346 = vmatprep.subr.mxu0 0.0
    %3347 = vmatpush1.msra.mxu0 0.0
    %3348 = vmatprep.subr.mxu0 0.0
    %3349 = vmatpush1.msra.mxu0 0.0
    %3350 = vmatprep.subr.mxu0 0.0
    %3351 = vmatpush1.msra.mxu0 0.0
    %3352 = vmatprep.subr.mxu0 0.0
    %3353 = vmatpush1.msra.mxu0 0.0
    %3354 = vmatprep.subr.mxu0 0.0
    %3355 = vmatpush1.msra.mxu0 0.0
    %3356 = vmatprep.subr.mxu0 0.0
    %3357 = vmatpush1.msra.mxu0 0.0
    %3358 = vmatprep.subr.mxu0 0.0
    %3359 = vmatpush1.msra.mxu0 0.0
    %3360 = vmatprep.subr.mxu0 0.0
    %3361 = vmatpush1.msra.mxu0 0.0
    %3362 = vmatprep.subr.mxu0 0.0
    %3363 = vmatpush1.msra.mxu0 0.0
    %3364 = vmatprep.subr.mxu0 0.0
    %3365 = vmatpush1.msra.mxu0 0.0
    %3366 = vmatprep.subr.mxu0 0.0
    %3367 = vmatpush1.msra.mxu0 0.0
    %3368 = vmatprep.subr.mxu0 0.0
    %3369 = vmatpush1.msra.mxu0 0.0
    %3370 = vmatprep.subr.mxu0 0.0
    %3371 = vmatpush1.msra.mxu0 0.0
    %3372 = vmatprep.subr.mxu0 0.0
    %3373 = vmatpush1.msra.mxu0 0.0
    %3374 = vmatprep.subr.mxu0 0.0
    %3375 = vmatpush1.msra.mxu0 0.0
    %3376 = vmatprep.subr.mxu0 0.0
    %3377 = vmatpush1.msra.mxu0 0.0
    %3378 = vmatprep.subr.mxu0 0.0
    %3379 = vmatpush1.msra.mxu0 0.0
    %3380 = vmatprep.subr.mxu0 0.0
    %3381 = vmatpush1.msra.mxu0 0.0
    %3382 = vmatprep.subr.mxu0 0.0
    %3383 = vmatpush1.msra.mxu0 0.0
    %3384 = vmatprep.subr.mxu0 0.0
    %3385 = vmatpush1.msra.mxu0 0.0
    %3386 = vmatprep.subr.mxu0 0.0
    %3387 = vmatpush1.msra.mxu0 0.0
    %3388 = vmatprep.subr.mxu0 0.0
    %3389 = vmatpush1.msra.mxu0 0.0
    %3390 = vmatprep.subr.mxu0 0.0
    %3391 = vmatpush1.msra.mxu0 0.0
    %3392 = vmatprep.subr.mxu0 0.0
    %3393 = vmatpush1.msra.mxu0 0.0
    %3394 = vmatprep.subr.mxu0 0.0
    %3395 = vmatpush1.msra.mxu0 0.0
    %3396 = vmatprep.subr.mxu0 0.0
    %3397 = vmatpush1.msra.mxu0 0.0
    %3398 = vmatprep.subr.mxu0 0.0
    %3399 = vmatpush1.msra.mxu0 0.0
    %3400 = vmatprep.mubr.f32.mxu0 0.0
    %3401 = vmatmul.mubr.f32.gmra.mrb[0].mxu0 %v3144
    %v3402 = vpop.f32.mrb[0].mxu0
    %v3403 = vadd.f32 %v3258, %v3402
    %v3404 = vpop.f32.mrb[0].mxu0
    %3405 = vmatprep.mubr.f32.mxu0 0.0
    %3406 = vmatmul.mubr.f32.gmra.mrb[0].mxu0 %v3147
    %v3407 = vpop.f32.mrb[0].mxu0
    %v3408 = vadd.f32 %v3263, %v3407
    %v3409 = vpop.f32.mrb[0].mxu0
    %3410 = vmatprep.mubr.f32.mxu0 0.0
    %3411 = vmatmul.mubr.f32.gmra.mrb[0].mxu0 %v3150
    %v3412 = vpop.f32.mrb[0].mxu0
    %v3413 = vadd.f32 %v3268, %v3412
    %v3414 = vpop.f32.mrb[0].mxu0
    %3415 = vmatprep.mubr.f32.mxu0 0.0
    %3416 = vmatmul.mubr.f32.gmra.mrb[0].mxu0 %v3153
    %v3417 = vpop.f32.mrb[0].mxu0
    %v3418 = vadd.f32 %v3273, %v3417
    %v3419 = vpop.f32.mrb[0].mxu0
    %3420 = vmatprep.mubr.f32.mxu0 0.0
    %3421 = vmatmul.mubr.f32.gmra.mrb[0].mxu0 %v3156
    %v3422 = vpop.f32.mrb[0].mxu0
    %v3423 = vadd.f32 %v3278, %v3422
    %v3424 = vpop.f32.mrb[0].mxu0
    %3425 = vmatprep.mubr.f32.mxu0 0.0
    %3426 = vmatmul.mubr.f32.gmra.mrb[0].mxu0 %v3159
    %v3427 = vpop.f32.mrb[0].mxu0
    %v3428 = vadd.f32 %v3283, %v3427
    %v3429 = vpop.f32.mrb[0].mxu0
    %3430 = vmatprep.mubr.f32.mxu0 0.0
    %3431 = vmatmul.mubr.f32.gmra.mrb[0].mxu0 %v3162
    %v3432 = vpop.f32.mrb[0].mxu0
    %v3433 = vadd.f32 %v3288, %v3432
    %v3434 = vpop.f32.mrb[0].mxu0
    %3435 = vmatprep.mubr.f32.mxu0 0.0
    %3436 = vmatmul.mubr.f32.gmra.mrb[0].mxu0 %v3165
    %v3437 = vpop.f32.mrb[0].mxu0
    %v3438 = vadd.f32 %v3293, %v3437
    %v3439 = vpop.f32.mrb[0].mxu0
    %3440 = vmatprep.mubr.f32.mxu0 0.0
    %3441 = vmatmul.mubr.f32.gmra.mrb[0].mxu0 %v3168
    %v3442 = vpop.f32.mrb[0].mxu0
    %v3443 = vadd.f32 %v3298, %v3442
    %v3444 = vpop.f32.mrb[0].mxu0
    %3445 = vmatprep.mubr.f32.mxu0 0.0
    %3446 = vmatmul.mubr.f32.gmra.mrb[0].mxu0 %v3171
    %v3447 = vpop.f32.mrb[0].mxu0
    %v3448 = vadd.f32 %v3303, %v3447
    %v3449 = vpop.f32.mrb[0].mxu0
    %3450 = vmatprep.mubr.f32.mxu0 0.0
    %3451 = vmatmul.mubr.f32.gmra.mrb[0].mxu0 %v3174
    %v3452 = vpop.f32.mrb[0].mxu0
    %v3453 = vadd.f32 %v3308, %v3452
    %v3454 = vpop.f32.mrb[0].mxu0
    %3455 = vmatprep.mubr.f32.mxu0 0.0
    %3456 = vmatmul.mubr.f32.gmra.mrb[0].mxu0 %v3177
    %v3457 = vpop.f32.mrb[0].mxu0
    %v3458 = vadd.f32 %v3313, %v3457
    %v3459 = vpop.f32.mrb[0].mxu0
    %3460 = vmatprep.mubr.f32.mxu0 0.0
    %3461 = vmatmul.mubr.f32.gmra.mrb[0].mxu0 %v3180
    %v3462 = vpop.f32.mrb[0].mxu0
    %v3463 = vadd.f32 %v3318, %v3462
    %v3464 = vpop.f32.mrb[0].mxu0
    %3465 = vmatprep.mubr.f32.mxu0 0.0
    %3466 = vmatmul.mubr.f32.gmra.mrb[0].mxu0 %v3183
    %v3467 = vpop.f32.mrb[0].mxu0
    %v3468 = vadd.f32 %v3323, %v3467
    %v3469 = vpop.f32.mrb[0].mxu0
    %3470 = vmatprep.mubr.f32.mxu0 0.0
    %3471 = vmatmul.mubr.f32.gmra.mrb[0].mxu0 %v3186
    %v3472 = vpop.f32.mrb[0].mxu0
    %v3473 = vadd.f32 %v3328, %v3472
    %v3474 = vpop.f32.mrb[0].mxu0
    %3475 = vmatprep.mubr.f32.mxu0 0.0
    %3476 = vmatmul.mubr.f32.gmra.mrb[0].mxu0 %v3189
    %v3477 = vpop.f32.mrb[0].mxu0
    %v3478 = vadd.f32 %v3333, %v3477
    %v3479 = vpop.f32.mrb[0].mxu0
    %3480 = vdwg.mxu0
    %v3481 = vadd.f32 %v3403, %v1227
    %v3482 = vadd.f32 %v3408, %v1228
    %v3483 = vadd.f32 %v3413, %v1229
    %v3484 = vadd.f32 %v3418, %v1230
    %v3485 = vadd.f32 %v3423, %v1231
    %v3486 = vadd.f32 %v3428, %v1232
    %v3487 = vadd.f32 %v3433, %v1233
    %v3488 = vadd.f32 %v3438, %v1234
    %v3489 = vadd.f32 %v3443, %v1235
    %v3490 = vadd.f32 %v3448, %v1236
    %v3491 = vadd.f32 %v3453, %v1237
    %v3492 = vadd.f32 %v3458, %v1238
    %v3493 = vadd.f32 %v3463, %v1239
    %v3494 = vadd.f32 %v3468, %v1240
    %v3495 = vadd.f32 %v3473, %v1241
    %v3496 = vadd.f32 %v3478, %v1242
    %v3497 = vmax.f32 %v3481, 0.0
    %v3498 = vmax.f32 %v3482, 0.0
    %v3499 = vmax.f32 %v3483, 0.0
    %v3500 = vmax.f32 %v3484, 0.0
    %v3501 = vmax.f32 %v3485, 0.0
    %v3502 = vmax.f32 %v3486, 0.0
    %v3503 = vmax.f32 %v3487, 0.0
    %v3504 = vmax.f32 %v3488, 0.0
    %v3505 = vmax.f32 %v3489, 0.0
    %v3506 = vmax.f32 %v3490, 0.0
    %v3507 = vmax.f32 %v3491, 0.0
    %v3508 = vmax.f32 %v3492, 0.0
    %v3509 = vmax.f32 %v3493, 0.0
    %v3510 = vmax.f32 %v3494, 0.0
    %v3511 = vmax.f32 %v3495, 0.0
    %v3512 = vmax.f32 %v3496, 0.0
    %3513 = vst.msk [vmem:[%s73 + $0x1] sm:$0xff] %vm15, %v3497
    %3514 = vst.msk [vmem:[%s73 + $0x11] sm:$0xff] %vm15, %v3498
    %3515 = vst.msk [vmem:[%s73 + $0x21] sm:$0xff] %vm15, %v3499
    %3516 = vst.msk [vmem:[%s73 + $0x31] sm:$0xff] %vm15, %v3500
    %3517 = vst.msk [vmem:[%s73 + $0x41] sm:$0xff] %vm15, %v3501
    %3518 = vst.msk [vmem:[%s73 + $0x51] sm:$0xff] %vm15, %v3502
    %3519 = vst.msk [vmem:[%s73 + $0x61] sm:$0xff] %vm15, %v3503
    %3520 = vst.msk [vmem:[%s73 + $0x71] sm:$0xff] %vm15, %v3504
    %3521 = vst.msk [vmem:[%s73 + $0xa1] sm:$0xff] %vm15, %v3505
    %3522 = vst.msk [vmem:[%s73 + $0xb1] sm:$0xff] %vm15, %v3506
    %3523 = vst.msk [vmem:[%s73 + $0xc1] sm:$0xff] %vm15, %v3507
    %3524 = vst.msk [vmem:[%s73 + $0xd1] sm:$0xff] %vm15, %v3508
    %3525 = vst.msk [vmem:[%s73 + $0xe1] sm:$0xff] %vm15, %v3509
    %3526 = vst.msk [vmem:[%s73 + $0xf1] sm:$0xff] %vm15, %v3510
    %3527 = vst.msk [vmem:[%s73 + $0x101] sm:$0xff] %vm15, %v3511
    %3528 = vst.msk [vmem:[%s73 + $0x111] sm:$0xff] %vm15, %v3512
    %v3529 = vld [vmem:[%s73 + $0x1] sm:$0xff]
    %v3530 = vld [vmem:[%s73 + $0x11] sm:$0xff]
    %v3531 = vld [vmem:[%s73 + $0x21] sm:$0xff]
    %v3532 = vld [vmem:[%s73 + $0x31] sm:$0xff]
    %v3533 = vld [vmem:[%s73 + $0x41] sm:$0xff]
    %v3534 = vld [vmem:[%s73 + $0x51] sm:$0xff]
    %v3535 = vld [vmem:[%s73 + $0x61] sm:$0xff]
    %v3536 = vld [vmem:[%s73 + $0x71] sm:$0xff]
    %v3537 = vld [vmem:[%s73 + $0xa1] sm:$0xff]
    %v3538 = vld [vmem:[%s73 + $0xb1] sm:$0xff]
    %v3539 = vld [vmem:[%s73 + $0xc1] sm:$0xff]
    %v3540 = vld [vmem:[%s73 + $0xd1] sm:$0xff]
    %v3541 = vld [vmem:[%s73 + $0xe1] sm:$0xff]
    %v3542 = vld [vmem:[%s73 + $0xf1] sm:$0xff]
    %v3543 = vld [vmem:[%s73 + $0x101] sm:$0xff]
    %v3544 = vld [vmem:[%s73 + $0x111] sm:$0xff]
    %v3545 = vld [vmem:[#allocation2] sm:$0xff]
    %v3546 = vld [vmem:[#allocation2 + $0x10] sm:$0xff]
    %v3547 = vld [vmem:[#allocation2 + $0x20] sm:$0xff]
    %v3548 = vld [vmem:[#allocation2 + $0x30] sm:$0xff]
    %v3549 = vld [vmem:[#allocation2 + $0x40] sm:$0xff]
    %v3550 = vld [vmem:[#allocation2 + $0x50] sm:$0xff]
    %v3551 = vld [vmem:[#allocation2 + $0x60] sm:$0xff]
    %v3552 = vld [vmem:[#allocation2 + $0x70] sm:$0xff]
    %v3553 = vld [vmem:[#allocation2 + $0xa0] sm:$0xff]
    %v3554 = vld [vmem:[#allocation2 + $0xb0] sm:$0xff]
    %v3555 = vld [vmem:[#allocation2 + $0xc0] sm:$0xff]
    %v3556 = vld [vmem:[#allocation2 + $0xd0] sm:$0xff]
    %v3557 = vld [vmem:[#allocation2 + $0xe0] sm:$0xff]
    %v3558 = vld [vmem:[#allocation2 + $0xf0] sm:$0xff]
    %v3559 = vld [vmem:[#allocation2 + $0x100] sm:$0xff]
    %v3560 = vld [vmem:[#allocation2 + $0x110] sm:$0xff]
    %3561 = vst.msk [vmem:[#allocation3] sm:$0xff] %vm15, %v3545
    %3562 = vst.msk [vmem:[#allocation3 + $0x18] sm:$0xff] %vm15, %v3546
    %3563 = vst.msk [vmem:[#allocation3 + $0x30] sm:$0xff] %vm15, %v3547
    %3564 = vst.msk [vmem:[#allocation3 + $0x48] sm:$0xff] %vm15, %v3548
    %3565 = vst.msk [vmem:[#allocation3 + $0x60] sm:$0xff] %vm15, %v3549
    %3566 = vst.msk [vmem:[#allocation3 + $0x78] sm:$0xff] %vm15, %v3550
    %3567 = vst.msk [vmem:[#allocation3 + $0x90] sm:$0xff] %vm15, %v3551
    %3568 = vst.msk [vmem:[#allocation3 + $0xa8] sm:$0xff] %vm15, %v3552
    %3569 = vst.msk [vmem:[#allocation3 + $0xc0] sm:$0xff] %vm15, %v3553
    %3570 = vst.msk [vmem:[#allocation3 + $0xd8] sm:$0xff] %vm15, %v3554
    %3571 = vst.msk [vmem:[#allocation3 + $0xf0] sm:$0xff] %vm15, %v3555
    %3572 = vst.msk [vmem:[#allocation3 + $0x108] sm:$0xff] %vm15, %v3556
    %3573 = vst.msk [vmem:[#allocation3 + $0x120] sm:$0xff] %vm15, %v3557
    %3574 = vst.msk [vmem:[#allocation3 + $0x138] sm:$0xff] %vm15, %v3558
    %3575 = vst.msk [vmem:[#allocation3 + $0x150] sm:$0xff] %vm15, %v3559
    %3576 = vst.msk [vmem:[#allocation3 + $0x168] sm:$0xff] %vm15, %v3560
    %v3577 = vld [vmem:[#allocation2 + $0x1] sm:$0xff]
    %v3578 = vld [vmem:[#allocation2 + $0x11] sm:$0xff]
    %v3579 = vld [vmem:[#allocation2 + $0x21] sm:$0xff]
    %v3580 = vld [vmem:[#allocation2 + $0x31] sm:$0xff]
    %v3581 = vld [vmem:[#allocation2 + $0x41] sm:$0xff]
    %v3582 = vld [vmem:[#allocation2 + $0x51] sm:$0xff]
    %v3583 = vld [vmem:[#allocation2 + $0x61] sm:$0xff]
    %v3584 = vld [vmem:[#allocation2 + $0x71] sm:$0xff]
    %v3585 = vld [vmem:[#allocation2 + $0xa1] sm:$0xff]
    %v3586 = vld [vmem:[#allocation2 + $0xb1] sm:$0xff]
    %v3587 = vld [vmem:[#allocation2 + $0xc1] sm:$0xff]
    %v3588 = vld [vmem:[#allocation2 + $0xd1] sm:$0xff]
    %v3589 = vld [vmem:[#allocation2 + $0xe1] sm:$0xff]
    %v3590 = vld [vmem:[#allocation2 + $0xf1] sm:$0xff]
    %v3591 = vld [vmem:[#allocation2 + $0x101] sm:$0xff]
    %v3592 = vld [vmem:[#allocation2 + $0x111] sm:$0xff]
    %3609 = vrot.lane.b32.xlu0 %v3577, 32
    %v3610 = vpop.permute.xlu0 %3609
    %3611 = vrot.lane.b32.xlu0 %v3578, 32
    %v3612 = vpop.permute.xlu0 %3611
    %3613 = vrot.lane.b32.xlu0 %v3579, 32
    %v3614 = vpop.permute.xlu0 %3613
    %3615 = vrot.lane.b32.xlu0 %v3580, 32
    %v3616 = vpop.permute.xlu0 %3615
    %3617 = vrot.lane.b32.xlu0 %v3581, 32
    %v3618 = vpop.permute.xlu0 %3617
    %3619 = vrot.lane.b32.xlu0 %v3582, 32
    %v3620 = vpop.permute.xlu0 %3619
    %3621 = vrot.lane.b32.xlu0 %v3583, 32
    %v3622 = vpop.permute.xlu0 %3621
    %3623 = vrot.lane.b32.xlu0 %v3584, 32
    %v3624 = vpop.permute.xlu0 %3623
    %3625 = vrot.lane.b32.xlu0 %v3585, 32
    %v3626 = vpop.permute.xlu0 %3625
    %3627 = vrot.lane.b32.xlu0 %v3586, 32
    %v3628 = vpop.permute.xlu0 %3627
    %3629 = vrot.lane.b32.xlu0 %v3587, 32
    %v3630 = vpop.permute.xlu0 %3629
    %3631 = vrot.lane.b32.xlu0 %v3588, 32
    %v3632 = vpop.permute.xlu0 %3631
    %3633 = vrot.lane.b32.xlu0 %v3589, 32
    %v3634 = vpop.permute.xlu0 %3633
    %3635 = vrot.lane.b32.xlu0 %v3590, 32
    %v3636 = vpop.permute.xlu0 %3635
    %3637 = vrot.lane.b32.xlu0 %v3591, 32
    %v3638 = vpop.permute.xlu0 %3637
    %3639 = vrot.lane.b32.xlu0 %v3592, 32
    %v3640 = vpop.permute.xlu0 %3639
    %3657 = vst.msk [vmem:[#allocation3] sm:$0xff] %vm202, %v3610
    %3658 = vst.msk [vmem:[#allocation3 + $0x18] sm:$0xff] %vm202, %v3612
    %3659 = vst.msk [vmem:[#allocation3 + $0x30] sm:$0xff] %vm202, %v3614
    %3660 = vst.msk [vmem:[#allocation3 + $0x48] sm:$0xff] %vm202, %v3616
    %3661 = vst.msk [vmem:[#allocation3 + $0x60] sm:$0xff] %vm202, %v3618
    %3662 = vst.msk [vmem:[#allocation3 + $0x78] sm:$0xff] %vm202, %v3620
    %3663 = vst.msk [vmem:[#allocation3 + $0x90] sm:$0xff] %vm202, %v3622
    %3664 = vst.msk [vmem:[#allocation3 + $0xa8] sm:$0xff] %vm202, %v3624
    %3665 = vst.msk [vmem:[#allocation3 + $0xc0] sm:$0xff] %vm202, %v3626
    %3666 = vst.msk [vmem:[#allocation3 + $0xd8] sm:$0xff] %vm202, %v3628
    %3667 = vst.msk [vmem:[#allocation3 + $0xf0] sm:$0xff] %vm202, %v3630
    %3668 = vst.msk [vmem:[#allocation3 + $0x108] sm:$0xff] %vm202, %v3632
    %3669 = vst.msk [vmem:[#allocation3 + $0x120] sm:$0xff] %vm202, %v3634
    %3670 = vst.msk [vmem:[#allocation3 + $0x138] sm:$0xff] %vm202, %v3636
    %3671 = vst.msk [vmem:[#allocation3 + $0x150] sm:$0xff] %vm202, %v3638
    %3672 = vst.msk [vmem:[#allocation3 + $0x168] sm:$0xff] %vm202, %v3640
    %v3673 = vld [vmem:[#allocation2 + $0x2] sm:$0xff]
    %v3674 = vld [vmem:[#allocation2 + $0x12] sm:$0xff]
    %v3675 = vld [vmem:[#allocation2 + $0x22] sm:$0xff]
    %v3676 = vld [vmem:[#allocation2 + $0x32] sm:$0xff]
    %v3677 = vld [vmem:[#allocation2 + $0x42] sm:$0xff]
    %v3678 = vld [vmem:[#allocation2 + $0x52] sm:$0xff]
    %v3679 = vld [vmem:[#allocation2 + $0x62] sm:$0xff]
    %v3680 = vld [vmem:[#allocation2 + $0x72] sm:$0xff]
    %v3681 = vld [vmem:[#allocation2 + $0xa2] sm:$0xff]
    %v3682 = vld [vmem:[#allocation2 + $0xb2] sm:$0xff]
    %v3683 = vld [vmem:[#allocation2 + $0xc2] sm:$0xff]
    %v3684 = vld [vmem:[#allocation2 + $0xd2] sm:$0xff]
    %v3685 = vld [vmem:[#allocation2 + $0xe2] sm:$0xff]
    %v3686 = vld [vmem:[#allocation2 + $0xf2] sm:$0xff]
    %v3687 = vld [vmem:[#allocation2 + $0x102] sm:$0xff]
    %v3688 = vld [vmem:[#allocation2 + $0x112] sm:$0xff]
    %3705 = vrot.lane.b32.xlu0 %v3673, 64
    %v3706 = vpop.permute.xlu0 %3705
    %3707 = vrot.lane.b32.xlu0 %v3674, 64
    %v3708 = vpop.permute.xlu0 %3707
    %3709 = vrot.lane.b32.xlu0 %v3675, 64
    %v3710 = vpop.permute.xlu0 %3709
    %3711 = vrot.lane.b32.xlu0 %v3676, 64
    %v3712 = vpop.permute.xlu0 %3711
    %3713 = vrot.lane.b32.xlu0 %v3677, 64
    %v3714 = vpop.permute.xlu0 %3713
    %3715 = vrot.lane.b32.xlu0 %v3678, 64
    %v3716 = vpop.permute.xlu0 %3715
    %3717 = vrot.lane.b32.xlu0 %v3679, 64
    %v3718 = vpop.permute.xlu0 %3717
    %3719 = vrot.lane.b32.xlu0 %v3680, 64
    %v3720 = vpop.permute.xlu0 %3719
    %3721 = vrot.lane.b32.xlu0 %v3681, 64
    %v3722 = vpop.permute.xlu0 %3721
    %3723 = vrot.lane.b32.xlu0 %v3682, 64
    %v3724 = vpop.permute.xlu0 %3723
    %3725 = vrot.lane.b32.xlu0 %v3683, 64
    %v3726 = vpop.permute.xlu0 %3725
    %3727 = vrot.lane.b32.xlu0 %v3684, 64
    %v3728 = vpop.permute.xlu0 %3727
    %3729 = vrot.lane.b32.xlu0 %v3685, 64
    %v3730 = vpop.permute.xlu0 %3729
    %3731 = vrot.lane.b32.xlu0 %v3686, 64
    %v3732 = vpop.permute.xlu0 %3731
    %3733 = vrot.lane.b32.xlu0 %v3687, 64
    %v3734 = vpop.permute.xlu0 %3733
    %3735 = vrot.lane.b32.xlu0 %v3688, 64
    %v3736 = vpop.permute.xlu0 %3735
    %3753 = vst.msk [vmem:[#allocation3] sm:$0xff] %vm299, %v3706
    %3754 = vst.msk [vmem:[#allocation3 + $0x18] sm:$0xff] %vm299, %v3708
    %3755 = vst.msk [vmem:[#allocation3 + $0x30] sm:$0xff] %vm299, %v3710
    %3756 = vst.msk [vmem:[#allocation3 + $0x48] sm:$0xff] %vm299, %v3712
    %3757 = vst.msk [vmem:[#allocation3 + $0x60] sm:$0xff] %vm299, %v3714
    %3758 = vst.msk [vmem:[#allocation3 + $0x78] sm:$0xff] %vm299, %v3716
    %3759 = vst.msk [vmem:[#allocation3 + $0x90] sm:$0xff] %vm299, %v3718
    %3760 = vst.msk [vmem:[#allocation3 + $0xa8] sm:$0xff] %vm299, %v3720
    %3761 = vst.msk [vmem:[#allocation3 + $0xc0] sm:$0xff] %vm299, %v3722
    %3762 = vst.msk [vmem:[#allocation3 + $0xd8] sm:$0xff] %vm299, %v3724
    %3763 = vst.msk [vmem:[#allocation3 + $0xf0] sm:$0xff] %vm299, %v3726
    %3764 = vst.msk [vmem:[#allocation3 + $0x108] sm:$0xff] %vm299, %v3728
    %3765 = vst.msk [vmem:[#allocation3 + $0x120] sm:$0xff] %vm299, %v3730
    %3766 = vst.msk [vmem:[#allocation3 + $0x138] sm:$0xff] %vm299, %v3732
    %3767 = vst.msk [vmem:[#allocation3 + $0x150] sm:$0xff] %vm299, %v3734
    %3768 = vst.msk [vmem:[#allocation3 + $0x168] sm:$0xff] %vm299, %v3736
    %v3769 = vld [vmem:[%s73] sm:$0xff]
    %v3770 = vld [vmem:[%s73 + $0x10] sm:$0xff]
    %v3771 = vld [vmem:[%s73 + $0x20] sm:$0xff]
    %v3772 = vld [vmem:[%s73 + $0x30] sm:$0xff]
    %v3773 = vld [vmem:[%s73 + $0x40] sm:$0xff]
    %v3774 = vld [vmem:[%s73 + $0x50] sm:$0xff]
    %v3775 = vld [vmem:[%s73 + $0x60] sm:$0xff]
    %v3776 = vld [vmem:[%s73 + $0x70] sm:$0xff]
    %v3777 = vld [vmem:[%s73 + $0xa0] sm:$0xff]
    %v3778 = vld [vmem:[%s73 + $0xb0] sm:$0xff]
    %v3779 = vld [vmem:[%s73 + $0xc0] sm:$0xff]
    %v3780 = vld [vmem:[%s73 + $0xd0] sm:$0xff]
    %v3781 = vld [vmem:[%s73 + $0xe0] sm:$0xff]
    %v3782 = vld [vmem:[%s73 + $0xf0] sm:$0xff]
    %v3783 = vld [vmem:[%s73 + $0x100] sm:$0xff]
    %v3784 = vld [vmem:[%s73 + $0x110] sm:$0xff]
    %3801 = vrot.lane.b32.xlu0 %v3769, 96
    %v3802 = vpop.permute.xlu0 %3801
    %3803 = vrot.lane.b32.xlu0 %v3770, 96
    %v3804 = vpop.permute.xlu0 %3803
    %3805 = vrot.lane.b32.xlu0 %v3771, 96
    %v3806 = vpop.permute.xlu0 %3805
    %3807 = vrot.lane.b32.xlu0 %v3772, 96
    %v3808 = vpop.permute.xlu0 %3807
    %3809 = vrot.lane.b32.xlu0 %v3773, 96
    %v3810 = vpop.permute.xlu0 %3809
    %3811 = vrot.lane.b32.xlu0 %v3774, 96
    %v3812 = vpop.permute.xlu0 %3811
    %3813 = vrot.lane.b32.xlu0 %v3775, 96
    %v3814 = vpop.permute.xlu0 %3813
    %3815 = vrot.lane.b32.xlu0 %v3776, 96
    %v3816 = vpop.permute.xlu0 %3815
    %3817 = vrot.lane.b32.xlu0 %v3777, 96
    %v3818 = vpop.permute.xlu0 %3817
    %3819 = vrot.lane.b32.xlu0 %v3778, 96
    %v3820 = vpop.permute.xlu0 %3819
    %3821 = vrot.lane.b32.xlu0 %v3779, 96
    %v3822 = vpop.permute.xlu0 %3821
    %3823 = vrot.lane.b32.xlu0 %v3780, 96
    %v3824 = vpop.permute.xlu0 %3823
    %3825 = vrot.lane.b32.xlu0 %v3781, 96
    %v3826 = vpop.permute.xlu0 %3825
    %3827 = vrot.lane.b32.xlu0 %v3782, 96
    %v3828 = vpop.permute.xlu0 %3827
    %3829 = vrot.lane.b32.xlu0 %v3783, 96
    %v3830 = vpop.permute.xlu0 %3829
    %3831 = vrot.lane.b32.xlu0 %v3784, 96
    %v3832 = vpop.permute.xlu0 %3831
    %3849 = vst.msk [vmem:[#allocation3] sm:$0xff] %vm396, %v3802
    %3850 = vst.msk [vmem:[#allocation3 + $0x18] sm:$0xff] %vm396, %v3804
    %3851 = vst.msk [vmem:[#allocation3 + $0x30] sm:$0xff] %vm396, %v3806
    %3852 = vst.msk [vmem:[#allocation3 + $0x48] sm:$0xff] %vm396, %v3808
    %3853 = vst.msk [vmem:[#allocation3 + $0x60] sm:$0xff] %vm396, %v3810
    %3854 = vst.msk [vmem:[#allocation3 + $0x78] sm:$0xff] %vm396, %v3812
    %3855 = vst.msk [vmem:[#allocation3 + $0x90] sm:$0xff] %vm396, %v3814
    %3856 = vst.msk [vmem:[#allocation3 + $0xa8] sm:$0xff] %vm396, %v3816
    %3857 = vst.msk [vmem:[#allocation3 + $0xc0] sm:$0xff] %vm396, %v3818
    %3858 = vst.msk [vmem:[#allocation3 + $0xd8] sm:$0xff] %vm396, %v3820
    %3859 = vst.msk [vmem:[#allocation3 + $0xf0] sm:$0xff] %vm396, %v3822
    %3860 = vst.msk [vmem:[#allocation3 + $0x108] sm:$0xff] %vm396, %v3824
    %3861 = vst.msk [vmem:[#allocation3 + $0x120] sm:$0xff] %vm396, %v3826
    %3862 = vst.msk [vmem:[#allocation3 + $0x138] sm:$0xff] %vm396, %v3828
    %3863 = vst.msk [vmem:[#allocation3 + $0x150] sm:$0xff] %vm396, %v3830
    %3864 = vst.msk [vmem:[#allocation3 + $0x168] sm:$0xff] %vm396, %v3832
    %v3865 = vld [vmem:[%s73 + $0x1] sm:$0xff]
    %v3866 = vld [vmem:[%s73 + $0x11] sm:$0xff]
    %v3867 = vld [vmem:[%s73 + $0x21] sm:$0xff]
    %v3868 = vld [vmem:[%s73 + $0x31] sm:$0xff]
    %v3869 = vld [vmem:[%s73 + $0x41] sm:$0xff]
    %v3870 = vld [vmem:[%s73 + $0x51] sm:$0xff]
    %v3871 = vld [vmem:[%s73 + $0x61] sm:$0xff]
    %v3872 = vld [vmem:[%s73 + $0x71] sm:$0xff]
    %v3873 = vld [vmem:[%s73 + $0xa1] sm:$0xff]
    %v3874 = vld [vmem:[%s73 + $0xb1] sm:$0xff]
    %v3875 = vld [vmem:[%s73 + $0xc1] sm:$0xff]
    %v3876 = vld [vmem:[%s73 + $0xd1] sm:$0xff]
    %v3877 = vld [vmem:[%s73 + $0xe1] sm:$0xff]
    %v3878 = vld [vmem:[%s73 + $0xf1] sm:$0xff]
    %v3879 = vld [vmem:[%s73 + $0x101] sm:$0xff]
    %v3880 = vld [vmem:[%s73 + $0x111] sm:$0xff]
    %3881 = vst.msk [vmem:[#allocation3 + $0x8] sm:$0xff] %vm15, %v3865
    %3882 = vst.msk [vmem:[#allocation3 + $0x20] sm:$0xff] %vm15, %v3866
    %3883 = vst.msk [vmem:[#allocation3 + $0x38] sm:$0xff] %vm15, %v3867
    %3884 = vst.msk [vmem:[#allocation3 + $0x50] sm:$0xff] %vm15, %v3868
    %3885 = vst.msk [vmem:[#allocation3 + $0x68] sm:$0xff] %vm15, %v3869
    %3886 = vst.msk [vmem:[#allocation3 + $0x80] sm:$0xff] %vm15, %v3870
    %3887 = vst.msk [vmem:[#allocation3 + $0x98] sm:$0xff] %vm15, %v3871
    %3888 = vst.msk [vmem:[#allocation3 + $0xb0] sm:$0xff] %vm15, %v3872
    %3889 = vst.msk [vmem:[#allocation3 + $0xc8] sm:$0xff] %vm15, %v3873
    %3890 = vst.msk [vmem:[#allocation3 + $0xe0] sm:$0xff] %vm15, %v3874
    %3891 = vst.msk [vmem:[#allocation3 + $0xf8] sm:$0xff] %vm15, %v3875
    %3892 = vst.msk [vmem:[#allocation3 + $0x110] sm:$0xff] %vm15, %v3876
    %3893 = vst.msk [vmem:[#allocation3 + $0x128] sm:$0xff] %vm15, %v3877
    %3894 = vst.msk [vmem:[#allocation3 + $0x140] sm:$0xff] %vm15, %v3878
    %3895 = vst.msk [vmem:[#allocation3 + $0x158] sm:$0xff] %vm15, %v3879
    %3896 = vst.msk [vmem:[#allocation3 + $0x170] sm:$0xff] %vm15, %v3880
    %v3897 = vld [vmem:[%s73 + $0x2] sm:$0xff]
    %v3898 = vld [vmem:[%s73 + $0x12] sm:$0xff]
    %v3899 = vld [vmem:[%s73 + $0x22] sm:$0xff]
    %v3900 = vld [vmem:[%s73 + $0x32] sm:$0xff]
    %v3901 = vld [vmem:[%s73 + $0x42] sm:$0xff]
    %v3902 = vld [vmem:[%s73 + $0x52] sm:$0xff]
    %v3903 = vld [vmem:[%s73 + $0x62] sm:$0xff]
    %v3904 = vld [vmem:[%s73 + $0x72] sm:$0xff]
    %v3905 = vld [vmem:[%s73 + $0xa2] sm:$0xff]
    %v3906 = vld [vmem:[%s73 + $0xb2] sm:$0xff]
    %v3907 = vld [vmem:[%s73 + $0xc2] sm:$0xff]
    %v3908 = vld [vmem:[%s73 + $0xd2] sm:$0xff]
    %v3909 = vld [vmem:[%s73 + $0xe2] sm:$0xff]
    %v3910 = vld [vmem:[%s73 + $0xf2] sm:$0xff]
    %v3911 = vld [vmem:[%s73 + $0x102] sm:$0xff]
    %v3912 = vld [vmem:[%s73 + $0x112] sm:$0xff]
    %3929 = vrot.lane.b32.xlu0 %v3897, 32
    %v3930 = vpop.permute.xlu0 %3929
    %3931 = vrot.lane.b32.xlu0 %v3898, 32
    %v3932 = vpop.permute.xlu0 %3931
    %3933 = vrot.lane.b32.xlu0 %v3899, 32
    %v3934 = vpop.permute.xlu0 %3933
    %3935 = vrot.lane.b32.xlu0 %v3900, 32
    %v3936 = vpop.permute.xlu0 %3935
    %3937 = vrot.lane.b32.xlu0 %v3901, 32
    %v3938 = vpop.permute.xlu0 %3937
    %3939 = vrot.lane.b32.xlu0 %v3902, 32
    %v3940 = vpop.permute.xlu0 %3939
    %3941 = vrot.lane.b32.xlu0 %v3903, 32
    %v3942 = vpop.permute.xlu0 %3941
    %3943 = vrot.lane.b32.xlu0 %v3904, 32
    %v3944 = vpop.permute.xlu0 %3943
    %3945 = vrot.lane.b32.xlu0 %v3905, 32
    %v3946 = vpop.permute.xlu0 %3945
    %3947 = vrot.lane.b32.xlu0 %v3906, 32
    %v3948 = vpop.permute.xlu0 %3947
    %3949 = vrot.lane.b32.xlu0 %v3907, 32
    %v3950 = vpop.permute.xlu0 %3949
    %3951 = vrot.lane.b32.xlu0 %v3908, 32
    %v3952 = vpop.permute.xlu0 %3951
    %3953 = vrot.lane.b32.xlu0 %v3909, 32
    %v3954 = vpop.permute.xlu0 %3953
    %3955 = vrot.lane.b32.xlu0 %v3910, 32
    %v3956 = vpop.permute.xlu0 %3955
    %3957 = vrot.lane.b32.xlu0 %v3911, 32
    %v3958 = vpop.permute.xlu0 %3957
    %3959 = vrot.lane.b32.xlu0 %v3912, 32
    %v3960 = vpop.permute.xlu0 %3959
    %3977 = vst.msk [vmem:[#allocation3 + $0x8] sm:$0xff] %vm202, %v3930
    %3978 = vst.msk [vmem:[#allocation3 + $0x20] sm:$0xff] %vm202, %v3932
    %3979 = vst.msk [vmem:[#allocation3 + $0x38] sm:$0xff] %vm202, %v3934
    %3980 = vst.msk [vmem:[#allocation3 + $0x50] sm:$0xff] %vm202, %v3936
    %3981 = vst.msk [vmem:[#allocation3 + $0x68] sm:$0xff] %vm202, %v3938
    %3982 = vst.msk [vmem:[#allocation3 + $0x80] sm:$0xff] %vm202, %v3940
    %3983 = vst.msk [vmem:[#allocation3 + $0x98] sm:$0xff] %vm202, %v3942
    %3984 = vst.msk [vmem:[#allocation3 + $0xb0] sm:$0xff] %vm202, %v3944
    %3985 = vst.msk [vmem:[#allocation3 + $0xc8] sm:$0xff] %vm202, %v3946
    %3986 = vst.msk [vmem:[#allocation3 + $0xe0] sm:$0xff] %vm202, %v3948
    %3987 = vst.msk [vmem:[#allocation3 + $0xf8] sm:$0xff] %vm202, %v3950
    %3988 = vst.msk [vmem:[#allocation3 + $0x110] sm:$0xff] %vm202, %v3952
    %3989 = vst.msk [vmem:[#allocation3 + $0x128] sm:$0xff] %vm202, %v3954
    %3990 = vst.msk [vmem:[#allocation3 + $0x140] sm:$0xff] %vm202, %v3956
    %3991 = vst.msk [vmem:[#allocation3 + $0x158] sm:$0xff] %vm202, %v3958
    %3992 = vst.msk [vmem:[#allocation3 + $0x170] sm:$0xff] %vm202, %v3960
    %v3993 = vld [vmem:[%s541] sm:$0xff]
    %v3994 = vld [vmem:[%s541 + $0x10] sm:$0xff]
    %v3995 = vld [vmem:[%s541 + $0x20] sm:$0xff]
    %v3996 = vld [vmem:[%s541 + $0x30] sm:$0xff]
    %v3997 = vld [vmem:[%s541 + $0x40] sm:$0xff]
    %v3998 = vld [vmem:[%s541 + $0x50] sm:$0xff]
    %v3999 = vld [vmem:[%s541 + $0x60] sm:$0xff]
    %v4000 = vld [vmem:[%s541 + $0x70] sm:$0xff]
    %v4001 = vld [vmem:[%s541 + $0xa0] sm:$0xff]
    %v4002 = vld [vmem:[%s541 + $0xb0] sm:$0xff]
    %v4003 = vld [vmem:[%s541 + $0xc0] sm:$0xff]
    %v4004 = vld [vmem:[%s541 + $0xd0] sm:$0xff]
    %v4005 = vld [vmem:[%s541 + $0xe0] sm:$0xff]
    %v4006 = vld [vmem:[%s541 + $0xf0] sm:$0xff]
    %v4007 = vld [vmem:[%s541 + $0x100] sm:$0xff]
    %v4008 = vld [vmem:[%s541 + $0x110] sm:$0xff]
    %4025 = vrot.lane.b32.xlu0 %v3993, 64
    %v4026 = vpop.permute.xlu0 %4025
    %4027 = vrot.lane.b32.xlu0 %v3994, 64
    %v4028 = vpop.permute.xlu0 %4027
    %4029 = vrot.lane.b32.xlu0 %v3995, 64
    %v4030 = vpop.permute.xlu0 %4029
    %4031 = vrot.lane.b32.xlu0 %v3996, 64
    %v4032 = vpop.permute.xlu0 %4031
    %4033 = vrot.lane.b32.xlu0 %v3997, 64
    %v4034 = vpop.permute.xlu0 %4033
    %4035 = vrot.lane.b32.xlu0 %v3998, 64
    %v4036 = vpop.permute.xlu0 %4035
    %4037 = vrot.lane.b32.xlu0 %v3999, 64
    %v4038 = vpop.permute.xlu0 %4037
    %4039 = vrot.lane.b32.xlu0 %v4000, 64
    %v4040 = vpop.permute.xlu0 %4039
    %4041 = vrot.lane.b32.xlu0 %v4001, 64
    %v4042 = vpop.permute.xlu0 %4041
    %4043 = vrot.lane.b32.xlu0 %v4002, 64
    %v4044 = vpop.permute.xlu0 %4043
    %4045 = vrot.lane.b32.xlu0 %v4003, 64
    %v4046 = vpop.permute.xlu0 %4045
    %4047 = vrot.lane.b32.xlu0 %v4004, 64
    %v4048 = vpop.permute.xlu0 %4047
    %4049 = vrot.lane.b32.xlu0 %v4005, 64
    %v4050 = vpop.permute.xlu0 %4049
    %4051 = vrot.lane.b32.xlu0 %v4006, 64
    %v4052 = vpop.permute.xlu0 %4051
    %4053 = vrot.lane.b32.xlu0 %v4007, 64
    %v4054 = vpop.permute.xlu0 %4053
    %4055 = vrot.lane.b32.xlu0 %v4008, 64
    %v4056 = vpop.permute.xlu0 %4055
    %4073 = vst.msk [vmem:[#allocation3 + $0x8] sm:$0xff] %vm299, %v4026
    %4074 = vst.msk [vmem:[#allocation3 + $0x20] sm:$0xff] %vm299, %v4028
    %4075 = vst.msk [vmem:[#allocation3 + $0x38] sm:$0xff] %vm299, %v4030
    %4076 = vst.msk [vmem:[#allocation3 + $0x50] sm:$0xff] %vm299, %v4032
    %4077 = vst.msk [vmem:[#allocation3 + $0x68] sm:$0xff] %vm299, %v4034
    %4078 = vst.msk [vmem:[#allocation3 + $0x80] sm:$0xff] %vm299, %v4036
    %4079 = vst.msk [vmem:[#allocation3 + $0x98] sm:$0xff] %vm299, %v4038
    %4080 = vst.msk [vmem:[#allocation3 + $0xb0] sm:$0xff] %vm299, %v4040
    %4081 = vst.msk [vmem:[#allocation3 + $0xc8] sm:$0xff] %vm299, %v4042
    %4082 = vst.msk [vmem:[#allocation3 + $0xe0] sm:$0xff] %vm299, %v4044
    %4083 = vst.msk [vmem:[#allocation3 + $0xf8] sm:$0xff] %vm299, %v4046
    %4084 = vst.msk [vmem:[#allocation3 + $0x110] sm:$0xff] %vm299, %v4048
    %4085 = vst.msk [vmem:[#allocation3 + $0x128] sm:$0xff] %vm299, %v4050
    %4086 = vst.msk [vmem:[#allocation3 + $0x140] sm:$0xff] %vm299, %v4052
    %4087 = vst.msk [vmem:[#allocation3 + $0x158] sm:$0xff] %vm299, %v4054
    %4088 = vst.msk [vmem:[#allocation3 + $0x170] sm:$0xff] %vm299, %v4056
    %v4089 = vld [vmem:[%s541 + $0x1] sm:$0xff]
    %v4090 = vld [vmem:[%s541 + $0x11] sm:$0xff]
    %v4091 = vld [vmem:[%s541 + $0x21] sm:$0xff]
    %v4092 = vld [vmem:[%s541 + $0x31] sm:$0xff]
    %v4093 = vld [vmem:[%s541 + $0x41] sm:$0xff]
    %v4094 = vld [vmem:[%s541 + $0x51] sm:$0xff]
    %v4095 = vld [vmem:[%s541 + $0x61] sm:$0xff]
    %v4096 = vld [vmem:[%s541 + $0x71] sm:$0xff]
    %v4097 = vld [vmem:[%s541 + $0xa1] sm:$0xff]
    %v4098 = vld [vmem:[%s541 + $0xb1] sm:$0xff]
    %v4099 = vld [vmem:[%s541 + $0xc1] sm:$0xff]
    %v4100 = vld [vmem:[%s541 + $0xd1] sm:$0xff]
    %v4101 = vld [vmem:[%s541 + $0xe1] sm:$0xff]
    %v4102 = vld [vmem:[%s541 + $0xf1] sm:$0xff]
    %v4103 = vld [vmem:[%s541 + $0x101] sm:$0xff]
    %v4104 = vld [vmem:[%s541 + $0x111] sm:$0xff]
    %4121 = vrot.lane.b32.xlu0 %v4089, 96
    %v4122 = vpop.permute.xlu0 %4121
    %4123 = vrot.lane.b32.xlu0 %v4090, 96
    %v4124 = vpop.permute.xlu0 %4123
    %4125 = vrot.lane.b32.xlu0 %v4091, 96
    %v4126 = vpop.permute.xlu0 %4125
    %4127 = vrot.lane.b32.xlu0 %v4092, 96
    %v4128 = vpop.permute.xlu0 %4127
    %4129 = vrot.lane.b32.xlu0 %v4093, 96
    %v4130 = vpop.permute.xlu0 %4129
    %4131 = vrot.lane.b32.xlu0 %v4094, 96
    %v4132 = vpop.permute.xlu0 %4131
    %4133 = vrot.lane.b32.xlu0 %v4095, 96
    %v4134 = vpop.permute.xlu0 %4133
    %4135 = vrot.lane.b32.xlu0 %v4096, 96
    %v4136 = vpop.permute.xlu0 %4135
    %4137 = vrot.lane.b32.xlu0 %v4097, 96
    %v4138 = vpop.permute.xlu0 %4137
    %4139 = vrot.lane.b32.xlu0 %v4098, 96
    %v4140 = vpop.permute.xlu0 %4139
    %4141 = vrot.lane.b32.xlu0 %v4099, 96
    %v4142 = vpop.permute.xlu0 %4141
    %4143 = vrot.lane.b32.xlu0 %v4100, 96
    %v4144 = vpop.permute.xlu0 %4143
    %4145 = vrot.lane.b32.xlu0 %v4101, 96
    %v4146 = vpop.permute.xlu0 %4145
    %4147 = vrot.lane.b32.xlu0 %v4102, 96
    %v4148 = vpop.permute.xlu0 %4147
    %4149 = vrot.lane.b32.xlu0 %v4103, 96
    %v4150 = vpop.permute.xlu0 %4149
    %4151 = vrot.lane.b32.xlu0 %v4104, 96
    %v4152 = vpop.permute.xlu0 %4151
    %4169 = vst.msk [vmem:[#allocation3 + $0x8] sm:$0xff] %vm396, %v4122
    %4170 = vst.msk [vmem:[#allocation3 + $0x20] sm:$0xff] %vm396, %v4124
    %4171 = vst.msk [vmem:[#allocation3 + $0x38] sm:$0xff] %vm396, %v4126
    %4172 = vst.msk [vmem:[#allocation3 + $0x50] sm:$0xff] %vm396, %v4128
    %4173 = vst.msk [vmem:[#allocation3 + $0x68] sm:$0xff] %vm396, %v4130
    %4174 = vst.msk [vmem:[#allocation3 + $0x80] sm:$0xff] %vm396, %v4132
    %4175 = vst.msk [vmem:[#allocation3 + $0x98] sm:$0xff] %vm396, %v4134
    %4176 = vst.msk [vmem:[#allocation3 + $0xb0] sm:$0xff] %vm396, %v4136
    %4177 = vst.msk [vmem:[#allocation3 + $0xc8] sm:$0xff] %vm396, %v4138
    %4178 = vst.msk [vmem:[#allocation3 + $0xe0] sm:$0xff] %vm396, %v4140
    %4179 = vst.msk [vmem:[#allocation3 + $0xf8] sm:$0xff] %vm396, %v4142
    %4180 = vst.msk [vmem:[#allocation3 + $0x110] sm:$0xff] %vm396, %v4144
    %4181 = vst.msk [vmem:[#allocation3 + $0x128] sm:$0xff] %vm396, %v4146
    %4182 = vst.msk [vmem:[#allocation3 + $0x140] sm:$0xff] %vm396, %v4148
    %4183 = vst.msk [vmem:[#allocation3 + $0x158] sm:$0xff] %vm396, %v4150
    %4184 = vst.msk [vmem:[#allocation3 + $0x170] sm:$0xff] %vm396, %v4152
    %v4185 = vld [vmem:[%s541 + $0x2] sm:$0xff]
    %v4186 = vld [vmem:[%s541 + $0x12] sm:$0xff]
    %v4187 = vld [vmem:[%s541 + $0x22] sm:$0xff]
    %v4188 = vld [vmem:[%s541 + $0x32] sm:$0xff]
    %v4189 = vld [vmem:[%s541 + $0x42] sm:$0xff]
    %v4190 = vld [vmem:[%s541 + $0x52] sm:$0xff]
    %v4191 = vld [vmem:[%s541 + $0x62] sm:$0xff]
    %v4192 = vld [vmem:[%s541 + $0x72] sm:$0xff]
    %v4193 = vld [vmem:[%s541 + $0xa2] sm:$0xff]
    %v4194 = vld [vmem:[%s541 + $0xb2] sm:$0xff]
    %v4195 = vld [vmem:[%s541 + $0xc2] sm:$0xff]
    %v4196 = vld [vmem:[%s541 + $0xd2] sm:$0xff]
    %v4197 = vld [vmem:[%s541 + $0xe2] sm:$0xff]
    %v4198 = vld [vmem:[%s541 + $0xf2] sm:$0xff]
    %v4199 = vld [vmem:[%s541 + $0x102] sm:$0xff]
    %v4200 = vld [vmem:[%s541 + $0x112] sm:$0xff]
    %4201 = vst.msk [vmem:[#allocation3 + $0x10] sm:$0xff] %vm15, %v4185
    %4202 = vst.msk [vmem:[#allocation3 + $0x28] sm:$0xff] %vm15, %v4186
    %4203 = vst.msk [vmem:[#allocation3 + $0x40] sm:$0xff] %vm15, %v4187
    %4204 = vst.msk [vmem:[#allocation3 + $0x58] sm:$0xff] %vm15, %v4188
    %4205 = vst.msk [vmem:[#allocation3 + $0x70] sm:$0xff] %vm15, %v4189
    %4206 = vst.msk [vmem:[#allocation3 + $0x88] sm:$0xff] %vm15, %v4190
    %4207 = vst.msk [vmem:[#allocation3 + $0xa0] sm:$0xff] %vm15, %v4191
    %4208 = vst.msk [vmem:[#allocation3 + $0xb8] sm:$0xff] %vm15, %v4192
    %4209 = vst.msk [vmem:[#allocation3 + $0xd0] sm:$0xff] %vm15, %v4193
    %4210 = vst.msk [vmem:[#allocation3 + $0xe8] sm:$0xff] %vm15, %v4194
    %4211 = vst.msk [vmem:[#allocation3 + $0x100] sm:$0xff] %vm15, %v4195
    %4212 = vst.msk [vmem:[#allocation3 + $0x118] sm:$0xff] %vm15, %v4196
    %4213 = vst.msk [vmem:[#allocation3 + $0x130] sm:$0xff] %vm15, %v4197
    %4214 = vst.msk [vmem:[#allocation3 + $0x148] sm:$0xff] %vm15, %v4198
    %4215 = vst.msk [vmem:[#allocation3 + $0x160] sm:$0xff] %vm15, %v4199
    %4216 = vst.msk [vmem:[#allocation3 + $0x178] sm:$0xff] %vm15, %v4200
    %v4217 = vld [vmem:[#allocation3] sm:$0xff]
    %v4218 = vld [vmem:[#allocation3 + $0x8] sm:$0xff]
    %v4219 = vld [vmem:[#allocation3 + $0x10] sm:$0xff]
    %v4220 = vld [vmem:[#allocation3 + $0x18] sm:$0xff]
    %v4221 = vld [vmem:[#allocation3 + $0x20] sm:$0xff]
    %v4222 = vld [vmem:[#allocation3 + $0x28] sm:$0xff]
    %v4223 = vld [vmem:[#allocation3 + $0x30] sm:$0xff]
    %v4224 = vld [vmem:[#allocation3 + $0x38] sm:$0xff]
    %v4225 = vld [vmem:[#allocation3 + $0x40] sm:$0xff]
    %v4226 = vld [vmem:[#allocation3 + $0x48] sm:$0xff]
    %v4227 = vld [vmem:[#allocation3 + $0x50] sm:$0xff]
    %v4228 = vld [vmem:[#allocation3 + $0x58] sm:$0xff]
    %v4229 = vld [vmem:[#allocation3 + $0x60] sm:$0xff]
    %v4230 = vld [vmem:[#allocation3 + $0x68] sm:$0xff]
    %v4231 = vld [vmem:[#allocation3 + $0x70] sm:$0xff]
    %v4232 = vld [vmem:[#allocation3 + $0x78] sm:$0xff]
    %v4233 = vld [vmem:[#allocation3 + $0x80] sm:$0xff]
    %v4234 = vld [vmem:[#allocation3 + $0x88] sm:$0xff]
    %v4235 = vld [vmem:[#allocation3 + $0x90] sm:$0xff]
    %v4236 = vld [vmem:[#allocation3 + $0x98] sm:$0xff]
    %v4237 = vld [vmem:[#allocation3 + $0xa0] sm:$0xff]
    %v4238 = vld [vmem:[#allocation3 + $0xa8] sm:$0xff]
    %v4239 = vld [vmem:[#allocation3 + $0xb0] sm:$0xff]
    %v4240 = vld [vmem:[#allocation3 + $0xb8] sm:$0xff]
    %v4241 = vld [vmem:[#allocation3 + $0xc0] sm:$0xff]
    %v4242 = vld [vmem:[#allocation3 + $0xc8] sm:$0xff]
    %v4243 = vld [vmem:[#allocation3 + $0xd0] sm:$0xff]
    %v4244 = vld [vmem:[#allocation3 + $0xd8] sm:$0xff]
    %v4245 = vld [vmem:[#allocation3 + $0xe0] sm:$0xff]
    %v4246 = vld [vmem:[#allocation3 + $0xe8] sm:$0xff]
    %v4247 = vld [vmem:[#allocation3 + $0xf0] sm:$0xff]
    %v4248 = vld [vmem:[#allocation3 + $0xf8] sm:$0xff]
    %v4249 = vld [vmem:[#allocation3 + $0x100] sm:$0xff]
    %v4250 = vld [vmem:[#allocation3 + $0x108] sm:$0xff]
    %v4251 = vld [vmem:[#allocation3 + $0x110] sm:$0xff]
    %v4252 = vld [vmem:[#allocation3 + $0x118] sm:$0xff]
    %v4253 = vld [vmem:[#allocation3 + $0x120] sm:$0xff]
    %v4254 = vld [vmem:[#allocation3 + $0x128] sm:$0xff]
    %v4255 = vld [vmem:[#allocation3 + $0x130] sm:$0xff]
    %v4256 = vld [vmem:[#allocation3 + $0x138] sm:$0xff]
    %v4257 = vld [vmem:[#allocation3 + $0x140] sm:$0xff]
    %v4258 = vld [vmem:[#allocation3 + $0x148] sm:$0xff]
    %v4259 = vld [vmem:[#allocation3 + $0x150] sm:$0xff]
    %v4260 = vld [vmem:[#allocation3 + $0x158] sm:$0xff]
    %v4261 = vld [vmem:[#allocation3 + $0x160] sm:$0xff]
    %v4262 = vld [vmem:[#allocation3 + $0x168] sm:$0xff]
    %v4263 = vld [vmem:[#allocation3 + $0x170] sm:$0xff]
    %v4264 = vld [vmem:[#allocation3 + $0x178] sm:$0xff]
    %s4265 = scalar_lea.vmem %s1, 864
    %v4266 = vld [vmem:[%s4265] sm:$0xff]
    %v4267 = vld [vmem:[%s4265 + $0x8] sm:$0xff]
    %v4268 = vld [vmem:[%s4265 + $0x10] sm:$0xff]
    %v4269 = vld [vmem:[%s4265 + $0x18] sm:$0xff]
    %v4270 = vld [vmem:[%s4265 + $0x20] sm:$0xff]
    %v4271 = vld [vmem:[%s4265 + $0x28] sm:$0xff]
    %v4272 = vld [vmem:[%s4265 + $0x30] sm:$0xff]
    %v4273 = vld [vmem:[%s4265 + $0x38] sm:$0xff]
    %v4274 = vld [vmem:[%s4265 + $0x40] sm:$0xff]
    %v4275 = vld [vmem:[%s4265 + $0x48] sm:$0xff]
    %v4276 = vld [vmem:[%s4265 + $0x50] sm:$0xff]
    %v4277 = vld [vmem:[%s4265 + $0x58] sm:$0xff]
    %v4278 = vld [vmem:[%s4265 + $0x60] sm:$0xff]
    %v4279 = vld [vmem:[%s4265 + $0x68] sm:$0xff]
    %v4280 = vld [vmem:[%s4265 + $0x70] sm:$0xff]
    %v4281 = vld [vmem:[%s4265 + $0x78] sm:$0xff]
    %v4282 = vld [vmem:[%s4265 + $0x80] sm:$0xff]
    %v4283 = vld [vmem:[%s4265 + $0x88] sm:$0xff]
    %v4284 = vld [vmem:[%s4265 + $0x90] sm:$0xff]
    %v4285 = vld [vmem:[%s4265 + $0x98] sm:$0xff]
    %v4286 = vld [vmem:[%s4265 + $0xa0] sm:$0xff]
    %v4287 = vld [vmem:[%s4265 + $0xa8] sm:$0xff]
    %v4288 = vld [vmem:[%s4265 + $0xb0] sm:$0xff]
    %v4289 = vld [vmem:[%s4265 + $0xb8] sm:$0xff]
    %v4290 = vld [vmem:[%s4265 + $0xc0] sm:$0xff]
    %v4291 = vld [vmem:[%s4265 + $0xc8] sm:$0xff]
    %v4292 = vld [vmem:[%s4265 + $0xd0] sm:$0xff]
    %v4293 = vld [vmem:[%s4265 + $0xd8] sm:$0xff]
    %v4294 = vld [vmem:[%s4265 + $0xe0] sm:$0xff]
    %v4295 = vld [vmem:[%s4265 + $0xe8] sm:$0xff]
    %v4296 = vld [vmem:[%s4265 + $0xf0] sm:$0xff]
    %v4297 = vld [vmem:[%s4265 + $0xf8] sm:$0xff]
    %v4298 = vld [vmem:[%s4265 + $0x100] sm:$0xff]
    %v4299 = vld [vmem:[%s4265 + $0x108] sm:$0xff]
    %v4300 = vld [vmem:[%s4265 + $0x110] sm:$0xff]
    %v4301 = vld [vmem:[%s4265 + $0x118] sm:$0xff]
    %s4302 = scalar_lea.vmem %s2, 3
    %v4303 = vld [vmem:[%s4302] sm:$0x1]
    %v4305 = vlaneseq
    %v4306 = vshrl.u32 %v4305, 7
    %v4307 = vsub.s32 0, %v4306
    %v4308 = vrot.slane %v4303, %v4307
    %v4311 = vsel %vm15, %v4219, 0
    %v4314 = vsel %vm15, %v4222, 0
    %v4317 = vsel %vm15, %v4225, 0
    %v4320 = vsel %vm15, %v4228, 0
    %v4323 = vsel %vm15, %v4231, 0
    %v4326 = vsel %vm15, %v4234, 0
    %v4329 = vsel %vm15, %v4237, 0
    %v4332 = vsel %vm15, %v4240, 0
    %v4335 = vsel %vm15, %v4243, 0
    %v4338 = vsel %vm15, %v4246, 0
    %v4341 = vsel %vm15, %v4249, 0
    %v4344 = vsel %vm15, %v4252, 0
    %v4347 = vsel %vm15, %v4255, 0
    %v4350 = vsel %vm15, %v4258, 0
    %v4353 = vsel %vm15, %v4261, 0
    %v4356 = vsel %vm15, %v4264, 0
    %4358 = vmatprep.subr.mxu0 0.0
    %4359 = vmatpush1.msra.mxu0 %v4266
    %4360 = vmatprep.subr.mxu0 0.0
    %4361 = vmatpush1.msra.mxu0 %v4267
    %4362 = vmatprep.subr.mxu0 0.0
    %4363 = vmatpush1.msra.mxu0 %v4268
    %4364 = vmatprep.subr.mxu0 0.0
    %4365 = vmatpush1.msra.mxu0 %v4269
    %4366 = vmatprep.subr.mxu0 0.0
    %4367 = vmatpush1.msra.mxu0 %v4270
    %4368 = vmatprep.subr.mxu0 0.0
    %4369 = vmatpush1.msra.mxu0 %v4271
    %4370 = vmatprep.subr.mxu0 0.0
    %4371 = vmatpush1.msra.mxu0 %v4272
    %4372 = vmatprep.subr.mxu0 0.0
    %4373 = vmatpush1.msra.mxu0 %v4273
    %4374 = vmatprep.subr.mxu0 0.0
    %4375 = vmatpush1.msra.mxu0 %v4274
    %4376 = vmatprep.subr.mxu0 0.0
    %4377 = vmatpush1.msra.mxu0 %v4275
    %4378 = vmatprep.subr.mxu0 0.0
    %4379 = vmatpush1.msra.mxu0 %v4276
    %4380 = vmatprep.subr.mxu0 0.0
    %4381 = vmatpush1.msra.mxu0 %v4277
    %4382 = vmatprep.subr.mxu0 0.0
    %4383 = vmatpush1.msra.mxu0 %v4278
    %4384 = vmatprep.subr.mxu0 0.0
    %4385 = vmatpush1.msra.mxu0 %v4279
    %4386 = vmatprep.subr.mxu0 0.0
    %4387 = vmatpush1.msra.mxu0 %v4280
    %4388 = vmatprep.subr.mxu0 0.0
    %4389 = vmatpush1.msra.mxu0 %v4281
    %4390 = vmatprep.subr.mxu0 0.0
    %4391 = vmatpush1.msra.mxu0 %v4282
    %4392 = vmatprep.subr.mxu0 0.0
    %4393 = vmatpush1.msra.mxu0 %v4283
    %4394 = vmatprep.subr.mxu0 0.0
    %4395 = vmatpush1.msra.mxu0 %v4284
    %4396 = vmatprep.subr.mxu0 0.0
    %4397 = vmatpush1.msra.mxu0 %v4285
    %4398 = vmatprep.subr.mxu0 0.0
    %4399 = vmatpush1.msra.mxu0 %v4286
    %4400 = vmatprep.subr.mxu0 0.0
    %4401 = vmatpush1.msra.mxu0 %v4287
    %4402 = vmatprep.subr.mxu0 0.0
    %4403 = vmatpush1.msra.mxu0 %v4288
    %4404 = vmatprep.subr.mxu0 0.0
    %4405 = vmatpush1.msra.mxu0 %v4289
    %4406 = vmatprep.subr.mxu0 0.0
    %4407 = vmatpush1.msra.mxu0 %v4290
    %4408 = vmatprep.subr.mxu0 0.0
    %4409 = vmatpush1.msra.mxu0 %v4291
    %4410 = vmatprep.subr.mxu0 0.0
    %4411 = vmatpush1.msra.mxu0 %v4292
    %4412 = vmatprep.subr.mxu0 0.0
    %4413 = vmatpush1.msra.mxu0 %v4293
    %4414 = vmatprep.subr.mxu0 0.0
    %4415 = vmatpush1.msra.mxu0 %v4294
    %4416 = vmatprep.subr.mxu0 0.0
    %4417 = vmatpush1.msra.mxu0 %v4295
    %4418 = vmatprep.subr.mxu0 0.0
    %4419 = vmatpush1.msra.mxu0 %v4296
    %4420 = vmatprep.subr.mxu0 0.0
    %4421 = vmatpush1.msra.mxu0 %v4297
    %4422 = vmatprep.mubr.f32.mxu0 %v4218
    %4423 = vmatmul.mubr.f32.gmra.mrb[0].mxu0 %v4217
    %v4424 = vpop.f32.mrb[0].mxu0
    %v4425 = vadd.f32 %v4308, %v4424
    %v4426 = vpop.f32.mrb[0].mxu0
    %4427 = vmatprep.mubr.f32.mxu0 %v4221
    %4428 = vmatmul.mubr.f32.gmra.mrb[0].mxu0 %v4220
    %v4429 = vpop.f32.mrb[0].mxu0
    %v4430 = vadd.f32 %v4308, %v4429
    %v4431 = vpop.f32.mrb[0].mxu0
    %4432 = vmatprep.mubr.f32.mxu0 %v4224
    %4433 = vmatmul.mubr.f32.gmra.mrb[0].mxu0 %v4223
    %v4434 = vpop.f32.mrb[0].mxu0
    %v4435 = vadd.f32 %v4308, %v4434
    %v4436 = vpop.f32.mrb[0].mxu0
    %4437 = vmatprep.mubr.f32.mxu0 %v4227
    %4438 = vmatmul.mubr.f32.gmra.mrb[0].mxu0 %v4226
    %v4439 = vpop.f32.mrb[0].mxu0
    %v4440 = vadd.f32 %v4308, %v4439
    %v4441 = vpop.f32.mrb[0].mxu0
    %4442 = vmatprep.mubr.f32.mxu0 %v4230
    %4443 = vmatmul.mubr.f32.gmra.mrb[0].mxu0 %v4229
    %v4444 = vpop.f32.mrb[0].mxu0
    %v4445 = vadd.f32 %v4308, %v4444
    %v4446 = vpop.f32.mrb[0].mxu0
    %4447 = vmatprep.mubr.f32.mxu0 %v4233
    %4448 = vmatmul.mubr.f32.gmra.mrb[0].mxu0 %v4232
    %v4449 = vpop.f32.mrb[0].mxu0
    %v4450 = vadd.f32 %v4308, %v4449
    %v4451 = vpop.f32.mrb[0].mxu0
    %4452 = vmatprep.mubr.f32.mxu0 %v4236
    %4453 = vmatmul.mubr.f32.gmra.mrb[0].mxu0 %v4235
    %v4454 = vpop.f32.mrb[0].mxu0
    %v4455 = vadd.f32 %v4308, %v4454
    %v4456 = vpop.f32.mrb[0].mxu0
    %4457 = vmatprep.mubr.f32.mxu0 %v4239
    %4458 = vmatmul.mubr.f32.gmra.mrb[0].mxu0 %v4238
    %v4459 = vpop.f32.mrb[0].mxu0
    %v4460 = vadd.f32 %v4308, %v4459
    %v4461 = vpop.f32.mrb[0].mxu0
    %4462 = vmatprep.mubr.f32.mxu0 %v4242
    %4463 = vmatmul.mubr.f32.gmra.mrb[0].mxu0 %v4241
    %v4464 = vpop.f32.mrb[0].mxu0
    %v4465 = vadd.f32 %v4308, %v4464
    %v4466 = vpop.f32.mrb[0].mxu0
    %4467 = vmatprep.mubr.f32.mxu0 %v4245
    %4468 = vmatmul.mubr.f32.gmra.mrb[0].mxu0 %v4244
    %v4469 = vpop.f32.mrb[0].mxu0
    %v4470 = vadd.f32 %v4308, %v4469
    %v4471 = vpop.f32.mrb[0].mxu0
    %4472 = vmatprep.mubr.f32.mxu0 %v4248
    %4473 = vmatmul.mubr.f32.gmra.mrb[0].mxu0 %v4247
    %v4474 = vpop.f32.mrb[0].mxu0
    %v4475 = vadd.f32 %v4308, %v4474
    %v4476 = vpop.f32.mrb[0].mxu0
    %4477 = vmatprep.mubr.f32.mxu0 %v4251
    %4478 = vmatmul.mubr.f32.gmra.mrb[0].mxu0 %v4250
    %v4479 = vpop.f32.mrb[0].mxu0
    %v4480 = vadd.f32 %v4308, %v4479
    %v4481 = vpop.f32.mrb[0].mxu0
    %4482 = vmatprep.mubr.f32.mxu0 %v4254
    %4483 = vmatmul.mubr.f32.gmra.mrb[0].mxu0 %v4253
    %v4484 = vpop.f32.mrb[0].mxu0
    %v4485 = vadd.f32 %v4308, %v4484
    %v4486 = vpop.f32.mrb[0].mxu0
    %4487 = vmatprep.mubr.f32.mxu0 %v4257
    %4488 = vmatmul.mubr.f32.gmra.mrb[0].mxu0 %v4256
    %v4489 = vpop.f32.mrb[0].mxu0
    %v4490 = vadd.f32 %v4308, %v4489
    %v4491 = vpop.f32.mrb[0].mxu0
    %4492 = vmatprep.mubr.f32.mxu0 %v4260
    %4493 = vmatmul.mubr.f32.gmra.mrb[0].mxu0 %v4259
    %v4494 = vpop.f32.mrb[0].mxu0
    %v4495 = vadd.f32 %v4308, %v4494
    %v4496 = vpop.f32.mrb[0].mxu0
    %4497 = vmatprep.mubr.f32.mxu0 %v4263
    %4498 = vmatmul.mubr.f32.gmra.mrb[0].mxu0 %v4262
    %v4499 = vpop.f32.mrb[0].mxu0
    %v4500 = vadd.f32 %v4308, %v4499
    %v4501 = vpop.f32.mrb[0].mxu0
    %4502 = vdwg.mxu0
    %4503 = vmatprep.subr.mxu0 0.0
    %4504 = vmatpush1.msra.mxu0 %v4298
    %4505 = vmatprep.subr.mxu0 0.0
    %4506 = vmatpush1.msra.mxu0 %v4299
    %4507 = vmatprep.subr.mxu0 0.0
    %4508 = vmatpush1.msra.mxu0 %v4300
    %4509 = vmatprep.subr.mxu0 0.0
    %4510 = vmatpush1.msra.mxu0 %v4301
    %4511 = vmatprep.subr.mxu0 0.0
    %4512 = vmatpush1.msra.mxu0 0.0
    %4513 = vmatprep.subr.mxu0 0.0
    %4514 = vmatpush1.msra.mxu0 0.0
    %4515 = vmatprep.subr.mxu0 0.0
    %4516 = vmatpush1.msra.mxu0 0.0
    %4517 = vmatprep.subr.mxu0 0.0
    %4518 = vmatpush1.msra.mxu0 0.0
    %4519 = vmatprep.subr.mxu0 0.0
    %4520 = vmatpush1.msra.mxu0 0.0
    %4521 = vmatprep.subr.mxu0 0.0
    %4522 = vmatpush1.msra.mxu0 0.0
    %4523 = vmatprep.subr.mxu0 0.0
    %4524 = vmatpush1.msra.mxu0 0.0
    %4525 = vmatprep.subr.mxu0 0.0
    %4526 = vmatpush1.msra.mxu0 0.0
    %4527 = vmatprep.subr.mxu0 0.0
    %4528 = vmatpush1.msra.mxu0 0.0
    %4529 = vmatprep.subr.mxu0 0.0
    %4530 = vmatpush1.msra.mxu0 0.0
    %4531 = vmatprep.subr.mxu0 0.0
    %4532 = vmatpush1.msra.mxu0 0.0
    %4533 = vmatprep.subr.mxu0 0.0
    %4534 = vmatpush1.msra.mxu0 0.0
    %4535 = vmatprep.subr.mxu0 0.0
    %4536 = vmatpush1.msra.mxu0 0.0
    %4537 = vmatprep.subr.mxu0 0.0
    %4538 = vmatpush1.msra.mxu0 0.0
    %4539 = vmatprep.subr.mxu0 0.0
    %4540 = vmatpush1.msra.mxu0 0.0
    %4541 = vmatprep.subr.mxu0 0.0
    %4542 = vmatpush1.msra.mxu0 0.0
    %4543 = vmatprep.subr.mxu0 0.0
    %4544 = vmatpush1.msra.mxu0 0.0
    %4545 = vmatprep.subr.mxu0 0.0
    %4546 = vmatpush1.msra.mxu0 0.0
    %4547 = vmatprep.subr.mxu0 0.0
    %4548 = vmatpush1.msra.mxu0 0.0
    %4549 = vmatprep.subr.mxu0 0.0
    %4550 = vmatpush1.msra.mxu0 0.0
    %4551 = vmatprep.subr.mxu0 0.0
    %4552 = vmatpush1.msra.mxu0 0.0
    %4553 = vmatprep.subr.mxu0 0.0
    %4554 = vmatpush1.msra.mxu0 0.0
    %4555 = vmatprep.subr.mxu0 0.0
    %4556 = vmatpush1.msra.mxu0 0.0
    %4557 = vmatprep.subr.mxu0 0.0
    %4558 = vmatpush1.msra.mxu0 0.0
    %4559 = vmatprep.subr.mxu0 0.0
    %4560 = vmatpush1.msra.mxu0 0.0
    %4561 = vmatprep.subr.mxu0 0.0
    %4562 = vmatpush1.msra.mxu0 0.0
    %4563 = vmatprep.subr.mxu0 0.0
    %4564 = vmatpush1.msra.mxu0 0.0
    %4565 = vmatprep.subr.mxu0 0.0
    %4566 = vmatpush1.msra.mxu0 0.0
    %4567 = vmatprep.mubr.f32.mxu0 0.0
    %4568 = vmatmul.mubr.f32.gmra.mrb[0].mxu0 %v4311
    %v4569 = vpop.f32.mrb[0].mxu0
    %v4570 = vadd.f32 %v4425, %v4569
    %v4571 = vpop.f32.mrb[0].mxu0
    %4572 = vmatprep.mubr.f32.mxu0 0.0
    %4573 = vmatmul.mubr.f32.gmra.mrb[0].mxu0 %v4314
    %v4574 = vpop.f32.mrb[0].mxu0
    %v4575 = vadd.f32 %v4430, %v4574
    %v4576 = vpop.f32.mrb[0].mxu0
    %4577 = vmatprep.mubr.f32.mxu0 0.0
    %4578 = vmatmul.mubr.f32.gmra.mrb[0].mxu0 %v4317
    %v4579 = vpop.f32.mrb[0].mxu0
    %v4580 = vadd.f32 %v4435, %v4579
    %v4581 = vpop.f32.mrb[0].mxu0
    %4582 = vmatprep.mubr.f32.mxu0 0.0
    %4583 = vmatmul.mubr.f32.gmra.mrb[0].mxu0 %v4320
    %v4584 = vpop.f32.mrb[0].mxu0
    %v4585 = vadd.f32 %v4440, %v4584
    %v4586 = vpop.f32.mrb[0].mxu0
    %4587 = vmatprep.mubr.f32.mxu0 0.0
    %4588 = vmatmul.mubr.f32.gmra.mrb[0].mxu0 %v4323
    %v4589 = vpop.f32.mrb[0].mxu0
    %v4590 = vadd.f32 %v4445, %v4589
    %v4591 = vpop.f32.mrb[0].mxu0
    %4592 = vmatprep.mubr.f32.mxu0 0.0
    %4593 = vmatmul.mubr.f32.gmra.mrb[0].mxu0 %v4326
    %v4594 = vpop.f32.mrb[0].mxu0
    %v4595 = vadd.f32 %v4450, %v4594
    %v4596 = vpop.f32.mrb[0].mxu0
    %4597 = vmatprep.mubr.f32.mxu0 0.0
    %4598 = vmatmul.mubr.f32.gmra.mrb[0].mxu0 %v4329
    %v4599 = vpop.f32.mrb[0].mxu0
    %v4600 = vadd.f32 %v4455, %v4599
    %v4601 = vpop.f32.mrb[0].mxu0
    %4602 = vmatprep.mubr.f32.mxu0 0.0
    %4603 = vmatmul.mubr.f32.gmra.mrb[0].mxu0 %v4332
    %v4604 = vpop.f32.mrb[0].mxu0
    %v4605 = vadd.f32 %v4460, %v4604
    %v4606 = vpop.f32.mrb[0].mxu0
    %4607 = vmatprep.mubr.f32.mxu0 0.0
    %4608 = vmatmul.mubr.f32.gmra.mrb[0].mxu0 %v4335
    %v4609 = vpop.f32.mrb[0].mxu0
    %v4610 = vadd.f32 %v4465, %v4609
    %v4611 = vpop.f32.mrb[0].mxu0
    %4612 = vmatprep.mubr.f32.mxu0 0.0
    %4613 = vmatmul.mubr.f32.gmra.mrb[0].mxu0 %v4338
    %v4614 = vpop.f32.mrb[0].mxu0
    %v4615 = vadd.f32 %v4470, %v4614
    %v4616 = vpop.f32.mrb[0].mxu0
    %4617 = vmatprep.mubr.f32.mxu0 0.0
    %4618 = vmatmul.mubr.f32.gmra.mrb[0].mxu0 %v4341
    %v4619 = vpop.f32.mrb[0].mxu0
    %v4620 = vadd.f32 %v4475, %v4619
    %v4621 = vpop.f32.mrb[0].mxu0
    %4622 = vmatprep.mubr.f32.mxu0 0.0
    %4623 = vmatmul.mubr.f32.gmra.mrb[0].mxu0 %v4344
    %v4624 = vpop.f32.mrb[0].mxu0
    %v4625 = vadd.f32 %v4480, %v4624
    %v4626 = vpop.f32.mrb[0].mxu0
    %4627 = vmatprep.mubr.f32.mxu0 0.0
    %4628 = vmatmul.mubr.f32.gmra.mrb[0].mxu0 %v4347
    %v4629 = vpop.f32.mrb[0].mxu0
    %v4630 = vadd.f32 %v4485, %v4629
    %v4631 = vpop.f32.mrb[0].mxu0
    %4632 = vmatprep.mubr.f32.mxu0 0.0
    %4633 = vmatmul.mubr.f32.gmra.mrb[0].mxu0 %v4350
    %v4634 = vpop.f32.mrb[0].mxu0
    %v4635 = vadd.f32 %v4490, %v4634
    %v4636 = vpop.f32.mrb[0].mxu0
    %4637 = vmatprep.mubr.f32.mxu0 0.0
    %4638 = vmatmul.mubr.f32.gmra.mrb[0].mxu0 %v4353
    %v4639 = vpop.f32.mrb[0].mxu0
    %v4640 = vadd.f32 %v4495, %v4639
    %v4641 = vpop.f32.mrb[0].mxu0
    %4642 = vmatprep.mubr.f32.mxu0 0.0
    %4643 = vmatmul.mubr.f32.gmra.mrb[0].mxu0 %v4356
    %v4644 = vpop.f32.mrb[0].mxu0
    %v4645 = vadd.f32 %v4500, %v4644
    %v4646 = vpop.f32.mrb[0].mxu0
    %4647 = vdwg.mxu0
    %v4648 = vmax.f32 %v4570, 0.0
    %v4649 = vmax.f32 %v4575, 0.0
    %v4650 = vmax.f32 %v4580, 0.0
    %v4651 = vmax.f32 %v4585, 0.0
    %v4652 = vmax.f32 %v4590, 0.0
    %v4653 = vmax.f32 %v4595, 0.0
    %v4654 = vmax.f32 %v4600, 0.0
    %v4655 = vmax.f32 %v4605, 0.0
    %v4656 = vmax.f32 %v4610, 0.0
    %v4657 = vmax.f32 %v4615, 0.0
    %v4658 = vmax.f32 %v4620, 0.0
    %v4659 = vmax.f32 %v4625, 0.0
    %v4660 = vmax.f32 %v4630, 0.0
    %v4661 = vmax.f32 %v4635, 0.0
    %v4662 = vmax.f32 %v4640, 0.0
    %v4663 = vmax.f32 %v4645, 0.0
    %4664 = vst.msk [vmem:[%s73 + $0x1] sm:$0xff] %vm15, %v4648
    %4665 = vst.msk [vmem:[%s73 + $0x11] sm:$0xff] %vm15, %v4649
    %4666 = vst.msk [vmem:[%s73 + $0x21] sm:$0xff] %vm15, %v4650
    %4667 = vst.msk [vmem:[%s73 + $0x31] sm:$0xff] %vm15, %v4651
    %4668 = vst.msk [vmem:[%s73 + $0x41] sm:$0xff] %vm15, %v4652
    %4669 = vst.msk [vmem:[%s73 + $0x51] sm:$0xff] %vm15, %v4653
    %4670 = vst.msk [vmem:[%s73 + $0x61] sm:$0xff] %vm15, %v4654
    %4671 = vst.msk [vmem:[%s73 + $0x71] sm:$0xff] %vm15, %v4655
    %4672 = vst.msk [vmem:[%s73 + $0xa1] sm:$0xff] %vm15, %v4656
    %4673 = vst.msk [vmem:[%s73 + $0xb1] sm:$0xff] %vm15, %v4657
    %4674 = vst.msk [vmem:[%s73 + $0xc1] sm:$0xff] %vm15, %v4658
    %4675 = vst.msk [vmem:[%s73 + $0xd1] sm:$0xff] %vm15, %v4659
    %4676 = vst.msk [vmem:[%s73 + $0xe1] sm:$0xff] %vm15, %v4660
    %4677 = vst.msk [vmem:[%s73 + $0xf1] sm:$0xff] %vm15, %v4661
    %4678 = vst.msk [vmem:[%s73 + $0x101] sm:$0xff] %vm15, %v4662
    %4679 = vst.msk [vmem:[%s73 + $0x111] sm:$0xff] %vm15, %v4663
    %v4680 = vld [vmem:[#allocation2] sm:$0xff]
    %v4681 = vld [vmem:[#allocation2 + $0x10] sm:$0xff]
    %v4682 = vld [vmem:[#allocation2 + $0x20] sm:$0xff]
    %v4683 = vld [vmem:[#allocation2 + $0x30] sm:$0xff]
    %v4684 = vld [vmem:[#allocation2 + $0x40] sm:$0xff]
    %v4685 = vld [vmem:[#allocation2 + $0x50] sm:$0xff]
    %v4686 = vld [vmem:[#allocation2 + $0x60] sm:$0xff]
    %v4687 = vld [vmem:[#allocation2 + $0x70] sm:$0xff]
    %v4688 = vld [vmem:[#allocation2 + $0xa0] sm:$0xff]
    %v4689 = vld [vmem:[#allocation2 + $0xb0] sm:$0xff]
    %v4690 = vld [vmem:[#allocation2 + $0xc0] sm:$0xff]
    %v4691 = vld [vmem:[#allocation2 + $0xd0] sm:$0xff]
    %v4692 = vld [vmem:[#allocation2 + $0xe0] sm:$0xff]
    %v4693 = vld [vmem:[#allocation2 + $0xf0] sm:$0xff]
    %v4694 = vld [vmem:[#allocation2 + $0x100] sm:$0xff]
    %v4695 = vld [vmem:[#allocation2 + $0x110] sm:$0xff]
    %4696 = vst.msk [vmem:[#allocation3] sm:$0xff] %vm15, %v4680
    %4697 = vst.msk [vmem:[#allocation3 + $0x18] sm:$0xff] %vm15, %v4681
    %4698 = vst.msk [vmem:[#allocation3 + $0x30] sm:$0xff] %vm15, %v4682
    %4699 = vst.msk [vmem:[#allocation3 + $0x48] sm:$0xff] %vm15, %v4683
    %4700 = vst.msk [vmem:[#allocation3 + $0x60] sm:$0xff] %vm15, %v4684
    %4701 = vst.msk [vmem:[#allocation3 + $0x78] sm:$0xff] %vm15, %v4685
    %4702 = vst.msk [vmem:[#allocation3 + $0x90] sm:$0xff] %vm15, %v4686
    %4703 = vst.msk [vmem:[#allocation3 + $0xa8] sm:$0xff] %vm15, %v4687
    %4704 = vst.msk [vmem:[#allocation3 + $0xc0] sm:$0xff] %vm15, %v4688
    %4705 = vst.msk [vmem:[#allocation3 + $0xd8] sm:$0xff] %vm15, %v4689
    %4706 = vst.msk [vmem:[#allocation3 + $0xf0] sm:$0xff] %vm15, %v4690
    %4707 = vst.msk [vmem:[#allocation3 + $0x108] sm:$0xff] %vm15, %v4691
    %4708 = vst.msk [vmem:[#allocation3 + $0x120] sm:$0xff] %vm15, %v4692
    %4709 = vst.msk [vmem:[#allocation3 + $0x138] sm:$0xff] %vm15, %v4693
    %4710 = vst.msk [vmem:[#allocation3 + $0x150] sm:$0xff] %vm15, %v4694
    %4711 = vst.msk [vmem:[#allocation3 + $0x168] sm:$0xff] %vm15, %v4695
    %v4712 = vld [vmem:[#allocation2 + $0x1] sm:$0xff]
    %v4713 = vld [vmem:[#allocation2 + $0x11] sm:$0xff]
    %v4714 = vld [vmem:[#allocation2 + $0x21] sm:$0xff]
    %v4715 = vld [vmem:[#allocation2 + $0x31] sm:$0xff]
    %v4716 = vld [vmem:[#allocation2 + $0x41] sm:$0xff]
    %v4717 = vld [vmem:[#allocation2 + $0x51] sm:$0xff]
    %v4718 = vld [vmem:[#allocation2 + $0x61] sm:$0xff]
    %v4719 = vld [vmem:[#allocation2 + $0x71] sm:$0xff]
    %v4720 = vld [vmem:[#allocation2 + $0xa1] sm:$0xff]
    %v4721 = vld [vmem:[#allocation2 + $0xb1] sm:$0xff]
    %v4722 = vld [vmem:[#allocation2 + $0xc1] sm:$0xff]
    %v4723 = vld [vmem:[#allocation2 + $0xd1] sm:$0xff]
    %v4724 = vld [vmem:[#allocation2 + $0xe1] sm:$0xff]
    %v4725 = vld [vmem:[#allocation2 + $0xf1] sm:$0xff]
    %v4726 = vld [vmem:[#allocation2 + $0x101] sm:$0xff]
    %v4727 = vld [vmem:[#allocation2 + $0x111] sm:$0xff]
    %4744 = vrot.lane.b32.xlu0 %v4712, 32
    %v4745 = vpop.permute.xlu0 %4744
    %4746 = vrot.lane.b32.xlu0 %v4713, 32
    %v4747 = vpop.permute.xlu0 %4746
    %4748 = vrot.lane.b32.xlu0 %v4714, 32
    %v4749 = vpop.permute.xlu0 %4748
    %4750 = vrot.lane.b32.xlu0 %v4715, 32
    %v4751 = vpop.permute.xlu0 %4750
    %4752 = vrot.lane.b32.xlu0 %v4716, 32
    %v4753 = vpop.permute.xlu0 %4752
    %4754 = vrot.lane.b32.xlu0 %v4717, 32
    %v4755 = vpop.permute.xlu0 %4754
    %4756 = vrot.lane.b32.xlu0 %v4718, 32
    %v4757 = vpop.permute.xlu0 %4756
    %4758 = vrot.lane.b32.xlu0 %v4719, 32
    %v4759 = vpop.permute.xlu0 %4758
    %4760 = vrot.lane.b32.xlu0 %v4720, 32
    %v4761 = vpop.permute.xlu0 %4760
    %4762 = vrot.lane.b32.xlu0 %v4721, 32
    %v4763 = vpop.permute.xlu0 %4762
    %4764 = vrot.lane.b32.xlu0 %v4722, 32
    %v4765 = vpop.permute.xlu0 %4764
    %4766 = vrot.lane.b32.xlu0 %v4723, 32
    %v4767 = vpop.permute.xlu0 %4766
    %4768 = vrot.lane.b32.xlu0 %v4724, 32
    %v4769 = vpop.permute.xlu0 %4768
    %4770 = vrot.lane.b32.xlu0 %v4725, 32
    %v4771 = vpop.permute.xlu0 %4770
    %4772 = vrot.lane.b32.xlu0 %v4726, 32
    %v4773 = vpop.permute.xlu0 %4772
    %4774 = vrot.lane.b32.xlu0 %v4727, 32
    %v4775 = vpop.permute.xlu0 %4774
    %4792 = vst.msk [vmem:[#allocation3] sm:$0xff] %vm202, %v4745
    %4793 = vst.msk [vmem:[#allocation3 + $0x18] sm:$0xff] %vm202, %v4747
    %4794 = vst.msk [vmem:[#allocation3 + $0x30] sm:$0xff] %vm202, %v4749
    %4795 = vst.msk [vmem:[#allocation3 + $0x48] sm:$0xff] %vm202, %v4751
    %4796 = vst.msk [vmem:[#allocation3 + $0x60] sm:$0xff] %vm202, %v4753
    %4797 = vst.msk [vmem:[#allocation3 + $0x78] sm:$0xff] %vm202, %v4755
    %4798 = vst.msk [vmem:[#allocation3 + $0x90] sm:$0xff] %vm202, %v4757
    %4799 = vst.msk [vmem:[#allocation3 + $0xa8] sm:$0xff] %vm202, %v4759
    %4800 = vst.msk [vmem:[#allocation3 + $0xc0] sm:$0xff] %vm202, %v4761
    %4801 = vst.msk [vmem:[#allocation3 + $0xd8] sm:$0xff] %vm202, %v4763
    %4802 = vst.msk [vmem:[#allocation3 + $0xf0] sm:$0xff] %vm202, %v4765
    %4803 = vst.msk [vmem:[#allocation3 + $0x108] sm:$0xff] %vm202, %v4767
    %4804 = vst.msk [vmem:[#allocation3 + $0x120] sm:$0xff] %vm202, %v4769
    %4805 = vst.msk [vmem:[#allocation3 + $0x138] sm:$0xff] %vm202, %v4771
    %4806 = vst.msk [vmem:[#allocation3 + $0x150] sm:$0xff] %vm202, %v4773
    %4807 = vst.msk [vmem:[#allocation3 + $0x168] sm:$0xff] %vm202, %v4775
    %v4808 = vld [vmem:[#allocation2 + $0x2] sm:$0xff]
    %v4809 = vld [vmem:[#allocation2 + $0x12] sm:$0xff]
    %v4810 = vld [vmem:[#allocation2 + $0x22] sm:$0xff]
    %v4811 = vld [vmem:[#allocation2 + $0x32] sm:$0xff]
    %v4812 = vld [vmem:[#allocation2 + $0x42] sm:$0xff]
    %v4813 = vld [vmem:[#allocation2 + $0x52] sm:$0xff]
    %v4814 = vld [vmem:[#allocation2 + $0x62] sm:$0xff]
    %v4815 = vld [vmem:[#allocation2 + $0x72] sm:$0xff]
    %v4816 = vld [vmem:[#allocation2 + $0xa2] sm:$0xff]
    %v4817 = vld [vmem:[#allocation2 + $0xb2] sm:$0xff]
    %v4818 = vld [vmem:[#allocation2 + $0xc2] sm:$0xff]
    %v4819 = vld [vmem:[#allocation2 + $0xd2] sm:$0xff]
    %v4820 = vld [vmem:[#allocation2 + $0xe2] sm:$0xff]
    %v4821 = vld [vmem:[#allocation2 + $0xf2] sm:$0xff]
    %v4822 = vld [vmem:[#allocation2 + $0x102] sm:$0xff]
    %v4823 = vld [vmem:[#allocation2 + $0x112] sm:$0xff]
    %4840 = vrot.lane.b32.xlu0 %v4808, 64
    %v4841 = vpop.permute.xlu0 %4840
    %4842 = vrot.lane.b32.xlu0 %v4809, 64
    %v4843 = vpop.permute.xlu0 %4842
    %4844 = vrot.lane.b32.xlu0 %v4810, 64
    %v4845 = vpop.permute.xlu0 %4844
    %4846 = vrot.lane.b32.xlu0 %v4811, 64
    %v4847 = vpop.permute.xlu0 %4846
    %4848 = vrot.lane.b32.xlu0 %v4812, 64
    %v4849 = vpop.permute.xlu0 %4848
    %4850 = vrot.lane.b32.xlu0 %v4813, 64
    %v4851 = vpop.permute.xlu0 %4850
    %4852 = vrot.lane.b32.xlu0 %v4814, 64
    %v4853 = vpop.permute.xlu0 %4852
    %4854 = vrot.lane.b32.xlu0 %v4815, 64
    %v4855 = vpop.permute.xlu0 %4854
    %4856 = vrot.lane.b32.xlu0 %v4816, 64
    %v4857 = vpop.permute.xlu0 %4856
    %4858 = vrot.lane.b32.xlu0 %v4817, 64
    %v4859 = vpop.permute.xlu0 %4858
    %4860 = vrot.lane.b32.xlu0 %v4818, 64
    %v4861 = vpop.permute.xlu0 %4860
    %4862 = vrot.lane.b32.xlu0 %v4819, 64
    %v4863 = vpop.permute.xlu0 %4862
    %4864 = vrot.lane.b32.xlu0 %v4820, 64
    %v4865 = vpop.permute.xlu0 %4864
    %4866 = vrot.lane.b32.xlu0 %v4821, 64
    %v4867 = vpop.permute.xlu0 %4866
    %4868 = vrot.lane.b32.xlu0 %v4822, 64
    %v4869 = vpop.permute.xlu0 %4868
    %4870 = vrot.lane.b32.xlu0 %v4823, 64
    %v4871 = vpop.permute.xlu0 %4870
    %4888 = vst.msk [vmem:[#allocation3] sm:$0xff] %vm299, %v4841
    %4889 = vst.msk [vmem:[#allocation3 + $0x18] sm:$0xff] %vm299, %v4843
    %4890 = vst.msk [vmem:[#allocation3 + $0x30] sm:$0xff] %vm299, %v4845
    %4891 = vst.msk [vmem:[#allocation3 + $0x48] sm:$0xff] %vm299, %v4847
    %4892 = vst.msk [vmem:[#allocation3 + $0x60] sm:$0xff] %vm299, %v4849
    %4893 = vst.msk [vmem:[#allocation3 + $0x78] sm:$0xff] %vm299, %v4851
    %4894 = vst.msk [vmem:[#allocation3 + $0x90] sm:$0xff] %vm299, %v4853
    %4895 = vst.msk [vmem:[#allocation3 + $0xa8] sm:$0xff] %vm299, %v4855
    %4896 = vst.msk [vmem:[#allocation3 + $0xc0] sm:$0xff] %vm299, %v4857
    %4897 = vst.msk [vmem:[#allocation3 + $0xd8] sm:$0xff] %vm299, %v4859
    %4898 = vst.msk [vmem:[#allocation3 + $0xf0] sm:$0xff] %vm299, %v4861
    %4899 = vst.msk [vmem:[#allocation3 + $0x108] sm:$0xff] %vm299, %v4863
    %4900 = vst.msk [vmem:[#allocation3 + $0x120] sm:$0xff] %vm299, %v4865
    %4901 = vst.msk [vmem:[#allocation3 + $0x138] sm:$0xff] %vm299, %v4867
    %4902 = vst.msk [vmem:[#allocation3 + $0x150] sm:$0xff] %vm299, %v4869
    %4903 = vst.msk [vmem:[#allocation3 + $0x168] sm:$0xff] %vm299, %v4871
    %v4904 = vld [vmem:[%s73] sm:$0xff]
    %v4905 = vld [vmem:[%s73 + $0x10] sm:$0xff]
    %v4906 = vld [vmem:[%s73 + $0x20] sm:$0xff]
    %v4907 = vld [vmem:[%s73 + $0x30] sm:$0xff]
    %v4908 = vld [vmem:[%s73 + $0x40] sm:$0xff]
    %v4909 = vld [vmem:[%s73 + $0x50] sm:$0xff]
    %v4910 = vld [vmem:[%s73 + $0x60] sm:$0xff]
    %v4911 = vld [vmem:[%s73 + $0x70] sm:$0xff]
    %v4912 = vld [vmem:[%s73 + $0xa0] sm:$0xff]
    %v4913 = vld [vmem:[%s73 + $0xb0] sm:$0xff]
    %v4914 = vld [vmem:[%s73 + $0xc0] sm:$0xff]
    %v4915 = vld [vmem:[%s73 + $0xd0] sm:$0xff]
    %v4916 = vld [vmem:[%s73 + $0xe0] sm:$0xff]
    %v4917 = vld [vmem:[%s73 + $0xf0] sm:$0xff]
    %v4918 = vld [vmem:[%s73 + $0x100] sm:$0xff]
    %v4919 = vld [vmem:[%s73 + $0x110] sm:$0xff]
    %4936 = vrot.lane.b32.xlu0 %v4904, 96
    %v4937 = vpop.permute.xlu0 %4936
    %4938 = vrot.lane.b32.xlu0 %v4905, 96
    %v4939 = vpop.permute.xlu0 %4938
    %4940 = vrot.lane.b32.xlu0 %v4906, 96
    %v4941 = vpop.permute.xlu0 %4940
    %4942 = vrot.lane.b32.xlu0 %v4907, 96
    %v4943 = vpop.permute.xlu0 %4942
    %4944 = vrot.lane.b32.xlu0 %v4908, 96
    %v4945 = vpop.permute.xlu0 %4944
    %4946 = vrot.lane.b32.xlu0 %v4909, 96
    %v4947 = vpop.permute.xlu0 %4946
    %4948 = vrot.lane.b32.xlu0 %v4910, 96
    %v4949 = vpop.permute.xlu0 %4948
    %4950 = vrot.lane.b32.xlu0 %v4911, 96
    %v4951 = vpop.permute.xlu0 %4950
    %4952 = vrot.lane.b32.xlu0 %v4912, 96
    %v4953 = vpop.permute.xlu0 %4952
    %4954 = vrot.lane.b32.xlu0 %v4913, 96
    %v4955 = vpop.permute.xlu0 %4954
    %4956 = vrot.lane.b32.xlu0 %v4914, 96
    %v4957 = vpop.permute.xlu0 %4956
    %4958 = vrot.lane.b32.xlu0 %v4915, 96
    %v4959 = vpop.permute.xlu0 %4958
    %4960 = vrot.lane.b32.xlu0 %v4916, 96
    %v4961 = vpop.permute.xlu0 %4960
    %4962 = vrot.lane.b32.xlu0 %v4917, 96
    %v4963 = vpop.permute.xlu0 %4962
    %4964 = vrot.lane.b32.xlu0 %v4918, 96
    %v4965 = vpop.permute.xlu0 %4964
    %4966 = vrot.lane.b32.xlu0 %v4919, 96
    %v4967 = vpop.permute.xlu0 %4966
    %4984 = vst.msk [vmem:[#allocation3] sm:$0xff] %vm396, %v4937
    %4985 = vst.msk [vmem:[#allocation3 + $0x18] sm:$0xff] %vm396, %v4939
    %4986 = vst.msk [vmem:[#allocation3 + $0x30] sm:$0xff] %vm396, %v4941
    %4987 = vst.msk [vmem:[#allocation3 + $0x48] sm:$0xff] %vm396, %v4943
    %4988 = vst.msk [vmem:[#allocation3 + $0x60] sm:$0xff] %vm396, %v4945
    %4989 = vst.msk [vmem:[#allocation3 + $0x78] sm:$0xff] %vm396, %v4947
    %4990 = vst.msk [vmem:[#allocation3 + $0x90] sm:$0xff] %vm396, %v4949
    %4991 = vst.msk [vmem:[#allocation3 + $0xa8] sm:$0xff] %vm396, %v4951
    %4992 = vst.msk [vmem:[#allocation3 + $0xc0] sm:$0xff] %vm396, %v4953
    %4993 = vst.msk [vmem:[#allocation3 + $0xd8] sm:$0xff] %vm396, %v4955
    %4994 = vst.msk [vmem:[#allocation3 + $0xf0] sm:$0xff] %vm396, %v4957
    %4995 = vst.msk [vmem:[#allocation3 + $0x108] sm:$0xff] %vm396, %v4959
    %4996 = vst.msk [vmem:[#allocation3 + $0x120] sm:$0xff] %vm396, %v4961
    %4997 = vst.msk [vmem:[#allocation3 + $0x138] sm:$0xff] %vm396, %v4963
    %4998 = vst.msk [vmem:[#allocation3 + $0x150] sm:$0xff] %vm396, %v4965
    %4999 = vst.msk [vmem:[#allocation3 + $0x168] sm:$0xff] %vm396, %v4967
    %v5000 = vld [vmem:[%s73 + $0x1] sm:$0xff]
    %v5001 = vld [vmem:[%s73 + $0x11] sm:$0xff]
    %v5002 = vld [vmem:[%s73 + $0x21] sm:$0xff]
    %v5003 = vld [vmem:[%s73 + $0x31] sm:$0xff]
    %v5004 = vld [vmem:[%s73 + $0x41] sm:$0xff]
    %v5005 = vld [vmem:[%s73 + $0x51] sm:$0xff]
    %v5006 = vld [vmem:[%s73 + $0x61] sm:$0xff]
    %v5007 = vld [vmem:[%s73 + $0x71] sm:$0xff]
    %v5008 = vld [vmem:[%s73 + $0xa1] sm:$0xff]
    %v5009 = vld [vmem:[%s73 + $0xb1] sm:$0xff]
    %v5010 = vld [vmem:[%s73 + $0xc1] sm:$0xff]
    %v5011 = vld [vmem:[%s73 + $0xd1] sm:$0xff]
    %v5012 = vld [vmem:[%s73 + $0xe1] sm:$0xff]
    %v5013 = vld [vmem:[%s73 + $0xf1] sm:$0xff]
    %v5014 = vld [vmem:[%s73 + $0x101] sm:$0xff]
    %v5015 = vld [vmem:[%s73 + $0x111] sm:$0xff]
    %5016 = vst.msk [vmem:[#allocation3 + $0x8] sm:$0xff] %vm15, %v5000
    %5017 = vst.msk [vmem:[#allocation3 + $0x20] sm:$0xff] %vm15, %v5001
    %5018 = vst.msk [vmem:[#allocation3 + $0x38] sm:$0xff] %vm15, %v5002
    %5019 = vst.msk [vmem:[#allocation3 + $0x50] sm:$0xff] %vm15, %v5003
    %5020 = vst.msk [vmem:[#allocation3 + $0x68] sm:$0xff] %vm15, %v5004
    %5021 = vst.msk [vmem:[#allocation3 + $0x80] sm:$0xff] %vm15, %v5005
    %5022 = vst.msk [vmem:[#allocation3 + $0x98] sm:$0xff] %vm15, %v5006
    %5023 = vst.msk [vmem:[#allocation3 + $0xb0] sm:$0xff] %vm15, %v5007
    %5024 = vst.msk [vmem:[#allocation3 + $0xc8] sm:$0xff] %vm15, %v5008
    %5025 = vst.msk [vmem:[#allocation3 + $0xe0] sm:$0xff] %vm15, %v5009
    %5026 = vst.msk [vmem:[#allocation3 + $0xf8] sm:$0xff] %vm15, %v5010
    %5027 = vst.msk [vmem:[#allocation3 + $0x110] sm:$0xff] %vm15, %v5011
    %5028 = vst.msk [vmem:[#allocation3 + $0x128] sm:$0xff] %vm15, %v5012
    %5029 = vst.msk [vmem:[#allocation3 + $0x140] sm:$0xff] %vm15, %v5013
    %5030 = vst.msk [vmem:[#allocation3 + $0x158] sm:$0xff] %vm15, %v5014
    %5031 = vst.msk [vmem:[#allocation3 + $0x170] sm:$0xff] %vm15, %v5015
    %v5032 = vld [vmem:[%s73 + $0x2] sm:$0xff]
    %v5033 = vld [vmem:[%s73 + $0x12] sm:$0xff]
    %v5034 = vld [vmem:[%s73 + $0x22] sm:$0xff]
    %v5035 = vld [vmem:[%s73 + $0x32] sm:$0xff]
    %v5036 = vld [vmem:[%s73 + $0x42] sm:$0xff]
    %v5037 = vld [vmem:[%s73 + $0x52] sm:$0xff]
    %v5038 = vld [vmem:[%s73 + $0x62] sm:$0xff]
    %v5039 = vld [vmem:[%s73 + $0x72] sm:$0xff]
    %v5040 = vld [vmem:[%s73 + $0xa2] sm:$0xff]
    %v5041 = vld [vmem:[%s73 + $0xb2] sm:$0xff]
    %v5042 = vld [vmem:[%s73 + $0xc2] sm:$0xff]
    %v5043 = vld [vmem:[%s73 + $0xd2] sm:$0xff]
    %v5044 = vld [vmem:[%s73 + $0xe2] sm:$0xff]
    %v5045 = vld [vmem:[%s73 + $0xf2] sm:$0xff]
    %v5046 = vld [vmem:[%s73 + $0x102] sm:$0xff]
    %v5047 = vld [vmem:[%s73 + $0x112] sm:$0xff]
    %5064 = vrot.lane.b32.xlu0 %v5032, 32
    %v5065 = vpop.permute.xlu0 %5064
    %5066 = vrot.lane.b32.xlu0 %v5033, 32
    %v5067 = vpop.permute.xlu0 %5066
    %5068 = vrot.lane.b32.xlu0 %v5034, 32
    %v5069 = vpop.permute.xlu0 %5068
    %5070 = vrot.lane.b32.xlu0 %v5035, 32
    %v5071 = vpop.permute.xlu0 %5070
    %5072 = vrot.lane.b32.xlu0 %v5036, 32
    %v5073 = vpop.permute.xlu0 %5072
    %5074 = vrot.lane.b32.xlu0 %v5037, 32
    %v5075 = vpop.permute.xlu0 %5074
    %5076 = vrot.lane.b32.xlu0 %v5038, 32
    %v5077 = vpop.permute.xlu0 %5076
    %5078 = vrot.lane.b32.xlu0 %v5039, 32
    %v5079 = vpop.permute.xlu0 %5078
    %5080 = vrot.lane.b32.xlu0 %v5040, 32
    %v5081 = vpop.permute.xlu0 %5080
    %5082 = vrot.lane.b32.xlu0 %v5041, 32
    %v5083 = vpop.permute.xlu0 %5082
    %5084 = vrot.lane.b32.xlu0 %v5042, 32
    %v5085 = vpop.permute.xlu0 %5084
    %5086 = vrot.lane.b32.xlu0 %v5043, 32
    %v5087 = vpop.permute.xlu0 %5086
    %5088 = vrot.lane.b32.xlu0 %v5044, 32
    %v5089 = vpop.permute.xlu0 %5088
    %5090 = vrot.lane.b32.xlu0 %v5045, 32
    %v5091 = vpop.permute.xlu0 %5090
    %5092 = vrot.lane.b32.xlu0 %v5046, 32
    %v5093 = vpop.permute.xlu0 %5092
    %5094 = vrot.lane.b32.xlu0 %v5047, 32
    %v5095 = vpop.permute.xlu0 %5094
    %5112 = vst.msk [vmem:[#allocation3 + $0x8] sm:$0xff] %vm202, %v5065
    %5113 = vst.msk [vmem:[#allocation3 + $0x20] sm:$0xff] %vm202, %v5067
    %5114 = vst.msk [vmem:[#allocation3 + $0x38] sm:$0xff] %vm202, %v5069
    %5115 = vst.msk [vmem:[#allocation3 + $0x50] sm:$0xff] %vm202, %v5071
    %5116 = vst.msk [vmem:[#allocation3 + $0x68] sm:$0xff] %vm202, %v5073
    %5117 = vst.msk [vmem:[#allocation3 + $0x80] sm:$0xff] %vm202, %v5075
    %5118 = vst.msk [vmem:[#allocation3 + $0x98] sm:$0xff] %vm202, %v5077
    %5119 = vst.msk [vmem:[#allocation3 + $0xb0] sm:$0xff] %vm202, %v5079
    %5120 = vst.msk [vmem:[#allocation3 + $0xc8] sm:$0xff] %vm202, %v5081
    %5121 = vst.msk [vmem:[#allocation3 + $0xe0] sm:$0xff] %vm202, %v5083
    %5122 = vst.msk [vmem:[#allocation3 + $0xf8] sm:$0xff] %vm202, %v5085
    %5123 = vst.msk [vmem:[#allocation3 + $0x110] sm:$0xff] %vm202, %v5087
    %5124 = vst.msk [vmem:[#allocation3 + $0x128] sm:$0xff] %vm202, %v5089
    %5125 = vst.msk [vmem:[#allocation3 + $0x140] sm:$0xff] %vm202, %v5091
    %5126 = vst.msk [vmem:[#allocation3 + $0x158] sm:$0xff] %vm202, %v5093
    %5127 = vst.msk [vmem:[#allocation3 + $0x170] sm:$0xff] %vm202, %v5095
    %v5128 = vld [vmem:[%s541] sm:$0xff]
    %v5129 = vld [vmem:[%s541 + $0x10] sm:$0xff]
    %v5130 = vld [vmem:[%s541 + $0x20] sm:$0xff]
    %v5131 = vld [vmem:[%s541 + $0x30] sm:$0xff]
    %v5132 = vld [vmem:[%s541 + $0x40] sm:$0xff]
    %v5133 = vld [vmem:[%s541 + $0x50] sm:$0xff]
    %v5134 = vld [vmem:[%s541 + $0x60] sm:$0xff]
    %v5135 = vld [vmem:[%s541 + $0x70] sm:$0xff]
    %v5136 = vld [vmem:[%s541 + $0xa0] sm:$0xff]
    %v5137 = vld [vmem:[%s541 + $0xb0] sm:$0xff]
    %v5138 = vld [vmem:[%s541 + $0xc0] sm:$0xff]
    %v5139 = vld [vmem:[%s541 + $0xd0] sm:$0xff]
    %v5140 = vld [vmem:[%s541 + $0xe0] sm:$0xff]
    %v5141 = vld [vmem:[%s541 + $0xf0] sm:$0xff]
    %v5142 = vld [vmem:[%s541 + $0x100] sm:$0xff]
    %v5143 = vld [vmem:[%s541 + $0x110] sm:$0xff]
    %5160 = vrot.lane.b32.xlu0 %v5128, 64
    %v5161 = vpop.permute.xlu0 %5160
    %5162 = vrot.lane.b32.xlu0 %v5129, 64
    %v5163 = vpop.permute.xlu0 %5162
    %5164 = vrot.lane.b32.xlu0 %v5130, 64
    %v5165 = vpop.permute.xlu0 %5164
    %5166 = vrot.lane.b32.xlu0 %v5131, 64
    %v5167 = vpop.permute.xlu0 %5166
    %5168 = vrot.lane.b32.xlu0 %v5132, 64
    %v5169 = vpop.permute.xlu0 %5168
    %5170 = vrot.lane.b32.xlu0 %v5133, 64
    %v5171 = vpop.permute.xlu0 %5170
    %5172 = vrot.lane.b32.xlu0 %v5134, 64
    %v5173 = vpop.permute.xlu0 %5172
    %5174 = vrot.lane.b32.xlu0 %v5135, 64
    %v5175 = vpop.permute.xlu0 %5174
    %5176 = vrot.lane.b32.xlu0 %v5136, 64
    %v5177 = vpop.permute.xlu0 %5176
    %5178 = vrot.lane.b32.xlu0 %v5137, 64
    %v5179 = vpop.permute.xlu0 %5178
    %5180 = vrot.lane.b32.xlu0 %v5138, 64
    %v5181 = vpop.permute.xlu0 %5180
    %5182 = vrot.lane.b32.xlu0 %v5139, 64
    %v5183 = vpop.permute.xlu0 %5182
    %5184 = vrot.lane.b32.xlu0 %v5140, 64
    %v5185 = vpop.permute.xlu0 %5184
    %5186 = vrot.lane.b32.xlu0 %v5141, 64
    %v5187 = vpop.permute.xlu0 %5186
    %5188 = vrot.lane.b32.xlu0 %v5142, 64
    %v5189 = vpop.permute.xlu0 %5188
    %5190 = vrot.lane.b32.xlu0 %v5143, 64
    %v5191 = vpop.permute.xlu0 %5190
    %5208 = vst.msk [vmem:[#allocation3 + $0x8] sm:$0xff] %vm299, %v5161
    %5209 = vst.msk [vmem:[#allocation3 + $0x20] sm:$0xff] %vm299, %v5163
    %5210 = vst.msk [vmem:[#allocation3 + $0x38] sm:$0xff] %vm299, %v5165
    %5211 = vst.msk [vmem:[#allocation3 + $0x50] sm:$0xff] %vm299, %v5167
    %5212 = vst.msk [vmem:[#allocation3 + $0x68] sm:$0xff] %vm299, %v5169
    %5213 = vst.msk [vmem:[#allocation3 + $0x80] sm:$0xff] %vm299, %v5171
    %5214 = vst.msk [vmem:[#allocation3 + $0x98] sm:$0xff] %vm299, %v5173
    %5215 = vst.msk [vmem:[#allocation3 + $0xb0] sm:$0xff] %vm299, %v5175
    %5216 = vst.msk [vmem:[#allocation3 + $0xc8] sm:$0xff] %vm299, %v5177
    %5217 = vst.msk [vmem:[#allocation3 + $0xe0] sm:$0xff] %vm299, %v5179
    %5218 = vst.msk [vmem:[#allocation3 + $0xf8] sm:$0xff] %vm299, %v5181
    %5219 = vst.msk [vmem:[#allocation3 + $0x110] sm:$0xff] %vm299, %v5183
    %5220 = vst.msk [vmem:[#allocation3 + $0x128] sm:$0xff] %vm299, %v5185
    %5221 = vst.msk [vmem:[#allocation3 + $0x140] sm:$0xff] %vm299, %v5187
    %5222 = vst.msk [vmem:[#allocation3 + $0x158] sm:$0xff] %vm299, %v5189
    %5223 = vst.msk [vmem:[#allocation3 + $0x170] sm:$0xff] %vm299, %v5191
    %v5224 = vld [vmem:[%s541 + $0x1] sm:$0xff]
    %v5225 = vld [vmem:[%s541 + $0x11] sm:$0xff]
    %v5226 = vld [vmem:[%s541 + $0x21] sm:$0xff]
    %v5227 = vld [vmem:[%s541 + $0x31] sm:$0xff]
    %v5228 = vld [vmem:[%s541 + $0x41] sm:$0xff]
    %v5229 = vld [vmem:[%s541 + $0x51] sm:$0xff]
    %v5230 = vld [vmem:[%s541 + $0x61] sm:$0xff]
    %v5231 = vld [vmem:[%s541 + $0x71] sm:$0xff]
    %v5232 = vld [vmem:[%s541 + $0xa1] sm:$0xff]
    %v5233 = vld [vmem:[%s541 + $0xb1] sm:$0xff]
    %v5234 = vld [vmem:[%s541 + $0xc1] sm:$0xff]
    %v5235 = vld [vmem:[%s541 + $0xd1] sm:$0xff]
    %v5236 = vld [vmem:[%s541 + $0xe1] sm:$0xff]
    %v5237 = vld [vmem:[%s541 + $0xf1] sm:$0xff]
    %v5238 = vld [vmem:[%s541 + $0x101] sm:$0xff]
    %v5239 = vld [vmem:[%s541 + $0x111] sm:$0xff]
    %5256 = vrot.lane.b32.xlu0 %v5224, 96
    %v5257 = vpop.permute.xlu0 %5256
    %5258 = vrot.lane.b32.xlu0 %v5225, 96
    %v5259 = vpop.permute.xlu0 %5258
    %5260 = vrot.lane.b32.xlu0 %v5226, 96
    %v5261 = vpop.permute.xlu0 %5260
    %5262 = vrot.lane.b32.xlu0 %v5227, 96
    %v5263 = vpop.permute.xlu0 %5262
    %5264 = vrot.lane.b32.xlu0 %v5228, 96
    %v5265 = vpop.permute.xlu0 %5264
    %5266 = vrot.lane.b32.xlu0 %v5229, 96
    %v5267 = vpop.permute.xlu0 %5266
    %5268 = vrot.lane.b32.xlu0 %v5230, 96
    %v5269 = vpop.permute.xlu0 %5268
    %5270 = vrot.lane.b32.xlu0 %v5231, 96
    %v5271 = vpop.permute.xlu0 %5270
    %5272 = vrot.lane.b32.xlu0 %v5232, 96
    %v5273 = vpop.permute.xlu0 %5272
    %5274 = vrot.lane.b32.xlu0 %v5233, 96
    %v5275 = vpop.permute.xlu0 %5274
    %5276 = vrot.lane.b32.xlu0 %v5234, 96
    %v5277 = vpop.permute.xlu0 %5276
    %5278 = vrot.lane.b32.xlu0 %v5235, 96
    %v5279 = vpop.permute.xlu0 %5278
    %5280 = vrot.lane.b32.xlu0 %v5236, 96
    %v5281 = vpop.permute.xlu0 %5280
    %5282 = vrot.lane.b32.xlu0 %v5237, 96
    %v5283 = vpop.permute.xlu0 %5282
    %5284 = vrot.lane.b32.xlu0 %v5238, 96
    %v5285 = vpop.permute.xlu0 %5284
    %5286 = vrot.lane.b32.xlu0 %v5239, 96
    %v5287 = vpop.permute.xlu0 %5286
    %5304 = vst.msk [vmem:[#allocation3 + $0x8] sm:$0xff] %vm396, %v5257
    %5305 = vst.msk [vmem:[#allocation3 + $0x20] sm:$0xff] %vm396, %v5259
    %5306 = vst.msk [vmem:[#allocation3 + $0x38] sm:$0xff] %vm396, %v5261
    %5307 = vst.msk [vmem:[#allocation3 + $0x50] sm:$0xff] %vm396, %v5263
    %5308 = vst.msk [vmem:[#allocation3 + $0x68] sm:$0xff] %vm396, %v5265
    %5309 = vst.msk [vmem:[#allocation3 + $0x80] sm:$0xff] %vm396, %v5267
    %5310 = vst.msk [vmem:[#allocation3 + $0x98] sm:$0xff] %vm396, %v5269
    %5311 = vst.msk [vmem:[#allocation3 + $0xb0] sm:$0xff] %vm396, %v5271
    %5312 = vst.msk [vmem:[#allocation3 + $0xc8] sm:$0xff] %vm396, %v5273
    %5313 = vst.msk [vmem:[#allocation3 + $0xe0] sm:$0xff] %vm396, %v5275
    %5314 = vst.msk [vmem:[#allocation3 + $0xf8] sm:$0xff] %vm396, %v5277
    %5315 = vst.msk [vmem:[#allocation3 + $0x110] sm:$0xff] %vm396, %v5279
    %5316 = vst.msk [vmem:[#allocation3 + $0x128] sm:$0xff] %vm396, %v5281
    %5317 = vst.msk [vmem:[#allocation3 + $0x140] sm:$0xff] %vm396, %v5283
    %5318 = vst.msk [vmem:[#allocation3 + $0x158] sm:$0xff] %vm396, %v5285
    %5319 = vst.msk [vmem:[#allocation3 + $0x170] sm:$0xff] %vm396, %v5287
    %v5320 = vld [vmem:[%s541 + $0x2] sm:$0xff]
    %v5321 = vld [vmem:[%s541 + $0x12] sm:$0xff]
    %v5322 = vld [vmem:[%s541 + $0x22] sm:$0xff]
    %v5323 = vld [vmem:[%s541 + $0x32] sm:$0xff]
    %v5324 = vld [vmem:[%s541 + $0x42] sm:$0xff]
    %v5325 = vld [vmem:[%s541 + $0x52] sm:$0xff]
    %v5326 = vld [vmem:[%s541 + $0x62] sm:$0xff]
    %v5327 = vld [vmem:[%s541 + $0x72] sm:$0xff]
    %v5328 = vld [vmem:[%s541 + $0xa2] sm:$0xff]
    %v5329 = vld [vmem:[%s541 + $0xb2] sm:$0xff]
    %v5330 = vld [vmem:[%s541 + $0xc2] sm:$0xff]
    %v5331 = vld [vmem:[%s541 + $0xd2] sm:$0xff]
    %v5332 = vld [vmem:[%s541 + $0xe2] sm:$0xff]
    %v5333 = vld [vmem:[%s541 + $0xf2] sm:$0xff]
    %v5334 = vld [vmem:[%s541 + $0x102] sm:$0xff]
    %v5335 = vld [vmem:[%s541 + $0x112] sm:$0xff]
    %5336 = vst.msk [vmem:[#allocation3 + $0x10] sm:$0xff] %vm15, %v5320
    %5337 = vst.msk [vmem:[#allocation3 + $0x28] sm:$0xff] %vm15, %v5321
    %5338 = vst.msk [vmem:[#allocation3 + $0x40] sm:$0xff] %vm15, %v5322
    %5339 = vst.msk [vmem:[#allocation3 + $0x58] sm:$0xff] %vm15, %v5323
    %5340 = vst.msk [vmem:[#allocation3 + $0x70] sm:$0xff] %vm15, %v5324
    %5341 = vst.msk [vmem:[#allocation3 + $0x88] sm:$0xff] %vm15, %v5325
    %5342 = vst.msk [vmem:[#allocation3 + $0xa0] sm:$0xff] %vm15, %v5326
    %5343 = vst.msk [vmem:[#allocation3 + $0xb8] sm:$0xff] %vm15, %v5327
    %5344 = vst.msk [vmem:[#allocation3 + $0xd0] sm:$0xff] %vm15, %v5328
    %5345 = vst.msk [vmem:[#allocation3 + $0xe8] sm:$0xff] %vm15, %v5329
    %5346 = vst.msk [vmem:[#allocation3 + $0x100] sm:$0xff] %vm15, %v5330
    %5347 = vst.msk [vmem:[#allocation3 + $0x118] sm:$0xff] %vm15, %v5331
    %5348 = vst.msk [vmem:[#allocation3 + $0x130] sm:$0xff] %vm15, %v5332
    %5349 = vst.msk [vmem:[#allocation3 + $0x148] sm:$0xff] %vm15, %v5333
    %5350 = vst.msk [vmem:[#allocation3 + $0x160] sm:$0xff] %vm15, %v5334
    %5351 = vst.msk [vmem:[#allocation3 + $0x178] sm:$0xff] %vm15, %v5335
    %v5352 = vld [vmem:[#allocation3] sm:$0xff]
    %v5353 = vld [vmem:[#allocation3 + $0x8] sm:$0xff]
    %v5354 = vld [vmem:[#allocation3 + $0x10] sm:$0xff]
    %v5355 = vld [vmem:[#allocation3 + $0x18] sm:$0xff]
    %v5356 = vld [vmem:[#allocation3 + $0x20] sm:$0xff]
    %v5357 = vld [vmem:[#allocation3 + $0x28] sm:$0xff]
    %v5358 = vld [vmem:[#allocation3 + $0x30] sm:$0xff]
    %v5359 = vld [vmem:[#allocation3 + $0x38] sm:$0xff]
    %v5360 = vld [vmem:[#allocation3 + $0x40] sm:$0xff]
    %v5361 = vld [vmem:[#allocation3 + $0x48] sm:$0xff]
    %v5362 = vld [vmem:[#allocation3 + $0x50] sm:$0xff]
    %v5363 = vld [vmem:[#allocation3 + $0x58] sm:$0xff]
    %v5364 = vld [vmem:[#allocation3 + $0x60] sm:$0xff]
    %v5365 = vld [vmem:[#allocation3 + $0x68] sm:$0xff]
    %v5366 = vld [vmem:[#allocation3 + $0x70] sm:$0xff]
    %v5367 = vld [vmem:[#allocation3 + $0x78] sm:$0xff]
    %v5368 = vld [vmem:[#allocation3 + $0x80] sm:$0xff]
    %v5369 = vld [vmem:[#allocation3 + $0x88] sm:$0xff]
    %v5370 = vld [vmem:[#allocation3 + $0x90] sm:$0xff]
    %v5371 = vld [vmem:[#allocation3 + $0x98] sm:$0xff]
    %v5372 = vld [vmem:[#allocation3 + $0xa0] sm:$0xff]
    %v5373 = vld [vmem:[#allocation3 + $0xa8] sm:$0xff]
    %v5374 = vld [vmem:[#allocation3 + $0xb0] sm:$0xff]
    %v5375 = vld [vmem:[#allocation3 + $0xb8] sm:$0xff]
    %v5376 = vld [vmem:[#allocation3 + $0xc0] sm:$0xff]
    %v5377 = vld [vmem:[#allocation3 + $0xc8] sm:$0xff]
    %v5378 = vld [vmem:[#allocation3 + $0xd0] sm:$0xff]
    %v5379 = vld [vmem:[#allocation3 + $0xd8] sm:$0xff]
    %v5380 = vld [vmem:[#allocation3 + $0xe0] sm:$0xff]
    %v5381 = vld [vmem:[#allocation3 + $0xe8] sm:$0xff]
    %v5382 = vld [vmem:[#allocation3 + $0xf0] sm:$0xff]
    %v5383 = vld [vmem:[#allocation3 + $0xf8] sm:$0xff]
    %v5384 = vld [vmem:[#allocation3 + $0x100] sm:$0xff]
    %v5385 = vld [vmem:[#allocation3 + $0x108] sm:$0xff]
    %v5386 = vld [vmem:[#allocation3 + $0x110] sm:$0xff]
    %v5387 = vld [vmem:[#allocation3 + $0x118] sm:$0xff]
    %v5388 = vld [vmem:[#allocation3 + $0x120] sm:$0xff]
    %v5389 = vld [vmem:[#allocation3 + $0x128] sm:$0xff]
    %v5390 = vld [vmem:[#allocation3 + $0x130] sm:$0xff]
    %v5391 = vld [vmem:[#allocation3 + $0x138] sm:$0xff]
    %v5392 = vld [vmem:[#allocation3 + $0x140] sm:$0xff]
    %v5393 = vld [vmem:[#allocation3 + $0x148] sm:$0xff]
    %v5394 = vld [vmem:[#allocation3 + $0x150] sm:$0xff]
    %v5395 = vld [vmem:[#allocation3 + $0x158] sm:$0xff]
    %v5396 = vld [vmem:[#allocation3 + $0x160] sm:$0xff]
    %v5397 = vld [vmem:[#allocation3 + $0x168] sm:$0xff]
    %v5398 = vld [vmem:[#allocation3 + $0x170] sm:$0xff]
    %v5399 = vld [vmem:[#allocation3 + $0x178] sm:$0xff]
    %s5400 = scalar_lea.vmem %s1, 1152
    %v5401 = vld [vmem:[%s5400] sm:$0xff]
    %v5402 = vld [vmem:[%s5400 + $0x8] sm:$0xff]
    %v5403 = vld [vmem:[%s5400 + $0x10] sm:$0xff]
    %v5404 = vld [vmem:[%s5400 + $0x18] sm:$0xff]
    %v5405 = vld [vmem:[%s5400 + $0x20] sm:$0xff]
    %v5406 = vld [vmem:[%s5400 + $0x28] sm:$0xff]
    %v5407 = vld [vmem:[%s5400 + $0x30] sm:$0xff]
    %v5408 = vld [vmem:[%s5400 + $0x38] sm:$0xff]
    %v5409 = vld [vmem:[%s5400 + $0x40] sm:$0xff]
    %v5410 = vld [vmem:[%s5400 + $0x48] sm:$0xff]
    %v5411 = vld [vmem:[%s5400 + $0x50] sm:$0xff]
    %v5412 = vld [vmem:[%s5400 + $0x58] sm:$0xff]
    %v5413 = vld [vmem:[%s5400 + $0x60] sm:$0xff]
    %v5414 = vld [vmem:[%s5400 + $0x68] sm:$0xff]
    %v5415 = vld [vmem:[%s5400 + $0x70] sm:$0xff]
    %v5416 = vld [vmem:[%s5400 + $0x78] sm:$0xff]
    %v5417 = vld [vmem:[%s5400 + $0x80] sm:$0xff]
    %v5418 = vld [vmem:[%s5400 + $0x88] sm:$0xff]
    %v5419 = vld [vmem:[%s5400 + $0x90] sm:$0xff]
    %v5420 = vld [vmem:[%s5400 + $0x98] sm:$0xff]
    %v5421 = vld [vmem:[%s5400 + $0xa0] sm:$0xff]
    %v5422 = vld [vmem:[%s5400 + $0xa8] sm:$0xff]
    %v5423 = vld [vmem:[%s5400 + $0xb0] sm:$0xff]
    %v5424 = vld [vmem:[%s5400 + $0xb8] sm:$0xff]
    %v5425 = vld [vmem:[%s5400 + $0xc0] sm:$0xff]
    %v5426 = vld [vmem:[%s5400 + $0xc8] sm:$0xff]
    %v5427 = vld [vmem:[%s5400 + $0xd0] sm:$0xff]
    %v5428 = vld [vmem:[%s5400 + $0xd8] sm:$0xff]
    %v5429 = vld [vmem:[%s5400 + $0xe0] sm:$0xff]
    %v5430 = vld [vmem:[%s5400 + $0xe8] sm:$0xff]
    %v5431 = vld [vmem:[%s5400 + $0xf0] sm:$0xff]
    %v5432 = vld [vmem:[%s5400 + $0xf8] sm:$0xff]
    %v5433 = vld [vmem:[%s5400 + $0x100] sm:$0xff]
    %v5434 = vld [vmem:[%s5400 + $0x108] sm:$0xff]
    %v5435 = vld [vmem:[%s5400 + $0x110] sm:$0xff]
    %v5436 = vld [vmem:[%s5400 + $0x118] sm:$0xff]
    %s5437 = scalar_lea.vmem %s2, 4
    %v5438 = vld [vmem:[%s5437] sm:$0x1]
    %v5440 = vlaneseq
    %v5441 = vshrl.u32 %v5440, 7
    %v5442 = vsub.s32 0, %v5441
    %v5443 = vrot.slane %v5438, %v5442
    %v5446 = vsel %vm15, %v5354, 0
    %v5449 = vsel %vm15, %v5357, 0
    %v5452 = vsel %vm15, %v5360, 0
    %v5455 = vsel %vm15, %v5363, 0
    %v5458 = vsel %vm15, %v5366, 0
    %v5461 = vsel %vm15, %v5369, 0
    %v5464 = vsel %vm15, %v5372, 0
    %v5467 = vsel %vm15, %v5375, 0
    %v5470 = vsel %vm15, %v5378, 0
    %v5473 = vsel %vm15, %v5381, 0
    %v5476 = vsel %vm15, %v5384, 0
    %v5479 = vsel %vm15, %v5387, 0
    %v5482 = vsel %vm15, %v5390, 0
    %v5485 = vsel %vm15, %v5393, 0
    %v5488 = vsel %vm15, %v5396, 0
    %v5491 = vsel %vm15, %v5399, 0
    %5493 = vmatprep.subr.mxu0 0.0
    %5494 = vmatpush1.msra.mxu0 %v5401
    %5495 = vmatprep.subr.mxu0 0.0
    %5496 = vmatpush1.msra.mxu0 %v5402
    %5497 = vmatprep.subr.mxu0 0.0
    %5498 = vmatpush1.msra.mxu0 %v5403
    %5499 = vmatprep.subr.mxu0 0.0
    %5500 = vmatpush1.msra.mxu0 %v5404
    %5501 = vmatprep.subr.mxu0 0.0
    %5502 = vmatpush1.msra.mxu0 %v5405
    %5503 = vmatprep.subr.mxu0 0.0
    %5504 = vmatpush1.msra.mxu0 %v5406
    %5505 = vmatprep.subr.mxu0 0.0
    %5506 = vmatpush1.msra.mxu0 %v5407
    %5507 = vmatprep.subr.mxu0 0.0
    %5508 = vmatpush1.msra.mxu0 %v5408
    %5509 = vmatprep.subr.mxu0 0.0
    %5510 = vmatpush1.msra.mxu0 %v5409
    %5511 = vmatprep.subr.mxu0 0.0
    %5512 = vmatpush1.msra.mxu0 %v5410
    %5513 = vmatprep.subr.mxu0 0.0
    %5514 = vmatpush1.msra.mxu0 %v5411
    %5515 = vmatprep.subr.mxu0 0.0
    %5516 = vmatpush1.msra.mxu0 %v5412
    %5517 = vmatprep.subr.mxu0 0.0
    %5518 = vmatpush1.msra.mxu0 %v5413
    %5519 = vmatprep.subr.mxu0 0.0
    %5520 = vmatpush1.msra.mxu0 %v5414
    %5521 = vmatprep.subr.mxu0 0.0
    %5522 = vmatpush1.msra.mxu0 %v5415
    %5523 = vmatprep.subr.mxu0 0.0
    %5524 = vmatpush1.msra.mxu0 %v5416
    %5525 = vmatprep.subr.mxu0 0.0
    %5526 = vmatpush1.msra.mxu0 %v5417
    %5527 = vmatprep.subr.mxu0 0.0
    %5528 = vmatpush1.msra.mxu0 %v5418
    %5529 = vmatprep.subr.mxu0 0.0
    %5530 = vmatpush1.msra.mxu0 %v5419
    %5531 = vmatprep.subr.mxu0 0.0
    %5532 = vmatpush1.msra.mxu0 %v5420
    %5533 = vmatprep.subr.mxu0 0.0
    %5534 = vmatpush1.msra.mxu0 %v5421
    %5535 = vmatprep.subr.mxu0 0.0
    %5536 = vmatpush1.msra.mxu0 %v5422
    %5537 = vmatprep.subr.mxu0 0.0
    %5538 = vmatpush1.msra.mxu0 %v5423
    %5539 = vmatprep.subr.mxu0 0.0
    %5540 = vmatpush1.msra.mxu0 %v5424
    %5541 = vmatprep.subr.mxu0 0.0
    %5542 = vmatpush1.msra.mxu0 %v5425
    %5543 = vmatprep.subr.mxu0 0.0
    %5544 = vmatpush1.msra.mxu0 %v5426
    %5545 = vmatprep.subr.mxu0 0.0
    %5546 = vmatpush1.msra.mxu0 %v5427
    %5547 = vmatprep.subr.mxu0 0.0
    %5548 = vmatpush1.msra.mxu0 %v5428
    %5549 = vmatprep.subr.mxu0 0.0
    %5550 = vmatpush1.msra.mxu0 %v5429
    %5551 = vmatprep.subr.mxu0 0.0
    %5552 = vmatpush1.msra.mxu0 %v5430
    %5553 = vmatprep.subr.mxu0 0.0
    %5554 = vmatpush1.msra.mxu0 %v5431
    %5555 = vmatprep.subr.mxu0 0.0
    %5556 = vmatpush1.msra.mxu0 %v5432
    %5557 = vmatprep.mubr.f32.mxu0 %v5353
    %5558 = vmatmul.mubr.f32.gmra.mrb[0].mxu0 %v5352
    %v5559 = vpop.f32.mrb[0].mxu0
    %v5560 = vadd.f32 %v5443, %v5559
    %v5561 = vpop.f32.mrb[0].mxu0
    %5562 = vmatprep.mubr.f32.mxu0 %v5356
    %5563 = vmatmul.mubr.f32.gmra.mrb[0].mxu0 %v5355
    %v5564 = vpop.f32.mrb[0].mxu0
    %v5565 = vadd.f32 %v5443, %v5564
    %v5566 = vpop.f32.mrb[0].mxu0
    %5567 = vmatprep.mubr.f32.mxu0 %v5359
    %5568 = vmatmul.mubr.f32.gmra.mrb[0].mxu0 %v5358
    %v5569 = vpop.f32.mrb[0].mxu0
    %v5570 = vadd.f32 %v5443, %v5569
    %v5571 = vpop.f32.mrb[0].mxu0
    %5572 = vmatprep.mubr.f32.mxu0 %v5362
    %5573 = vmatmul.mubr.f32.gmra.mrb[0].mxu0 %v5361
    %v5574 = vpop.f32.mrb[0].mxu0
    %v5575 = vadd.f32 %v5443, %v5574
    %v5576 = vpop.f32.mrb[0].mxu0
    %5577 = vmatprep.mubr.f32.mxu0 %v5365
    %5578 = vmatmul.mubr.f32.gmra.mrb[0].mxu0 %v5364
    %v5579 = vpop.f32.mrb[0].mxu0
    %v5580 = vadd.f32 %v5443, %v5579
    %v5581 = vpop.f32.mrb[0].mxu0
    %5582 = vmatprep.mubr.f32.mxu0 %v5368
    %5583 = vmatmul.mubr.f32.gmra.mrb[0].mxu0 %v5367
    %v5584 = vpop.f32.mrb[0].mxu0
    %v5585 = vadd.f32 %v5443, %v5584
    %v5586 = vpop.f32.mrb[0].mxu0
    %5587 = vmatprep.mubr.f32.mxu0 %v5371
    %5588 = vmatmul.mubr.f32.gmra.mrb[0].mxu0 %v5370
    %v5589 = vpop.f32.mrb[0].mxu0
    %v5590 = vadd.f32 %v5443, %v5589
    %v5591 = vpop.f32.mrb[0].mxu0
    %5592 = vmatprep.mubr.f32.mxu0 %v5374
    %5593 = vmatmul.mubr.f32.gmra.mrb[0].mxu0 %v5373
    %v5594 = vpop.f32.mrb[0].mxu0
    %v5595 = vadd.f32 %v5443, %v5594
    %v5596 = vpop.f32.mrb[0].mxu0
    %5597 = vmatprep.mubr.f32.mxu0 %v5377
    %5598 = vmatmul.mubr.f32.gmra.mrb[0].mxu0 %v5376
    %v5599 = vpop.f32.mrb[0].mxu0
    %v5600 = vadd.f32 %v5443, %v5599
    %v5601 = vpop.f32.mrb[0].mxu0
    %5602 = vmatprep.mubr.f32.mxu0 %v5380
    %5603 = vmatmul.mubr.f32.gmra.mrb[0].mxu0 %v5379
    %v5604 = vpop.f32.mrb[0].mxu0
    %v5605 = vadd.f32 %v5443, %v5604
    %v5606 = vpop.f32.mrb[0].mxu0
    %5607 = vmatprep.mubr.f32.mxu0 %v5383
    %5608 = vmatmul.mubr.f32.gmra.mrb[0].mxu0 %v5382
    %v5609 = vpop.f32.mrb[0].mxu0
    %v5610 = vadd.f32 %v5443, %v5609
    %v5611 = vpop.f32.mrb[0].mxu0
    %5612 = vmatprep.mubr.f32.mxu0 %v5386
    %5613 = vmatmul.mubr.f32.gmra.mrb[0].mxu0 %v5385
    %v5614 = vpop.f32.mrb[0].mxu0
    %v5615 = vadd.f32 %v5443, %v5614
    %v5616 = vpop.f32.mrb[0].mxu0
    %5617 = vmatprep.mubr.f32.mxu0 %v5389
    %5618 = vmatmul.mubr.f32.gmra.mrb[0].mxu0 %v5388
    %v5619 = vpop.f32.mrb[0].mxu0
    %v5620 = vadd.f32 %v5443, %v5619
    %v5621 = vpop.f32.mrb[0].mxu0
    %5622 = vmatprep.mubr.f32.mxu0 %v5392
    %5623 = vmatmul.mubr.f32.gmra.mrb[0].mxu0 %v5391
    %v5624 = vpop.f32.mrb[0].mxu0
    %v5625 = vadd.f32 %v5443, %v5624
    %v5626 = vpop.f32.mrb[0].mxu0
    %5627 = vmatprep.mubr.f32.mxu0 %v5395
    %5628 = vmatmul.mubr.f32.gmra.mrb[0].mxu0 %v5394
    %v5629 = vpop.f32.mrb[0].mxu0
    %v5630 = vadd.f32 %v5443, %v5629
    %v5631 = vpop.f32.mrb[0].mxu0
    %5632 = vmatprep.mubr.f32.mxu0 %v5398
    %5633 = vmatmul.mubr.f32.gmra.mrb[0].mxu0 %v5397
    %v5634 = vpop.f32.mrb[0].mxu0
    %v5635 = vadd.f32 %v5443, %v5634
    %v5636 = vpop.f32.mrb[0].mxu0
    %5637 = vdwg.mxu0
    %5638 = vmatprep.subr.mxu0 0.0
    %5639 = vmatpush1.msra.mxu0 %v5433
    %5640 = vmatprep.subr.mxu0 0.0
    %5641 = vmatpush1.msra.mxu0 %v5434
    %5642 = vmatprep.subr.mxu0 0.0
    %5643 = vmatpush1.msra.mxu0 %v5435
    %5644 = vmatprep.subr.mxu0 0.0
    %5645 = vmatpush1.msra.mxu0 %v5436
    %5646 = vmatprep.subr.mxu0 0.0
    %5647 = vmatpush1.msra.mxu0 0.0
    %5648 = vmatprep.subr.mxu0 0.0
    %5649 = vmatpush1.msra.mxu0 0.0
    %5650 = vmatprep.subr.mxu0 0.0
    %5651 = vmatpush1.msra.mxu0 0.0
    %5652 = vmatprep.subr.mxu0 0.0
    %5653 = vmatpush1.msra.mxu0 0.0
    %5654 = vmatprep.subr.mxu0 0.0
    %5655 = vmatpush1.msra.mxu0 0.0
    %5656 = vmatprep.subr.mxu0 0.0
    %5657 = vmatpush1.msra.mxu0 0.0
    %5658 = vmatprep.subr.mxu0 0.0
    %5659 = vmatpush1.msra.mxu0 0.0
    %5660 = vmatprep.subr.mxu0 0.0
    %5661 = vmatpush1.msra.mxu0 0.0
    %5662 = vmatprep.subr.mxu0 0.0
    %5663 = vmatpush1.msra.mxu0 0.0
    %5664 = vmatprep.subr.mxu0 0.0
    %5665 = vmatpush1.msra.mxu0 0.0
    %5666 = vmatprep.subr.mxu0 0.0
    %5667 = vmatpush1.msra.mxu0 0.0
    %5668 = vmatprep.subr.mxu0 0.0
    %5669 = vmatpush1.msra.mxu0 0.0
    %5670 = vmatprep.subr.mxu0 0.0
    %5671 = vmatpush1.msra.mxu0 0.0
    %5672 = vmatprep.subr.mxu0 0.0
    %5673 = vmatpush1.msra.mxu0 0.0
    %5674 = vmatprep.subr.mxu0 0.0
    %5675 = vmatpush1.msra.mxu0 0.0
    %5676 = vmatprep.subr.mxu0 0.0
    %5677 = vmatpush1.msra.mxu0 0.0
    %5678 = vmatprep.subr.mxu0 0.0
    %5679 = vmatpush1.msra.mxu0 0.0
    %5680 = vmatprep.subr.mxu0 0.0
    %5681 = vmatpush1.msra.mxu0 0.0
    %5682 = vmatprep.subr.mxu0 0.0
    %5683 = vmatpush1.msra.mxu0 0.0
    %5684 = vmatprep.subr.mxu0 0.0
    %5685 = vmatpush1.msra.mxu0 0.0
    %5686 = vmatprep.subr.mxu0 0.0
    %5687 = vmatpush1.msra.mxu0 0.0
    %5688 = vmatprep.subr.mxu0 0.0
    %5689 = vmatpush1.msra.mxu0 0.0
    %5690 = vmatprep.subr.mxu0 0.0
    %5691 = vmatpush1.msra.mxu0 0.0
    %5692 = vmatprep.subr.mxu0 0.0
    %5693 = vmatpush1.msra.mxu0 0.0
    %5694 = vmatprep.subr.mxu0 0.0
    %5695 = vmatpush1.msra.mxu0 0.0
    %5696 = vmatprep.subr.mxu0 0.0
    %5697 = vmatpush1.msra.mxu0 0.0
    %5698 = vmatprep.subr.mxu0 0.0
    %5699 = vmatpush1.msra.mxu0 0.0
    %5700 = vmatprep.subr.mxu0 0.0
    %5701 = vmatpush1.msra.mxu0 0.0
    %5702 = vmatprep.mubr.f32.mxu0 0.0
    %5703 = vmatmul.mubr.f32.gmra.mrb[0].mxu0 %v5446
    %v5704 = vpop.f32.mrb[0].mxu0
    %v5705 = vadd.f32 %v5560, %v5704
    %v5706 = vpop.f32.mrb[0].mxu0
    %5707 = vmatprep.mubr.f32.mxu0 0.0
    %5708 = vmatmul.mubr.f32.gmra.mrb[0].mxu0 %v5449
    %v5709 = vpop.f32.mrb[0].mxu0
    %v5710 = vadd.f32 %v5565, %v5709
    %v5711 = vpop.f32.mrb[0].mxu0
    %5712 = vmatprep.mubr.f32.mxu0 0.0
    %5713 = vmatmul.mubr.f32.gmra.mrb[0].mxu0 %v5452
    %v5714 = vpop.f32.mrb[0].mxu0
    %v5715 = vadd.f32 %v5570, %v5714
    %v5716 = vpop.f32.mrb[0].mxu0
    %5717 = vmatprep.mubr.f32.mxu0 0.0
    %5718 = vmatmul.mubr.f32.gmra.mrb[0].mxu0 %v5455
    %v5719 = vpop.f32.mrb[0].mxu0
    %v5720 = vadd.f32 %v5575, %v5719
    %v5721 = vpop.f32.mrb[0].mxu0
    %5722 = vmatprep.mubr.f32.mxu0 0.0
    %5723 = vmatmul.mubr.f32.gmra.mrb[0].mxu0 %v5458
    %v5724 = vpop.f32.mrb[0].mxu0
    %v5725 = vadd.f32 %v5580, %v5724
    %v5726 = vpop.f32.mrb[0].mxu0
    %5727 = vmatprep.mubr.f32.mxu0 0.0
    %5728 = vmatmul.mubr.f32.gmra.mrb[0].mxu0 %v5461
    %v5729 = vpop.f32.mrb[0].mxu0
    %v5730 = vadd.f32 %v5585, %v5729
    %v5731 = vpop.f32.mrb[0].mxu0
    %5732 = vmatprep.mubr.f32.mxu0 0.0
    %5733 = vmatmul.mubr.f32.gmra.mrb[0].mxu0 %v5464
    %v5734 = vpop.f32.mrb[0].mxu0
    %v5735 = vadd.f32 %v5590, %v5734
    %v5736 = vpop.f32.mrb[0].mxu0
    %5737 = vmatprep.mubr.f32.mxu0 0.0
    %5738 = vmatmul.mubr.f32.gmra.mrb[0].mxu0 %v5467
    %v5739 = vpop.f32.mrb[0].mxu0
    %v5740 = vadd.f32 %v5595, %v5739
    %v5741 = vpop.f32.mrb[0].mxu0
    %5742 = vmatprep.mubr.f32.mxu0 0.0
    %5743 = vmatmul.mubr.f32.gmra.mrb[0].mxu0 %v5470
    %v5744 = vpop.f32.mrb[0].mxu0
    %v5745 = vadd.f32 %v5600, %v5744
    %v5746 = vpop.f32.mrb[0].mxu0
    %5747 = vmatprep.mubr.f32.mxu0 0.0
    %5748 = vmatmul.mubr.f32.gmra.mrb[0].mxu0 %v5473
    %v5749 = vpop.f32.mrb[0].mxu0
    %v5750 = vadd.f32 %v5605, %v5749
    %v5751 = vpop.f32.mrb[0].mxu0
    %5752 = vmatprep.mubr.f32.mxu0 0.0
    %5753 = vmatmul.mubr.f32.gmra.mrb[0].mxu0 %v5476
    %v5754 = vpop.f32.mrb[0].mxu0
    %v5755 = vadd.f32 %v5610, %v5754
    %v5756 = vpop.f32.mrb[0].mxu0
    %5757 = vmatprep.mubr.f32.mxu0 0.0
    %5758 = vmatmul.mubr.f32.gmra.mrb[0].mxu0 %v5479
    %v5759 = vpop.f32.mrb[0].mxu0
    %v5760 = vadd.f32 %v5615, %v5759
    %v5761 = vpop.f32.mrb[0].mxu0
    %5762 = vmatprep.mubr.f32.mxu0 0.0
    %5763 = vmatmul.mubr.f32.gmra.mrb[0].mxu0 %v5482
    %v5764 = vpop.f32.mrb[0].mxu0
    %v5765 = vadd.f32 %v5620, %v5764
    %v5766 = vpop.f32.mrb[0].mxu0
    %5767 = vmatprep.mubr.f32.mxu0 0.0
    %5768 = vmatmul.mubr.f32.gmra.mrb[0].mxu0 %v5485
    %v5769 = vpop.f32.mrb[0].mxu0
    %v5770 = vadd.f32 %v5625, %v5769
    %v5771 = vpop.f32.mrb[0].mxu0
    %5772 = vmatprep.mubr.f32.mxu0 0.0
    %5773 = vmatmul.mubr.f32.gmra.mrb[0].mxu0 %v5488
    %v5774 = vpop.f32.mrb[0].mxu0
    %v5775 = vadd.f32 %v5630, %v5774
    %v5776 = vpop.f32.mrb[0].mxu0
    %5777 = vmatprep.mubr.f32.mxu0 0.0
    %5778 = vmatmul.mubr.f32.gmra.mrb[0].mxu0 %v5491
    %v5779 = vpop.f32.mrb[0].mxu0
    %v5780 = vadd.f32 %v5635, %v5779
    %v5781 = vpop.f32.mrb[0].mxu0
    %5782 = vdwg.mxu0
    %v5783 = vadd.f32 %v5705, %v3529
    %v5784 = vadd.f32 %v5710, %v3530
    %v5785 = vadd.f32 %v5715, %v3531
    %v5786 = vadd.f32 %v5720, %v3532
    %v5787 = vadd.f32 %v5725, %v3533
    %v5788 = vadd.f32 %v5730, %v3534
    %v5789 = vadd.f32 %v5735, %v3535
    %v5790 = vadd.f32 %v5740, %v3536
    %v5791 = vadd.f32 %v5745, %v3537
    %v5792 = vadd.f32 %v5750, %v3538
    %v5793 = vadd.f32 %v5755, %v3539
    %v5794 = vadd.f32 %v5760, %v3540
    %v5795 = vadd.f32 %v5765, %v3541
    %v5796 = vadd.f32 %v5770, %v3542
    %v5797 = vadd.f32 %v5775, %v3543
    %v5798 = vadd.f32 %v5780, %v3544
    %v5799 = vmax.f32 %v5783, 0.0
    %v5800 = vmax.f32 %v5784, 0.0
    %v5801 = vmax.f32 %v5785, 0.0
    %v5802 = vmax.f32 %v5786, 0.0
    %v5803 = vmax.f32 %v5787, 0.0
    %v5804 = vmax.f32 %v5788, 0.0
    %v5805 = vmax.f32 %v5789, 0.0
    %v5806 = vmax.f32 %v5790, 0.0
    %v5807 = vmax.f32 %v5791, 0.0
    %v5808 = vmax.f32 %v5792, 0.0
    %v5809 = vmax.f32 %v5793, 0.0
    %v5810 = vmax.f32 %v5794, 0.0
    %v5811 = vmax.f32 %v5795, 0.0
    %v5812 = vmax.f32 %v5796, 0.0
    %v5813 = vmax.f32 %v5797, 0.0
    %v5814 = vmax.f32 %v5798, 0.0
    %5815 = vst.msk [vmem:[#allocation4] sm:$0xff] %vm15, %v5799
    %5816 = vst.msk [vmem:[#allocation4 + $0x8] sm:$0xff] %vm15, %v5800
    %5817 = vst.msk [vmem:[#allocation4 + $0x10] sm:$0xff] %vm15, %v5801
    %5818 = vst.msk [vmem:[#allocation4 + $0x18] sm:$0xff] %vm15, %v5802
    %5819 = vst.msk [vmem:[#allocation4 + $0x20] sm:$0xff] %vm15, %v5803
    %5820 = vst.msk [vmem:[#allocation4 + $0x28] sm:$0xff] %vm15, %v5804
    %5821 = vst.msk [vmem:[#allocation4 + $0x30] sm:$0xff] %vm15, %v5805
    %5822 = vst.msk [vmem:[#allocation4 + $0x38] sm:$0xff] %vm15, %v5806
    %5823 = vst.msk [vmem:[#allocation4 + $0x40] sm:$0xff] %vm15, %v5807
    %5824 = vst.msk [vmem:[#allocation4 + $0x48] sm:$0xff] %vm15, %v5808
    %5825 = vst.msk [vmem:[#allocation4 + $0x50] sm:$0xff] %vm15, %v5809
    %5826 = vst.msk [vmem:[#allocation4 + $0x58] sm:$0xff] %vm15, %v5810
    %5827 = vst.msk [vmem:[#allocation4 + $0x60] sm:$0xff] %vm15, %v5811
    %5828 = vst.msk [vmem:[#allocation4 + $0x68] sm:$0xff] %vm15, %v5812
    %5829 = vst.msk [vmem:[#allocation4 + $0x70] sm:$0xff] %vm15, %v5813
    %5830 = vst.msk [vmem:[#allocation4 + $0x78] sm:$0xff] %vm15, %v5814
    // Predicated region
    $region14: #{feature_forward.1} parent=1 // pred_check
      _
    $region15: #{feature_forward.1} parent=1 // pred_check_branch
      %5832 = sbr.rel (0) target = $region17
    $region16: #{feature_forward.1} parent=1 // pred_region
      %s5834 = ssub.s32 2048, 2048
      %5835 = vsyncadd [#allocation5], %s5834
      %s5836 = sshll.u32 [#allocation4], 4
      %s5837 = int_to_ptr.vmem [resolvable:$true] %s5836
      %5842 = dma.vmem_to_hbm [thread:$0]  %s5837, 2048, %s3, [#allocation5], 128, 128, 8
    $region17: #{feature_forward.1} parent=1 // pred_fallthru
      _
    // Predicated region
    $region18: #{feature_forward.1} parent=1 // pred_check
      _
    $region19: #{feature_forward.1} parent=1 // pred_check_branch
      %5844 = sbr.rel (0) target = $region21
    $region20: #{feature_forward.1} parent=1 // pred_region
      %5845 = dma.done [#allocation5], 2048
    $region21: #{feature_forward.1} parent=1 // pred_fallthru
      _
    %5846 = vsyncpa [#allocation5], 1

</llo_original>
